<compile_context>
chip_gen: v7x
topology: tpu7x:2x2x1
jax: 0.10.0
libtpu: 0.0.40
codegen_flags: <defaults>
</compile_context>

<pallas_src>
import numpy as np
import jax
import jax.numpy as jnp
from jax.experimental import pallas as pl
from jax.experimental.pallas import tpu as pltpu


# ----------------------------------------------------------------------------
# Static network configuration
# ----------------------------------------------------------------------------
def _conv_out(size, stride):
    # kernel=3, padding=1
    return (size - 1) // stride + 1


def build_config(channels, in_hw):
    """Per-block static descriptors: input spatial size, stride, channels."""
    c = channels
    ds_io = [(c[0], c[1], 1), (c[1], c[2], 2), (c[2], c[2], 1), (c[2], c[3], 2),
             (c[3], c[3], 1), (c[3], c[4], 2),
             (c[4], c[4], 1), (c[4], c[4], 1), (c[4], c[4], 1), (c[4], c[4], 1),
             (c[4], c[4], 1),
             (c[4], c[5], 2), (c[5], c[5], 1)]
    blocks = []
    h = w = in_hw
    ho, wo = _conv_out(h, 2), _conv_out(w, 2)
    blocks.append(dict(kind="stem", cin=1, cout=c[0], stride=2,
                       H=h, W=w, Ho=ho, Wo=wo))
    h, w = ho, wo
    for cin, cout, s in ds_io:
        ho, wo = _conv_out(h, s), _conv_out(w, s)
        # A block whose input is already 1x1 needs only the centre tap.
        kind = "flat" if (h > 1 or w > 1) else "compact"
        blocks.append(dict(kind=kind, cin=cin, cout=cout, stride=s,
                           H=h, W=w, Ho=ho, Wo=wo))
        h, w = ho, wo
    assert h == 1 and w == 1, "network must end with 1x1 spatial maps"
    return blocks


def _selection_matrix(blk):
    """Exact 0/1 matrix mapping the stride-1 'core' rows of a block's flattened
    padded input grid to the next activation rows: either the next block's
    zero-bordered padded-flat layout, or compact (Ho*Wo) rows once the spatial
    size reaches 1x1.  Handles stride-2 decimation and border zeroing for free
    as a single MXU matmul."""
    H, W, s, Ho, Wo = blk["H"], blk["W"], blk["stride"], blk["Ho"], blk["Wo"]
    Hp, Wp = H + 2, W + 2
    L = Wp + 1
    R = Hp * Wp - 2 * L
    out_padded = (Ho > 1 or Wo > 1)
    if out_padded:
        Wop = Wo + 2
        M = (Ho + 2) * Wop
    else:
        Wop = 0
        M = Ho * Wo
    S = np.zeros((M, R), np.float32)
    for oy in range(Ho):
        for ox in range(Wo):
            src = (s * oy + 1) * Wp + (s * ox + 1) - L
            dst = (oy + 1) * Wop + (ox + 1) if out_padded else oy * Wo + ox
            S[dst, src] = 1.0
    return jnp.asarray(S)


# ----------------------------------------------------------------------------
# Fused Pallas kernel (one grid step == one image)
# ----------------------------------------------------------------------------
def _make_kernel(blocks):
    def kernel(*refs):
        it = iter(refs)
        # Padded-flat stem input for this image: (Hp*Wp, 1), zero borders.
        x = next(it)[0]
        for blk in blocks:
            if blk["kind"] in ("stem", "flat"):
                Wp = blk["W"] + 2
                L = Wp + 1
                R = (blk["H"] + 2) * Wp - 2 * L
                w9 = next(it)[...]          # (9, C)  BN scale already folded in
                b1 = next(it)[...]          # (1, C)
                if blk["kind"] == "flat":
                    pw = next(it)[...]      # (Cin, Cout)  scale folded in
                    b2 = next(it)[...]      # (1, Cout)
                S = next(it)                # selection matrix ref
                # 3x3 conv = 9 constant row-shift MACs on the flattened grid.
                acc = None
                for t in range(9):
                    dy, dx = divmod(t, 3)
                    off = (dy - 1) * Wp + (dx - 1)
                    term = x[L + off: L + off + R, :] * w9[t:t + 1, :]
                    acc = term if acc is None else acc + term
                act = jnp.maximum(acc + b1, 0.0)
                if blk["kind"] == "flat":
                    act = jnp.maximum(
                        jnp.dot(act, pw, preferred_element_type=jnp.float32)
                        + b2, 0.0)
                # Exact 0/1 gather: stride-2 decimation + border zeroing +
                # re-layout for the next block, in one MXU matmul.
                x = jnp.dot(S[...], act, preferred_element_type=jnp.float32)
            else:
                # Compact path: 1x1 spatial, depthwise conv == centre tap only.
                wc = next(it)[...]          # (1, Cin)  centre tap, scale folded
                b1 = next(it)[...]
                pw = next(it)[...]
                b2 = next(it)[...]
                d = jnp.maximum(x * wc + b1, 0.0)
                x = jnp.maximum(
                    jnp.dot(d, pw, preferred_element_type=jnp.float32) + b2,
                    0.0)
        lin_w = next(it)[...]               # (C_last, num_classes)
        lin_b = next(it)[...]               # (1, num_classes)
        out_ref = next(it)
        # AdaptiveAvgPool2d((1,1)) on a 1x1 map == identity; Dropout is a no-op
        # in eval mode.
        out_ref[0] = (jnp.dot(x, lin_w, preferred_element_type=jnp.float32)
                      + lin_b)
    return kernel


def make_forward(blocks, num_classes, in_hw):
    kernel = _make_kernel(blocks)
    hp = in_hw + 2
    m0 = hp * hp

    def _const_spec(a):
        nd = a.ndim

        def imap(i):
            return (0,) * nd

        return pl.BlockSpec(a.shape, imap)

    def forward(x_nchw, flat_params):
        n = x_nchw.shape[0]
        x = x_nchw.reshape(n, in_hw, in_hw).astype(jnp.float32)
        xp = jnp.pad(x, ((0, 0), (1, 1), (1, 1)))
        xflat = xp.reshape(n, m0, 1)
        in_specs = [pl.BlockSpec((1, m0, 1), lambda i: (i, 0, 0))]
        in_specs += [_const_spec(a) for a in flat_params]
        out = pl.pallas_call(
            kernel,
            grid=(n,),
            in_specs=in_specs,
            out_specs=pl.BlockSpec((1, 1, num_classes), lambda i: (i, 0, 0)),
            out_shape=jax.ShapeDtypeStruct((n, 1, num_classes), jnp.float32),
            compiler_params=pltpu.CompilerParams(
                dimension_semantics=("parallel",)),
        )(xflat, *flat_params)
        return out.reshape(-1, 1)           # matches torch .view(-1, 1)

    return forward


# ----------------------------------------------------------------------------
# Deterministic synthetic parameters (matching the torch module's shapes)
# ----------------------------------------------------------------------------
def _folded_bn(key, c):
    k1, k2, k3, k4 = jax.random.split(key, 4)
    gamma = jax.random.uniform(k1, (c,), minval=0.5, maxval=1.5)
    beta = 0.1 * jax.random.normal(k2, (c,))
    mean = 0.1 * jax.random.normal(k3, (c,))
    var = jax.random.uniform(k4, (c,), minval=0.5, maxval=1.5)
    scale = gamma / jnp.sqrt(var + 1e-5)
    bias = beta - mean * scale
    return scale.astype(jnp.float32), bias.astype(jnp.float32)


def init_params(key, blocks, num_classes):
    keys = iter(jax.random.split(key, 4 * len(blocks) + 8))
    stem = blocks[0]
    w = 0.2 * jax.random.normal(next(keys), (9, stem["cout"]), dtype=jnp.float32)
    scale, bias = _folded_bn(next(keys), stem["cout"])
    params = {"stem": {"w": w, "scale": scale, "bias": bias}, "ds": []}
    for blk in blocks[1:]:
        cin, cout = blk["cin"], blk["cout"]
        dw_w = 0.2 * jax.random.normal(next(keys), (9, cin), dtype=jnp.float32)
        dw_s, dw_b = _folded_bn(next(keys), cin)
        pw_w = 0.2 * jax.random.normal(next(keys), (cin, cout), dtype=jnp.float32)
        pw_s, pw_b = _folded_bn(next(keys), cout)
        params["ds"].append({"dw_w": dw_w, "dw_scale": dw_s, "dw_bias": dw_b,
                             "pw_w": pw_w, "pw_scale": pw_s, "pw_bias": pw_b})
    c_last = blocks[-1]["cout"]
    lw = 0.1 * jax.random.normal(next(keys), (c_last, num_classes),
                                 dtype=jnp.float32)
    lb = 0.1 * jax.random.normal(next(keys), (num_classes,), dtype=jnp.float32)
    params["linear"] = {"w": lw, "bias": lb}
    return params


def pack_args(params, blocks):
    """Fold BN scales into conv/matmul weights and append the static 0/1
    selection matrices.  Returns the flat operand list for the fused kernel."""
    args = []
    stem = params["stem"]
    args += [stem["w"] * stem["scale"][None, :],
             stem["bias"][None, :],
             _selection_matrix(blocks[0])]
    for p, blk in zip(params["ds"], blocks[1:]):
        dw_w = p["dw_w"] * p["dw_scale"][None, :]
        pw_w = p["pw_w"] * p["pw_scale"][None, :]
        if blk["kind"] == "flat":
            args += [dw_w, p["dw_bias"][None, :],
                     pw_w, p["pw_bias"][None, :],
                     _selection_matrix(blk)]
        else:
            args += [dw_w[4:5, :], p["dw_bias"][None, :],
                     pw_w, p["pw_bias"][None, :]]
    lin = params["linear"]
    args += [lin["w"], lin["bias"][None, :]]
    return args


# ----------------------------------------------------------------------------
# Plain-JAX (XLA) reference with un-folded BatchNorm, for validation
# ----------------------------------------------------------------------------
def reference_forward(x_nchw, params, blocks):
    x = jnp.transpose(x_nchw, (0, 2, 3, 1)).astype(jnp.float32)

    def conv3x3(x, w9, scale, bias, stride):
        n, h, w, _ = x.shape
        co = w9.shape[-1]
        xp = jnp.pad(x, ((0, 0), (1, 1), (1, 1), (0, 0)))
        acc = jnp.zeros((n, h, w, co), jnp.float32)
        for dy in range(3):
            for dx in range(3):
                acc = acc + xp[:, dy:dy + h, dx:dx + w, :] * w9[dy * 3 + dx]
        acc = jnp.maximum(acc * scale + bias, 0.0)
        return acc[:, ::stride, ::stride, :] if stride > 1 else acc

    stem = params["stem"]
    y = conv3x3(x, stem["w"], stem["scale"], stem["bias"], blocks[0]["stride"])
    for p, blk in zip(params["ds"], blocks[1:]):
        y = conv3x3(y, p["dw_w"], p["dw_scale"], p["dw_bias"], blk["stride"])
        n, h, w, cin = y.shape
        z = jnp.dot(y.reshape(n * h * w, cin), p["pw_w"],
                    precision=jax.lax.Precision.HIGHEST)
        z = jnp.maximum(z * p["pw_scale"] + p["pw_bias"], 0.0)
        y = z.reshape(n, h, w, -1)
    pooled = jnp.mean(y, axis=(1, 2))
    lin = params["linear"]
    out = jnp.dot(pooled, lin["w"],
                  precision=jax.lax.Precision.HIGHEST) + lin["bias"]
    return out.reshape(-1, 1)


# ----------------------------------------------------------------------------
if __name__ == "__main__":
    channels = [8, 16, 16, 32, 32, 64]
    num_classes = 784
    batch, spatial = 2, 16

    key = jax.random.PRNGKey(0)
    k_x, k_p = jax.random.split(key)
    x = jax.random.normal(k_x, (batch, 1, spatial, spatial), dtype=jnp.float32)

    blocks = build_config(channels, spatial)
    params = init_params(k_p, blocks, num_classes)
    kernel_args = pack_args(params, blocks)     # BN folded + selection matrices
    forward = make_forward(blocks, num_classes, spatial)

    fwd = jax.jit(forward)
    out = jax.block_until_ready(fwd(x, kernel_args))

    assert out.shape == (batch * num_classes, 1), out.shape
    assert bool(jnp.all(jnp.isfinite(out)))

    ref_fn = jax.jit(lambda xx, pp: reference_forward(xx, pp, blocks))
    ref = jax.block_until_ready(ref_fn(x, params))
    np.testing.assert_allclose(np.asarray(out), np.asarray(ref),
                               rtol=2e-2, atol=2e-2)
    print("KERNEL_OK")
</pallas_src>

<mosaic_0001>
module attributes {stable_mosaic.version = 11 : i64} {
  func.func @kernel(%arg0: i32, %arg1: memref<1x324x1xf32, #tpu.memory_space<vmem>>, %arg2: memref<9x8xf32, #tpu.memory_space<vmem>>, %arg3: memref<1x8xf32, #tpu.memory_space<vmem>>, %arg4: memref<100x286xf32, #tpu.memory_space<vmem>>, %arg5: memref<9x8xf32, #tpu.memory_space<vmem>>, %arg6: memref<1x8xf32, #tpu.memory_space<vmem>>, %arg7: memref<8x16xf32, #tpu.memory_space<vmem>>, %arg8: memref<1x16xf32, #tpu.memory_space<vmem>>, %arg9: memref<100x78xf32, #tpu.memory_space<vmem>>, %arg10: memref<9x16xf32, #tpu.memory_space<vmem>>, %arg11: memref<1x16xf32, #tpu.memory_space<vmem>>, %arg12: memref<16x16xf32, #tpu.memory_space<vmem>>, %arg13: memref<1x16xf32, #tpu.memory_space<vmem>>, %arg14: memref<36x78xf32, #tpu.memory_space<vmem>>, %arg15: memref<9x16xf32, #tpu.memory_space<vmem>>, %arg16: memref<1x16xf32, #tpu.memory_space<vmem>>, %arg17: memref<16x16xf32, #tpu.memory_space<vmem>>, %arg18: memref<1x16xf32, #tpu.memory_space<vmem>>, %arg19: memref<36x22xf32, #tpu.memory_space<vmem>>, %arg20: memref<9x16xf32, #tpu.memory_space<vmem>>, %arg21: memref<1x16xf32, #tpu.memory_space<vmem>>, %arg22: memref<16x32xf32, #tpu.memory_space<vmem>>, %arg23: memref<1x32xf32, #tpu.memory_space<vmem>>, %arg24: memref<16x22xf32, #tpu.memory_space<vmem>>, %arg25: memref<9x32xf32, #tpu.memory_space<vmem>>, %arg26: memref<1x32xf32, #tpu.memory_space<vmem>>, %arg27: memref<32x32xf32, #tpu.memory_space<vmem>>, %arg28: memref<1x32xf32, #tpu.memory_space<vmem>>, %arg29: memref<16x6xf32, #tpu.memory_space<vmem>>, %arg30: memref<9x32xf32, #tpu.memory_space<vmem>>, %arg31: memref<1x32xf32, #tpu.memory_space<vmem>>, %arg32: memref<32x32xf32, #tpu.memory_space<vmem>>, %arg33: memref<1x32xf32, #tpu.memory_space<vmem>>, %arg34: memref<1x6xf32, #tpu.memory_space<vmem>>, %arg35: memref<1x32xf32, #tpu.memory_space<vmem>>, %arg36: memref<1x32xf32, #tpu.memory_space<vmem>>, %arg37: memref<32x32xf32, #tpu.memory_space<vmem>>, %arg38: memref<1x32xf32, #tpu.memory_space<vmem>>, %arg39: memref<1x32xf32, #tpu.memory_space<vmem>>, %arg40: memref<1x32xf32, #tpu.memory_space<vmem>>, %arg41: memref<32x32xf32, #tpu.memory_space<vmem>>, %arg42: memref<1x32xf32, #tpu.memory_space<vmem>>, %arg43: memref<1x32xf32, #tpu.memory_space<vmem>>, %arg44: memref<1x32xf32, #tpu.memory_space<vmem>>, %arg45: memref<32x32xf32, #tpu.memory_space<vmem>>, %arg46: memref<1x32xf32, #tpu.memory_space<vmem>>, %arg47: memref<1x32xf32, #tpu.memory_space<vmem>>, %arg48: memref<1x32xf32, #tpu.memory_space<vmem>>, %arg49: memref<32x32xf32, #tpu.memory_space<vmem>>, %arg50: memref<1x32xf32, #tpu.memory_space<vmem>>, %arg51: memref<1x32xf32, #tpu.memory_space<vmem>>, %arg52: memref<1x32xf32, #tpu.memory_space<vmem>>, %arg53: memref<32x32xf32, #tpu.memory_space<vmem>>, %arg54: memref<1x32xf32, #tpu.memory_space<vmem>>, %arg55: memref<1x32xf32, #tpu.memory_space<vmem>>, %arg56: memref<1x32xf32, #tpu.memory_space<vmem>>, %arg57: memref<32x64xf32, #tpu.memory_space<vmem>>, %arg58: memref<1x64xf32, #tpu.memory_space<vmem>>, %arg59: memref<1x64xf32, #tpu.memory_space<vmem>>, %arg60: memref<1x64xf32, #tpu.memory_space<vmem>>, %arg61: memref<64x64xf32, #tpu.memory_space<vmem>>, %arg62: memref<1x64xf32, #tpu.memory_space<vmem>>, %arg63: memref<64x784xf32, #tpu.memory_space<vmem>>, %arg64: memref<1x784xf32, #tpu.memory_space<vmem>>, %arg65: memref<1x1x784xf32, #tpu.memory_space<vmem>>) attributes {dimension_semantics = [#tpu.dimension_semantics<parallel>], iteration_bounds = array<i64: 2>, scalar_prefetch = 0 : i64, scratch_operands = 0 : i64, tpu.core_type = #tpu.core_type<tc>, window_params = [{transform_indices = @transform_0, window_bounds = array<i64: 1, 324, 1>}, {pipeline_mode = #tpu.pipeline_mode<synchronous>, transform_indices = @transform_1, window_bounds = array<i64: 9, 8>}, {pipeline_mode = #tpu.pipeline_mode<synchronous>, transform_indices = @transform_2, window_bounds = array<i64: 1, 8>}, {pipeline_mode = #tpu.pipeline_mode<synchronous>, transform_indices = @transform_3, window_bounds = array<i64: 100, 286>}, {pipeline_mode = #tpu.pipeline_mode<synchronous>, transform_indices = @transform_4, window_bounds = array<i64: 9, 8>}, {pipeline_mode = #tpu.pipeline_mode<synchronous>, transform_indices = @transform_5, window_bounds = array<i64: 1, 8>}, {pipeline_mode = #tpu.pipeline_mode<synchronous>, transform_indices = @transform_6, window_bounds = array<i64: 8, 16>}, {pipeline_mode = #tpu.pipeline_mode<synchronous>, transform_indices = @transform_7, window_bounds = array<i64: 1, 16>}, {pipeline_mode = #tpu.pipeline_mode<synchronous>, transform_indices = @transform_8, window_bounds = array<i64: 100, 78>}, {pipeline_mode = #tpu.pipeline_mode<synchronous>, transform_indices = @transform_9, window_bounds = array<i64: 9, 16>}, {pipeline_mode = #tpu.pipeline_mode<synchronous>, transform_indices = @transform_10, window_bounds = array<i64: 1, 16>}, {pipeline_mode = #tpu.pipeline_mode<synchronous>, transform_indices = @transform_11, window_bounds = array<i64: 16, 16>}, {pipeline_mode = #tpu.pipeline_mode<synchronous>, transform_indices = @transform_12, window_bounds = array<i64: 1, 16>}, {pipeline_mode = #tpu.pipeline_mode<synchronous>, transform_indices = @transform_13, window_bounds = array<i64: 36, 78>}, {pipeline_mode = #tpu.pipeline_mode<synchronous>, transform_indices = @transform_14, window_bounds = array<i64: 9, 16>}, {pipeline_mode = #tpu.pipeline_mode<synchronous>, transform_indices = @transform_15, window_bounds = array<i64: 1, 16>}, {pipeline_mode = #tpu.pipeline_mode<synchronous>, transform_indices = @transform_16, window_bounds = array<i64: 16, 16>}, {pipeline_mode = #tpu.pipeline_mode<synchronous>, transform_indices = @transform_17, window_bounds = array<i64: 1, 16>}, {pipeline_mode = #tpu.pipeline_mode<synchronous>, transform_indices = @transform_18, window_bounds = array<i64: 36, 22>}, {pipeline_mode = #tpu.pipeline_mode<synchronous>, transform_indices = @transform_19, window_bounds = array<i64: 9, 16>}, {pipeline_mode = #tpu.pipeline_mode<synchronous>, transform_indices = @transform_20, window_bounds = array<i64: 1, 16>}, {pipeline_mode = #tpu.pipeline_mode<synchronous>, transform_indices = @transform_21, window_bounds = array<i64: 16, 32>}, {pipeline_mode = #tpu.pipeline_mode<synchronous>, transform_indices = @transform_22, window_bounds = array<i64: 1, 32>}, {pipeline_mode = #tpu.pipeline_mode<synchronous>, transform_indices = @transform_23, window_bounds = array<i64: 16, 22>}, {pipeline_mode = #tpu.pipeline_mode<synchronous>, transform_indices = @transform_24, window_bounds = array<i64: 9, 32>}, {pipeline_mode = #tpu.pipeline_mode<synchronous>, transform_indices = @transform_25, window_bounds = array<i64: 1, 32>}, {pipeline_mode = #tpu.pipeline_mode<synchronous>, transform_indices = @transform_26, window_bounds = array<i64: 32, 32>}, {pipeline_mode = #tpu.pipeline_mode<synchronous>, transform_indices = @transform_27, window_bounds = array<i64: 1, 32>}, {pipeline_mode = #tpu.pipeline_mode<synchronous>, transform_indices = @transform_28, window_bounds = array<i64: 16, 6>}, {pipeline_mode = #tpu.pipeline_mode<synchronous>, transform_indices = @transform_29, window_bounds = array<i64: 9, 32>}, {pipeline_mode = #tpu.pipeline_mode<synchronous>, transform_indices = @transform_30, window_bounds = array<i64: 1, 32>}, {pipeline_mode = #tpu.pipeline_mode<synchronous>, transform_indices = @transform_31, window_bounds = array<i64: 32, 32>}, {pipeline_mode = #tpu.pipeline_mode<synchronous>, transform_indices = @transform_32, window_bounds = array<i64: 1, 32>}, {pipeline_mode = #tpu.pipeline_mode<synchronous>, transform_indices = @transform_33, window_bounds = array<i64: 1, 6>}, {pipeline_mode = #tpu.pipeline_mode<synchronous>, transform_indices = @transform_34, window_bounds = array<i64: 1, 32>}, {pipeline_mode = #tpu.pipeline_mode<synchronous>, transform_indices = @transform_35, window_bounds = array<i64: 1, 32>}, {pipeline_mode = #tpu.pipeline_mode<synchronous>, transform_indices = @transform_36, window_bounds = array<i64: 32, 32>}, {pipeline_mode = #tpu.pipeline_mode<synchronous>, transform_indices = @transform_37, window_bounds = array<i64: 1, 32>}, {pipeline_mode = #tpu.pipeline_mode<synchronous>, transform_indices = @transform_38, window_bounds = array<i64: 1, 32>}, {pipeline_mode = #tpu.pipeline_mode<synchronous>, transform_indices = @transform_39, window_bounds = array<i64: 1, 32>}, {pipeline_mode = #tpu.pipeline_mode<synchronous>, transform_indices = @transform_40, window_bounds = array<i64: 32, 32>}, {pipeline_mode = #tpu.pipeline_mode<synchronous>, transform_indices = @transform_41, window_bounds = array<i64: 1, 32>}, {pipeline_mode = #tpu.pipeline_mode<synchronous>, transform_indices = @transform_42, window_bounds = array<i64: 1, 32>}, {pipeline_mode = #tpu.pipeline_mode<synchronous>, transform_indices = @transform_43, window_bounds = array<i64: 1, 32>}, {pipeline_mode = #tpu.pipeline_mode<synchronous>, transform_indices = @transform_44, window_bounds = array<i64: 32, 32>}, {pipeline_mode = #tpu.pipeline_mode<synchronous>, transform_indices = @transform_45, window_bounds = array<i64: 1, 32>}, {pipeline_mode = #tpu.pipeline_mode<synchronous>, transform_indices = @transform_46, window_bounds = array<i64: 1, 32>}, {pipeline_mode = #tpu.pipeline_mode<synchronous>, transform_indices = @transform_47, window_bounds = array<i64: 1, 32>}, {pipeline_mode = #tpu.pipeline_mode<synchronous>, transform_indices = @transform_48, window_bounds = array<i64: 32, 32>}, {pipeline_mode = #tpu.pipeline_mode<synchronous>, transform_indices = @transform_49, window_bounds = array<i64: 1, 32>}, {pipeline_mode = #tpu.pipeline_mode<synchronous>, transform_indices = @transform_50, window_bounds = array<i64: 1, 32>}, {pipeline_mode = #tpu.pipeline_mode<synchronous>, transform_indices = @transform_51, window_bounds = array<i64: 1, 32>}, {pipeline_mode = #tpu.pipeline_mode<synchronous>, transform_indices = @transform_52, window_bounds = array<i64: 32, 32>}, {pipeline_mode = #tpu.pipeline_mode<synchronous>, transform_indices = @transform_53, window_bounds = array<i64: 1, 32>}, {pipeline_mode = #tpu.pipeline_mode<synchronous>, transform_indices = @transform_54, window_bounds = array<i64: 1, 32>}, {pipeline_mode = #tpu.pipeline_mode<synchronous>, transform_indices = @transform_55, window_bounds = array<i64: 1, 32>}, {pipeline_mode = #tpu.pipeline_mode<synchronous>, transform_indices = @transform_56, window_bounds = array<i64: 32, 64>}, {pipeline_mode = #tpu.pipeline_mode<synchronous>, transform_indices = @transform_57, window_bounds = array<i64: 1, 64>}, {pipeline_mode = #tpu.pipeline_mode<synchronous>, transform_indices = @transform_58, window_bounds = array<i64: 1, 64>}, {pipeline_mode = #tpu.pipeline_mode<synchronous>, transform_indices = @transform_59, window_bounds = array<i64: 1, 64>}, {pipeline_mode = #tpu.pipeline_mode<synchronous>, transform_indices = @transform_60, window_bounds = array<i64: 64, 64>}, {pipeline_mode = #tpu.pipeline_mode<synchronous>, transform_indices = @transform_61, window_bounds = array<i64: 1, 64>}, {pipeline_mode = #tpu.pipeline_mode<synchronous>, transform_indices = @transform_62, window_bounds = array<i64: 64, 784>}, {pipeline_mode = #tpu.pipeline_mode<synchronous>, transform_indices = @transform_63, window_bounds = array<i64: 1, 784>}, {transform_indices = @transform_64, window_bounds = array<i64: 1, 1, 784>}]} {
    %c0 = arith.constant 0 : index
    %c0_0 = arith.constant 0 : index
    %c0_1 = arith.constant 0 : index
    %0 = vector.load %arg1[%c0, %c0_0, %c0_1] : memref<1x324x1xf32, #tpu.memory_space<vmem>>, vector<1x324x1xf32>
    %1 = vector.shape_cast %0 : vector<1x324x1xf32> to vector<324x1xf32>
    %c0_2 = arith.constant 0 : index
    %c0_3 = arith.constant 0 : index
    %2 = vector.load %arg2[%c0_2, %c0_3] : memref<9x8xf32, #tpu.memory_space<vmem>>, vector<9x8xf32>
    %c0_4 = arith.constant 0 : index
    %c0_5 = arith.constant 0 : index
    %3 = vector.load %arg3[%c0_4, %c0_5] : memref<1x8xf32, #tpu.memory_space<vmem>>, vector<1x8xf32>
    %4 = vector.extract_strided_slice %1 {offsets = [0, 0], sizes = [286, 1], strides = [1, 1]} : vector<324x1xf32> to vector<286x1xf32>
    %5 = vector.extract_strided_slice %2 {offsets = [0, 0], sizes = [1, 8], strides = [1, 1]} : vector<9x8xf32> to vector<1x8xf32>
    %6 = vector.broadcast %4 : vector<286x1xf32> to vector<286x8xf32>
    %7 = vector.broadcast %5 : vector<1x8xf32> to vector<286x8xf32>
    %8 = arith.mulf %6, %7 : vector<286x8xf32>
    %9 = vector.extract_strided_slice %1 {offsets = [1, 0], sizes = [286, 1], strides = [1, 1]} : vector<324x1xf32> to vector<286x1xf32>
    %10 = vector.extract_strided_slice %2 {offsets = [1, 0], sizes = [1, 8], strides = [1, 1]} : vector<9x8xf32> to vector<1x8xf32>
    %11 = vector.broadcast %9 : vector<286x1xf32> to vector<286x8xf32>
    %12 = vector.broadcast %10 : vector<1x8xf32> to vector<286x8xf32>
    %13 = arith.mulf %11, %12 : vector<286x8xf32>
    %14 = arith.addf %8, %13 : vector<286x8xf32>
    %15 = vector.extract_strided_slice %1 {offsets = [2, 0], sizes = [286, 1], strides = [1, 1]} : vector<324x1xf32> to vector<286x1xf32>
    %16 = vector.extract_strided_slice %2 {offsets = [2, 0], sizes = [1, 8], strides = [1, 1]} : vector<9x8xf32> to vector<1x8xf32>
    %17 = vector.broadcast %15 : vector<286x1xf32> to vector<286x8xf32>
    %18 = vector.broadcast %16 : vector<1x8xf32> to vector<286x8xf32>
    %19 = arith.mulf %17, %18 : vector<286x8xf32>
    %20 = arith.addf %14, %19 : vector<286x8xf32>
    %21 = vector.extract_strided_slice %1 {offsets = [18, 0], sizes = [286, 1], strides = [1, 1]} : vector<324x1xf32> to vector<286x1xf32>
    %22 = vector.extract_strided_slice %2 {offsets = [3, 0], sizes = [1, 8], strides = [1, 1]} : vector<9x8xf32> to vector<1x8xf32>
    %23 = vector.broadcast %21 : vector<286x1xf32> to vector<286x8xf32>
    %24 = vector.broadcast %22 : vector<1x8xf32> to vector<286x8xf32>
    %25 = arith.mulf %23, %24 : vector<286x8xf32>
    %26 = arith.addf %20, %25 : vector<286x8xf32>
    %27 = vector.extract_strided_slice %1 {offsets = [19, 0], sizes = [286, 1], strides = [1, 1]} : vector<324x1xf32> to vector<286x1xf32>
    %28 = vector.extract_strided_slice %2 {offsets = [4, 0], sizes = [1, 8], strides = [1, 1]} : vector<9x8xf32> to vector<1x8xf32>
    %29 = vector.broadcast %27 : vector<286x1xf32> to vector<286x8xf32>
    %30 = vector.broadcast %28 : vector<1x8xf32> to vector<286x8xf32>
    %31 = arith.mulf %29, %30 : vector<286x8xf32>
    %32 = arith.addf %26, %31 : vector<286x8xf32>
    %33 = vector.extract_strided_slice %1 {offsets = [20, 0], sizes = [286, 1], strides = [1, 1]} : vector<324x1xf32> to vector<286x1xf32>
    %34 = vector.extract_strided_slice %2 {offsets = [5, 0], sizes = [1, 8], strides = [1, 1]} : vector<9x8xf32> to vector<1x8xf32>
    %35 = vector.broadcast %33 : vector<286x1xf32> to vector<286x8xf32>
    %36 = vector.broadcast %34 : vector<1x8xf32> to vector<286x8xf32>
    %37 = arith.mulf %35, %36 : vector<286x8xf32>
    %38 = arith.addf %32, %37 : vector<286x8xf32>
    %39 = vector.extract_strided_slice %1 {offsets = [36, 0], sizes = [286, 1], strides = [1, 1]} : vector<324x1xf32> to vector<286x1xf32>
    %40 = vector.extract_strided_slice %2 {offsets = [6, 0], sizes = [1, 8], strides = [1, 1]} : vector<9x8xf32> to vector<1x8xf32>
    %41 = vector.broadcast %39 : vector<286x1xf32> to vector<286x8xf32>
    %42 = vector.broadcast %40 : vector<1x8xf32> to vector<286x8xf32>
    %43 = arith.mulf %41, %42 : vector<286x8xf32>
    %44 = arith.addf %38, %43 : vector<286x8xf32>
    %45 = vector.extract_strided_slice %1 {offsets = [37, 0], sizes = [286, 1], strides = [1, 1]} : vector<324x1xf32> to vector<286x1xf32>
    %46 = vector.extract_strided_slice %2 {offsets = [7, 0], sizes = [1, 8], strides = [1, 1]} : vector<9x8xf32> to vector<1x8xf32>
    %47 = vector.broadcast %45 : vector<286x1xf32> to vector<286x8xf32>
    %48 = vector.broadcast %46 : vector<1x8xf32> to vector<286x8xf32>
    %49 = arith.mulf %47, %48 : vector<286x8xf32>
    %50 = arith.addf %44, %49 : vector<286x8xf32>
    %51 = vector.extract_strided_slice %1 {offsets = [38, 0], sizes = [286, 1], strides = [1, 1]} : vector<324x1xf32> to vector<286x1xf32>
    %52 = vector.extract_strided_slice %2 {offsets = [8, 0], sizes = [1, 8], strides = [1, 1]} : vector<9x8xf32> to vector<1x8xf32>
    %53 = vector.broadcast %51 : vector<286x1xf32> to vector<286x8xf32>
    %54 = vector.broadcast %52 : vector<1x8xf32> to vector<286x8xf32>
    %55 = arith.mulf %53, %54 : vector<286x8xf32>
    %56 = arith.addf %50, %55 : vector<286x8xf32>
    %57 = vector.broadcast %3 : vector<1x8xf32> to vector<286x8xf32>
    %58 = arith.addf %56, %57 : vector<286x8xf32>
    %cst = arith.constant 0.000000e+00 : f32
    %59 = vector.broadcast %cst : f32 to vector<286x8xf32>
    %60 = arith.maximumf %58, %59 : vector<286x8xf32>
    %c0_6 = arith.constant 0 : index
    %c0_7 = arith.constant 0 : index
    %61 = vector.load %arg4[%c0_6, %c0_7] : memref<100x286xf32, #tpu.memory_space<vmem>>, vector<100x286xf32>
    %cst_8 = arith.constant dense<0.000000e+00> : vector<100x8xf32>
    %62 = tpu.matmul %61, %60, %cst_8 {dimension_numbers = #tpu.dot_dimension_numbers<[1], [0], [0], [1], [0, 0, 1, 1], [], []>} : vector<100x286xf32>, vector<286x8xf32>, vector<100x8xf32> -> vector<100x8xf32>
    %c0_9 = arith.constant 0 : index
    %c0_10 = arith.constant 0 : index
    %63 = vector.load %arg5[%c0_9, %c0_10] : memref<9x8xf32, #tpu.memory_space<vmem>>, vector<9x8xf32>
    %c0_11 = arith.constant 0 : index
    %c0_12 = arith.constant 0 : index
    %64 = vector.load %arg6[%c0_11, %c0_12] : memref<1x8xf32, #tpu.memory_space<vmem>>, vector<1x8xf32>
    %c0_13 = arith.constant 0 : index
    %c0_14 = arith.constant 0 : index
    %65 = vector.load %arg7[%c0_13, %c0_14] : memref<8x16xf32, #tpu.memory_space<vmem>>, vector<8x16xf32>
    %c0_15 = arith.constant 0 : index
    %c0_16 = arith.constant 0 : index
    %66 = vector.load %arg8[%c0_15, %c0_16] : memref<1x16xf32, #tpu.memory_space<vmem>>, vector<1x16xf32>
    %67 = vector.extract_strided_slice %62 {offsets = [0, 0], sizes = [78, 8], strides = [1, 1]} : vector<100x8xf32> to vector<78x8xf32>
    %68 = vector.extract_strided_slice %63 {offsets = [0, 0], sizes = [1, 8], strides = [1, 1]} : vector<9x8xf32> to vector<1x8xf32>
    %69 = vector.broadcast %68 : vector<1x8xf32> to vector<78x8xf32>
    %70 = arith.mulf %67, %69 : vector<78x8xf32>
    %71 = vector.extract_strided_slice %62 {offsets = [1, 0], sizes = [78, 8], strides = [1, 1]} : vector<100x8xf32> to vector<78x8xf32>
    %72 = vector.extract_strided_slice %63 {offsets = [1, 0], sizes = [1, 8], strides = [1, 1]} : vector<9x8xf32> to vector<1x8xf32>
    %73 = vector.broadcast %72 : vector<1x8xf32> to vector<78x8xf32>
    %74 = arith.mulf %71, %73 : vector<78x8xf32>
    %75 = arith.addf %70, %74 : vector<78x8xf32>
    %76 = vector.extract_strided_slice %62 {offsets = [2, 0], sizes = [78, 8], strides = [1, 1]} : vector<100x8xf32> to vector<78x8xf32>
    %77 = vector.extract_strided_slice %63 {offsets = [2, 0], sizes = [1, 8], strides = [1, 1]} : vector<9x8xf32> to vector<1x8xf32>
    %78 = vector.broadcast %77 : vector<1x8xf32> to vector<78x8xf32>
    %79 = arith.mulf %76, %78 : vector<78x8xf32>
    %80 = arith.addf %75, %79 : vector<78x8xf32>
    %81 = vector.extract_strided_slice %62 {offsets = [10, 0], sizes = [78, 8], strides = [1, 1]} : vector<100x8xf32> to vector<78x8xf32>
    %82 = vector.extract_strided_slice %63 {offsets = [3, 0], sizes = [1, 8], strides = [1, 1]} : vector<9x8xf32> to vector<1x8xf32>
    %83 = vector.broadcast %82 : vector<1x8xf32> to vector<78x8xf32>
    %84 = arith.mulf %81, %83 : vector<78x8xf32>
    %85 = arith.addf %80, %84 : vector<78x8xf32>
    %86 = vector.extract_strided_slice %62 {offsets = [11, 0], sizes = [78, 8], strides = [1, 1]} : vector<100x8xf32> to vector<78x8xf32>
    %87 = vector.extract_strided_slice %63 {offsets = [4, 0], sizes = [1, 8], strides = [1, 1]} : vector<9x8xf32> to vector<1x8xf32>
    %88 = vector.broadcast %87 : vector<1x8xf32> to vector<78x8xf32>
    %89 = arith.mulf %86, %88 : vector<78x8xf32>
    %90 = arith.addf %85, %89 : vector<78x8xf32>
    %91 = vector.extract_strided_slice %62 {offsets = [12, 0], sizes = [78, 8], strides = [1, 1]} : vector<100x8xf32> to vector<78x8xf32>
    %92 = vector.extract_strided_slice %63 {offsets = [5, 0], sizes = [1, 8], strides = [1, 1]} : vector<9x8xf32> to vector<1x8xf32>
    %93 = vector.broadcast %92 : vector<1x8xf32> to vector<78x8xf32>
    %94 = arith.mulf %91, %93 : vector<78x8xf32>
    %95 = arith.addf %90, %94 : vector<78x8xf32>
    %96 = vector.extract_strided_slice %62 {offsets = [20, 0], sizes = [78, 8], strides = [1, 1]} : vector<100x8xf32> to vector<78x8xf32>
    %97 = vector.extract_strided_slice %63 {offsets = [6, 0], sizes = [1, 8], strides = [1, 1]} : vector<9x8xf32> to vector<1x8xf32>
    %98 = vector.broadcast %97 : vector<1x8xf32> to vector<78x8xf32>
    %99 = arith.mulf %96, %98 : vector<78x8xf32>
    %100 = arith.addf %95, %99 : vector<78x8xf32>
    %101 = vector.extract_strided_slice %62 {offsets = [21, 0], sizes = [78, 8], strides = [1, 1]} : vector<100x8xf32> to vector<78x8xf32>
    %102 = vector.extract_strided_slice %63 {offsets = [7, 0], sizes = [1, 8], strides = [1, 1]} : vector<9x8xf32> to vector<1x8xf32>
    %103 = vector.broadcast %102 : vector<1x8xf32> to vector<78x8xf32>
    %104 = arith.mulf %101, %103 : vector<78x8xf32>
    %105 = arith.addf %100, %104 : vector<78x8xf32>
    %106 = vector.extract_strided_slice %62 {offsets = [22, 0], sizes = [78, 8], strides = [1, 1]} : vector<100x8xf32> to vector<78x8xf32>
    %107 = vector.extract_strided_slice %63 {offsets = [8, 0], sizes = [1, 8], strides = [1, 1]} : vector<9x8xf32> to vector<1x8xf32>
    %108 = vector.broadcast %107 : vector<1x8xf32> to vector<78x8xf32>
    %109 = arith.mulf %106, %108 : vector<78x8xf32>
    %110 = arith.addf %105, %109 : vector<78x8xf32>
    %111 = vector.broadcast %64 : vector<1x8xf32> to vector<78x8xf32>
    %112 = arith.addf %110, %111 : vector<78x8xf32>
    %cst_17 = arith.constant 0.000000e+00 : f32
    %113 = vector.broadcast %cst_17 : f32 to vector<78x8xf32>
    %114 = arith.maximumf %112, %113 : vector<78x8xf32>
    %cst_18 = arith.constant dense<0.000000e+00> : vector<78x16xf32>
    %115 = tpu.matmul %114, %65, %cst_18 {dimension_numbers = #tpu.dot_dimension_numbers<[1], [0], [0], [1], [0, 0, 1, 1], [], []>} : vector<78x8xf32>, vector<8x16xf32>, vector<78x16xf32> -> vector<78x16xf32>
    %116 = vector.broadcast %66 : vector<1x16xf32> to vector<78x16xf32>
    %117 = arith.addf %115, %116 : vector<78x16xf32>
    %cst_19 = arith.constant 0.000000e+00 : f32
    %118 = vector.broadcast %cst_19 : f32 to vector<78x16xf32>
    %119 = arith.maximumf %117, %118 : vector<78x16xf32>
    %c0_20 = arith.constant 0 : index
    %c0_21 = arith.constant 0 : index
    %120 = vector.load %arg9[%c0_20, %c0_21] : memref<100x78xf32, #tpu.memory_space<vmem>>, vector<100x78xf32>
    %cst_22 = arith.constant dense<0.000000e+00> : vector<100x16xf32>
    %121 = tpu.matmul %120, %119, %cst_22 {dimension_numbers = #tpu.dot_dimension_numbers<[1], [0], [0], [1], [0, 0, 1, 1], [], []>} : vector<100x78xf32>, vector<78x16xf32>, vector<100x16xf32> -> vector<100x16xf32>
    %c0_23 = arith.constant 0 : index
    %c0_24 = arith.constant 0 : index
    %122 = vector.load %arg10[%c0_23, %c0_24] : memref<9x16xf32, #tpu.memory_space<vmem>>, vector<9x16xf32>
    %c0_25 = arith.constant 0 : index
    %c0_26 = arith.constant 0 : index
    %123 = vector.load %arg11[%c0_25, %c0_26] : memref<1x16xf32, #tpu.memory_space<vmem>>, vector<1x16xf32>
    %c0_27 = arith.constant 0 : index
    %c0_28 = arith.constant 0 : index
    %124 = vector.load %arg12[%c0_27, %c0_28] : memref<16x16xf32, #tpu.memory_space<vmem>>, vector<16x16xf32>
    %c0_29 = arith.constant 0 : index
    %c0_30 = arith.constant 0 : index
    %125 = vector.load %arg13[%c0_29, %c0_30] : memref<1x16xf32, #tpu.memory_space<vmem>>, vector<1x16xf32>
    %126 = vector.extract_strided_slice %121 {offsets = [0, 0], sizes = [78, 16], strides = [1, 1]} : vector<100x16xf32> to vector<78x16xf32>
    %127 = vector.extract_strided_slice %122 {offsets = [0, 0], sizes = [1, 16], strides = [1, 1]} : vector<9x16xf32> to vector<1x16xf32>
    %128 = vector.broadcast %127 : vector<1x16xf32> to vector<78x16xf32>
    %129 = arith.mulf %126, %128 : vector<78x16xf32>
    %130 = vector.extract_strided_slice %121 {offsets = [1, 0], sizes = [78, 16], strides = [1, 1]} : vector<100x16xf32> to vector<78x16xf32>
    %131 = vector.extract_strided_slice %122 {offsets = [1, 0], sizes = [1, 16], strides = [1, 1]} : vector<9x16xf32> to vector<1x16xf32>
    %132 = vector.broadcast %131 : vector<1x16xf32> to vector<78x16xf32>
    %133 = arith.mulf %130, %132 : vector<78x16xf32>
    %134 = arith.addf %129, %133 : vector<78x16xf32>
    %135 = vector.extract_strided_slice %121 {offsets = [2, 0], sizes = [78, 16], strides = [1, 1]} : vector<100x16xf32> to vector<78x16xf32>
    %136 = vector.extract_strided_slice %122 {offsets = [2, 0], sizes = [1, 16], strides = [1, 1]} : vector<9x16xf32> to vector<1x16xf32>
    %137 = vector.broadcast %136 : vector<1x16xf32> to vector<78x16xf32>
    %138 = arith.mulf %135, %137 : vector<78x16xf32>
    %139 = arith.addf %134, %138 : vector<78x16xf32>
    %140 = vector.extract_strided_slice %121 {offsets = [10, 0], sizes = [78, 16], strides = [1, 1]} : vector<100x16xf32> to vector<78x16xf32>
    %141 = vector.extract_strided_slice %122 {offsets = [3, 0], sizes = [1, 16], strides = [1, 1]} : vector<9x16xf32> to vector<1x16xf32>
    %142 = vector.broadcast %141 : vector<1x16xf32> to vector<78x16xf32>
    %143 = arith.mulf %140, %142 : vector<78x16xf32>
    %144 = arith.addf %139, %143 : vector<78x16xf32>
    %145 = vector.extract_strided_slice %121 {offsets = [11, 0], sizes = [78, 16], strides = [1, 1]} : vector<100x16xf32> to vector<78x16xf32>
    %146 = vector.extract_strided_slice %122 {offsets = [4, 0], sizes = [1, 16], strides = [1, 1]} : vector<9x16xf32> to vector<1x16xf32>
    %147 = vector.broadcast %146 : vector<1x16xf32> to vector<78x16xf32>
    %148 = arith.mulf %145, %147 : vector<78x16xf32>
    %149 = arith.addf %144, %148 : vector<78x16xf32>
    %150 = vector.extract_strided_slice %121 {offsets = [12, 0], sizes = [78, 16], strides = [1, 1]} : vector<100x16xf32> to vector<78x16xf32>
    %151 = vector.extract_strided_slice %122 {offsets = [5, 0], sizes = [1, 16], strides = [1, 1]} : vector<9x16xf32> to vector<1x16xf32>
    %152 = vector.broadcast %151 : vector<1x16xf32> to vector<78x16xf32>
    %153 = arith.mulf %150, %152 : vector<78x16xf32>
    %154 = arith.addf %149, %153 : vector<78x16xf32>
    %155 = vector.extract_strided_slice %121 {offsets = [20, 0], sizes = [78, 16], strides = [1, 1]} : vector<100x16xf32> to vector<78x16xf32>
    %156 = vector.extract_strided_slice %122 {offsets = [6, 0], sizes = [1, 16], strides = [1, 1]} : vector<9x16xf32> to vector<1x16xf32>
    %157 = vector.broadcast %156 : vector<1x16xf32> to vector<78x16xf32>
    %158 = arith.mulf %155, %157 : vector<78x16xf32>
    %159 = arith.addf %154, %158 : vector<78x16xf32>
    %160 = vector.extract_strided_slice %121 {offsets = [21, 0], sizes = [78, 16], strides = [1, 1]} : vector<100x16xf32> to vector<78x16xf32>
    %161 = vector.extract_strided_slice %122 {offsets = [7, 0], sizes = [1, 16], strides = [1, 1]} : vector<9x16xf32> to vector<1x16xf32>
    %162 = vector.broadcast %161 : vector<1x16xf32> to vector<78x16xf32>
    %163 = arith.mulf %160, %162 : vector<78x16xf32>
    %164 = arith.addf %159, %163 : vector<78x16xf32>
    %165 = vector.extract_strided_slice %121 {offsets = [22, 0], sizes = [78, 16], strides = [1, 1]} : vector<100x16xf32> to vector<78x16xf32>
    %166 = vector.extract_strided_slice %122 {offsets = [8, 0], sizes = [1, 16], strides = [1, 1]} : vector<9x16xf32> to vector<1x16xf32>
    %167 = vector.broadcast %166 : vector<1x16xf32> to vector<78x16xf32>
    %168 = arith.mulf %165, %167 : vector<78x16xf32>
    %169 = arith.addf %164, %168 : vector<78x16xf32>
    %170 = vector.broadcast %123 : vector<1x16xf32> to vector<78x16xf32>
    %171 = arith.addf %169, %170 : vector<78x16xf32>
    %cst_31 = arith.constant 0.000000e+00 : f32
    %172 = vector.broadcast %cst_31 : f32 to vector<78x16xf32>
    %173 = arith.maximumf %171, %172 : vector<78x16xf32>
    %cst_32 = arith.constant dense<0.000000e+00> : vector<78x16xf32>
    %174 = tpu.matmul %173, %124, %cst_32 {dimension_numbers = #tpu.dot_dimension_numbers<[1], [0], [0], [1], [0, 0, 1, 1], [], []>} : vector<78x16xf32>, vector<16x16xf32>, vector<78x16xf32> -> vector<78x16xf32>
    %175 = vector.broadcast %125 : vector<1x16xf32> to vector<78x16xf32>
    %176 = arith.addf %174, %175 : vector<78x16xf32>
    %cst_33 = arith.constant 0.000000e+00 : f32
    %177 = vector.broadcast %cst_33 : f32 to vector<78x16xf32>
    %178 = arith.maximumf %176, %177 : vector<78x16xf32>
    %c0_34 = arith.constant 0 : index
    %c0_35 = arith.constant 0 : index
    %179 = vector.load %arg14[%c0_34, %c0_35] : memref<36x78xf32, #tpu.memory_space<vmem>>, vector<36x78xf32>
    %cst_36 = arith.constant dense<0.000000e+00> : vector<36x16xf32>
    %180 = tpu.matmul %179, %178, %cst_36 {dimension_numbers = #tpu.dot_dimension_numbers<[1], [0], [0], [1], [0, 0, 1, 1], [], []>} : vector<36x78xf32>, vector<78x16xf32>, vector<36x16xf32> -> vector<36x16xf32>
    %c0_37 = arith.constant 0 : index
    %c0_38 = arith.constant 0 : index
    %181 = vector.load %arg15[%c0_37, %c0_38] : memref<9x16xf32, #tpu.memory_space<vmem>>, vector<9x16xf32>
    %c0_39 = arith.constant 0 : index
    %c0_40 = arith.constant 0 : index
    %182 = vector.load %arg16[%c0_39, %c0_40] : memref<1x16xf32, #tpu.memory_space<vmem>>, vector<1x16xf32>
    %c0_41 = arith.constant 0 : index
    %c0_42 = arith.constant 0 : index
    %183 = vector.load %arg17[%c0_41, %c0_42] : memref<16x16xf32, #tpu.memory_space<vmem>>, vector<16x16xf32>
    %c0_43 = arith.constant 0 : index
    %c0_44 = arith.constant 0 : index
    %184 = vector.load %arg18[%c0_43, %c0_44] : memref<1x16xf32, #tpu.memory_space<vmem>>, vector<1x16xf32>
    %185 = vector.extract_strided_slice %180 {offsets = [0, 0], sizes = [22, 16], strides = [1, 1]} : vector<36x16xf32> to vector<22x16xf32>
    %186 = vector.extract_strided_slice %181 {offsets = [0, 0], sizes = [1, 16], strides = [1, 1]} : vector<9x16xf32> to vector<1x16xf32>
    %187 = vector.broadcast %186 : vector<1x16xf32> to vector<22x16xf32>
    %188 = arith.mulf %185, %187 : vector<22x16xf32>
    %189 = vector.extract_strided_slice %180 {offsets = [1, 0], sizes = [22, 16], strides = [1, 1]} : vector<36x16xf32> to vector<22x16xf32>
    %190 = vector.extract_strided_slice %181 {offsets = [1, 0], sizes = [1, 16], strides = [1, 1]} : vector<9x16xf32> to vector<1x16xf32>
    %191 = vector.broadcast %190 : vector<1x16xf32> to vector<22x16xf32>
    %192 = arith.mulf %189, %191 : vector<22x16xf32>
    %193 = arith.addf %188, %192 : vector<22x16xf32>
    %194 = vector.extract_strided_slice %180 {offsets = [2, 0], sizes = [22, 16], strides = [1, 1]} : vector<36x16xf32> to vector<22x16xf32>
    %195 = vector.extract_strided_slice %181 {offsets = [2, 0], sizes = [1, 16], strides = [1, 1]} : vector<9x16xf32> to vector<1x16xf32>
    %196 = vector.broadcast %195 : vector<1x16xf32> to vector<22x16xf32>
    %197 = arith.mulf %194, %196 : vector<22x16xf32>
    %198 = arith.addf %193, %197 : vector<22x16xf32>
    %199 = vector.extract_strided_slice %180 {offsets = [6, 0], sizes = [22, 16], strides = [1, 1]} : vector<36x16xf32> to vector<22x16xf32>
    %200 = vector.extract_strided_slice %181 {offsets = [3, 0], sizes = [1, 16], strides = [1, 1]} : vector<9x16xf32> to vector<1x16xf32>
    %201 = vector.broadcast %200 : vector<1x16xf32> to vector<22x16xf32>
    %202 = arith.mulf %199, %201 : vector<22x16xf32>
    %203 = arith.addf %198, %202 : vector<22x16xf32>
    %204 = vector.extract_strided_slice %180 {offsets = [7, 0], sizes = [22, 16], strides = [1, 1]} : vector<36x16xf32> to vector<22x16xf32>
    %205 = vector.extract_strided_slice %181 {offsets = [4, 0], sizes = [1, 16], strides = [1, 1]} : vector<9x16xf32> to vector<1x16xf32>
    %206 = vector.broadcast %205 : vector<1x16xf32> to vector<22x16xf32>
    %207 = arith.mulf %204, %206 : vector<22x16xf32>
    %208 = arith.addf %203, %207 : vector<22x16xf32>
    %209 = vector.extract_strided_slice %180 {offsets = [8, 0], sizes = [22, 16], strides = [1, 1]} : vector<36x16xf32> to vector<22x16xf32>
    %210 = vector.extract_strided_slice %181 {offsets = [5, 0], sizes = [1, 16], strides = [1, 1]} : vector<9x16xf32> to vector<1x16xf32>
    %211 = vector.broadcast %210 : vector<1x16xf32> to vector<22x16xf32>
    %212 = arith.mulf %209, %211 : vector<22x16xf32>
    %213 = arith.addf %208, %212 : vector<22x16xf32>
    %214 = vector.extract_strided_slice %180 {offsets = [12, 0], sizes = [22, 16], strides = [1, 1]} : vector<36x16xf32> to vector<22x16xf32>
    %215 = vector.extract_strided_slice %181 {offsets = [6, 0], sizes = [1, 16], strides = [1, 1]} : vector<9x16xf32> to vector<1x16xf32>
    %216 = vector.broadcast %215 : vector<1x16xf32> to vector<22x16xf32>
    %217 = arith.mulf %214, %216 : vector<22x16xf32>
    %218 = arith.addf %213, %217 : vector<22x16xf32>
    %219 = vector.extract_strided_slice %180 {offsets = [13, 0], sizes = [22, 16], strides = [1, 1]} : vector<36x16xf32> to vector<22x16xf32>
    %220 = vector.extract_strided_slice %181 {offsets = [7, 0], sizes = [1, 16], strides = [1, 1]} : vector<9x16xf32> to vector<1x16xf32>
    %221 = vector.broadcast %220 : vector<1x16xf32> to vector<22x16xf32>
    %222 = arith.mulf %219, %221 : vector<22x16xf32>
    %223 = arith.addf %218, %222 : vector<22x16xf32>
    %224 = vector.extract_strided_slice %180 {offsets = [14, 0], sizes = [22, 16], strides = [1, 1]} : vector<36x16xf32> to vector<22x16xf32>
    %225 = vector.extract_strided_slice %181 {offsets = [8, 0], sizes = [1, 16], strides = [1, 1]} : vector<9x16xf32> to vector<1x16xf32>
    %226 = vector.broadcast %225 : vector<1x16xf32> to vector<22x16xf32>
    %227 = arith.mulf %224, %226 : vector<22x16xf32>
    %228 = arith.addf %223, %227 : vector<22x16xf32>
    %229 = vector.broadcast %182 : vector<1x16xf32> to vector<22x16xf32>
    %230 = arith.addf %228, %229 : vector<22x16xf32>
    %cst_45 = arith.constant 0.000000e+00 : f32
    %231 = vector.broadcast %cst_45 : f32 to vector<22x16xf32>
    %232 = arith.maximumf %230, %231 : vector<22x16xf32>
    %cst_46 = arith.constant dense<0.000000e+00> : vector<22x16xf32>
    %233 = tpu.matmul %232, %183, %cst_46 {dimension_numbers = #tpu.dot_dimension_numbers<[1], [0], [0], [1], [0, 0, 1, 1], [], []>} : vector<22x16xf32>, vector<16x16xf32>, vector<22x16xf32> -> vector<22x16xf32>
    %234 = vector.broadcast %184 : vector<1x16xf32> to vector<22x16xf32>
    %235 = arith.addf %233, %234 : vector<22x16xf32>
    %cst_47 = arith.constant 0.000000e+00 : f32
    %236 = vector.broadcast %cst_47 : f32 to vector<22x16xf32>
    %237 = arith.maximumf %235, %236 : vector<22x16xf32>
    %c0_48 = arith.constant 0 : index
    %c0_49 = arith.constant 0 : index
    %238 = vector.load %arg19[%c0_48, %c0_49] : memref<36x22xf32, #tpu.memory_space<vmem>>, vector<36x22xf32>
    %cst_50 = arith.constant dense<0.000000e+00> : vector<36x16xf32>
    %239 = tpu.matmul %238, %237, %cst_50 {dimension_numbers = #tpu.dot_dimension_numbers<[1], [0], [0], [1], [0, 0, 1, 1], [], []>} : vector<36x22xf32>, vector<22x16xf32>, vector<36x16xf32> -> vector<36x16xf32>
    %c0_51 = arith.constant 0 : index
    %c0_52 = arith.constant 0 : index
    %240 = vector.load %arg20[%c0_51, %c0_52] : memref<9x16xf32, #tpu.memory_space<vmem>>, vector<9x16xf32>
    %c0_53 = arith.constant 0 : index
    %c0_54 = arith.constant 0 : index
    %241 = vector.load %arg21[%c0_53, %c0_54] : memref<1x16xf32, #tpu.memory_space<vmem>>, vector<1x16xf32>
    %c0_55 = arith.constant 0 : index
    %c0_56 = arith.constant 0 : index
    %242 = vector.load %arg22[%c0_55, %c0_56] : memref<16x32xf32, #tpu.memory_space<vmem>>, vector<16x32xf32>
    %c0_57 = arith.constant 0 : index
    %c0_58 = arith.constant 0 : index
    %243 = vector.load %arg23[%c0_57, %c0_58] : memref<1x32xf32, #tpu.memory_space<vmem>>, vector<1x32xf32>
    %244 = vector.extract_strided_slice %239 {offsets = [0, 0], sizes = [22, 16], strides = [1, 1]} : vector<36x16xf32> to vector<22x16xf32>
    %245 = vector.extract_strided_slice %240 {offsets = [0, 0], sizes = [1, 16], strides = [1, 1]} : vector<9x16xf32> to vector<1x16xf32>
    %246 = vector.broadcast %245 : vector<1x16xf32> to vector<22x16xf32>
    %247 = arith.mulf %244, %246 : vector<22x16xf32>
    %248 = vector.extract_strided_slice %239 {offsets = [1, 0], sizes = [22, 16], strides = [1, 1]} : vector<36x16xf32> to vector<22x16xf32>
    %249 = vector.extract_strided_slice %240 {offsets = [1, 0], sizes = [1, 16], strides = [1, 1]} : vector<9x16xf32> to vector<1x16xf32>
    %250 = vector.broadcast %249 : vector<1x16xf32> to vector<22x16xf32>
    %251 = arith.mulf %248, %250 : vector<22x16xf32>
    %252 = arith.addf %247, %251 : vector<22x16xf32>
    %253 = vector.extract_strided_slice %239 {offsets = [2, 0], sizes = [22, 16], strides = [1, 1]} : vector<36x16xf32> to vector<22x16xf32>
    %254 = vector.extract_strided_slice %240 {offsets = [2, 0], sizes = [1, 16], strides = [1, 1]} : vector<9x16xf32> to vector<1x16xf32>
    %255 = vector.broadcast %254 : vector<1x16xf32> to vector<22x16xf32>
    %256 = arith.mulf %253, %255 : vector<22x16xf32>
    %257 = arith.addf %252, %256 : vector<22x16xf32>
    %258 = vector.extract_strided_slice %239 {offsets = [6, 0], sizes = [22, 16], strides = [1, 1]} : vector<36x16xf32> to vector<22x16xf32>
    %259 = vector.extract_strided_slice %240 {offsets = [3, 0], sizes = [1, 16], strides = [1, 1]} : vector<9x16xf32> to vector<1x16xf32>
    %260 = vector.broadcast %259 : vector<1x16xf32> to vector<22x16xf32>
    %261 = arith.mulf %258, %260 : vector<22x16xf32>
    %262 = arith.addf %257, %261 : vector<22x16xf32>
    %263 = vector.extract_strided_slice %239 {offsets = [7, 0], sizes = [22, 16], strides = [1, 1]} : vector<36x16xf32> to vector<22x16xf32>
    %264 = vector.extract_strided_slice %240 {offsets = [4, 0], sizes = [1, 16], strides = [1, 1]} : vector<9x16xf32> to vector<1x16xf32>
    %265 = vector.broadcast %264 : vector<1x16xf32> to vector<22x16xf32>
    %266 = arith.mulf %263, %265 : vector<22x16xf32>
    %267 = arith.addf %262, %266 : vector<22x16xf32>
    %268 = vector.extract_strided_slice %239 {offsets = [8, 0], sizes = [22, 16], strides = [1, 1]} : vector<36x16xf32> to vector<22x16xf32>
    %269 = vector.extract_strided_slice %240 {offsets = [5, 0], sizes = [1, 16], strides = [1, 1]} : vector<9x16xf32> to vector<1x16xf32>
    %270 = vector.broadcast %269 : vector<1x16xf32> to vector<22x16xf32>
    %271 = arith.mulf %268, %270 : vector<22x16xf32>
    %272 = arith.addf %267, %271 : vector<22x16xf32>
    %273 = vector.extract_strided_slice %239 {offsets = [12, 0], sizes = [22, 16], strides = [1, 1]} : vector<36x16xf32> to vector<22x16xf32>
    %274 = vector.extract_strided_slice %240 {offsets = [6, 0], sizes = [1, 16], strides = [1, 1]} : vector<9x16xf32> to vector<1x16xf32>
    %275 = vector.broadcast %274 : vector<1x16xf32> to vector<22x16xf32>
    %276 = arith.mulf %273, %275 : vector<22x16xf32>
    %277 = arith.addf %272, %276 : vector<22x16xf32>
    %278 = vector.extract_strided_slice %239 {offsets = [13, 0], sizes = [22, 16], strides = [1, 1]} : vector<36x16xf32> to vector<22x16xf32>
    %279 = vector.extract_strided_slice %240 {offsets = [7, 0], sizes = [1, 16], strides = [1, 1]} : vector<9x16xf32> to vector<1x16xf32>
    %280 = vector.broadcast %279 : vector<1x16xf32> to vector<22x16xf32>
    %281 = arith.mulf %278, %280 : vector<22x16xf32>
    %282 = arith.addf %277, %281 : vector<22x16xf32>
    %283 = vector.extract_strided_slice %239 {offsets = [14, 0], sizes = [22, 16], strides = [1, 1]} : vector<36x16xf32> to vector<22x16xf32>
    %284 = vector.extract_strided_slice %240 {offsets = [8, 0], sizes = [1, 16], strides = [1, 1]} : vector<9x16xf32> to vector<1x16xf32>
    %285 = vector.broadcast %284 : vector<1x16xf32> to vector<22x16xf32>
    %286 = arith.mulf %283, %285 : vector<22x16xf32>
    %287 = arith.addf %282, %286 : vector<22x16xf32>
    %288 = vector.broadcast %241 : vector<1x16xf32> to vector<22x16xf32>
    %289 = arith.addf %287, %288 : vector<22x16xf32>
    %cst_59 = arith.constant 0.000000e+00 : f32
    %290 = vector.broadcast %cst_59 : f32 to vector<22x16xf32>
    %291 = arith.maximumf %289, %290 : vector<22x16xf32>
    %cst_60 = arith.constant dense<0.000000e+00> : vector<22x32xf32>
    %292 = tpu.matmul %291, %242, %cst_60 {dimension_numbers = #tpu.dot_dimension_numbers<[1], [0], [0], [1], [0, 0, 1, 1], [], []>} : vector<22x16xf32>, vector<16x32xf32>, vector<22x32xf32> -> vector<22x32xf32>
    %293 = vector.broadcast %243 : vector<1x32xf32> to vector<22x32xf32>
    %294 = arith.addf %292, %293 : vector<22x32xf32>
    %cst_61 = arith.constant 0.000000e+00 : f32
    %295 = vector.broadcast %cst_61 : f32 to vector<22x32xf32>
    %296 = arith.maximumf %294, %295 : vector<22x32xf32>
    %c0_62 = arith.constant 0 : index
    %c0_63 = arith.constant 0 : index
    %297 = vector.load %arg24[%c0_62, %c0_63] : memref<16x22xf32, #tpu.memory_space<vmem>>, vector<16x22xf32>
    %cst_64 = arith.constant dense<0.000000e+00> : vector<16x32xf32>
    %298 = tpu.matmul %297, %296, %cst_64 {dimension_numbers = #tpu.dot_dimension_numbers<[1], [0], [0], [1], [0, 0, 1, 1], [], []>} : vector<16x22xf32>, vector<22x32xf32>, vector<16x32xf32> -> vector<16x32xf32>
    %c0_65 = arith.constant 0 : index
    %c0_66 = arith.constant 0 : index
    %299 = vector.load %arg25[%c0_65, %c0_66] : memref<9x32xf32, #tpu.memory_space<vmem>>, vector<9x32xf32>
    %c0_67 = arith.constant 0 : index
    %c0_68 = arith.constant 0 : index
    %300 = vector.load %arg26[%c0_67, %c0_68] : memref<1x32xf32, #tpu.memory_space<vmem>>, vector<1x32xf32>
    %c0_69 = arith.constant 0 : index
    %c0_70 = arith.constant 0 : index
    %301 = vector.load %arg27[%c0_69, %c0_70] : memref<32x32xf32, #tpu.memory_space<vmem>>, vector<32x32xf32>
    %c0_71 = arith.constant 0 : index
    %c0_72 = arith.constant 0 : index
    %302 = vector.load %arg28[%c0_71, %c0_72] : memref<1x32xf32, #tpu.memory_space<vmem>>, vector<1x32xf32>
    %303 = vector.extract_strided_slice %298 {offsets = [0, 0], sizes = [6, 32], strides = [1, 1]} : vector<16x32xf32> to vector<6x32xf32>
    %304 = vector.extract_strided_slice %299 {offsets = [0, 0], sizes = [1, 32], strides = [1, 1]} : vector<9x32xf32> to vector<1x32xf32>
    %305 = vector.broadcast %304 : vector<1x32xf32> to vector<6x32xf32>
    %306 = arith.mulf %303, %305 : vector<6x32xf32>
    %307 = vector.extract_strided_slice %298 {offsets = [1, 0], sizes = [6, 32], strides = [1, 1]} : vector<16x32xf32> to vector<6x32xf32>
    %308 = vector.extract_strided_slice %299 {offsets = [1, 0], sizes = [1, 32], strides = [1, 1]} : vector<9x32xf32> to vector<1x32xf32>
    %309 = vector.broadcast %308 : vector<1x32xf32> to vector<6x32xf32>
    %310 = arith.mulf %307, %309 : vector<6x32xf32>
    %311 = arith.addf %306, %310 : vector<6x32xf32>
    %312 = vector.extract_strided_slice %298 {offsets = [2, 0], sizes = [6, 32], strides = [1, 1]} : vector<16x32xf32> to vector<6x32xf32>
    %313 = vector.extract_strided_slice %299 {offsets = [2, 0], sizes = [1, 32], strides = [1, 1]} : vector<9x32xf32> to vector<1x32xf32>
    %314 = vector.broadcast %313 : vector<1x32xf32> to vector<6x32xf32>
    %315 = arith.mulf %312, %314 : vector<6x32xf32>
    %316 = arith.addf %311, %315 : vector<6x32xf32>
    %317 = vector.extract_strided_slice %298 {offsets = [4, 0], sizes = [6, 32], strides = [1, 1]} : vector<16x32xf32> to vector<6x32xf32>
    %318 = vector.extract_strided_slice %299 {offsets = [3, 0], sizes = [1, 32], strides = [1, 1]} : vector<9x32xf32> to vector<1x32xf32>
    %319 = vector.broadcast %318 : vector<1x32xf32> to vector<6x32xf32>
    %320 = arith.mulf %317, %319 : vector<6x32xf32>
    %321 = arith.addf %316, %320 : vector<6x32xf32>
    %322 = vector.extract_strided_slice %298 {offsets = [5, 0], sizes = [6, 32], strides = [1, 1]} : vector<16x32xf32> to vector<6x32xf32>
    %323 = vector.extract_strided_slice %299 {offsets = [4, 0], sizes = [1, 32], strides = [1, 1]} : vector<9x32xf32> to vector<1x32xf32>
    %324 = vector.broadcast %323 : vector<1x32xf32> to vector<6x32xf32>
    %325 = arith.mulf %322, %324 : vector<6x32xf32>
    %326 = arith.addf %321, %325 : vector<6x32xf32>
    %327 = vector.extract_strided_slice %298 {offsets = [6, 0], sizes = [6, 32], strides = [1, 1]} : vector<16x32xf32> to vector<6x32xf32>
    %328 = vector.extract_strided_slice %299 {offsets = [5, 0], sizes = [1, 32], strides = [1, 1]} : vector<9x32xf32> to vector<1x32xf32>
    %329 = vector.broadcast %328 : vector<1x32xf32> to vector<6x32xf32>
    %330 = arith.mulf %327, %329 : vector<6x32xf32>
    %331 = arith.addf %326, %330 : vector<6x32xf32>
    %332 = vector.extract_strided_slice %298 {offsets = [8, 0], sizes = [6, 32], strides = [1, 1]} : vector<16x32xf32> to vector<6x32xf32>
    %333 = vector.extract_strided_slice %299 {offsets = [6, 0], sizes = [1, 32], strides = [1, 1]} : vector<9x32xf32> to vector<1x32xf32>
    %334 = vector.broadcast %333 : vector<1x32xf32> to vector<6x32xf32>
    %335 = arith.mulf %332, %334 : vector<6x32xf32>
    %336 = arith.addf %331, %335 : vector<6x32xf32>
    %337 = vector.extract_strided_slice %298 {offsets = [9, 0], sizes = [6, 32], strides = [1, 1]} : vector<16x32xf32> to vector<6x32xf32>
    %338 = vector.extract_strided_slice %299 {offsets = [7, 0], sizes = [1, 32], strides = [1, 1]} : vector<9x32xf32> to vector<1x32xf32>
    %339 = vector.broadcast %338 : vector<1x32xf32> to vector<6x32xf32>
    %340 = arith.mulf %337, %339 : vector<6x32xf32>
    %341 = arith.addf %336, %340 : vector<6x32xf32>
    %342 = vector.extract_strided_slice %298 {offsets = [10, 0], sizes = [6, 32], strides = [1, 1]} : vector<16x32xf32> to vector<6x32xf32>
    %343 = vector.extract_strided_slice %299 {offsets = [8, 0], sizes = [1, 32], strides = [1, 1]} : vector<9x32xf32> to vector<1x32xf32>
    %344 = vector.broadcast %343 : vector<1x32xf32> to vector<6x32xf32>
    %345 = arith.mulf %342, %344 : vector<6x32xf32>
    %346 = arith.addf %341, %345 : vector<6x32xf32>
    %347 = vector.broadcast %300 : vector<1x32xf32> to vector<6x32xf32>
    %348 = arith.addf %346, %347 : vector<6x32xf32>
    %cst_73 = arith.constant 0.000000e+00 : f32
    %349 = vector.broadcast %cst_73 : f32 to vector<6x32xf32>
    %350 = arith.maximumf %348, %349 : vector<6x32xf32>
    %cst_74 = arith.constant dense<0.000000e+00> : vector<6x32xf32>
    %351 = tpu.matmul %350, %301, %cst_74 {dimension_numbers = #tpu.dot_dimension_numbers<[1], [0], [0], [1], [0, 0, 1, 1], [], []>} : vector<6x32xf32>, vector<32x32xf32>, vector<6x32xf32> -> vector<6x32xf32>
    %352 = vector.broadcast %302 : vector<1x32xf32> to vector<6x32xf32>
    %353 = arith.addf %351, %352 : vector<6x32xf32>
    %cst_75 = arith.constant 0.000000e+00 : f32
    %354 = vector.broadcast %cst_75 : f32 to vector<6x32xf32>
    %355 = arith.maximumf %353, %354 : vector<6x32xf32>
    %c0_76 = arith.constant 0 : index
    %c0_77 = arith.constant 0 : index
    %356 = vector.load %arg29[%c0_76, %c0_77] : memref<16x6xf32, #tpu.memory_space<vmem>>, vector<16x6xf32>
    %cst_78 = arith.constant dense<0.000000e+00> : vector<16x32xf32>
    %357 = tpu.matmul %356, %355, %cst_78 {dimension_numbers = #tpu.dot_dimension_numbers<[1], [0], [0], [1], [0, 0, 1, 1], [], []>} : vector<16x6xf32>, vector<6x32xf32>, vector<16x32xf32> -> vector<16x32xf32>
    %c0_79 = arith.constant 0 : index
    %c0_80 = arith.constant 0 : index
    %358 = vector.load %arg30[%c0_79, %c0_80] : memref<9x32xf32, #tpu.memory_space<vmem>>, vector<9x32xf32>
    %c0_81 = arith.constant 0 : index
    %c0_82 = arith.constant 0 : index
    %359 = vector.load %arg31[%c0_81, %c0_82] : memref<1x32xf32, #tpu.memory_space<vmem>>, vector<1x32xf32>
    %c0_83 = arith.constant 0 : index
    %c0_84 = arith.constant 0 : index
    %360 = vector.load %arg32[%c0_83, %c0_84] : memref<32x32xf32, #tpu.memory_space<vmem>>, vector<32x32xf32>
    %c0_85 = arith.constant 0 : index
    %c0_86 = arith.constant 0 : index
    %361 = vector.load %arg33[%c0_85, %c0_86] : memref<1x32xf32, #tpu.memory_space<vmem>>, vector<1x32xf32>
    %362 = vector.extract_strided_slice %357 {offsets = [0, 0], sizes = [6, 32], strides = [1, 1]} : vector<16x32xf32> to vector<6x32xf32>
    %363 = vector.extract_strided_slice %358 {offsets = [0, 0], sizes = [1, 32], strides = [1, 1]} : vector<9x32xf32> to vector<1x32xf32>
    %364 = vector.broadcast %363 : vector<1x32xf32> to vector<6x32xf32>
    %365 = arith.mulf %362, %364 : vector<6x32xf32>
    %366 = vector.extract_strided_slice %357 {offsets = [1, 0], sizes = [6, 32], strides = [1, 1]} : vector<16x32xf32> to vector<6x32xf32>
    %367 = vector.extract_strided_slice %358 {offsets = [1, 0], sizes = [1, 32], strides = [1, 1]} : vector<9x32xf32> to vector<1x32xf32>
    %368 = vector.broadcast %367 : vector<1x32xf32> to vector<6x32xf32>
    %369 = arith.mulf %366, %368 : vector<6x32xf32>
    %370 = arith.addf %365, %369 : vector<6x32xf32>
    %371 = vector.extract_strided_slice %357 {offsets = [2, 0], sizes = [6, 32], strides = [1, 1]} : vector<16x32xf32> to vector<6x32xf32>
    %372 = vector.extract_strided_slice %358 {offsets = [2, 0], sizes = [1, 32], strides = [1, 1]} : vector<9x32xf32> to vector<1x32xf32>
    %373 = vector.broadcast %372 : vector<1x32xf32> to vector<6x32xf32>
    %374 = arith.mulf %371, %373 : vector<6x32xf32>
    %375 = arith.addf %370, %374 : vector<6x32xf32>
    %376 = vector.extract_strided_slice %357 {offsets = [4, 0], sizes = [6, 32], strides = [1, 1]} : vector<16x32xf32> to vector<6x32xf32>
    %377 = vector.extract_strided_slice %358 {offsets = [3, 0], sizes = [1, 32], strides = [1, 1]} : vector<9x32xf32> to vector<1x32xf32>
    %378 = vector.broadcast %377 : vector<1x32xf32> to vector<6x32xf32>
    %379 = arith.mulf %376, %378 : vector<6x32xf32>
    %380 = arith.addf %375, %379 : vector<6x32xf32>
    %381 = vector.extract_strided_slice %357 {offsets = [5, 0], sizes = [6, 32], strides = [1, 1]} : vector<16x32xf32> to vector<6x32xf32>
    %382 = vector.extract_strided_slice %358 {offsets = [4, 0], sizes = [1, 32], strides = [1, 1]} : vector<9x32xf32> to vector<1x32xf32>
    %383 = vector.broadcast %382 : vector<1x32xf32> to vector<6x32xf32>
    %384 = arith.mulf %381, %383 : vector<6x32xf32>
    %385 = arith.addf %380, %384 : vector<6x32xf32>
    %386 = vector.extract_strided_slice %357 {offsets = [6, 0], sizes = [6, 32], strides = [1, 1]} : vector<16x32xf32> to vector<6x32xf32>
    %387 = vector.extract_strided_slice %358 {offsets = [5, 0], sizes = [1, 32], strides = [1, 1]} : vector<9x32xf32> to vector<1x32xf32>
    %388 = vector.broadcast %387 : vector<1x32xf32> to vector<6x32xf32>
    %389 = arith.mulf %386, %388 : vector<6x32xf32>
    %390 = arith.addf %385, %389 : vector<6x32xf32>
    %391 = vector.extract_strided_slice %357 {offsets = [8, 0], sizes = [6, 32], strides = [1, 1]} : vector<16x32xf32> to vector<6x32xf32>
    %392 = vector.extract_strided_slice %358 {offsets = [6, 0], sizes = [1, 32], strides = [1, 1]} : vector<9x32xf32> to vector<1x32xf32>
    %393 = vector.broadcast %392 : vector<1x32xf32> to vector<6x32xf32>
    %394 = arith.mulf %391, %393 : vector<6x32xf32>
    %395 = arith.addf %390, %394 : vector<6x32xf32>
    %396 = vector.extract_strided_slice %357 {offsets = [9, 0], sizes = [6, 32], strides = [1, 1]} : vector<16x32xf32> to vector<6x32xf32>
    %397 = vector.extract_strided_slice %358 {offsets = [7, 0], sizes = [1, 32], strides = [1, 1]} : vector<9x32xf32> to vector<1x32xf32>
    %398 = vector.broadcast %397 : vector<1x32xf32> to vector<6x32xf32>
    %399 = arith.mulf %396, %398 : vector<6x32xf32>
    %400 = arith.addf %395, %399 : vector<6x32xf32>
    %401 = vector.extract_strided_slice %357 {offsets = [10, 0], sizes = [6, 32], strides = [1, 1]} : vector<16x32xf32> to vector<6x32xf32>
    %402 = vector.extract_strided_slice %358 {offsets = [8, 0], sizes = [1, 32], strides = [1, 1]} : vector<9x32xf32> to vector<1x32xf32>
    %403 = vector.broadcast %402 : vector<1x32xf32> to vector<6x32xf32>
    %404 = arith.mulf %401, %403 : vector<6x32xf32>
    %405 = arith.addf %400, %404 : vector<6x32xf32>
    %406 = vector.broadcast %359 : vector<1x32xf32> to vector<6x32xf32>
    %407 = arith.addf %405, %406 : vector<6x32xf32>
    %cst_87 = arith.constant 0.000000e+00 : f32
    %408 = vector.broadcast %cst_87 : f32 to vector<6x32xf32>
    %409 = arith.maximumf %407, %408 : vector<6x32xf32>
    %cst_88 = arith.constant dense<0.000000e+00> : vector<6x32xf32>
    %410 = tpu.matmul %409, %360, %cst_88 {dimension_numbers = #tpu.dot_dimension_numbers<[1], [0], [0], [1], [0, 0, 1, 1], [], []>} : vector<6x32xf32>, vector<32x32xf32>, vector<6x32xf32> -> vector<6x32xf32>
    %411 = vector.broadcast %361 : vector<1x32xf32> to vector<6x32xf32>
    %412 = arith.addf %410, %411 : vector<6x32xf32>
    %cst_89 = arith.constant 0.000000e+00 : f32
    %413 = vector.broadcast %cst_89 : f32 to vector<6x32xf32>
    %414 = arith.maximumf %412, %413 : vector<6x32xf32>
    %c0_90 = arith.constant 0 : index
    %c0_91 = arith.constant 0 : index
    %415 = vector.load %arg34[%c0_90, %c0_91] : memref<1x6xf32, #tpu.memory_space<vmem>>, vector<1x6xf32>
    %cst_92 = arith.constant dense<0.000000e+00> : vector<1x32xf32>
    %416 = tpu.matmul %415, %414, %cst_92 {dimension_numbers = #tpu.dot_dimension_numbers<[1], [0], [0], [1], [0, 0, 1, 1], [], []>} : vector<1x6xf32>, vector<6x32xf32>, vector<1x32xf32> -> vector<1x32xf32>
    %c0_93 = arith.constant 0 : index
    %c0_94 = arith.constant 0 : index
    %417 = vector.load %arg35[%c0_93, %c0_94] : memref<1x32xf32, #tpu.memory_space<vmem>>, vector<1x32xf32>
    %c0_95 = arith.constant 0 : index
    %c0_96 = arith.constant 0 : index
    %418 = vector.load %arg36[%c0_95, %c0_96] : memref<1x32xf32, #tpu.memory_space<vmem>>, vector<1x32xf32>
    %c0_97 = arith.constant 0 : index
    %c0_98 = arith.constant 0 : index
    %419 = vector.load %arg37[%c0_97, %c0_98] : memref<32x32xf32, #tpu.memory_space<vmem>>, vector<32x32xf32>
    %c0_99 = arith.constant 0 : index
    %c0_100 = arith.constant 0 : index
    %420 = vector.load %arg38[%c0_99, %c0_100] : memref<1x32xf32, #tpu.memory_space<vmem>>, vector<1x32xf32>
    %421 = arith.mulf %416, %417 : vector<1x32xf32>
    %422 = arith.addf %421, %418 : vector<1x32xf32>
    %cst_101 = arith.constant 0.000000e+00 : f32
    %423 = vector.broadcast %cst_101 : f32 to vector<1x32xf32>
    %424 = arith.maximumf %422, %423 : vector<1x32xf32>
    %cst_102 = arith.constant dense<0.000000e+00> : vector<1x32xf32>
    %425 = tpu.matmul %424, %419, %cst_102 {dimension_numbers = #tpu.dot_dimension_numbers<[1], [0], [0], [1], [0, 0, 1, 1], [], []>} : vector<1x32xf32>, vector<32x32xf32>, vector<1x32xf32> -> vector<1x32xf32>
    %426 = arith.addf %425, %420 : vector<1x32xf32>
    %cst_103 = arith.constant 0.000000e+00 : f32
    %427 = vector.broadcast %cst_103 : f32 to vector<1x32xf32>
    %428 = arith.maximumf %426, %427 : vector<1x32xf32>
    %c0_104 = arith.constant 0 : index
    %c0_105 = arith.constant 0 : index
    %429 = vector.load %arg39[%c0_104, %c0_105] : memref<1x32xf32, #tpu.memory_space<vmem>>, vector<1x32xf32>
    %c0_106 = arith.constant 0 : index
    %c0_107 = arith.constant 0 : index
    %430 = vector.load %arg40[%c0_106, %c0_107] : memref<1x32xf32, #tpu.memory_space<vmem>>, vector<1x32xf32>
    %c0_108 = arith.constant 0 : index
    %c0_109 = arith.constant 0 : index
    %431 = vector.load %arg41[%c0_108, %c0_109] : memref<32x32xf32, #tpu.memory_space<vmem>>, vector<32x32xf32>
    %c0_110 = arith.constant 0 : index
    %c0_111 = arith.constant 0 : index
    %432 = vector.load %arg42[%c0_110, %c0_111] : memref<1x32xf32, #tpu.memory_space<vmem>>, vector<1x32xf32>
    %433 = arith.mulf %428, %429 : vector<1x32xf32>
    %434 = arith.addf %433, %430 : vector<1x32xf32>
    %cst_112 = arith.constant 0.000000e+00 : f32
    %435 = vector.broadcast %cst_112 : f32 to vector<1x32xf32>
    %436 = arith.maximumf %434, %435 : vector<1x32xf32>
    %cst_113 = arith.constant dense<0.000000e+00> : vector<1x32xf32>
    %437 = tpu.matmul %436, %431, %cst_113 {dimension_numbers = #tpu.dot_dimension_numbers<[1], [0], [0], [1], [0, 0, 1, 1], [], []>} : vector<1x32xf32>, vector<32x32xf32>, vector<1x32xf32> -> vector<1x32xf32>
    %438 = arith.addf %437, %432 : vector<1x32xf32>
    %cst_114 = arith.constant 0.000000e+00 : f32
    %439 = vector.broadcast %cst_114 : f32 to vector<1x32xf32>
    %440 = arith.maximumf %438, %439 : vector<1x32xf32>
    %c0_115 = arith.constant 0 : index
    %c0_116 = arith.constant 0 : index
    %441 = vector.load %arg43[%c0_115, %c0_116] : memref<1x32xf32, #tpu.memory_space<vmem>>, vector<1x32xf32>
    %c0_117 = arith.constant 0 : index
    %c0_118 = arith.constant 0 : index
    %442 = vector.load %arg44[%c0_117, %c0_118] : memref<1x32xf32, #tpu.memory_space<vmem>>, vector<1x32xf32>
    %c0_119 = arith.constant 0 : index
    %c0_120 = arith.constant 0 : index
    %443 = vector.load %arg45[%c0_119, %c0_120] : memref<32x32xf32, #tpu.memory_space<vmem>>, vector<32x32xf32>
    %c0_121 = arith.constant 0 : index
    %c0_122 = arith.constant 0 : index
    %444 = vector.load %arg46[%c0_121, %c0_122] : memref<1x32xf32, #tpu.memory_space<vmem>>, vector<1x32xf32>
    %445 = arith.mulf %440, %441 : vector<1x32xf32>
    %446 = arith.addf %445, %442 : vector<1x32xf32>
    %cst_123 = arith.constant 0.000000e+00 : f32
    %447 = vector.broadcast %cst_123 : f32 to vector<1x32xf32>
    %448 = arith.maximumf %446, %447 : vector<1x32xf32>
    %cst_124 = arith.constant dense<0.000000e+00> : vector<1x32xf32>
    %449 = tpu.matmul %448, %443, %cst_124 {dimension_numbers = #tpu.dot_dimension_numbers<[1], [0], [0], [1], [0, 0, 1, 1], [], []>} : vector<1x32xf32>, vector<32x32xf32>, vector<1x32xf32> -> vector<1x32xf32>
    %450 = arith.addf %449, %444 : vector<1x32xf32>
    %cst_125 = arith.constant 0.000000e+00 : f32
    %451 = vector.broadcast %cst_125 : f32 to vector<1x32xf32>
    %452 = arith.maximumf %450, %451 : vector<1x32xf32>
    %c0_126 = arith.constant 0 : index
    %c0_127 = arith.constant 0 : index
    %453 = vector.load %arg47[%c0_126, %c0_127] : memref<1x32xf32, #tpu.memory_space<vmem>>, vector<1x32xf32>
    %c0_128 = arith.constant 0 : index
    %c0_129 = arith.constant 0 : index
    %454 = vector.load %arg48[%c0_128, %c0_129] : memref<1x32xf32, #tpu.memory_space<vmem>>, vector<1x32xf32>
    %c0_130 = arith.constant 0 : index
    %c0_131 = arith.constant 0 : index
    %455 = vector.load %arg49[%c0_130, %c0_131] : memref<32x32xf32, #tpu.memory_space<vmem>>, vector<32x32xf32>
    %c0_132 = arith.constant 0 : index
    %c0_133 = arith.constant 0 : index
    %456 = vector.load %arg50[%c0_132, %c0_133] : memref<1x32xf32, #tpu.memory_space<vmem>>, vector<1x32xf32>
    %457 = arith.mulf %452, %453 : vector<1x32xf32>
    %458 = arith.addf %457, %454 : vector<1x32xf32>
    %cst_134 = arith.constant 0.000000e+00 : f32
    %459 = vector.broadcast %cst_134 : f32 to vector<1x32xf32>
    %460 = arith.maximumf %458, %459 : vector<1x32xf32>
    %cst_135 = arith.constant dense<0.000000e+00> : vector<1x32xf32>
    %461 = tpu.matmul %460, %455, %cst_135 {dimension_numbers = #tpu.dot_dimension_numbers<[1], [0], [0], [1], [0, 0, 1, 1], [], []>} : vector<1x32xf32>, vector<32x32xf32>, vector<1x32xf32> -> vector<1x32xf32>
    %462 = arith.addf %461, %456 : vector<1x32xf32>
    %cst_136 = arith.constant 0.000000e+00 : f32
    %463 = vector.broadcast %cst_136 : f32 to vector<1x32xf32>
    %464 = arith.maximumf %462, %463 : vector<1x32xf32>
    %c0_137 = arith.constant 0 : index
    %c0_138 = arith.constant 0 : index
    %465 = vector.load %arg51[%c0_137, %c0_138] : memref<1x32xf32, #tpu.memory_space<vmem>>, vector<1x32xf32>
    %c0_139 = arith.constant 0 : index
    %c0_140 = arith.constant 0 : index
    %466 = vector.load %arg52[%c0_139, %c0_140] : memref<1x32xf32, #tpu.memory_space<vmem>>, vector<1x32xf32>
    %c0_141 = arith.constant 0 : index
    %c0_142 = arith.constant 0 : index
    %467 = vector.load %arg53[%c0_141, %c0_142] : memref<32x32xf32, #tpu.memory_space<vmem>>, vector<32x32xf32>
    %c0_143 = arith.constant 0 : index
    %c0_144 = arith.constant 0 : index
    %468 = vector.load %arg54[%c0_143, %c0_144] : memref<1x32xf32, #tpu.memory_space<vmem>>, vector<1x32xf32>
    %469 = arith.mulf %464, %465 : vector<1x32xf32>
    %470 = arith.addf %469, %466 : vector<1x32xf32>
    %cst_145 = arith.constant 0.000000e+00 : f32
    %471 = vector.broadcast %cst_145 : f32 to vector<1x32xf32>
    %472 = arith.maximumf %470, %471 : vector<1x32xf32>
    %cst_146 = arith.constant dense<0.000000e+00> : vector<1x32xf32>
    %473 = tpu.matmul %472, %467, %cst_146 {dimension_numbers = #tpu.dot_dimension_numbers<[1], [0], [0], [1], [0, 0, 1, 1], [], []>} : vector<1x32xf32>, vector<32x32xf32>, vector<1x32xf32> -> vector<1x32xf32>
    %474 = arith.addf %473, %468 : vector<1x32xf32>
    %cst_147 = arith.constant 0.000000e+00 : f32
    %475 = vector.broadcast %cst_147 : f32 to vector<1x32xf32>
    %476 = arith.maximumf %474, %475 : vector<1x32xf32>
    %c0_148 = arith.constant 0 : index
    %c0_149 = arith.constant 0 : index
    %477 = vector.load %arg55[%c0_148, %c0_149] : memref<1x32xf32, #tpu.memory_space<vmem>>, vector<1x32xf32>
    %c0_150 = arith.constant 0 : index
    %c0_151 = arith.constant 0 : index
    %478 = vector.load %arg56[%c0_150, %c0_151] : memref<1x32xf32, #tpu.memory_space<vmem>>, vector<1x32xf32>
    %c0_152 = arith.constant 0 : index
    %c0_153 = arith.constant 0 : index
    %479 = vector.load %arg57[%c0_152, %c0_153] : memref<32x64xf32, #tpu.memory_space<vmem>>, vector<32x64xf32>
    %c0_154 = arith.constant 0 : index
    %c0_155 = arith.constant 0 : index
    %480 = vector.load %arg58[%c0_154, %c0_155] : memref<1x64xf32, #tpu.memory_space<vmem>>, vector<1x64xf32>
    %481 = arith.mulf %476, %477 : vector<1x32xf32>
    %482 = arith.addf %481, %478 : vector<1x32xf32>
    %cst_156 = arith.constant 0.000000e+00 : f32
    %483 = vector.broadcast %cst_156 : f32 to vector<1x32xf32>
    %484 = arith.maximumf %482, %483 : vector<1x32xf32>
    %cst_157 = arith.constant dense<0.000000e+00> : vector<1x64xf32>
    %485 = tpu.matmul %484, %479, %cst_157 {dimension_numbers = #tpu.dot_dimension_numbers<[1], [0], [0], [1], [0, 0, 1, 1], [], []>} : vector<1x32xf32>, vector<32x64xf32>, vector<1x64xf32> -> vector<1x64xf32>
    %486 = arith.addf %485, %480 : vector<1x64xf32>
    %cst_158 = arith.constant 0.000000e+00 : f32
    %487 = vector.broadcast %cst_158 : f32 to vector<1x64xf32>
    %488 = arith.maximumf %486, %487 : vector<1x64xf32>
    %c0_159 = arith.constant 0 : index
    %c0_160 = arith.constant 0 : index
    %489 = vector.load %arg59[%c0_159, %c0_160] : memref<1x64xf32, #tpu.memory_space<vmem>>, vector<1x64xf32>
    %c0_161 = arith.constant 0 : index
    %c0_162 = arith.constant 0 : index
    %490 = vector.load %arg60[%c0_161, %c0_162] : memref<1x64xf32, #tpu.memory_space<vmem>>, vector<1x64xf32>
    %c0_163 = arith.constant 0 : index
    %c0_164 = arith.constant 0 : index
    %491 = vector.load %arg61[%c0_163, %c0_164] : memref<64x64xf32, #tpu.memory_space<vmem>>, vector<64x64xf32>
    %c0_165 = arith.constant 0 : index
    %c0_166 = arith.constant 0 : index
    %492 = vector.load %arg62[%c0_165, %c0_166] : memref<1x64xf32, #tpu.memory_space<vmem>>, vector<1x64xf32>
    %493 = arith.mulf %488, %489 : vector<1x64xf32>
    %494 = arith.addf %493, %490 : vector<1x64xf32>
    %cst_167 = arith.constant 0.000000e+00 : f32
    %495 = vector.broadcast %cst_167 : f32 to vector<1x64xf32>
    %496 = arith.maximumf %494, %495 : vector<1x64xf32>
    %cst_168 = arith.constant dense<0.000000e+00> : vector<1x64xf32>
    %497 = tpu.matmul %496, %491, %cst_168 {dimension_numbers = #tpu.dot_dimension_numbers<[1], [0], [0], [1], [0, 0, 1, 1], [], []>} : vector<1x64xf32>, vector<64x64xf32>, vector<1x64xf32> -> vector<1x64xf32>
    %498 = arith.addf %497, %492 : vector<1x64xf32>
    %cst_169 = arith.constant 0.000000e+00 : f32
    %499 = vector.broadcast %cst_169 : f32 to vector<1x64xf32>
    %500 = arith.maximumf %498, %499 : vector<1x64xf32>
    %c0_170 = arith.constant 0 : index
    %c0_171 = arith.constant 0 : index
    %501 = vector.load %arg63[%c0_170, %c0_171] : memref<64x784xf32, #tpu.memory_space<vmem>>, vector<64x784xf32>
    %c0_172 = arith.constant 0 : index
    %c0_173 = arith.constant 0 : index
    %502 = vector.load %arg64[%c0_172, %c0_173] : memref<1x784xf32, #tpu.memory_space<vmem>>, vector<1x784xf32>
    %cst_174 = arith.constant dense<0.000000e+00> : vector<1x784xf32>
    %503 = tpu.matmul %500, %501, %cst_174 {dimension_numbers = #tpu.dot_dimension_numbers<[1], [0], [0], [1], [0, 0, 1, 1], [], []>} : vector<1x64xf32>, vector<64x784xf32>, vector<1x784xf32> -> vector<1x784xf32>
    %504 = arith.addf %503, %502 : vector<1x784xf32>
    %c0_175 = arith.constant 0 : index
    %c0_176 = arith.constant 0 : index
    %c0_177 = arith.constant 0 : index
    %505 = vector.load %arg65[%c0_175, %c0_176, %c0_177] : memref<1x1x784xf32, #tpu.memory_space<vmem>>, vector<1x1x784xf32>
    %506 = vector.shape_cast %505 : vector<1x1x784xf32> to vector<1x784xf32>
    %507 = vector.shape_cast %504 : vector<1x784xf32> to vector<1x1x784xf32>
    tpu.vector_store %arg65[%c0_175, %c0_176, %c0_177], %507 {strides = array<i32>} : memref<1x1x784xf32, #tpu.memory_space<vmem>>, vector<1x1x784xf32>,
    return
  }
  func.func @transform_0(%arg0: i32) -> (i32, i32, i32) {
    %c0_i32 = arith.constant 0 : i32
    %c0_i32_0 = arith.constant 0 : i32
    %c0_i32_1 = arith.constant 0 : i32
    return %arg0, %c0_i32, %c0_i32_0 : i32, i32, i32
  }
  func.func @transform_1(%arg0: i32) -> (i32, i32) {
    %c0_i32 = arith.constant 0 : i32
    %c0_i32_0 = arith.constant 0 : i32
    %c0_i32_1 = arith.constant 0 : i32
    return %c0_i32, %c0_i32_0 : i32, i32
  }
  func.func @transform_2(%arg0: i32) -> (i32, i32) {
    %c0_i32 = arith.constant 0 : i32
    %c0_i32_0 = arith.constant 0 : i32
    %c0_i32_1 = arith.constant 0 : i32
    return %c0_i32, %c0_i32_0 : i32, i32
  }
  func.func @transform_3(%arg0: i32) -> (i32, i32) {
    %c0_i32 = arith.constant 0 : i32
    %c0_i32_0 = arith.constant 0 : i32
    %c0_i32_1 = arith.constant 0 : i32
    return %c0_i32, %c0_i32_0 : i32, i32
  }
  func.func @transform_4(%arg0: i32) -> (i32, i32) {
    %c0_i32 = arith.constant 0 : i32
    %c0_i32_0 = arith.constant 0 : i32
    %c0_i32_1 = arith.constant 0 : i32
    return %c0_i32, %c0_i32_0 : i32, i32
  }
  func.func @transform_5(%arg0: i32) -> (i32, i32) {
    %c0_i32 = arith.constant 0 : i32
    %c0_i32_0 = arith.constant 0 : i32
    %c0_i32_1 = arith.constant 0 : i32
    return %c0_i32, %c0_i32_0 : i32, i32
  }
  func.func @transform_6(%arg0: i32) -> (i32, i32) {
    %c0_i32 = arith.constant 0 : i32
    %c0_i32_0 = arith.constant 0 : i32
    %c0_i32_1 = arith.constant 0 : i32
    return %c0_i32, %c0_i32_0 : i32, i32
  }
  func.func @transform_7(%arg0: i32) -> (i32, i32) {
    %c0_i32 = arith.constant 0 : i32
    %c0_i32_0 = arith.constant 0 : i32
    %c0_i32_1 = arith.constant 0 : i32
    return %c0_i32, %c0_i32_0 : i32, i32
  }
  func.func @transform_8(%arg0: i32) -> (i32, i32) {
    %c0_i32 = arith.constant 0 : i32
    %c0_i32_0 = arith.constant 0 : i32
    %c0_i32_1 = arith.constant 0 : i32
    return %c0_i32, %c0_i32_0 : i32, i32
  }
  func.func @transform_9(%arg0: i32) -> (i32, i32) {
    %c0_i32 = arith.constant 0 : i32
    %c0_i32_0 = arith.constant 0 : i32
    %c0_i32_1 = arith.constant 0 : i32
    return %c0_i32, %c0_i32_0 : i32, i32
  }
  func.func @transform_10(%arg0: i32) -> (i32, i32) {
    %c0_i32 = arith.constant 0 : i32
    %c0_i32_0 = arith.constant 0 : i32
    %c0_i32_1 = arith.constant 0 : i32
    return %c0_i32, %c0_i32_0 : i32, i32
  }
  func.func @transform_11(%arg0: i32) -> (i32, i32) {
    %c0_i32 = arith.constant 0 : i32
    %c0_i32_0 = arith.constant 0 : i32
    %c0_i32_1 = arith.constant 0 : i32
    return %c0_i32, %c0_i32_0 : i32, i32
  }
  func.func @transform_12(%arg0: i32) -> (i32, i32) {
    %c0_i32 = arith.constant 0 : i32
    %c0_i32_0 = arith.constant 0 : i32
    %c0_i32_1 = arith.constant 0 : i32
    return %c0_i32, %c0_i32_0 : i32, i32
  }
  func.func @transform_13(%arg0: i32) -> (i32, i32) {
    %c0_i32 = arith.constant 0 : i32
    %c0_i32_0 = arith.constant 0 : i32
    %c0_i32_1 = arith.constant 0 : i32
    return %c0_i32, %c0_i32_0 : i32, i32
  }
  func.func @transform_14(%arg0: i32) -> (i32, i32) {
    %c0_i32 = arith.constant 0 : i32
    %c0_i32_0 = arith.constant 0 : i32
    %c0_i32_1 = arith.constant 0 : i32
    return %c0_i32, %c0_i32_0 : i32, i32
  }
  func.func @transform_15(%arg0: i32) -> (i32, i32) {
    %c0_i32 = arith.constant 0 : i32
    %c0_i32_0 = arith.constant 0 : i32
    %c0_i32_1 = arith.constant 0 : i32
    return %c0_i32, %c0_i32_0 : i32, i32
  }
  func.func @transform_16(%arg0: i32) -> (i32, i32) {
    %c0_i32 = arith.constant 0 : i32
    %c0_i32_0 = arith.constant 0 : i32
    %c0_i32_1 = arith.constant 0 : i32
    return %c0_i32, %c0_i32_0 : i32, i32
  }
  func.func @transform_17(%arg0: i32) -> (i32, i32) {
    %c0_i32 = arith.constant 0 : i32
    %c0_i32_0 = arith.constant 0 : i32
    %c0_i32_1 = arith.constant 0 : i32
    return %c0_i32, %c0_i32_0 : i32, i32
  }
  func.func @transform_18(%arg0: i32) -> (i32, i32) {
    %c0_i32 = arith.constant 0 : i32
    %c0_i32_0 = arith.constant 0 : i32
    %c0_i32_1 = arith.constant 0 : i32
    return %c0_i32, %c0_i32_0 : i32, i32
  }
  func.func @transform_19(%arg0: i32) -> (i32, i32) {
    %c0_i32 = arith.constant 0 : i32
    %c0_i32_0 = arith.constant 0 : i32
    %c0_i32_1 = arith.constant 0 : i32
    return %c0_i32, %c0_i32_0 : i32, i32
  }
  func.func @transform_20(%arg0: i32) -> (i32, i32) {
    %c0_i32 = arith.constant 0 : i32
    %c0_i32_0 = arith.constant 0 : i32
    %c0_i32_1 = arith.constant 0 : i32
    return %c0_i32, %c0_i32_0 : i32, i32
  }
  func.func @transform_21(%arg0: i32) -> (i32, i32) {
    %c0_i32 = arith.constant 0 : i32
    %c0_i32_0 = arith.constant 0 : i32
    %c0_i32_1 = arith.constant 0 : i32
    return %c0_i32, %c0_i32_0 : i32, i32
  }
  func.func @transform_22(%arg0: i32) -> (i32, i32) {
    %c0_i32 = arith.constant 0 : i32
    %c0_i32_0 = arith.constant 0 : i32
    %c0_i32_1 = arith.constant 0 : i32
    return %c0_i32, %c0_i32_0 : i32, i32
  }
  func.func @transform_23(%arg0: i32) -> (i32, i32) {
    %c0_i32 = arith.constant 0 : i32
    %c0_i32_0 = arith.constant 0 : i32
    %c0_i32_1 = arith.constant 0 : i32
    return %c0_i32, %c0_i32_0 : i32, i32
  }
  func.func @transform_24(%arg0: i32) -> (i32, i32) {
    %c0_i32 = arith.constant 0 : i32
    %c0_i32_0 = arith.constant 0 : i32
    %c0_i32_1 = arith.constant 0 : i32
    return %c0_i32, %c0_i32_0 : i32, i32
  }
  func.func @transform_25(%arg0: i32) -> (i32, i32) {
    %c0_i32 = arith.constant 0 : i32
    %c0_i32_0 = arith.constant 0 : i32
    %c0_i32_1 = arith.constant 0 : i32
    return %c0_i32, %c0_i32_0 : i32, i32
  }
  func.func @transform_26(%arg0: i32) -> (i32, i32) {
    %c0_i32 = arith.constant 0 : i32
    %c0_i32_0 = arith.constant 0 : i32
    %c0_i32_1 = arith.constant 0 : i32
    return %c0_i32, %c0_i32_0 : i32, i32
  }
  func.func @transform_27(%arg0: i32) -> (i32, i32) {
    %c0_i32 = arith.constant 0 : i32
    %c0_i32_0 = arith.constant 0 : i32
    %c0_i32_1 = arith.constant 0 : i32
    return %c0_i32, %c0_i32_0 : i32, i32
  }
  func.func @transform_28(%arg0: i32) -> (i32, i32) {
    %c0_i32 = arith.constant 0 : i32
    %c0_i32_0 = arith.constant 0 : i32
    %c0_i32_1 = arith.constant 0 : i32
    return %c0_i32, %c0_i32_0 : i32, i32
  }
  func.func @transform_29(%arg0: i32) -> (i32, i32) {
    %c0_i32 = arith.constant 0 : i32
    %c0_i32_0 = arith.constant 0 : i32
    %c0_i32_1 = arith.constant 0 : i32
    return %c0_i32, %c0_i32_0 : i32, i32
  }
  func.func @transform_30(%arg0: i32) -> (i32, i32) {
    %c0_i32 = arith.constant 0 : i32
    %c0_i32_0 = arith.constant 0 : i32
    %c0_i32_1 = arith.constant 0 : i32
    return %c0_i32, %c0_i32_0 : i32, i32
  }
  func.func @transform_31(%arg0: i32) -> (i32, i32) {
    %c0_i32 = arith.constant 0 : i32
    %c0_i32_0 = arith.constant 0 : i32
    %c0_i32_1 = arith.constant 0 : i32
    return %c0_i32, %c0_i32_0 : i32, i32
  }
  func.func @transform_32(%arg0: i32) -> (i32, i32) {
    %c0_i32 = arith.constant 0 : i32
    %c0_i32_0 = arith.constant 0 : i32
    %c0_i32_1 = arith.constant 0 : i32
    return %c0_i32, %c0_i32_0 : i32, i32
  }
  func.func @transform_33(%arg0: i32) -> (i32, i32) {
    %c0_i32 = arith.constant 0 : i32
    %c0_i32_0 = arith.constant 0 : i32
    %c0_i32_1 = arith.constant 0 : i32
    return %c0_i32, %c0_i32_0 : i32, i32
  }
  func.func @transform_34(%arg0: i32) -> (i32, i32) {
    %c0_i32 = arith.constant 0 : i32
    %c0_i32_0 = arith.constant 0 : i32
    %c0_i32_1 = arith.constant 0 : i32
    return %c0_i32, %c0_i32_0 : i32, i32
  }
  func.func @transform_35(%arg0: i32) -> (i32, i32) {
    %c0_i32 = arith.constant 0 : i32
    %c0_i32_0 = arith.constant 0 : i32
    %c0_i32_1 = arith.constant 0 : i32
    return %c0_i32, %c0_i32_0 : i32, i32
  }
  func.func @transform_36(%arg0: i32) -> (i32, i32) {
    %c0_i32 = arith.constant 0 : i32
    %c0_i32_0 = arith.constant 0 : i32
    %c0_i32_1 = arith.constant 0 : i32
    return %c0_i32, %c0_i32_0 : i32, i32
  }
  func.func @transform_37(%arg0: i32) -> (i32, i32) {
    %c0_i32 = arith.constant 0 : i32
    %c0_i32_0 = arith.constant 0 : i32
    %c0_i32_1 = arith.constant 0 : i32
    return %c0_i32, %c0_i32_0 : i32, i32
  }
  func.func @transform_38(%arg0: i32) -> (i32, i32) {
    %c0_i32 = arith.constant 0 : i32
    %c0_i32_0 = arith.constant 0 : i32
    %c0_i32_1 = arith.constant 0 : i32
    return %c0_i32, %c0_i32_0 : i32, i32
  }
  func.func @transform_39(%arg0: i32) -> (i32, i32) {
    %c0_i32 = arith.constant 0 : i32
    %c0_i32_0 = arith.constant 0 : i32
    %c0_i32_1 = arith.constant 0 : i32
    return %c0_i32, %c0_i32_0 : i32, i32
  }
  func.func @transform_40(%arg0: i32) -> (i32, i32) {
    %c0_i32 = arith.constant 0 : i32
    %c0_i32_0 = arith.constant 0 : i32
    %c0_i32_1 = arith.constant 0 : i32
    return %c0_i32, %c0_i32_0 : i32, i32
  }
  func.func @transform_41(%arg0: i32) -> (i32, i32) {
    %c0_i32 = arith.constant 0 : i32
    %c0_i32_0 = arith.constant 0 : i32
    %c0_i32_1 = arith.constant 0 : i32
    return %c0_i32, %c0_i32_0 : i32, i32
  }
  func.func @transform_42(%arg0: i32) -> (i32, i32) {
    %c0_i32 = arith.constant 0 : i32
    %c0_i32_0 = arith.constant 0 : i32
    %c0_i32_1 = arith.constant 0 : i32
    return %c0_i32, %c0_i32_0 : i32, i32
  }
  func.func @transform_43(%arg0: i32) -> (i32, i32) {
    %c0_i32 = arith.constant 0 : i32
    %c0_i32_0 = arith.constant 0 : i32
    %c0_i32_1 = arith.constant 0 : i32
    return %c0_i32, %c0_i32_0 : i32, i32
  }
  func.func @transform_44(%arg0: i32) -> (i32, i32) {
    %c0_i32 = arith.constant 0 : i32
    %c0_i32_0 = arith.constant 0 : i32
    %c0_i32_1 = arith.constant 0 : i32
    return %c0_i32, %c0_i32_0 : i32, i32
  }
  func.func @transform_45(%arg0: i32) -> (i32, i32) {
    %c0_i32 = arith.constant 0 : i32
    %c0_i32_0 = arith.constant 0 : i32
    %c0_i32_1 = arith.constant 0 : i32
    return %c0_i32, %c0_i32_0 : i32, i32
  }
  func.func @transform_46(%arg0: i32) -> (i32, i32) {
    %c0_i32 = arith.constant 0 : i32
    %c0_i32_0 = arith.constant 0 : i32
    %c0_i32_1 = arith.constant 0 : i32
    return %c0_i32, %c0_i32_0 : i32, i32
  }
  func.func @transform_47(%arg0: i32) -> (i32, i32) {
    %c0_i32 = arith.constant 0 : i32
    %c0_i32_0 = arith.constant 0 : i32
    %c0_i32_1 = arith.constant 0 : i32
    return %c0_i32, %c0_i32_0 : i32, i32
  }
  func.func @transform_48(%arg0: i32) -> (i32, i32) {
    %c0_i32 = arith.constant 0 : i32
    %c0_i32_0 = arith.constant 0 : i32
    %c0_i32_1 = arith.constant 0 : i32
    return %c0_i32, %c0_i32_0 : i32, i32
  }
  func.func @transform_49(%arg0: i32) -> (i32, i32) {
    %c0_i32 = arith.constant 0 : i32
    %c0_i32_0 = arith.constant 0 : i32
    %c0_i32_1 = arith.constant 0 : i32
    return %c0_i32, %c0_i32_0 : i32, i32
  }
  func.func @transform_50(%arg0: i32) -> (i32, i32) {
    %c0_i32 = arith.constant 0 : i32
    %c0_i32_0 = arith.constant 0 : i32
    %c0_i32_1 = arith.constant 0 : i32
    return %c0_i32, %c0_i32_0 : i32, i32
  }
  func.func @transform_51(%arg0: i32) -> (i32, i32) {
    %c0_i32 = arith.constant 0 : i32
    %c0_i32_0 = arith.constant 0 : i32
    %c0_i32_1 = arith.constant 0 : i32
    return %c0_i32, %c0_i32_0 : i32, i32
  }
  func.func @transform_52(%arg0: i32) -> (i32, i32) {
    %c0_i32 = arith.constant 0 : i32
    %c0_i32_0 = arith.constant 0 : i32
    %c0_i32_1 = arith.constant 0 : i32
    return %c0_i32, %c0_i32_0 : i32, i32
  }
  func.func @transform_53(%arg0: i32) -> (i32, i32) {
    %c0_i32 = arith.constant 0 : i32
    %c0_i32_0 = arith.constant 0 : i32
    %c0_i32_1 = arith.constant 0 : i32
    return %c0_i32, %c0_i32_0 : i32, i32
  }
  func.func @transform_54(%arg0: i32) -> (i32, i32) {
    %c0_i32 = arith.constant 0 : i32
    %c0_i32_0 = arith.constant 0 : i32
    %c0_i32_1 = arith.constant 0 : i32
    return %c0_i32, %c0_i32_0 : i32, i32
  }
  func.func @transform_55(%arg0: i32) -> (i32, i32) {
    %c0_i32 = arith.constant 0 : i32
    %c0_i32_0 = arith.constant 0 : i32
    %c0_i32_1 = arith.constant 0 : i32
    return %c0_i32, %c0_i32_0 : i32, i32
  }
  func.func @transform_56(%arg0: i32) -> (i32, i32) {
    %c0_i32 = arith.constant 0 : i32
    %c0_i32_0 = arith.constant 0 : i32
    %c0_i32_1 = arith.constant 0 : i32
    return %c0_i32, %c0_i32_0 : i32, i32
  }
  func.func @transform_57(%arg0: i32) -> (i32, i32) {
    %c0_i32 = arith.constant 0 : i32
    %c0_i32_0 = arith.constant 0 : i32
    %c0_i32_1 = arith.constant 0 : i32
    return %c0_i32, %c0_i32_0 : i32, i32
  }
  func.func @transform_58(%arg0: i32) -> (i32, i32) {
    %c0_i32 = arith.constant 0 : i32
    %c0_i32_0 = arith.constant 0 : i32
    %c0_i32_1 = arith.constant 0 : i32
    return %c0_i32, %c0_i32_0 : i32, i32
  }
  func.func @transform_59(%arg0: i32) -> (i32, i32) {
    %c0_i32 = arith.constant 0 : i32
    %c0_i32_0 = arith.constant 0 : i32
    %c0_i32_1 = arith.constant 0 : i32
    return %c0_i32, %c0_i32_0 : i32, i32
  }
  func.func @transform_60(%arg0: i32) -> (i32, i32) {
    %c0_i32 = arith.constant 0 : i32
    %c0_i32_0 = arith.constant 0 : i32
    %c0_i32_1 = arith.constant 0 : i32
    return %c0_i32, %c0_i32_0 : i32, i32
  }
  func.func @transform_61(%arg0: i32) -> (i32, i32) {
    %c0_i32 = arith.constant 0 : i32
    %c0_i32_0 = arith.constant 0 : i32
    %c0_i32_1 = arith.constant 0 : i32
    return %c0_i32, %c0_i32_0 : i32, i32
  }
  func.func @transform_62(%arg0: i32) -> (i32, i32) {
    %c0_i32 = arith.constant 0 : i32
    %c0_i32_0 = arith.constant 0 : i32
    %c0_i32_1 = arith.constant 0 : i32
    return %c0_i32, %c0_i32_0 : i32, i32
  }
  func.func @transform_63(%arg0: i32) -> (i32, i32) {
    %c0_i32 = arith.constant 0 : i32
    %c0_i32_0 = arith.constant 0 : i32
    %c0_i32_1 = arith.constant 0 : i32
    return %c0_i32, %c0_i32_0 : i32, i32
  }
  func.func @transform_64(%arg0: i32) -> (i32, i32, i32) {
    %c0_i32 = arith.constant 0 : i32
    %c0_i32_0 = arith.constant 0 : i32
    %c0_i32_1 = arith.constant 0 : i32
    return %arg0, %c0_i32, %c0_i32_0 : i32, i32, i32
  }
}

</mosaic_0001>

<llo_original>
// kernel: forward.1
$region0: #{forward.1}
  #allocation0 [shape = 'u32[]', space=smem, size = 0x4, offset = 0x4, fixed_abs, tag = 'smem constant byte address 0x4 - core index']
  #allocation1 [shape = 'u32[144,128]{1,0:T(1,128)}', space=vmem, size = 0x12000, scoped, tag = 'internal scratch']
  %s0 = inlined_call_operand.smem [shape: u32[65], index: -1, kind: input, shape index: {}]
  %s1 = sld [smem:[%s0]]
  %s2 = scalar_lea.smem %s0, 1
  %s3 = sld [smem:[%s2]]
  %s4 = scalar_lea.smem %s0, 2
  %s5 = sld [smem:[%s4]]
  %s6 = scalar_lea.smem %s0, 3
  %s7 = sld [smem:[%s6]]
  %s8 = scalar_lea.smem %s0, 4
  %s9 = sld [smem:[%s8]]
  %s10 = scalar_lea.smem %s0, 5
  %s11 = sld [smem:[%s10]]
  %s12 = scalar_lea.smem %s0, 6
  %s13 = sld [smem:[%s12]]
  %s14 = scalar_lea.smem %s0, 7
  %s15 = sld [smem:[%s14]]
  %s16 = scalar_lea.smem %s0, 8
  %s17 = sld [smem:[%s16]]
  %s18 = scalar_lea.smem %s0, 9
  %s19 = sld [smem:[%s18]]
  %s20 = scalar_lea.smem %s0, 10
  %s21 = sld [smem:[%s20]]
  %s22 = scalar_lea.smem %s0, 11
  %s23 = sld [smem:[%s22]]
  %s24 = scalar_lea.smem %s0, 12
  %s25 = sld [smem:[%s24]]
  %s26 = scalar_lea.smem %s0, 13
  %s27 = sld [smem:[%s26]]
  %s28 = scalar_lea.smem %s0, 14
  %s29 = sld [smem:[%s28]]
  %s30 = scalar_lea.smem %s0, 15
  %s31 = sld [smem:[%s30]]
  %s32 = scalar_lea.smem %s0, 16
  %s33 = sld [smem:[%s32]]
  %s34 = scalar_lea.smem %s0, 17
  %s35 = sld [smem:[%s34]]
  %s36 = scalar_lea.smem %s0, 18
  %s37 = sld [smem:[%s36]]
  %s38 = scalar_lea.smem %s0, 19
  %s39 = sld [smem:[%s38]]
  %s40 = scalar_lea.smem %s0, 20
  %s41 = sld [smem:[%s40]]
  %s42 = scalar_lea.smem %s0, 21
  %s43 = sld [smem:[%s42]]
  %s44 = scalar_lea.smem %s0, 22
  %s45 = sld [smem:[%s44]]
  %s46 = scalar_lea.smem %s0, 23
  %s47 = sld [smem:[%s46]]
  %s48 = scalar_lea.smem %s0, 24
  %s49 = sld [smem:[%s48]]
  %s50 = scalar_lea.smem %s0, 25
  %s51 = sld [smem:[%s50]]
  %s52 = scalar_lea.smem %s0, 26
  %s53 = sld [smem:[%s52]]
  %s54 = scalar_lea.smem %s0, 27
  %s55 = sld [smem:[%s54]]
  %s56 = scalar_lea.smem %s0, 28
  %s57 = sld [smem:[%s56]]
  %s58 = scalar_lea.smem %s0, 29
  %s59 = sld [smem:[%s58]]
  %s60 = scalar_lea.smem %s0, 30
  %s61 = sld [smem:[%s60]]
  %s62 = scalar_lea.smem %s0, 31
  %s63 = sld [smem:[%s62]]
  %s64 = scalar_lea.smem %s0, 32
  %s65 = sld [smem:[%s64]]
  %s66 = scalar_lea.smem %s0, 33
  %s67 = sld [smem:[%s66]]
  %s68 = scalar_lea.smem %s0, 34
  %s69 = sld [smem:[%s68]]
  %s70 = scalar_lea.smem %s0, 35
  %s71 = sld [smem:[%s70]]
  %s72 = scalar_lea.smem %s0, 36
  %s73 = sld [smem:[%s72]]
  %s74 = scalar_lea.smem %s0, 37
  %s75 = sld [smem:[%s74]]
  %s76 = scalar_lea.smem %s0, 38
  %s77 = sld [smem:[%s76]]
  %s78 = scalar_lea.smem %s0, 39
  %s79 = sld [smem:[%s78]]
  %s80 = scalar_lea.smem %s0, 40
  %s81 = sld [smem:[%s80]]
  %s82 = scalar_lea.smem %s0, 41
  %s83 = sld [smem:[%s82]]
  %s84 = scalar_lea.smem %s0, 42
  %s85 = sld [smem:[%s84]]
  %s86 = scalar_lea.smem %s0, 43
  %s87 = sld [smem:[%s86]]
  %s88 = scalar_lea.smem %s0, 44
  %s89 = sld [smem:[%s88]]
  %s90 = scalar_lea.smem %s0, 45
  %s91 = sld [smem:[%s90]]
  %s92 = scalar_lea.smem %s0, 46
  %s93 = sld [smem:[%s92]]
  %s94 = scalar_lea.smem %s0, 47
  %s95 = sld [smem:[%s94]]
  %s96 = scalar_lea.smem %s0, 48
  %s97 = sld [smem:[%s96]]
  %s98 = scalar_lea.smem %s0, 49
  %s99 = sld [smem:[%s98]]
  %s100 = scalar_lea.smem %s0, 50
  %s101 = sld [smem:[%s100]]
  %s102 = scalar_lea.smem %s0, 51
  %s103 = sld [smem:[%s102]]
  %s104 = scalar_lea.smem %s0, 52
  %s105 = sld [smem:[%s104]]
  %s106 = scalar_lea.smem %s0, 53
  %s107 = sld [smem:[%s106]]
  %s108 = scalar_lea.smem %s0, 54
  %s109 = sld [smem:[%s108]]
  %s110 = scalar_lea.smem %s0, 55
  %s111 = sld [smem:[%s110]]
  %s112 = scalar_lea.smem %s0, 56
  %s113 = sld [smem:[%s112]]
  %s114 = scalar_lea.smem %s0, 57
  %s115 = sld [smem:[%s114]]
  %s116 = scalar_lea.smem %s0, 58
  %s117 = sld [smem:[%s116]]
  %s118 = scalar_lea.smem %s0, 59
  %s119 = sld [smem:[%s118]]
  %s120 = scalar_lea.smem %s0, 60
  %s121 = sld [smem:[%s120]]
  %s122 = scalar_lea.smem %s0, 61
  %s123 = sld [smem:[%s122]]
  %s124 = scalar_lea.smem %s0, 62
  %s125 = sld [smem:[%s124]]
  %s126 = scalar_lea.smem %s0, 63
  %s127 = sld [smem:[%s126]]
  %s128 = scalar_lea.smem %s0, 64
  %s129 = sld [smem:[%s128]]
  %s130 = sld [smem:[#allocation0]]
  $region385: #{forward.1} parent=0
    _
  %s132 = ssub.s32 1, %s130
  %s133 = scalar_select 0, %s132, %s130
  $region1: #{forward.1} parent=0
    #allocation2 [shape = 'u8[512]{0}', space=vmem, size = 0x400, scoped, tag = 'input window, operand 30, single buffered']
    #allocation3 [shape = 's32[2]{0}', space=sflag, size = 0x8, scoped, tag = 'scoped memory for forward.1']
    #allocation4 [shape = 'u8[512]{0}', space=vmem, size = 0x400, scoped, tag = 'input window, operand 32, single buffered']
    #allocation5 [shape = 's32[1]{0}', space=sflag, size = 0x4, scoped, tag = 'scoped memory for forward.1']
    #allocation6 [shape = 'u8[512]{0}', space=vmem, size = 0x400, scoped, tag = 'input window, operand 33, single buffered']
    #allocation7 [shape = 'u8[512]{0}', space=vmem, size = 0x400, scoped, tag = 'input window, operand 34, single buffered']
    #allocation8 [shape = 's32[1]{0}', space=sflag, size = 0x4, scoped, tag = 'scoped memory for forward.1']
    #allocation9 [shape = 'u8[512]{0}', space=vmem, size = 0x400, scoped, tag = 'input window, operand 35, single buffered']
    #allocation10 [shape = 'u8[512]{0}', space=vmem, size = 0x400, scoped, tag = 'input window, operand 37, single buffered']
    #allocation11 [shape = 's32[1]{0}', space=sflag, size = 0x4, scoped, tag = 'scoped memory for forward.1']
    #allocation12 [shape = 'u8[512]{0}', space=vmem, size = 0x400, scoped, tag = 'input window, operand 38, single buffered']
    #allocation13 [shape = 'u8[512]{0}', space=vmem, size = 0x400, scoped, tag = 'input window, operand 39, single buffered']
    #allocation14 [shape = 's32[1]{0}', space=sflag, size = 0x4, scoped, tag = 'scoped memory for forward.1']
    #allocation15 [shape = 'u8[512]{0}', space=vmem, size = 0x400, scoped, tag = 'input window, operand 41, single buffered']
    #allocation16 [shape = 'u8[512]{0}', space=vmem, size = 0x400, scoped, tag = 'input window, operand 42, single buffered']
    #allocation17 [shape = 's32[1]{0}', space=sflag, size = 0x4, scoped, tag = 'scoped memory for forward.1']
    #allocation18 [shape = 'u8[512]{0}', space=vmem, size = 0x400, scoped, tag = 'input window, operand 43, single buffered']
    #allocation19 [shape = 'u8[512]{0}', space=vmem, size = 0x400, scoped, tag = 'input window, operand 45, single buffered']
    #allocation20 [shape = 's32[1]{0}', space=sflag, size = 0x4, scoped, tag = 'scoped memory for forward.1']
    #allocation21 [shape = 'u8[512]{0}', space=vmem, size = 0x400, scoped, tag = 'input window, operand 46, single buffered']
    #allocation22 [shape = 'u8[512]{0}', space=vmem, size = 0x400, scoped, tag = 'input window, operand 47, single buffered']
    #allocation23 [shape = 's32[1]{0}', space=sflag, size = 0x4, scoped, tag = 'scoped memory for forward.1']
    #allocation24 [shape = 'u8[512]{0}', space=vmem, size = 0x400, scoped, tag = 'input window, operand 49, single buffered']
    #allocation25 [shape = 'u8[512]{0}', space=vmem, size = 0x400, scoped, tag = 'input window, operand 50, single buffered']
    #allocation26 [shape = 's32[1]{0}', space=sflag, size = 0x4, scoped, tag = 'scoped memory for forward.1']
    #allocation27 [shape = 'u8[512]{0}', space=vmem, size = 0x400, scoped, tag = 'input window, operand 51, single buffered']
    #allocation28 [shape = 'u8[512]{0}', space=vmem, size = 0x400, scoped, tag = 'input window, operand 53, single buffered']
    #allocation29 [shape = 's32[1]{0}', space=sflag, size = 0x4, scoped, tag = 'scoped memory for forward.1']
    #allocation30 [shape = 'u8[512]{0}', space=vmem, size = 0x400, scoped, tag = 'input window, operand 54, single buffered']
    #allocation31 [shape = 'u8[512]{0}', space=vmem, size = 0x400, scoped, tag = 'input window, operand 55, single buffered']
    #allocation32 [shape = 's32[1]{0}', space=sflag, size = 0x4, scoped, tag = 'scoped memory for forward.1']
    #allocation33 [shape = 'u8[512]{0}', space=vmem, size = 0x400, scoped, tag = 'input window, operand 57, single buffered']
    #allocation34 [shape = 'u8[512]{0}', space=vmem, size = 0x400, scoped, tag = 'input window, operand 58, single buffered']
    #allocation35 [shape = 's32[1]{0}', space=sflag, size = 0x4, scoped, tag = 'scoped memory for forward.1']
    #allocation36 [shape = 'u8[512]{0}', space=vmem, size = 0x400, scoped, tag = 'input window, operand 59, single buffered']
    #allocation37 [shape = 'u8[512]{0}', space=vmem, size = 0x400, scoped, tag = 'input window, operand 61, single buffered']
    #allocation38 [shape = 's32[1]{0}', space=sflag, size = 0x4, scoped, tag = 'scoped memory for forward.1']
    %134 = vsyncpa [#allocation3], 0
    %135 = vsyncpa [#allocation5], 0
    %136 = vsyncpa [#allocation8], 0
    %137 = vsyncpa [#allocation11], 0
    %138 = vsyncpa [#allocation14], 0
    %139 = vsyncpa [#allocation17], 0
    %140 = vsyncpa [#allocation20], 0
    %141 = vsyncpa [#allocation23], 0
    %142 = vsyncpa [#allocation26], 0
    %143 = vsyncpa [#allocation29], 0
    %144 = vsyncpa [#allocation32], 0
    %145 = vsyncpa [#allocation35], 0
    %146 = vsyncpa [#allocation38], 0
    loop: start=0, step=1, limit=4
    $region2: #{forward.1} parent=1 // loop_pre_header
      _
    $region3: #{forward.1} parent=1 // loop_header
      %s148 = sphi 0, %s152
      %p149 = scmp.ge.s32.totalorder %s148, 4
      %s158 = sphi 0, %s160
      %s161 = sphi 0, %s158
      %s162 = sphi 0, %s161
      %s178 = sphi 0, %s162
      %s182 = sphi 0, %s182
      %s184 = sphi 0, %s182
      %s185 = sphi 0, %s184
      %s199 = sphi 0, %s185
      %s203 = sphi 0, %s203
      %s205 = sphi 0, %s203
      %s206 = sphi 0, %s205
      %s220 = sphi 0, %s206
      %s224 = sphi 0, %s224
      %s226 = sphi 0, %s224
      %s227 = sphi 0, %s226
      %s241 = sphi 0, %s227
      %s245 = sphi 0, %s245
      %s247 = sphi 0, %s245
      %s248 = sphi 0, %s247
      %s262 = sphi 0, %s248
      %s266 = sphi 0, %s266
      %s268 = sphi 0, %s266
      %s269 = sphi 0, %s268
      %s283 = sphi 0, %s269
      %s287 = sphi 0, %s287
      %s289 = sphi 0, %s287
      %s290 = sphi 0, %s289
      %s304 = sphi 0, %s290
      %s308 = sphi 0, %s308
      %s310 = sphi 0, %s308
      %s311 = sphi 0, %s310
      %s325 = sphi 0, %s311
      %s329 = sphi 0, %s329
      %s331 = sphi 0, %s329
      %s332 = sphi 0, %s331
      %s346 = sphi 0, %s332
      %s350 = sphi 0, %s350
      %s352 = sphi 0, %s350
      %s353 = sphi 0, %s352
      %s367 = sphi 0, %s353
      %s371 = sphi 0, %s371
      %s373 = sphi 0, %s371
      %s374 = sphi 0, %s373
      %s388 = sphi 0, %s374
      %s392 = sphi 0, %s392
      %s394 = sphi 0, %s392
      %s395 = sphi 0, %s394
      %s409 = sphi 0, %s395
      %s413 = sphi 0, %s413
      %s415 = sphi 0, %s413
      %s416 = sphi 0, %s415
      %s430 = sphi 0, %s416
      %s434 = sphi 0, %s434
      %s436 = sphi 0, %s434
      %s437 = sphi 0, %s436
      %s451 = sphi 0, %s437
      %s455 = sphi 0, %s455
      %s457 = sphi 0, %s455
      %s458 = sphi 0, %s457
      %s472 = sphi 0, %s458
      %s476 = sphi 0, %s476
      %s478 = sphi 0, %s476
      %s479 = sphi 0, %s478
      %s493 = sphi 0, %s479
      %s497 = sphi 0, %s497
      %s499 = sphi 0, %s497
      %s500 = sphi 0, %s499
      %s514 = sphi 0, %s500
      %s518 = sphi 0, %s518
      %s520 = sphi 0, %s518
      %s521 = sphi 0, %s520
      %s535 = sphi 0, %s521
      %s539 = sphi 0, %s539
      %s541 = sphi 0, %s539
      %s542 = sphi 0, %s541
      %s556 = sphi 0, %s542
      %s560 = sphi 0, %s560
      %s562 = sphi 0, %s560
      %s563 = sphi 0, %s562
      %s577 = sphi 0, %s563
      %s581 = sphi 0, %s581
      %s583 = sphi 0, %s581
      %s584 = sphi 0, %s583
      %s598 = sphi 0, %s584
      %s602 = sphi 0, %s602
      %s604 = sphi 0, %s602
      %s605 = sphi 0, %s604
      %s619 = sphi 0, %s605
      %s623 = sphi 0, %s623
      %s625 = sphi 0, %s623
      %s626 = sphi 0, %s625
      %s640 = sphi 0, %s626
      %s644 = sphi 0, %s644
      %s646 = sphi 0, %s644
      %s647 = sphi 0, %s646
      %s661 = sphi 0, %s647
      %s665 = sphi 0, %s665
      %s667 = sphi 0, %s665
      %s668 = sphi 0, %s667
      %s682 = sphi 0, %s668
      %s686 = sphi 0, %s686
      %s688 = sphi 0, %s686
      %s689 = sphi 0, %s688
      %s703 = sphi 0, %s689
      %s707 = sphi 0, %s707
      %s709 = sphi 0, %s707
      %s710 = sphi 0, %s709
      %s724 = sphi 0, %s710
      %s728 = sphi 0, %s728
      %s730 = sphi 0, %s728
      %s731 = sphi 0, %s730
      %s745 = sphi 0, %s731
      %s749 = sphi 0, %s749
      %s751 = sphi 0, %s749
      %s752 = sphi 0, %s751
      %s766 = sphi 0, %s752
      %s770 = sphi 0, %s770
      %s772 = sphi 0, %s770
      %s773 = sphi 0, %s772
      %s787 = sphi 0, %s773
      %s791 = sphi 0, %s791
      %s793 = sphi 0, %s791
      %s794 = sphi 0, %s793
      %s808 = sphi 0, %s794
      %s812 = sphi 0, %s812
      %s814 = sphi 0, %s812
      %s815 = sphi 0, %s814
      %s829 = sphi 0, %s815
      %s833 = sphi 0, %s833
      %s835 = sphi 0, %s833
      %s836 = sphi 0, %s835
      %s850 = sphi 0, %s836
      %s854 = sphi 0, %s854
      %s856 = sphi 0, %s854
      %s857 = sphi 0, %s856
      %s871 = sphi 0, %s857
      %s875 = sphi 0, %s875
      %s877 = sphi 0, %s875
      %s878 = sphi 0, %s877
      %s892 = sphi 0, %s878
      %s896 = sphi 0, %s896
      %s898 = sphi 0, %s896
      %s899 = sphi 0, %s898
      %s913 = sphi 0, %s899
      %s917 = sphi 0, %s917
      %s919 = sphi 0, %s917
      %s920 = sphi 0, %s919
      %s934 = sphi 0, %s920
      %s938 = sphi 0, %s938
      %s940 = sphi 0, %s938
      %s941 = sphi 0, %s940
      %s955 = sphi 0, %s941
      %s959 = sphi 0, %s959
      %s961 = sphi 0, %s959
      %s962 = sphi 0, %s961
      %s976 = sphi 0, %s962
      %s980 = sphi 0, %s980
      %s982 = sphi 0, %s980
      %s983 = sphi 0, %s982
      %s997 = sphi 0, %s983
      %s1001 = sphi 0, %s1001
      %s1003 = sphi 0, %s1001
      %s1004 = sphi 0, %s1003
      %s1018 = sphi 0, %s1004
      %s1022 = sphi 0, %s1022
      %s1024 = sphi 0, %s1022
      %s1025 = sphi 0, %s1024
      %s1039 = sphi 0, %s1025
      %s1043 = sphi 0, %s1043
      %s1045 = sphi 0, %s1043
      %s1046 = sphi 0, %s1045
      %s1060 = sphi 0, %s1046
      %s1064 = sphi 0, %s1064
      %s1066 = sphi 0, %s1064
      %s1067 = sphi 0, %s1066
      %s1081 = sphi 0, %s1067
      %s1085 = sphi 0, %s1085
      %s1087 = sphi 0, %s1085
      %s1088 = sphi 0, %s1087
      %s1102 = sphi 0, %s1088
      %s1106 = sphi 0, %s1106
      %s1108 = sphi 0, %s1106
      %s1109 = sphi 0, %s1108
      %s1123 = sphi 0, %s1109
      %s1127 = sphi 0, %s1127
      %s1129 = sphi 0, %s1127
      %s1130 = sphi 0, %s1129
      %s1144 = sphi 0, %s1130
      %s1148 = sphi 0, %s1148
      %s1150 = sphi 0, %s1148
      %s1151 = sphi 0, %s1150
      %s1165 = sphi 0, %s1151
      %s1169 = sphi 0, %s1169
      %s1171 = sphi 0, %s1169
      %s1172 = sphi 0, %s1171
      %s1186 = sphi 0, %s1172
      %s1190 = sphi 0, %s1190
      %s1192 = sphi 0, %s1190
      %s1193 = sphi 0, %s1192
      %s1207 = sphi 0, %s1193
      %s1211 = sphi 0, %s1211
      %s1213 = sphi 0, %s1211
      %s1214 = sphi 0, %s1213
      %s1228 = sphi 0, %s1214
      %s1232 = sphi 0, %s1232
      %s1234 = sphi 0, %s1232
      %s1235 = sphi 0, %s1234
      %s1249 = sphi 0, %s1235
      %s1253 = sphi 0, %s1253
      %s1255 = sphi 0, %s1253
      %s1256 = sphi 0, %s1255
      %s1270 = sphi 0, %s1256
      %s1274 = sphi 0, %s1274
      %s1276 = sphi 0, %s1274
      %s1277 = sphi 0, %s1276
      %s1291 = sphi 0, %s1277
      %s1295 = sphi 0, %s1295
      %s1297 = sphi 0, %s1295
      %s1298 = sphi 0, %s1297
      %s1312 = sphi 0, %s1298
      %s1316 = sphi 0, %s1316
      %s1318 = sphi 0, %s1316
      %s1319 = sphi 0, %s1318
      %s1333 = sphi 0, %s1319
      %s1337 = sphi 0, %s1337
      %s1339 = sphi 0, %s1337
      %s1340 = sphi 0, %s1339
      %s1354 = sphi 0, %s1340
      %s1358 = sphi 0, %s1358
      %s1360 = sphi 0, %s1358
      %s1361 = sphi 0, %s1360
      %s1375 = sphi 0, %s1361
      %s1379 = sphi 0, %s1379
      %s1381 = sphi 0, %s1379
      %s1382 = sphi 0, %s1381
      %s1396 = sphi 0, %s1382
      %s1400 = sphi 0, %s1400
      %s1402 = sphi 0, %s1400
      %s1403 = sphi 0, %s1402
      %s1417 = sphi 0, %s1403
      %s1421 = sphi 0, %s1421
      %s1423 = sphi 0, %s1421
      %s1424 = sphi 0, %s1423
      %s1438 = sphi 0, %s1424
      %s1442 = sphi 0, %s1442
      %s1444 = sphi 0, %s1442
      %s1445 = sphi 0, %s1444
      %s1459 = sphi 0, %s1445
      %s1463 = sphi 0, %s1463
      %s1465 = sphi 0, %s1463
      %s1466 = sphi 0, %s1465
      %s1480 = sphi 0, %s1466
      %s1484 = sphi 0, %s1484
      %s1486 = sphi 0, %s1484
      %s1487 = sphi 0, %s1486
      %s1501 = sphi 0, %s1487
      %s1507 = sphi 0, %s1509
      %s1510 = sphi 0, %s1507
      %s1511 = sphi 0, %s1510
      %s1527 = sphi 0, %s1511
    $region4: #{forward.1} parent=1 // loop_header_branch
      %151 = sbr.rel (%p149) target = $region8
    $region5: #{forward.1} parent=1 // loop_body
      %s153 = ssub.s32 %s148, 1
      %s154 = ssub.s32 %s148, 2
      %s155 = sadd.s32 %s148, 1
      %s156 = ssub.s32 %s148, %s155
      %p157 = scmp.eq.s32.totalorder %s156, 0
      %s159 = sadd.s32 %s158, 1
      %s160 = scalar_select %p157, %s158, %s159
      %p163 = pneg %p157
      %p164 = scmp.eq.s32.totalorder %s148, 1
      %p165 = por %p163, %p164
      %p166 = scmp.ne.s32.totalorder %s158, %s161
      %p167 = scmp.eq.s32.totalorder %s148, 0
      %p168 = por %p166, %p167
      %p169 = scmp.ne.s32.totalorder %s158, %s161
      %p170 = scmp.eq.s32.totalorder %s153, 1
      %p171 = por %p169, %p170
      %p172 = scmp.ne.s32.totalorder %s161, %s162
      %p173 = scmp.eq.s32.totalorder %s153, 0
      %p174 = por %p172, %p173
      %p175 = scmp.ne.s32.totalorder %s161, %s162
      %p176 = scmp.eq.s32.totalorder %s154, 1
      %p177 = por %p175, %p176
      %p179 = scmp.ne.s32.totalorder %s162, %s178
      %p180 = scmp.eq.s32.totalorder %s154, 0
      %p181 = por %p179, %p180
      %s183 = sadd.s32 %s182, 1
      %p186 = scmp.eq.s32.totalorder %s148, 1
      %p187 = scmp.ne.s32.totalorder %s182, %s184
      %p188 = scmp.eq.s32.totalorder %s148, 0
      %p189 = por %p187, %p188
      %p190 = scmp.ne.s32.totalorder %s182, %s184
      %p191 = scmp.eq.s32.totalorder %s153, 1
      %p192 = por %p190, %p191
      %p193 = scmp.ne.s32.totalorder %s184, %s185
      %p194 = scmp.eq.s32.totalorder %s153, 0
      %p195 = por %p193, %p194
      %p196 = scmp.ne.s32.totalorder %s184, %s185
      %p197 = scmp.eq.s32.totalorder %s154, 1
      %p198 = por %p196, %p197
      %p200 = scmp.ne.s32.totalorder %s185, %s199
      %p201 = scmp.eq.s32.totalorder %s154, 0
      %p202 = por %p200, %p201
      %s204 = sadd.s32 %s203, 1
      %p207 = scmp.eq.s32.totalorder %s148, 1
      %p208 = scmp.ne.s32.totalorder %s203, %s205
      %p209 = scmp.eq.s32.totalorder %s148, 0
      %p210 = por %p208, %p209
      %p211 = scmp.ne.s32.totalorder %s203, %s205
      %p212 = scmp.eq.s32.totalorder %s153, 1
      %p213 = por %p211, %p212
      %p214 = scmp.ne.s32.totalorder %s205, %s206
      %p215 = scmp.eq.s32.totalorder %s153, 0
      %p216 = por %p214, %p215
      %p217 = scmp.ne.s32.totalorder %s205, %s206
      %p218 = scmp.eq.s32.totalorder %s154, 1
      %p219 = por %p217, %p218
      %p221 = scmp.ne.s32.totalorder %s206, %s220
      %p222 = scmp.eq.s32.totalorder %s154, 0
      %p223 = por %p221, %p222
      %s225 = sadd.s32 %s224, 1
      %p228 = scmp.eq.s32.totalorder %s148, 1
      %p229 = scmp.ne.s32.totalorder %s224, %s226
      %p230 = scmp.eq.s32.totalorder %s148, 0
      %p231 = por %p229, %p230
      %p232 = scmp.ne.s32.totalorder %s224, %s226
      %p233 = scmp.eq.s32.totalorder %s153, 1
      %p234 = por %p232, %p233
      %p235 = scmp.ne.s32.totalorder %s226, %s227
      %p236 = scmp.eq.s32.totalorder %s153, 0
      %p237 = por %p235, %p236
      %p238 = scmp.ne.s32.totalorder %s226, %s227
      %p239 = scmp.eq.s32.totalorder %s154, 1
      %p240 = por %p238, %p239
      %p242 = scmp.ne.s32.totalorder %s227, %s241
      %p243 = scmp.eq.s32.totalorder %s154, 0
      %p244 = por %p242, %p243
      %s246 = sadd.s32 %s245, 1
      %p249 = scmp.eq.s32.totalorder %s148, 1
      %p250 = scmp.ne.s32.totalorder %s245, %s247
      %p251 = scmp.eq.s32.totalorder %s148, 0
      %p252 = por %p250, %p251
      %p253 = scmp.ne.s32.totalorder %s245, %s247
      %p254 = scmp.eq.s32.totalorder %s153, 1
      %p255 = por %p253, %p254
      %p256 = scmp.ne.s32.totalorder %s247, %s248
      %p257 = scmp.eq.s32.totalorder %s153, 0
      %p258 = por %p256, %p257
      %p259 = scmp.ne.s32.totalorder %s247, %s248
      %p260 = scmp.eq.s32.totalorder %s154, 1
      %p261 = por %p259, %p260
      %p263 = scmp.ne.s32.totalorder %s248, %s262
      %p264 = scmp.eq.s32.totalorder %s154, 0
      %p265 = por %p263, %p264
      %s267 = sadd.s32 %s266, 1
      %p270 = scmp.eq.s32.totalorder %s148, 1
      %p271 = scmp.ne.s32.totalorder %s266, %s268
      %p272 = scmp.eq.s32.totalorder %s148, 0
      %p273 = por %p271, %p272
      %p274 = scmp.ne.s32.totalorder %s266, %s268
      %p275 = scmp.eq.s32.totalorder %s153, 1
      %p276 = por %p274, %p275
      %p277 = scmp.ne.s32.totalorder %s268, %s269
      %p278 = scmp.eq.s32.totalorder %s153, 0
      %p279 = por %p277, %p278
      %p280 = scmp.ne.s32.totalorder %s268, %s269
      %p281 = scmp.eq.s32.totalorder %s154, 1
      %p282 = por %p280, %p281
      %p284 = scmp.ne.s32.totalorder %s269, %s283
      %p285 = scmp.eq.s32.totalorder %s154, 0
      %p286 = por %p284, %p285
      %s288 = sadd.s32 %s287, 1
      %p291 = scmp.eq.s32.totalorder %s148, 1
      %p292 = scmp.ne.s32.totalorder %s287, %s289
      %p293 = scmp.eq.s32.totalorder %s148, 0
      %p294 = por %p292, %p293
      %p295 = scmp.ne.s32.totalorder %s287, %s289
      %p296 = scmp.eq.s32.totalorder %s153, 1
      %p297 = por %p295, %p296
      %p298 = scmp.ne.s32.totalorder %s289, %s290
      %p299 = scmp.eq.s32.totalorder %s153, 0
      %p300 = por %p298, %p299
      %p301 = scmp.ne.s32.totalorder %s289, %s290
      %p302 = scmp.eq.s32.totalorder %s154, 1
      %p303 = por %p301, %p302
      %p305 = scmp.ne.s32.totalorder %s290, %s304
      %p306 = scmp.eq.s32.totalorder %s154, 0
      %p307 = por %p305, %p306
      %s309 = sadd.s32 %s308, 1
      %p312 = scmp.eq.s32.totalorder %s148, 1
      %p313 = scmp.ne.s32.totalorder %s308, %s310
      %p314 = scmp.eq.s32.totalorder %s148, 0
      %p315 = por %p313, %p314
      %p316 = scmp.ne.s32.totalorder %s308, %s310
      %p317 = scmp.eq.s32.totalorder %s153, 1
      %p318 = por %p316, %p317
      %p319 = scmp.ne.s32.totalorder %s310, %s311
      %p320 = scmp.eq.s32.totalorder %s153, 0
      %p321 = por %p319, %p320
      %p322 = scmp.ne.s32.totalorder %s310, %s311
      %p323 = scmp.eq.s32.totalorder %s154, 1
      %p324 = por %p322, %p323
      %p326 = scmp.ne.s32.totalorder %s311, %s325
      %p327 = scmp.eq.s32.totalorder %s154, 0
      %p328 = por %p326, %p327
      %s330 = sadd.s32 %s329, 1
      %p333 = scmp.eq.s32.totalorder %s148, 1
      %p334 = scmp.ne.s32.totalorder %s329, %s331
      %p335 = scmp.eq.s32.totalorder %s148, 0
      %p336 = por %p334, %p335
      %p337 = scmp.ne.s32.totalorder %s329, %s331
      %p338 = scmp.eq.s32.totalorder %s153, 1
      %p339 = por %p337, %p338
      %p340 = scmp.ne.s32.totalorder %s331, %s332
      %p341 = scmp.eq.s32.totalorder %s153, 0
      %p342 = por %p340, %p341
      %p343 = scmp.ne.s32.totalorder %s331, %s332
      %p344 = scmp.eq.s32.totalorder %s154, 1
      %p345 = por %p343, %p344
      %p347 = scmp.ne.s32.totalorder %s332, %s346
      %p348 = scmp.eq.s32.totalorder %s154, 0
      %p349 = por %p347, %p348
      %s351 = sadd.s32 %s350, 1
      %p354 = scmp.eq.s32.totalorder %s148, 1
      %p355 = scmp.ne.s32.totalorder %s350, %s352
      %p356 = scmp.eq.s32.totalorder %s148, 0
      %p357 = por %p355, %p356
      %p358 = scmp.ne.s32.totalorder %s350, %s352
      %p359 = scmp.eq.s32.totalorder %s153, 1
      %p360 = por %p358, %p359
      %p361 = scmp.ne.s32.totalorder %s352, %s353
      %p362 = scmp.eq.s32.totalorder %s153, 0
      %p363 = por %p361, %p362
      %p364 = scmp.ne.s32.totalorder %s352, %s353
      %p365 = scmp.eq.s32.totalorder %s154, 1
      %p366 = por %p364, %p365
      %p368 = scmp.ne.s32.totalorder %s353, %s367
      %p369 = scmp.eq.s32.totalorder %s154, 0
      %p370 = por %p368, %p369
      %s372 = sadd.s32 %s371, 1
      %p375 = scmp.eq.s32.totalorder %s148, 1
      %p376 = scmp.ne.s32.totalorder %s371, %s373
      %p377 = scmp.eq.s32.totalorder %s148, 0
      %p378 = por %p376, %p377
      %p379 = scmp.ne.s32.totalorder %s371, %s373
      %p380 = scmp.eq.s32.totalorder %s153, 1
      %p381 = por %p379, %p380
      %p382 = scmp.ne.s32.totalorder %s373, %s374
      %p383 = scmp.eq.s32.totalorder %s153, 0
      %p384 = por %p382, %p383
      %p385 = scmp.ne.s32.totalorder %s373, %s374
      %p386 = scmp.eq.s32.totalorder %s154, 1
      %p387 = por %p385, %p386
      %p389 = scmp.ne.s32.totalorder %s374, %s388
      %p390 = scmp.eq.s32.totalorder %s154, 0
      %p391 = por %p389, %p390
      %s393 = sadd.s32 %s392, 1
      %p396 = scmp.eq.s32.totalorder %s148, 1
      %p397 = scmp.ne.s32.totalorder %s392, %s394
      %p398 = scmp.eq.s32.totalorder %s148, 0
      %p399 = por %p397, %p398
      %p400 = scmp.ne.s32.totalorder %s392, %s394
      %p401 = scmp.eq.s32.totalorder %s153, 1
      %p402 = por %p400, %p401
      %p403 = scmp.ne.s32.totalorder %s394, %s395
      %p404 = scmp.eq.s32.totalorder %s153, 0
      %p405 = por %p403, %p404
      %p406 = scmp.ne.s32.totalorder %s394, %s395
      %p407 = scmp.eq.s32.totalorder %s154, 1
      %p408 = por %p406, %p407
      %p410 = scmp.ne.s32.totalorder %s395, %s409
      %p411 = scmp.eq.s32.totalorder %s154, 0
      %p412 = por %p410, %p411
      %s414 = sadd.s32 %s413, 1
      %p417 = scmp.eq.s32.totalorder %s148, 1
      %p418 = scmp.ne.s32.totalorder %s413, %s415
      %p419 = scmp.eq.s32.totalorder %s148, 0
      %p420 = por %p418, %p419
      %p421 = scmp.ne.s32.totalorder %s413, %s415
      %p422 = scmp.eq.s32.totalorder %s153, 1
      %p423 = por %p421, %p422
      %p424 = scmp.ne.s32.totalorder %s415, %s416
      %p425 = scmp.eq.s32.totalorder %s153, 0
      %p426 = por %p424, %p425
      %p427 = scmp.ne.s32.totalorder %s415, %s416
      %p428 = scmp.eq.s32.totalorder %s154, 1
      %p429 = por %p427, %p428
      %p431 = scmp.ne.s32.totalorder %s416, %s430
      %p432 = scmp.eq.s32.totalorder %s154, 0
      %p433 = por %p431, %p432
      %s435 = sadd.s32 %s434, 1
      %p438 = scmp.eq.s32.totalorder %s148, 1
      %p439 = scmp.ne.s32.totalorder %s434, %s436
      %p440 = scmp.eq.s32.totalorder %s148, 0
      %p441 = por %p439, %p440
      %p442 = scmp.ne.s32.totalorder %s434, %s436
      %p443 = scmp.eq.s32.totalorder %s153, 1
      %p444 = por %p442, %p443
      %p445 = scmp.ne.s32.totalorder %s436, %s437
      %p446 = scmp.eq.s32.totalorder %s153, 0
      %p447 = por %p445, %p446
      %p448 = scmp.ne.s32.totalorder %s436, %s437
      %p449 = scmp.eq.s32.totalorder %s154, 1
      %p450 = por %p448, %p449
      %p452 = scmp.ne.s32.totalorder %s437, %s451
      %p453 = scmp.eq.s32.totalorder %s154, 0
      %p454 = por %p452, %p453
      %s456 = sadd.s32 %s455, 1
      %p459 = scmp.eq.s32.totalorder %s148, 1
      %p460 = scmp.ne.s32.totalorder %s455, %s457
      %p461 = scmp.eq.s32.totalorder %s148, 0
      %p462 = por %p460, %p461
      %p463 = scmp.ne.s32.totalorder %s455, %s457
      %p464 = scmp.eq.s32.totalorder %s153, 1
      %p465 = por %p463, %p464
      %p466 = scmp.ne.s32.totalorder %s457, %s458
      %p467 = scmp.eq.s32.totalorder %s153, 0
      %p468 = por %p466, %p467
      %p469 = scmp.ne.s32.totalorder %s457, %s458
      %p470 = scmp.eq.s32.totalorder %s154, 1
      %p471 = por %p469, %p470
      %p473 = scmp.ne.s32.totalorder %s458, %s472
      %p474 = scmp.eq.s32.totalorder %s154, 0
      %p475 = por %p473, %p474
      %s477 = sadd.s32 %s476, 1
      %p480 = scmp.eq.s32.totalorder %s148, 1
      %p481 = scmp.ne.s32.totalorder %s476, %s478
      %p482 = scmp.eq.s32.totalorder %s148, 0
      %p483 = por %p481, %p482
      %p484 = scmp.ne.s32.totalorder %s476, %s478
      %p485 = scmp.eq.s32.totalorder %s153, 1
      %p486 = por %p484, %p485
      %p487 = scmp.ne.s32.totalorder %s478, %s479
      %p488 = scmp.eq.s32.totalorder %s153, 0
      %p489 = por %p487, %p488
      %p490 = scmp.ne.s32.totalorder %s478, %s479
      %p491 = scmp.eq.s32.totalorder %s154, 1
      %p492 = por %p490, %p491
      %p494 = scmp.ne.s32.totalorder %s479, %s493
      %p495 = scmp.eq.s32.totalorder %s154, 0
      %p496 = por %p494, %p495
      %s498 = sadd.s32 %s497, 1
      %p501 = scmp.eq.s32.totalorder %s148, 1
      %p502 = scmp.ne.s32.totalorder %s497, %s499
      %p503 = scmp.eq.s32.totalorder %s148, 0
      %p504 = por %p502, %p503
      %p505 = scmp.ne.s32.totalorder %s497, %s499
      %p506 = scmp.eq.s32.totalorder %s153, 1
      %p507 = por %p505, %p506
      %p508 = scmp.ne.s32.totalorder %s499, %s500
      %p509 = scmp.eq.s32.totalorder %s153, 0
      %p510 = por %p508, %p509
      %p511 = scmp.ne.s32.totalorder %s499, %s500
      %p512 = scmp.eq.s32.totalorder %s154, 1
      %p513 = por %p511, %p512
      %p515 = scmp.ne.s32.totalorder %s500, %s514
      %p516 = scmp.eq.s32.totalorder %s154, 0
      %p517 = por %p515, %p516
      %s519 = sadd.s32 %s518, 1
      %p522 = scmp.eq.s32.totalorder %s148, 1
      %p523 = scmp.ne.s32.totalorder %s518, %s520
      %p524 = scmp.eq.s32.totalorder %s148, 0
      %p525 = por %p523, %p524
      %p526 = scmp.ne.s32.totalorder %s518, %s520
      %p527 = scmp.eq.s32.totalorder %s153, 1
      %p528 = por %p526, %p527
      %p529 = scmp.ne.s32.totalorder %s520, %s521
      %p530 = scmp.eq.s32.totalorder %s153, 0
      %p531 = por %p529, %p530
      %p532 = scmp.ne.s32.totalorder %s520, %s521
      %p533 = scmp.eq.s32.totalorder %s154, 1
      %p534 = por %p532, %p533
      %p536 = scmp.ne.s32.totalorder %s521, %s535
      %p537 = scmp.eq.s32.totalorder %s154, 0
      %p538 = por %p536, %p537
      %s540 = sadd.s32 %s539, 1
      %p543 = scmp.eq.s32.totalorder %s148, 1
      %p544 = scmp.ne.s32.totalorder %s539, %s541
      %p545 = scmp.eq.s32.totalorder %s148, 0
      %p546 = por %p544, %p545
      %p547 = scmp.ne.s32.totalorder %s539, %s541
      %p548 = scmp.eq.s32.totalorder %s153, 1
      %p549 = por %p547, %p548
      %p550 = scmp.ne.s32.totalorder %s541, %s542
      %p551 = scmp.eq.s32.totalorder %s153, 0
      %p552 = por %p550, %p551
      %p553 = scmp.ne.s32.totalorder %s541, %s542
      %p554 = scmp.eq.s32.totalorder %s154, 1
      %p555 = por %p553, %p554
      %p557 = scmp.ne.s32.totalorder %s542, %s556
      %p558 = scmp.eq.s32.totalorder %s154, 0
      %p559 = por %p557, %p558
      %s561 = sadd.s32 %s560, 1
      %p564 = scmp.eq.s32.totalorder %s148, 1
      %p565 = scmp.ne.s32.totalorder %s560, %s562
      %p566 = scmp.eq.s32.totalorder %s148, 0
      %p567 = por %p565, %p566
      %p568 = scmp.ne.s32.totalorder %s560, %s562
      %p569 = scmp.eq.s32.totalorder %s153, 1
      %p570 = por %p568, %p569
      %p571 = scmp.ne.s32.totalorder %s562, %s563
      %p572 = scmp.eq.s32.totalorder %s153, 0
      %p573 = por %p571, %p572
      %p574 = scmp.ne.s32.totalorder %s562, %s563
      %p575 = scmp.eq.s32.totalorder %s154, 1
      %p576 = por %p574, %p575
      %p578 = scmp.ne.s32.totalorder %s563, %s577
      %p579 = scmp.eq.s32.totalorder %s154, 0
      %p580 = por %p578, %p579
      %s582 = sadd.s32 %s581, 1
      %p585 = scmp.eq.s32.totalorder %s148, 1
      %p586 = scmp.ne.s32.totalorder %s581, %s583
      %p587 = scmp.eq.s32.totalorder %s148, 0
      %p588 = por %p586, %p587
      %p589 = scmp.ne.s32.totalorder %s581, %s583
      %p590 = scmp.eq.s32.totalorder %s153, 1
      %p591 = por %p589, %p590
      %p592 = scmp.ne.s32.totalorder %s583, %s584
      %p593 = scmp.eq.s32.totalorder %s153, 0
      %p594 = por %p592, %p593
      %p595 = scmp.ne.s32.totalorder %s583, %s584
      %p596 = scmp.eq.s32.totalorder %s154, 1
      %p597 = por %p595, %p596
      %p599 = scmp.ne.s32.totalorder %s584, %s598
      %p600 = scmp.eq.s32.totalorder %s154, 0
      %p601 = por %p599, %p600
      %s603 = sadd.s32 %s602, 1
      %p606 = scmp.eq.s32.totalorder %s148, 1
      %p607 = scmp.ne.s32.totalorder %s602, %s604
      %p608 = scmp.eq.s32.totalorder %s148, 0
      %p609 = por %p607, %p608
      %p610 = scmp.ne.s32.totalorder %s602, %s604
      %p611 = scmp.eq.s32.totalorder %s153, 1
      %p612 = por %p610, %p611
      %p613 = scmp.ne.s32.totalorder %s604, %s605
      %p614 = scmp.eq.s32.totalorder %s153, 0
      %p615 = por %p613, %p614
      %p616 = scmp.ne.s32.totalorder %s604, %s605
      %p617 = scmp.eq.s32.totalorder %s154, 1
      %p618 = por %p616, %p617
      %p620 = scmp.ne.s32.totalorder %s605, %s619
      %p621 = scmp.eq.s32.totalorder %s154, 0
      %p622 = por %p620, %p621
      %s624 = sadd.s32 %s623, 1
      %p627 = scmp.eq.s32.totalorder %s148, 1
      %p628 = scmp.ne.s32.totalorder %s623, %s625
      %p629 = scmp.eq.s32.totalorder %s148, 0
      %p630 = por %p628, %p629
      %p631 = scmp.ne.s32.totalorder %s623, %s625
      %p632 = scmp.eq.s32.totalorder %s153, 1
      %p633 = por %p631, %p632
      %p634 = scmp.ne.s32.totalorder %s625, %s626
      %p635 = scmp.eq.s32.totalorder %s153, 0
      %p636 = por %p634, %p635
      %p637 = scmp.ne.s32.totalorder %s625, %s626
      %p638 = scmp.eq.s32.totalorder %s154, 1
      %p639 = por %p637, %p638
      %p641 = scmp.ne.s32.totalorder %s626, %s640
      %p642 = scmp.eq.s32.totalorder %s154, 0
      %p643 = por %p641, %p642
      %s645 = sadd.s32 %s644, 1
      %p648 = scmp.eq.s32.totalorder %s148, 1
      %p649 = scmp.ne.s32.totalorder %s644, %s646
      %p650 = scmp.eq.s32.totalorder %s148, 0
      %p651 = por %p649, %p650
      %p652 = scmp.ne.s32.totalorder %s644, %s646
      %p653 = scmp.eq.s32.totalorder %s153, 1
      %p654 = por %p652, %p653
      %p655 = scmp.ne.s32.totalorder %s646, %s647
      %p656 = scmp.eq.s32.totalorder %s153, 0
      %p657 = por %p655, %p656
      %p658 = scmp.ne.s32.totalorder %s646, %s647
      %p659 = scmp.eq.s32.totalorder %s154, 1
      %p660 = por %p658, %p659
      %p662 = scmp.ne.s32.totalorder %s647, %s661
      %p663 = scmp.eq.s32.totalorder %s154, 0
      %p664 = por %p662, %p663
      %s666 = sadd.s32 %s665, 1
      %p669 = scmp.eq.s32.totalorder %s148, 1
      %p670 = scmp.ne.s32.totalorder %s665, %s667
      %p671 = scmp.eq.s32.totalorder %s148, 0
      %p672 = por %p670, %p671
      %p673 = scmp.ne.s32.totalorder %s665, %s667
      %p674 = scmp.eq.s32.totalorder %s153, 1
      %p675 = por %p673, %p674
      %p676 = scmp.ne.s32.totalorder %s667, %s668
      %p677 = scmp.eq.s32.totalorder %s153, 0
      %p678 = por %p676, %p677
      %p679 = scmp.ne.s32.totalorder %s667, %s668
      %p680 = scmp.eq.s32.totalorder %s154, 1
      %p681 = por %p679, %p680
      %p683 = scmp.ne.s32.totalorder %s668, %s682
      %p684 = scmp.eq.s32.totalorder %s154, 0
      %p685 = por %p683, %p684
      %s687 = sadd.s32 %s686, 1
      %p690 = scmp.eq.s32.totalorder %s148, 1
      %p691 = scmp.ne.s32.totalorder %s686, %s688
      %p692 = scmp.eq.s32.totalorder %s148, 0
      %p693 = por %p691, %p692
      %p694 = scmp.ne.s32.totalorder %s686, %s688
      %p695 = scmp.eq.s32.totalorder %s153, 1
      %p696 = por %p694, %p695
      %p697 = scmp.ne.s32.totalorder %s688, %s689
      %p698 = scmp.eq.s32.totalorder %s153, 0
      %p699 = por %p697, %p698
      %p700 = scmp.ne.s32.totalorder %s688, %s689
      %p701 = scmp.eq.s32.totalorder %s154, 1
      %p702 = por %p700, %p701
      %p704 = scmp.ne.s32.totalorder %s689, %s703
      %p705 = scmp.eq.s32.totalorder %s154, 0
      %p706 = por %p704, %p705
      %s708 = sadd.s32 %s707, 1
      %p711 = scmp.eq.s32.totalorder %s148, 1
      %p712 = scmp.ne.s32.totalorder %s707, %s709
      %p713 = scmp.eq.s32.totalorder %s148, 0
      %p714 = por %p712, %p713
      %p715 = scmp.ne.s32.totalorder %s707, %s709
      %p716 = scmp.eq.s32.totalorder %s153, 1
      %p717 = por %p715, %p716
      %p718 = scmp.ne.s32.totalorder %s709, %s710
      %p719 = scmp.eq.s32.totalorder %s153, 0
      %p720 = por %p718, %p719
      %p721 = scmp.ne.s32.totalorder %s709, %s710
      %p722 = scmp.eq.s32.totalorder %s154, 1
      %p723 = por %p721, %p722
      %p725 = scmp.ne.s32.totalorder %s710, %s724
      %p726 = scmp.eq.s32.totalorder %s154, 0
      %p727 = por %p725, %p726
      %s729 = sadd.s32 %s728, 1
      %p732 = scmp.eq.s32.totalorder %s148, 1
      %p733 = scmp.ne.s32.totalorder %s728, %s730
      %p734 = scmp.eq.s32.totalorder %s148, 0
      %p735 = por %p733, %p734
      %p736 = scmp.ne.s32.totalorder %s728, %s730
      %p737 = scmp.eq.s32.totalorder %s153, 1
      %p738 = por %p736, %p737
      %p739 = scmp.ne.s32.totalorder %s730, %s731
      %p740 = scmp.eq.s32.totalorder %s153, 0
      %p741 = por %p739, %p740
      %p742 = scmp.ne.s32.totalorder %s730, %s731
      %p743 = scmp.eq.s32.totalorder %s154, 1
      %p744 = por %p742, %p743
      %p746 = scmp.ne.s32.totalorder %s731, %s745
      %p747 = scmp.eq.s32.totalorder %s154, 0
      %p748 = por %p746, %p747
      %s750 = sadd.s32 %s749, 1
      %p753 = scmp.eq.s32.totalorder %s148, 1
      %p754 = scmp.ne.s32.totalorder %s749, %s751
      %p755 = scmp.eq.s32.totalorder %s148, 0
      %p756 = por %p754, %p755
      %p757 = scmp.ne.s32.totalorder %s749, %s751
      %p758 = scmp.eq.s32.totalorder %s153, 1
      %p759 = por %p757, %p758
      %p760 = scmp.ne.s32.totalorder %s751, %s752
      %p761 = scmp.eq.s32.totalorder %s153, 0
      %p762 = por %p760, %p761
      %p763 = scmp.ne.s32.totalorder %s751, %s752
      %p764 = scmp.eq.s32.totalorder %s154, 1
      %p765 = por %p763, %p764
      %p767 = scmp.ne.s32.totalorder %s752, %s766
      %p768 = scmp.eq.s32.totalorder %s154, 0
      %p769 = por %p767, %p768
      %s771 = sadd.s32 %s770, 1
      %p774 = scmp.eq.s32.totalorder %s148, 1
      %p775 = scmp.ne.s32.totalorder %s770, %s772
      %p776 = scmp.eq.s32.totalorder %s148, 0
      %p777 = por %p775, %p776
      %p778 = scmp.ne.s32.totalorder %s770, %s772
      %p779 = scmp.eq.s32.totalorder %s153, 1
      %p780 = por %p778, %p779
      %p781 = scmp.ne.s32.totalorder %s772, %s773
      %p782 = scmp.eq.s32.totalorder %s153, 0
      %p783 = por %p781, %p782
      %p784 = scmp.ne.s32.totalorder %s772, %s773
      %p785 = scmp.eq.s32.totalorder %s154, 1
      %p786 = por %p784, %p785
      %p788 = scmp.ne.s32.totalorder %s773, %s787
      %p789 = scmp.eq.s32.totalorder %s154, 0
      %p790 = por %p788, %p789
      %s792 = sadd.s32 %s791, 1
      %p795 = scmp.eq.s32.totalorder %s148, 1
      %p796 = scmp.ne.s32.totalorder %s791, %s793
      %p797 = scmp.eq.s32.totalorder %s148, 0
      %p798 = por %p796, %p797
      %p799 = scmp.ne.s32.totalorder %s791, %s793
      %p800 = scmp.eq.s32.totalorder %s153, 1
      %p801 = por %p799, %p800
      %p802 = scmp.ne.s32.totalorder %s793, %s794
      %p803 = scmp.eq.s32.totalorder %s153, 0
      %p804 = por %p802, %p803
      %p805 = scmp.ne.s32.totalorder %s793, %s794
      %p806 = scmp.eq.s32.totalorder %s154, 1
      %p807 = por %p805, %p806
      %p809 = scmp.ne.s32.totalorder %s794, %s808
      %p810 = scmp.eq.s32.totalorder %s154, 0
      %p811 = por %p809, %p810
      %s813 = sadd.s32 %s812, 1
      %p816 = scmp.eq.s32.totalorder %s148, 1
      %p817 = scmp.ne.s32.totalorder %s812, %s814
      %p818 = scmp.eq.s32.totalorder %s148, 0
      %p819 = por %p817, %p818
      %p820 = scmp.ne.s32.totalorder %s812, %s814
      %p821 = scmp.eq.s32.totalorder %s153, 1
      %p822 = por %p820, %p821
      %p823 = scmp.ne.s32.totalorder %s814, %s815
      %p824 = scmp.eq.s32.totalorder %s153, 0
      %p825 = por %p823, %p824
      %p826 = scmp.ne.s32.totalorder %s814, %s815
      %p827 = scmp.eq.s32.totalorder %s154, 1
      %p828 = por %p826, %p827
      %p830 = scmp.ne.s32.totalorder %s815, %s829
      %p831 = scmp.eq.s32.totalorder %s154, 0
      %p832 = por %p830, %p831
      %s834 = sadd.s32 %s833, 1
      %p837 = scmp.eq.s32.totalorder %s148, 1
      %p838 = scmp.ne.s32.totalorder %s833, %s835
      %p839 = scmp.eq.s32.totalorder %s148, 0
      %p840 = por %p838, %p839
      %p841 = scmp.ne.s32.totalorder %s833, %s835
      %p842 = scmp.eq.s32.totalorder %s153, 1
      %p843 = por %p841, %p842
      %p844 = scmp.ne.s32.totalorder %s835, %s836
      %p845 = scmp.eq.s32.totalorder %s153, 0
      %p846 = por %p844, %p845
      %p847 = scmp.ne.s32.totalorder %s835, %s836
      %p848 = scmp.eq.s32.totalorder %s154, 1
      %p849 = por %p847, %p848
      %p851 = scmp.ne.s32.totalorder %s836, %s850
      %p852 = scmp.eq.s32.totalorder %s154, 0
      %p853 = por %p851, %p852
      %s855 = sadd.s32 %s854, 1
      %p858 = scmp.eq.s32.totalorder %s148, 1
      %p859 = scmp.ne.s32.totalorder %s854, %s856
      %p860 = scmp.eq.s32.totalorder %s148, 0
      %p861 = por %p859, %p860
      %p862 = scmp.ne.s32.totalorder %s854, %s856
      %p863 = scmp.eq.s32.totalorder %s153, 1
      %p864 = por %p862, %p863
      %p865 = scmp.ne.s32.totalorder %s856, %s857
      %p866 = scmp.eq.s32.totalorder %s153, 0
      %p867 = por %p865, %p866
      %p868 = scmp.ne.s32.totalorder %s856, %s857
      %p869 = scmp.eq.s32.totalorder %s154, 1
      %p870 = por %p868, %p869
      %p872 = scmp.ne.s32.totalorder %s857, %s871
      %p873 = scmp.eq.s32.totalorder %s154, 0
      %p874 = por %p872, %p873
      %s876 = sadd.s32 %s875, 1
      %p879 = scmp.eq.s32.totalorder %s148, 1
      %p880 = scmp.ne.s32.totalorder %s875, %s877
      %p881 = scmp.eq.s32.totalorder %s148, 0
      %p882 = por %p880, %p881
      %p883 = scmp.ne.s32.totalorder %s875, %s877
      %p884 = scmp.eq.s32.totalorder %s153, 1
      %p885 = por %p883, %p884
      %p886 = scmp.ne.s32.totalorder %s877, %s878
      %p887 = scmp.eq.s32.totalorder %s153, 0
      %p888 = por %p886, %p887
      %p889 = scmp.ne.s32.totalorder %s877, %s878
      %p890 = scmp.eq.s32.totalorder %s154, 1
      %p891 = por %p889, %p890
      %p893 = scmp.ne.s32.totalorder %s878, %s892
      %p894 = scmp.eq.s32.totalorder %s154, 0
      %p895 = por %p893, %p894
      %s897 = sadd.s32 %s896, 1
      %p900 = scmp.eq.s32.totalorder %s148, 1
      %p901 = scmp.ne.s32.totalorder %s896, %s898
      %p902 = scmp.eq.s32.totalorder %s148, 0
      %p903 = por %p901, %p902
      %p904 = scmp.ne.s32.totalorder %s896, %s898
      %p905 = scmp.eq.s32.totalorder %s153, 1
      %p906 = por %p904, %p905
      %p907 = scmp.ne.s32.totalorder %s898, %s899
      %p908 = scmp.eq.s32.totalorder %s153, 0
      %p909 = por %p907, %p908
      %p910 = scmp.ne.s32.totalorder %s898, %s899
      %p911 = scmp.eq.s32.totalorder %s154, 1
      %p912 = por %p910, %p911
      %p914 = scmp.ne.s32.totalorder %s899, %s913
      %p915 = scmp.eq.s32.totalorder %s154, 0
      %p916 = por %p914, %p915
      %s918 = sadd.s32 %s917, 1
      %p921 = scmp.eq.s32.totalorder %s148, 1
      %p922 = scmp.ne.s32.totalorder %s917, %s919
      %p923 = scmp.eq.s32.totalorder %s148, 0
      %p924 = por %p922, %p923
      %p925 = scmp.ne.s32.totalorder %s917, %s919
      %p926 = scmp.eq.s32.totalorder %s153, 1
      %p927 = por %p925, %p926
      %p928 = scmp.ne.s32.totalorder %s919, %s920
      %p929 = scmp.eq.s32.totalorder %s153, 0
      %p930 = por %p928, %p929
      %p931 = scmp.ne.s32.totalorder %s919, %s920
      %p932 = scmp.eq.s32.totalorder %s154, 1
      %p933 = por %p931, %p932
      %p935 = scmp.ne.s32.totalorder %s920, %s934
      %p936 = scmp.eq.s32.totalorder %s154, 0
      %p937 = por %p935, %p936
      %s939 = sadd.s32 %s938, 1
      %p942 = scmp.eq.s32.totalorder %s148, 1
      %p943 = scmp.ne.s32.totalorder %s938, %s940
      %p944 = scmp.eq.s32.totalorder %s148, 0
      %p945 = por %p943, %p944
      %p946 = scmp.ne.s32.totalorder %s938, %s940
      %p947 = scmp.eq.s32.totalorder %s153, 1
      %p948 = por %p946, %p947
      %p949 = scmp.ne.s32.totalorder %s940, %s941
      %p950 = scmp.eq.s32.totalorder %s153, 0
      %p951 = por %p949, %p950
      %p952 = scmp.ne.s32.totalorder %s940, %s941
      %p953 = scmp.eq.s32.totalorder %s154, 1
      %p954 = por %p952, %p953
      %p956 = scmp.ne.s32.totalorder %s941, %s955
      %p957 = scmp.eq.s32.totalorder %s154, 0
      %p958 = por %p956, %p957
      %s960 = sadd.s32 %s959, 1
      %p963 = scmp.eq.s32.totalorder %s148, 1
      %p964 = scmp.ne.s32.totalorder %s959, %s961
      %p965 = scmp.eq.s32.totalorder %s148, 0
      %p966 = por %p964, %p965
      %p967 = scmp.ne.s32.totalorder %s959, %s961
      %p968 = scmp.eq.s32.totalorder %s153, 1
      %p969 = por %p967, %p968
      %p970 = scmp.ne.s32.totalorder %s961, %s962
      %p971 = scmp.eq.s32.totalorder %s153, 0
      %p972 = por %p970, %p971
      %p973 = scmp.ne.s32.totalorder %s961, %s962
      %p974 = scmp.eq.s32.totalorder %s154, 1
      %p975 = por %p973, %p974
      %p977 = scmp.ne.s32.totalorder %s962, %s976
      %p978 = scmp.eq.s32.totalorder %s154, 0
      %p979 = por %p977, %p978
      %s981 = sadd.s32 %s980, 1
      %p984 = scmp.eq.s32.totalorder %s148, 1
      %p985 = scmp.ne.s32.totalorder %s980, %s982
      %p986 = scmp.eq.s32.totalorder %s148, 0
      %p987 = por %p985, %p986
      %p988 = scmp.ne.s32.totalorder %s980, %s982
      %p989 = scmp.eq.s32.totalorder %s153, 1
      %p990 = por %p988, %p989
      %p991 = scmp.ne.s32.totalorder %s982, %s983
      %p992 = scmp.eq.s32.totalorder %s153, 0
      %p993 = por %p991, %p992
      %p994 = scmp.ne.s32.totalorder %s982, %s983
      %p995 = scmp.eq.s32.totalorder %s154, 1
      %p996 = por %p994, %p995
      %p998 = scmp.ne.s32.totalorder %s983, %s997
      %p999 = scmp.eq.s32.totalorder %s154, 0
      %p1000 = por %p998, %p999
      %s1002 = sadd.s32 %s1001, 1
      %p1005 = scmp.eq.s32.totalorder %s148, 1
      %p1006 = scmp.ne.s32.totalorder %s1001, %s1003
      %p1007 = scmp.eq.s32.totalorder %s148, 0
      %p1008 = por %p1006, %p1007
      %p1009 = scmp.ne.s32.totalorder %s1001, %s1003
      %p1010 = scmp.eq.s32.totalorder %s153, 1
      %p1011 = por %p1009, %p1010
      %p1012 = scmp.ne.s32.totalorder %s1003, %s1004
      %p1013 = scmp.eq.s32.totalorder %s153, 0
      %p1014 = por %p1012, %p1013
      %p1015 = scmp.ne.s32.totalorder %s1003, %s1004
      %p1016 = scmp.eq.s32.totalorder %s154, 1
      %p1017 = por %p1015, %p1016
      %p1019 = scmp.ne.s32.totalorder %s1004, %s1018
      %p1020 = scmp.eq.s32.totalorder %s154, 0
      %p1021 = por %p1019, %p1020
      %s1023 = sadd.s32 %s1022, 1
      %p1026 = scmp.eq.s32.totalorder %s148, 1
      %p1027 = scmp.ne.s32.totalorder %s1022, %s1024
      %p1028 = scmp.eq.s32.totalorder %s148, 0
      %p1029 = por %p1027, %p1028
      %p1030 = scmp.ne.s32.totalorder %s1022, %s1024
      %p1031 = scmp.eq.s32.totalorder %s153, 1
      %p1032 = por %p1030, %p1031
      %p1033 = scmp.ne.s32.totalorder %s1024, %s1025
      %p1034 = scmp.eq.s32.totalorder %s153, 0
      %p1035 = por %p1033, %p1034
      %p1036 = scmp.ne.s32.totalorder %s1024, %s1025
      %p1037 = scmp.eq.s32.totalorder %s154, 1
      %p1038 = por %p1036, %p1037
      %p1040 = scmp.ne.s32.totalorder %s1025, %s1039
      %p1041 = scmp.eq.s32.totalorder %s154, 0
      %p1042 = por %p1040, %p1041
      %s1044 = sadd.s32 %s1043, 1
      %p1047 = scmp.eq.s32.totalorder %s148, 1
      %p1048 = scmp.ne.s32.totalorder %s1043, %s1045
      %p1049 = scmp.eq.s32.totalorder %s148, 0
      %p1050 = por %p1048, %p1049
      %p1051 = scmp.ne.s32.totalorder %s1043, %s1045
      %p1052 = scmp.eq.s32.totalorder %s153, 1
      %p1053 = por %p1051, %p1052
      %p1054 = scmp.ne.s32.totalorder %s1045, %s1046
      %p1055 = scmp.eq.s32.totalorder %s153, 0
      %p1056 = por %p1054, %p1055
      %p1057 = scmp.ne.s32.totalorder %s1045, %s1046
      %p1058 = scmp.eq.s32.totalorder %s154, 1
      %p1059 = por %p1057, %p1058
      %p1061 = scmp.ne.s32.totalorder %s1046, %s1060
      %p1062 = scmp.eq.s32.totalorder %s154, 0
      %p1063 = por %p1061, %p1062
      %s1065 = sadd.s32 %s1064, 1
      %p1068 = scmp.eq.s32.totalorder %s148, 1
      %p1069 = scmp.ne.s32.totalorder %s1064, %s1066
      %p1070 = scmp.eq.s32.totalorder %s148, 0
      %p1071 = por %p1069, %p1070
      %p1072 = scmp.ne.s32.totalorder %s1064, %s1066
      %p1073 = scmp.eq.s32.totalorder %s153, 1
      %p1074 = por %p1072, %p1073
      %p1075 = scmp.ne.s32.totalorder %s1066, %s1067
      %p1076 = scmp.eq.s32.totalorder %s153, 0
      %p1077 = por %p1075, %p1076
      %p1078 = scmp.ne.s32.totalorder %s1066, %s1067
      %p1079 = scmp.eq.s32.totalorder %s154, 1
      %p1080 = por %p1078, %p1079
      %p1082 = scmp.ne.s32.totalorder %s1067, %s1081
      %p1083 = scmp.eq.s32.totalorder %s154, 0
      %p1084 = por %p1082, %p1083
      %s1086 = sadd.s32 %s1085, 1
      %p1089 = scmp.eq.s32.totalorder %s148, 1
      %p1090 = scmp.ne.s32.totalorder %s1085, %s1087
      %p1091 = scmp.eq.s32.totalorder %s148, 0
      %p1092 = por %p1090, %p1091
      %p1093 = scmp.ne.s32.totalorder %s1085, %s1087
      %p1094 = scmp.eq.s32.totalorder %s153, 1
      %p1095 = por %p1093, %p1094
      %p1096 = scmp.ne.s32.totalorder %s1087, %s1088
      %p1097 = scmp.eq.s32.totalorder %s153, 0
      %p1098 = por %p1096, %p1097
      %p1099 = scmp.ne.s32.totalorder %s1087, %s1088
      %p1100 = scmp.eq.s32.totalorder %s154, 1
      %p1101 = por %p1099, %p1100
      %p1103 = scmp.ne.s32.totalorder %s1088, %s1102
      %p1104 = scmp.eq.s32.totalorder %s154, 0
      %p1105 = por %p1103, %p1104
      %s1107 = sadd.s32 %s1106, 1
      %p1110 = scmp.eq.s32.totalorder %s148, 1
      %p1111 = scmp.ne.s32.totalorder %s1106, %s1108
      %p1112 = scmp.eq.s32.totalorder %s148, 0
      %p1113 = por %p1111, %p1112
      %p1114 = scmp.ne.s32.totalorder %s1106, %s1108
      %p1115 = scmp.eq.s32.totalorder %s153, 1
      %p1116 = por %p1114, %p1115
      %p1117 = scmp.ne.s32.totalorder %s1108, %s1109
      %p1118 = scmp.eq.s32.totalorder %s153, 0
      %p1119 = por %p1117, %p1118
      %p1120 = scmp.ne.s32.totalorder %s1108, %s1109
      %p1121 = scmp.eq.s32.totalorder %s154, 1
      %p1122 = por %p1120, %p1121
      %p1124 = scmp.ne.s32.totalorder %s1109, %s1123
      %p1125 = scmp.eq.s32.totalorder %s154, 0
      %p1126 = por %p1124, %p1125
      %s1128 = sadd.s32 %s1127, 1
      %p1131 = scmp.eq.s32.totalorder %s148, 1
      %p1132 = scmp.ne.s32.totalorder %s1127, %s1129
      %p1133 = scmp.eq.s32.totalorder %s148, 0
      %p1134 = por %p1132, %p1133
      %p1135 = scmp.ne.s32.totalorder %s1127, %s1129
      %p1136 = scmp.eq.s32.totalorder %s153, 1
      %p1137 = por %p1135, %p1136
      %p1138 = scmp.ne.s32.totalorder %s1129, %s1130
      %p1139 = scmp.eq.s32.totalorder %s153, 0
      %p1140 = por %p1138, %p1139
      %p1141 = scmp.ne.s32.totalorder %s1129, %s1130
      %p1142 = scmp.eq.s32.totalorder %s154, 1
      %p1143 = por %p1141, %p1142
      %p1145 = scmp.ne.s32.totalorder %s1130, %s1144
      %p1146 = scmp.eq.s32.totalorder %s154, 0
      %p1147 = por %p1145, %p1146
      %s1149 = sadd.s32 %s1148, 1
      %p1152 = scmp.eq.s32.totalorder %s148, 1
      %p1153 = scmp.ne.s32.totalorder %s1148, %s1150
      %p1154 = scmp.eq.s32.totalorder %s148, 0
      %p1155 = por %p1153, %p1154
      %p1156 = scmp.ne.s32.totalorder %s1148, %s1150
      %p1157 = scmp.eq.s32.totalorder %s153, 1
      %p1158 = por %p1156, %p1157
      %p1159 = scmp.ne.s32.totalorder %s1150, %s1151
      %p1160 = scmp.eq.s32.totalorder %s153, 0
      %p1161 = por %p1159, %p1160
      %p1162 = scmp.ne.s32.totalorder %s1150, %s1151
      %p1163 = scmp.eq.s32.totalorder %s154, 1
      %p1164 = por %p1162, %p1163
      %p1166 = scmp.ne.s32.totalorder %s1151, %s1165
      %p1167 = scmp.eq.s32.totalorder %s154, 0
      %p1168 = por %p1166, %p1167
      %s1170 = sadd.s32 %s1169, 1
      %p1173 = scmp.eq.s32.totalorder %s148, 1
      %p1174 = scmp.ne.s32.totalorder %s1169, %s1171
      %p1175 = scmp.eq.s32.totalorder %s148, 0
      %p1176 = por %p1174, %p1175
      %p1177 = scmp.ne.s32.totalorder %s1169, %s1171
      %p1178 = scmp.eq.s32.totalorder %s153, 1
      %p1179 = por %p1177, %p1178
      %p1180 = scmp.ne.s32.totalorder %s1171, %s1172
      %p1181 = scmp.eq.s32.totalorder %s153, 0
      %p1182 = por %p1180, %p1181
      %p1183 = scmp.ne.s32.totalorder %s1171, %s1172
      %p1184 = scmp.eq.s32.totalorder %s154, 1
      %p1185 = por %p1183, %p1184
      %p1187 = scmp.ne.s32.totalorder %s1172, %s1186
      %p1188 = scmp.eq.s32.totalorder %s154, 0
      %p1189 = por %p1187, %p1188
      %s1191 = sadd.s32 %s1190, 1
      %p1194 = scmp.eq.s32.totalorder %s148, 1
      %p1195 = scmp.ne.s32.totalorder %s1190, %s1192
      %p1196 = scmp.eq.s32.totalorder %s148, 0
      %p1197 = por %p1195, %p1196
      %p1198 = scmp.ne.s32.totalorder %s1190, %s1192
      %p1199 = scmp.eq.s32.totalorder %s153, 1
      %p1200 = por %p1198, %p1199
      %p1201 = scmp.ne.s32.totalorder %s1192, %s1193
      %p1202 = scmp.eq.s32.totalorder %s153, 0
      %p1203 = por %p1201, %p1202
      %p1204 = scmp.ne.s32.totalorder %s1192, %s1193
      %p1205 = scmp.eq.s32.totalorder %s154, 1
      %p1206 = por %p1204, %p1205
      %p1208 = scmp.ne.s32.totalorder %s1193, %s1207
      %p1209 = scmp.eq.s32.totalorder %s154, 0
      %p1210 = por %p1208, %p1209
      %s1212 = sadd.s32 %s1211, 1
      %p1215 = scmp.eq.s32.totalorder %s148, 1
      %p1216 = scmp.ne.s32.totalorder %s1211, %s1213
      %p1217 = scmp.eq.s32.totalorder %s148, 0
      %p1218 = por %p1216, %p1217
      %p1219 = scmp.ne.s32.totalorder %s1211, %s1213
      %p1220 = scmp.eq.s32.totalorder %s153, 1
      %p1221 = por %p1219, %p1220
      %p1222 = scmp.ne.s32.totalorder %s1213, %s1214
      %p1223 = scmp.eq.s32.totalorder %s153, 0
      %p1224 = por %p1222, %p1223
      %p1225 = scmp.ne.s32.totalorder %s1213, %s1214
      %p1226 = scmp.eq.s32.totalorder %s154, 1
      %p1227 = por %p1225, %p1226
      %p1229 = scmp.ne.s32.totalorder %s1214, %s1228
      %p1230 = scmp.eq.s32.totalorder %s154, 0
      %p1231 = por %p1229, %p1230
      %s1233 = sadd.s32 %s1232, 1
      %p1236 = scmp.eq.s32.totalorder %s148, 1
      %p1237 = scmp.ne.s32.totalorder %s1232, %s1234
      %p1238 = scmp.eq.s32.totalorder %s148, 0
      %p1239 = por %p1237, %p1238
      %p1240 = scmp.ne.s32.totalorder %s1232, %s1234
      %p1241 = scmp.eq.s32.totalorder %s153, 1
      %p1242 = por %p1240, %p1241
      %p1243 = scmp.ne.s32.totalorder %s1234, %s1235
      %p1244 = scmp.eq.s32.totalorder %s153, 0
      %p1245 = por %p1243, %p1244
      %p1246 = scmp.ne.s32.totalorder %s1234, %s1235
      %p1247 = scmp.eq.s32.totalorder %s154, 1
      %p1248 = por %p1246, %p1247
      %p1250 = scmp.ne.s32.totalorder %s1235, %s1249
      %p1251 = scmp.eq.s32.totalorder %s154, 0
      %p1252 = por %p1250, %p1251
      %s1254 = sadd.s32 %s1253, 1
      %p1257 = scmp.eq.s32.totalorder %s148, 1
      %p1258 = scmp.ne.s32.totalorder %s1253, %s1255
      %p1259 = scmp.eq.s32.totalorder %s148, 0
      %p1260 = por %p1258, %p1259
      %p1261 = scmp.ne.s32.totalorder %s1253, %s1255
      %p1262 = scmp.eq.s32.totalorder %s153, 1
      %p1263 = por %p1261, %p1262
      %p1264 = scmp.ne.s32.totalorder %s1255, %s1256
      %p1265 = scmp.eq.s32.totalorder %s153, 0
      %p1266 = por %p1264, %p1265
      %p1267 = scmp.ne.s32.totalorder %s1255, %s1256
      %p1268 = scmp.eq.s32.totalorder %s154, 1
      %p1269 = por %p1267, %p1268
      %p1271 = scmp.ne.s32.totalorder %s1256, %s1270
      %p1272 = scmp.eq.s32.totalorder %s154, 0
      %p1273 = por %p1271, %p1272
      %s1275 = sadd.s32 %s1274, 1
      %p1278 = scmp.eq.s32.totalorder %s148, 1
      %p1279 = scmp.ne.s32.totalorder %s1274, %s1276
      %p1280 = scmp.eq.s32.totalorder %s148, 0
      %p1281 = por %p1279, %p1280
      %p1282 = scmp.ne.s32.totalorder %s1274, %s1276
      %p1283 = scmp.eq.s32.totalorder %s153, 1
      %p1284 = por %p1282, %p1283
      %p1285 = scmp.ne.s32.totalorder %s1276, %s1277
      %p1286 = scmp.eq.s32.totalorder %s153, 0
      %p1287 = por %p1285, %p1286
      %p1288 = scmp.ne.s32.totalorder %s1276, %s1277
      %p1289 = scmp.eq.s32.totalorder %s154, 1
      %p1290 = por %p1288, %p1289
      %p1292 = scmp.ne.s32.totalorder %s1277, %s1291
      %p1293 = scmp.eq.s32.totalorder %s154, 0
      %p1294 = por %p1292, %p1293
      %s1296 = sadd.s32 %s1295, 1
      %p1299 = scmp.eq.s32.totalorder %s148, 1
      %p1300 = scmp.ne.s32.totalorder %s1295, %s1297
      %p1301 = scmp.eq.s32.totalorder %s148, 0
      %p1302 = por %p1300, %p1301
      %p1303 = scmp.ne.s32.totalorder %s1295, %s1297
      %p1304 = scmp.eq.s32.totalorder %s153, 1
      %p1305 = por %p1303, %p1304
      %p1306 = scmp.ne.s32.totalorder %s1297, %s1298
      %p1307 = scmp.eq.s32.totalorder %s153, 0
      %p1308 = por %p1306, %p1307
      %p1309 = scmp.ne.s32.totalorder %s1297, %s1298
      %p1310 = scmp.eq.s32.totalorder %s154, 1
      %p1311 = por %p1309, %p1310
      %p1313 = scmp.ne.s32.totalorder %s1298, %s1312
      %p1314 = scmp.eq.s32.totalorder %s154, 0
      %p1315 = por %p1313, %p1314
      %s1317 = sadd.s32 %s1316, 1
      %p1320 = scmp.eq.s32.totalorder %s148, 1
      %p1321 = scmp.ne.s32.totalorder %s1316, %s1318
      %p1322 = scmp.eq.s32.totalorder %s148, 0
      %p1323 = por %p1321, %p1322
      %p1324 = scmp.ne.s32.totalorder %s1316, %s1318
      %p1325 = scmp.eq.s32.totalorder %s153, 1
      %p1326 = por %p1324, %p1325
      %p1327 = scmp.ne.s32.totalorder %s1318, %s1319
      %p1328 = scmp.eq.s32.totalorder %s153, 0
      %p1329 = por %p1327, %p1328
      %p1330 = scmp.ne.s32.totalorder %s1318, %s1319
      %p1331 = scmp.eq.s32.totalorder %s154, 1
      %p1332 = por %p1330, %p1331
      %p1334 = scmp.ne.s32.totalorder %s1319, %s1333
      %p1335 = scmp.eq.s32.totalorder %s154, 0
      %p1336 = por %p1334, %p1335
      %s1338 = sadd.s32 %s1337, 1
      %p1341 = scmp.eq.s32.totalorder %s148, 1
      %p1342 = scmp.ne.s32.totalorder %s1337, %s1339
      %p1343 = scmp.eq.s32.totalorder %s148, 0
      %p1344 = por %p1342, %p1343
      %p1345 = scmp.ne.s32.totalorder %s1337, %s1339
      %p1346 = scmp.eq.s32.totalorder %s153, 1
      %p1347 = por %p1345, %p1346
      %p1348 = scmp.ne.s32.totalorder %s1339, %s1340
      %p1349 = scmp.eq.s32.totalorder %s153, 0
      %p1350 = por %p1348, %p1349
      %p1351 = scmp.ne.s32.totalorder %s1339, %s1340
      %p1352 = scmp.eq.s32.totalorder %s154, 1
      %p1353 = por %p1351, %p1352
      %p1355 = scmp.ne.s32.totalorder %s1340, %s1354
      %p1356 = scmp.eq.s32.totalorder %s154, 0
      %p1357 = por %p1355, %p1356
      %s1359 = sadd.s32 %s1358, 1
      %p1362 = scmp.eq.s32.totalorder %s148, 1
      %p1363 = scmp.ne.s32.totalorder %s1358, %s1360
      %p1364 = scmp.eq.s32.totalorder %s148, 0
      %p1365 = por %p1363, %p1364
      %p1366 = scmp.ne.s32.totalorder %s1358, %s1360
      %p1367 = scmp.eq.s32.totalorder %s153, 1
      %p1368 = por %p1366, %p1367
      %p1369 = scmp.ne.s32.totalorder %s1360, %s1361
      %p1370 = scmp.eq.s32.totalorder %s153, 0
      %p1371 = por %p1369, %p1370
      %p1372 = scmp.ne.s32.totalorder %s1360, %s1361
      %p1373 = scmp.eq.s32.totalorder %s154, 1
      %p1374 = por %p1372, %p1373
      %p1376 = scmp.ne.s32.totalorder %s1361, %s1375
      %p1377 = scmp.eq.s32.totalorder %s154, 0
      %p1378 = por %p1376, %p1377
      %s1380 = sadd.s32 %s1379, 1
      %p1383 = scmp.eq.s32.totalorder %s148, 1
      %p1384 = scmp.ne.s32.totalorder %s1379, %s1381
      %p1385 = scmp.eq.s32.totalorder %s148, 0
      %p1386 = por %p1384, %p1385
      %p1387 = scmp.ne.s32.totalorder %s1379, %s1381
      %p1388 = scmp.eq.s32.totalorder %s153, 1
      %p1389 = por %p1387, %p1388
      %p1390 = scmp.ne.s32.totalorder %s1381, %s1382
      %p1391 = scmp.eq.s32.totalorder %s153, 0
      %p1392 = por %p1390, %p1391
      %p1393 = scmp.ne.s32.totalorder %s1381, %s1382
      %p1394 = scmp.eq.s32.totalorder %s154, 1
      %p1395 = por %p1393, %p1394
      %p1397 = scmp.ne.s32.totalorder %s1382, %s1396
      %p1398 = scmp.eq.s32.totalorder %s154, 0
      %p1399 = por %p1397, %p1398
      %s1401 = sadd.s32 %s1400, 1
      %p1404 = scmp.eq.s32.totalorder %s148, 1
      %p1405 = scmp.ne.s32.totalorder %s1400, %s1402
      %p1406 = scmp.eq.s32.totalorder %s148, 0
      %p1407 = por %p1405, %p1406
      %p1408 = scmp.ne.s32.totalorder %s1400, %s1402
      %p1409 = scmp.eq.s32.totalorder %s153, 1
      %p1410 = por %p1408, %p1409
      %p1411 = scmp.ne.s32.totalorder %s1402, %s1403
      %p1412 = scmp.eq.s32.totalorder %s153, 0
      %p1413 = por %p1411, %p1412
      %p1414 = scmp.ne.s32.totalorder %s1402, %s1403
      %p1415 = scmp.eq.s32.totalorder %s154, 1
      %p1416 = por %p1414, %p1415
      %p1418 = scmp.ne.s32.totalorder %s1403, %s1417
      %p1419 = scmp.eq.s32.totalorder %s154, 0
      %p1420 = por %p1418, %p1419
      %s1422 = sadd.s32 %s1421, 1
      %p1425 = scmp.eq.s32.totalorder %s148, 1
      %p1426 = scmp.ne.s32.totalorder %s1421, %s1423
      %p1427 = scmp.eq.s32.totalorder %s148, 0
      %p1428 = por %p1426, %p1427
      %p1429 = scmp.ne.s32.totalorder %s1421, %s1423
      %p1430 = scmp.eq.s32.totalorder %s153, 1
      %p1431 = por %p1429, %p1430
      %p1432 = scmp.ne.s32.totalorder %s1423, %s1424
      %p1433 = scmp.eq.s32.totalorder %s153, 0
      %p1434 = por %p1432, %p1433
      %p1435 = scmp.ne.s32.totalorder %s1423, %s1424
      %p1436 = scmp.eq.s32.totalorder %s154, 1
      %p1437 = por %p1435, %p1436
      %p1439 = scmp.ne.s32.totalorder %s1424, %s1438
      %p1440 = scmp.eq.s32.totalorder %s154, 0
      %p1441 = por %p1439, %p1440
      %s1443 = sadd.s32 %s1442, 1
      %p1446 = scmp.eq.s32.totalorder %s148, 1
      %p1447 = scmp.ne.s32.totalorder %s1442, %s1444
      %p1448 = scmp.eq.s32.totalorder %s148, 0
      %p1449 = por %p1447, %p1448
      %p1450 = scmp.ne.s32.totalorder %s1442, %s1444
      %p1451 = scmp.eq.s32.totalorder %s153, 1
      %p1452 = por %p1450, %p1451
      %p1453 = scmp.ne.s32.totalorder %s1444, %s1445
      %p1454 = scmp.eq.s32.totalorder %s153, 0
      %p1455 = por %p1453, %p1454
      %p1456 = scmp.ne.s32.totalorder %s1444, %s1445
      %p1457 = scmp.eq.s32.totalorder %s154, 1
      %p1458 = por %p1456, %p1457
      %p1460 = scmp.ne.s32.totalorder %s1445, %s1459
      %p1461 = scmp.eq.s32.totalorder %s154, 0
      %p1462 = por %p1460, %p1461
      %s1464 = sadd.s32 %s1463, 1
      %p1467 = scmp.eq.s32.totalorder %s148, 1
      %p1468 = scmp.ne.s32.totalorder %s1463, %s1465
      %p1469 = scmp.eq.s32.totalorder %s148, 0
      %p1470 = por %p1468, %p1469
      %p1471 = scmp.ne.s32.totalorder %s1463, %s1465
      %p1472 = scmp.eq.s32.totalorder %s153, 1
      %p1473 = por %p1471, %p1472
      %p1474 = scmp.ne.s32.totalorder %s1465, %s1466
      %p1475 = scmp.eq.s32.totalorder %s153, 0
      %p1476 = por %p1474, %p1475
      %p1477 = scmp.ne.s32.totalorder %s1465, %s1466
      %p1478 = scmp.eq.s32.totalorder %s154, 1
      %p1479 = por %p1477, %p1478
      %p1481 = scmp.ne.s32.totalorder %s1466, %s1480
      %p1482 = scmp.eq.s32.totalorder %s154, 0
      %p1483 = por %p1481, %p1482
      %s1485 = sadd.s32 %s1484, 1
      %p1488 = scmp.eq.s32.totalorder %s148, 1
      %p1489 = scmp.ne.s32.totalorder %s1484, %s1486
      %p1490 = scmp.eq.s32.totalorder %s148, 0
      %p1491 = por %p1489, %p1490
      %p1492 = scmp.ne.s32.totalorder %s1484, %s1486
      %p1493 = scmp.eq.s32.totalorder %s153, 1
      %p1494 = por %p1492, %p1493
      %p1495 = scmp.ne.s32.totalorder %s1486, %s1487
      %p1496 = scmp.eq.s32.totalorder %s153, 0
      %p1497 = por %p1495, %p1496
      %p1498 = scmp.ne.s32.totalorder %s1486, %s1487
      %p1499 = scmp.eq.s32.totalorder %s154, 1
      %p1500 = por %p1498, %p1499
      %p1502 = scmp.ne.s32.totalorder %s1487, %s1501
      %p1503 = scmp.eq.s32.totalorder %s154, 0
      %p1504 = por %p1502, %p1503
      %s1505 = ssub.s32 %s148, %s155
      %p1506 = scmp.eq.s32.totalorder %s1505, 0
      %s1508 = sadd.s32 %s1507, 1
      %s1509 = scalar_select %p1506, %s1507, %s1508
      %p1512 = pneg %p1506
      %p1513 = scmp.eq.s32.totalorder %s148, 1
      %p1514 = por %p1512, %p1513
      %p1515 = scmp.ne.s32.totalorder %s1507, %s1510
      %p1516 = scmp.eq.s32.totalorder %s148, 0
      %p1517 = por %p1515, %p1516
      %p1518 = scmp.ne.s32.totalorder %s1507, %s1510
      %p1519 = scmp.eq.s32.totalorder %s153, 1
      %p1520 = por %p1518, %p1519
      %p1521 = scmp.ne.s32.totalorder %s1510, %s1511
      %p1522 = scmp.eq.s32.totalorder %s153, 0
      %p1523 = por %p1521, %p1522
      %p1524 = scmp.ne.s32.totalorder %s1510, %s1511
      %p1525 = scmp.eq.s32.totalorder %s154, 1
      %p1526 = por %p1524, %p1525
      %p1528 = scmp.ne.s32.totalorder %s1511, %s1527
      %p1529 = scmp.eq.s32.totalorder %s154, 0
      %p1530 = por %p1528, %p1529
      %p1531 = scmp.le.s32.totalorder 1, %s148
      %p1532 = scmp.lt.s32.totalorder %s148, 3
      %p1533 = pnand %p1531, %p1532
      %p1534 = pneg %p1533
      // Predicated region
      $region9: #{forward.1} parent=5 // pred_check
        _
      $region10: #{forward.1} parent=5 // pred_check_branch
        %1536 = sbr.rel (%p1533) target = $region12
      $region11: #{forward.1} parent=5 // pred_region
        %s1537 = ssub.s32 %s148, 1
        // Predicated region
        $region13: #{forward.1} parent=11 // pred_check
          %p1538 = pneg %p195
        $region14: #{forward.1} parent=11 // pred_check_branch
          %1540 = sbr.rel (%p1538) target = $region16
        $region15: #{forward.1} parent=11 // pred_region
          _
        $region16: #{forward.1} parent=11 // pred_fallthru
          _
        // Predicated region
        $region17: #{forward.1} parent=11 // pred_check
          %p1541 = pneg %p216
        $region18: #{forward.1} parent=11 // pred_check_branch
          %1543 = sbr.rel (%p1541) target = $region20
        $region19: #{forward.1} parent=11 // pred_region
          _
        $region20: #{forward.1} parent=11 // pred_fallthru
          _
        // Predicated region
        $region21: #{forward.1} parent=11 // pred_check
          %p1544 = pneg %p237
        $region22: #{forward.1} parent=11 // pred_check_branch
          %1546 = sbr.rel (%p1544) target = $region24
        $region23: #{forward.1} parent=11 // pred_region
          _
        $region24: #{forward.1} parent=11 // pred_fallthru
          _
        // Predicated region
        $region25: #{forward.1} parent=11 // pred_check
          %p1547 = pneg %p258
        $region26: #{forward.1} parent=11 // pred_check_branch
          %1549 = sbr.rel (%p1547) target = $region28
        $region27: #{forward.1} parent=11 // pred_region
          _
        $region28: #{forward.1} parent=11 // pred_fallthru
          _
        // Predicated region
        $region29: #{forward.1} parent=11 // pred_check
          %p1550 = pneg %p279
        $region30: #{forward.1} parent=11 // pred_check_branch
          %1552 = sbr.rel (%p1550) target = $region32
        $region31: #{forward.1} parent=11 // pred_region
          _
        $region32: #{forward.1} parent=11 // pred_fallthru
          _
        // Predicated region
        $region33: #{forward.1} parent=11 // pred_check
          %p1553 = pneg %p300
        $region34: #{forward.1} parent=11 // pred_check_branch
          %1555 = sbr.rel (%p1553) target = $region36
        $region35: #{forward.1} parent=11 // pred_region
          _
        $region36: #{forward.1} parent=11 // pred_fallthru
          _
        // Predicated region
        $region37: #{forward.1} parent=11 // pred_check
          %p1556 = pneg %p321
        $region38: #{forward.1} parent=11 // pred_check_branch
          %1558 = sbr.rel (%p1556) target = $region40
        $region39: #{forward.1} parent=11 // pred_region
          _
        $region40: #{forward.1} parent=11 // pred_fallthru
          _
        // Predicated region
        $region41: #{forward.1} parent=11 // pred_check
          %p1559 = pneg %p342
        $region42: #{forward.1} parent=11 // pred_check_branch
          %1561 = sbr.rel (%p1559) target = $region44
        $region43: #{forward.1} parent=11 // pred_region
          _
        $region44: #{forward.1} parent=11 // pred_fallthru
          _
        // Predicated region
        $region45: #{forward.1} parent=11 // pred_check
          %p1562 = pneg %p363
        $region46: #{forward.1} parent=11 // pred_check_branch
          %1564 = sbr.rel (%p1562) target = $region48
        $region47: #{forward.1} parent=11 // pred_region
          _
        $region48: #{forward.1} parent=11 // pred_fallthru
          _
        // Predicated region
        $region49: #{forward.1} parent=11 // pred_check
          %p1565 = pneg %p384
        $region50: #{forward.1} parent=11 // pred_check_branch
          %1567 = sbr.rel (%p1565) target = $region52
        $region51: #{forward.1} parent=11 // pred_region
          _
        $region52: #{forward.1} parent=11 // pred_fallthru
          _
        // Predicated region
        $region53: #{forward.1} parent=11 // pred_check
          %p1568 = pneg %p405
        $region54: #{forward.1} parent=11 // pred_check_branch
          %1570 = sbr.rel (%p1568) target = $region56
        $region55: #{forward.1} parent=11 // pred_region
          _
        $region56: #{forward.1} parent=11 // pred_fallthru
          _
        // Predicated region
        $region57: #{forward.1} parent=11 // pred_check
          %p1571 = pneg %p426
        $region58: #{forward.1} parent=11 // pred_check_branch
          %1573 = sbr.rel (%p1571) target = $region60
        $region59: #{forward.1} parent=11 // pred_region
          _
        $region60: #{forward.1} parent=11 // pred_fallthru
          _
        // Predicated region
        $region61: #{forward.1} parent=11 // pred_check
          %p1574 = pneg %p447
        $region62: #{forward.1} parent=11 // pred_check_branch
          %1576 = sbr.rel (%p1574) target = $region64
        $region63: #{forward.1} parent=11 // pred_region
          _
        $region64: #{forward.1} parent=11 // pred_fallthru
          _
        // Predicated region
        $region65: #{forward.1} parent=11 // pred_check
          %p1577 = pneg %p468
        $region66: #{forward.1} parent=11 // pred_check_branch
          %1579 = sbr.rel (%p1577) target = $region68
        $region67: #{forward.1} parent=11 // pred_region
          _
        $region68: #{forward.1} parent=11 // pred_fallthru
          _
        // Predicated region
        $region69: #{forward.1} parent=11 // pred_check
          %p1580 = pneg %p489
        $region70: #{forward.1} parent=11 // pred_check_branch
          %1582 = sbr.rel (%p1580) target = $region72
        $region71: #{forward.1} parent=11 // pred_region
          _
        $region72: #{forward.1} parent=11 // pred_fallthru
          _
        // Predicated region
        $region73: #{forward.1} parent=11 // pred_check
          %p1583 = pneg %p510
        $region74: #{forward.1} parent=11 // pred_check_branch
          %1585 = sbr.rel (%p1583) target = $region76
        $region75: #{forward.1} parent=11 // pred_region
          _
        $region76: #{forward.1} parent=11 // pred_fallthru
          _
        // Predicated region
        $region77: #{forward.1} parent=11 // pred_check
          %p1586 = pneg %p531
        $region78: #{forward.1} parent=11 // pred_check_branch
          %1588 = sbr.rel (%p1586) target = $region80
        $region79: #{forward.1} parent=11 // pred_region
          _
        $region80: #{forward.1} parent=11 // pred_fallthru
          _
        // Predicated region
        $region81: #{forward.1} parent=11 // pred_check
          %p1589 = pneg %p552
        $region82: #{forward.1} parent=11 // pred_check_branch
          %1591 = sbr.rel (%p1589) target = $region84
        $region83: #{forward.1} parent=11 // pred_region
          _
        $region84: #{forward.1} parent=11 // pred_fallthru
          _
        // Predicated region
        $region85: #{forward.1} parent=11 // pred_check
          %p1592 = pneg %p573
        $region86: #{forward.1} parent=11 // pred_check_branch
          %1594 = sbr.rel (%p1592) target = $region88
        $region87: #{forward.1} parent=11 // pred_region
          _
        $region88: #{forward.1} parent=11 // pred_fallthru
          _
        // Predicated region
        $region89: #{forward.1} parent=11 // pred_check
          %p1595 = pneg %p594
        $region90: #{forward.1} parent=11 // pred_check_branch
          %1597 = sbr.rel (%p1595) target = $region92
        $region91: #{forward.1} parent=11 // pred_region
          _
        $region92: #{forward.1} parent=11 // pred_fallthru
          _
        // Predicated region
        $region93: #{forward.1} parent=11 // pred_check
          %p1598 = pneg %p615
        $region94: #{forward.1} parent=11 // pred_check_branch
          %1600 = sbr.rel (%p1598) target = $region96
        $region95: #{forward.1} parent=11 // pred_region
          _
        $region96: #{forward.1} parent=11 // pred_fallthru
          _
        // Predicated region
        $region97: #{forward.1} parent=11 // pred_check
          %p1601 = pneg %p636
        $region98: #{forward.1} parent=11 // pred_check_branch
          %1603 = sbr.rel (%p1601) target = $region100
        $region99: #{forward.1} parent=11 // pred_region
          _
        $region100: #{forward.1} parent=11 // pred_fallthru
          _
        // Predicated region
        $region101: #{forward.1} parent=11 // pred_check
          %p1604 = pneg %p657
        $region102: #{forward.1} parent=11 // pred_check_branch
          %1606 = sbr.rel (%p1604) target = $region104
        $region103: #{forward.1} parent=11 // pred_region
          _
        $region104: #{forward.1} parent=11 // pred_fallthru
          _
        // Predicated region
        $region105: #{forward.1} parent=11 // pred_check
          %p1607 = pneg %p678
        $region106: #{forward.1} parent=11 // pred_check_branch
          %1609 = sbr.rel (%p1607) target = $region108
        $region107: #{forward.1} parent=11 // pred_region
          _
        $region108: #{forward.1} parent=11 // pred_fallthru
          _
        // Predicated region
        $region109: #{forward.1} parent=11 // pred_check
          %p1610 = pneg %p699
        $region110: #{forward.1} parent=11 // pred_check_branch
          %1612 = sbr.rel (%p1610) target = $region112
        $region111: #{forward.1} parent=11 // pred_region
          _
        $region112: #{forward.1} parent=11 // pred_fallthru
          _
        // Predicated region
        $region113: #{forward.1} parent=11 // pred_check
          %p1613 = pneg %p720
        $region114: #{forward.1} parent=11 // pred_check_branch
          %1615 = sbr.rel (%p1613) target = $region116
        $region115: #{forward.1} parent=11 // pred_region
          _
        $region116: #{forward.1} parent=11 // pred_fallthru
          _
        // Predicated region
        $region117: #{forward.1} parent=11 // pred_check
          %p1616 = pneg %p741
        $region118: #{forward.1} parent=11 // pred_check_branch
          %1618 = sbr.rel (%p1616) target = $region120
        $region119: #{forward.1} parent=11 // pred_region
          _
        $region120: #{forward.1} parent=11 // pred_fallthru
          _
        // Predicated region
        $region121: #{forward.1} parent=11 // pred_check
          %p1619 = pneg %p762
        $region122: #{forward.1} parent=11 // pred_check_branch
          %1621 = sbr.rel (%p1619) target = $region124
        $region123: #{forward.1} parent=11 // pred_region
          _
        $region124: #{forward.1} parent=11 // pred_fallthru
          _
        // Predicated region
        $region125: #{forward.1} parent=11 // pred_check
          %p1622 = pneg %p783
        $region126: #{forward.1} parent=11 // pred_check_branch
          %1624 = sbr.rel (%p1622) target = $region128
        $region127: #{forward.1} parent=11 // pred_region
          _
        $region128: #{forward.1} parent=11 // pred_fallthru
          _
        // Predicated region
        $region129: #{forward.1} parent=11 // pred_check
          %p1625 = pneg %p804
        $region130: #{forward.1} parent=11 // pred_check_branch
          %1627 = sbr.rel (%p1625) target = $region132
        $region131: #{forward.1} parent=11 // pred_region
          %s1629 = ssub.s32 16, 16
          %1630 = vsyncadd [#allocation3], %s1629
          %s1632 = sshll.u32 [#allocation2], 4
          %s1633 = int_to_ptr.vmem [resolvable:$true] %s1632
          %1635 = dma.hbm_to_vmem [thread:$0]  %s61, 16, %s1633, [#allocation3]
        $region132: #{forward.1} parent=11 // pred_fallthru
          _
        // Predicated region
        $region133: #{forward.1} parent=11 // pred_check
          %p1636 = pneg %p825
        $region134: #{forward.1} parent=11 // pred_check_branch
          %1638 = sbr.rel (%p1636) target = $region136
        $region135: #{forward.1} parent=11 // pred_region
          _
        $region136: #{forward.1} parent=11 // pred_fallthru
          _
        // Predicated region
        $region137: #{forward.1} parent=11 // pred_check
          %p1639 = pneg %p846
        $region138: #{forward.1} parent=11 // pred_check_branch
          %1641 = sbr.rel (%p1639) target = $region140
        $region139: #{forward.1} parent=11 // pred_region
          %s1643 = ssub.s32 16, 16
          %1644 = vsyncadd [#allocation5], %s1643
          %s1646 = sshll.u32 [#allocation4], 4
          %s1647 = int_to_ptr.vmem [resolvable:$true] %s1646
          %1649 = dma.hbm_to_vmem [thread:$0]  %s65, 16, %s1647, [#allocation5]
        $region140: #{forward.1} parent=11 // pred_fallthru
          _
        // Predicated region
        $region141: #{forward.1} parent=11 // pred_check
          %p1650 = pneg %p867
        $region142: #{forward.1} parent=11 // pred_check_branch
          %1652 = sbr.rel (%p1650) target = $region144
        $region143: #{forward.1} parent=11 // pred_region
          %s1654 = ssub.s32 16, 16
          %1655 = vsyncadd [#allocation5], %s1654
          %s1657 = sshll.u32 [#allocation6], 4
          %s1658 = int_to_ptr.vmem [resolvable:$true] %s1657
          %1660 = dma.hbm_to_vmem [thread:$0]  %s67, 16, %s1658, [#allocation5]
        $region144: #{forward.1} parent=11 // pred_fallthru
          _
        // Predicated region
        $region145: #{forward.1} parent=11 // pred_check
          %p1661 = pneg %p888
        $region146: #{forward.1} parent=11 // pred_check_branch
          %1663 = sbr.rel (%p1661) target = $region148
        $region147: #{forward.1} parent=11 // pred_region
          %s1665 = ssub.s32 16, 16
          %1666 = vsyncadd [#allocation8], %s1665
          %s1668 = sshll.u32 [#allocation7], 4
          %s1669 = int_to_ptr.vmem [resolvable:$true] %s1668
          %1671 = dma.hbm_to_vmem [thread:$0]  %s69, 16, %s1669, [#allocation8]
        $region148: #{forward.1} parent=11 // pred_fallthru
          _
        // Predicated region
        $region149: #{forward.1} parent=11 // pred_check
          %p1672 = pneg %p909
        $region150: #{forward.1} parent=11 // pred_check_branch
          %1674 = sbr.rel (%p1672) target = $region152
        $region151: #{forward.1} parent=11 // pred_region
          %s1676 = ssub.s32 16, 16
          %1677 = vsyncadd [#allocation8], %s1676
          %s1679 = sshll.u32 [#allocation9], 4
          %s1680 = int_to_ptr.vmem [resolvable:$true] %s1679
          %1682 = dma.hbm_to_vmem [thread:$0]  %s71, 16, %s1680, [#allocation8]
        $region152: #{forward.1} parent=11 // pred_fallthru
          _
        // Predicated region
        $region153: #{forward.1} parent=11 // pred_check
          %p1683 = pneg %p930
        $region154: #{forward.1} parent=11 // pred_check_branch
          %1685 = sbr.rel (%p1683) target = $region156
        $region155: #{forward.1} parent=11 // pred_region
          _
        $region156: #{forward.1} parent=11 // pred_fallthru
          _
        // Predicated region
        $region157: #{forward.1} parent=11 // pred_check
          %p1686 = pneg %p951
        $region158: #{forward.1} parent=11 // pred_check_branch
          %1688 = sbr.rel (%p1686) target = $region160
        $region159: #{forward.1} parent=11 // pred_region
          %s1690 = ssub.s32 16, 16
          %1691 = vsyncadd [#allocation11], %s1690
          %s1693 = sshll.u32 [#allocation10], 4
          %s1694 = int_to_ptr.vmem [resolvable:$true] %s1693
          %1696 = dma.hbm_to_vmem [thread:$0]  %s75, 16, %s1694, [#allocation11]
        $region160: #{forward.1} parent=11 // pred_fallthru
          _
        // Predicated region
        $region161: #{forward.1} parent=11 // pred_check
          %p1697 = pneg %p972
        $region162: #{forward.1} parent=11 // pred_check_branch
          %1699 = sbr.rel (%p1697) target = $region164
        $region163: #{forward.1} parent=11 // pred_region
          %s1701 = ssub.s32 16, 16
          %1702 = vsyncadd [#allocation11], %s1701
          %s1704 = sshll.u32 [#allocation12], 4
          %s1705 = int_to_ptr.vmem [resolvable:$true] %s1704
          %1707 = dma.hbm_to_vmem [thread:$0]  %s77, 16, %s1705, [#allocation11]
        $region164: #{forward.1} parent=11 // pred_fallthru
          _
        // Predicated region
        $region165: #{forward.1} parent=11 // pred_check
          %p1708 = pneg %p993
        $region166: #{forward.1} parent=11 // pred_check_branch
          %1710 = sbr.rel (%p1708) target = $region168
        $region167: #{forward.1} parent=11 // pred_region
          %s1712 = ssub.s32 16, 16
          %1713 = vsyncadd [#allocation14], %s1712
          %s1715 = sshll.u32 [#allocation13], 4
          %s1716 = int_to_ptr.vmem [resolvable:$true] %s1715
          %1718 = dma.hbm_to_vmem [thread:$0]  %s79, 16, %s1716, [#allocation14]
        $region168: #{forward.1} parent=11 // pred_fallthru
          _
        // Predicated region
        $region169: #{forward.1} parent=11 // pred_check
          %p1719 = pneg %p1014
        $region170: #{forward.1} parent=11 // pred_check_branch
          %1721 = sbr.rel (%p1719) target = $region172
        $region171: #{forward.1} parent=11 // pred_region
          _
        $region172: #{forward.1} parent=11 // pred_fallthru
          _
        // Predicated region
        $region173: #{forward.1} parent=11 // pred_check
          %p1722 = pneg %p1035
        $region174: #{forward.1} parent=11 // pred_check_branch
          %1724 = sbr.rel (%p1722) target = $region176
        $region175: #{forward.1} parent=11 // pred_region
          %s1726 = ssub.s32 16, 16
          %1727 = vsyncadd [#allocation14], %s1726
          %s1729 = sshll.u32 [#allocation15], 4
          %s1730 = int_to_ptr.vmem [resolvable:$true] %s1729
          %1732 = dma.hbm_to_vmem [thread:$0]  %s83, 16, %s1730, [#allocation14]
        $region176: #{forward.1} parent=11 // pred_fallthru
          _
        // Predicated region
        $region177: #{forward.1} parent=11 // pred_check
          %p1733 = pneg %p1056
        $region178: #{forward.1} parent=11 // pred_check_branch
          %1735 = sbr.rel (%p1733) target = $region180
        $region179: #{forward.1} parent=11 // pred_region
          %s1737 = ssub.s32 16, 16
          %1738 = vsyncadd [#allocation17], %s1737
          %s1740 = sshll.u32 [#allocation16], 4
          %s1741 = int_to_ptr.vmem [resolvable:$true] %s1740
          %1743 = dma.hbm_to_vmem [thread:$0]  %s85, 16, %s1741, [#allocation17]
        $region180: #{forward.1} parent=11 // pred_fallthru
          _
        // Predicated region
        $region181: #{forward.1} parent=11 // pred_check
          %p1744 = pneg %p1077
        $region182: #{forward.1} parent=11 // pred_check_branch
          %1746 = sbr.rel (%p1744) target = $region184
        $region183: #{forward.1} parent=11 // pred_region
          %s1748 = ssub.s32 16, 16
          %1749 = vsyncadd [#allocation17], %s1748
          %s1751 = sshll.u32 [#allocation18], 4
          %s1752 = int_to_ptr.vmem [resolvable:$true] %s1751
          %1754 = dma.hbm_to_vmem [thread:$0]  %s87, 16, %s1752, [#allocation17]
        $region184: #{forward.1} parent=11 // pred_fallthru
          _
        // Predicated region
        $region185: #{forward.1} parent=11 // pred_check
          %p1755 = pneg %p1098
        $region186: #{forward.1} parent=11 // pred_check_branch
          %1757 = sbr.rel (%p1755) target = $region188
        $region187: #{forward.1} parent=11 // pred_region
          _
        $region188: #{forward.1} parent=11 // pred_fallthru
          _
        // Predicated region
        $region189: #{forward.1} parent=11 // pred_check
          %p1758 = pneg %p1119
        $region190: #{forward.1} parent=11 // pred_check_branch
          %1760 = sbr.rel (%p1758) target = $region192
        $region191: #{forward.1} parent=11 // pred_region
          %s1762 = ssub.s32 16, 16
          %1763 = vsyncadd [#allocation20], %s1762
          %s1765 = sshll.u32 [#allocation19], 4
          %s1766 = int_to_ptr.vmem [resolvable:$true] %s1765
          %1768 = dma.hbm_to_vmem [thread:$0]  %s91, 16, %s1766, [#allocation20]
        $region192: #{forward.1} parent=11 // pred_fallthru
          _
        // Predicated region
        $region193: #{forward.1} parent=11 // pred_check
          %p1769 = pneg %p1140
        $region194: #{forward.1} parent=11 // pred_check_branch
          %1771 = sbr.rel (%p1769) target = $region196
        $region195: #{forward.1} parent=11 // pred_region
          %s1773 = ssub.s32 16, 16
          %1774 = vsyncadd [#allocation20], %s1773
          %s1776 = sshll.u32 [#allocation21], 4
          %s1777 = int_to_ptr.vmem [resolvable:$true] %s1776
          %1779 = dma.hbm_to_vmem [thread:$0]  %s93, 16, %s1777, [#allocation20]
        $region196: #{forward.1} parent=11 // pred_fallthru
          _
        // Predicated region
        $region197: #{forward.1} parent=11 // pred_check
          %p1780 = pneg %p1161
        $region198: #{forward.1} parent=11 // pred_check_branch
          %1782 = sbr.rel (%p1780) target = $region200
        $region199: #{forward.1} parent=11 // pred_region
          %s1784 = ssub.s32 16, 16
          %1785 = vsyncadd [#allocation23], %s1784
          %s1787 = sshll.u32 [#allocation22], 4
          %s1788 = int_to_ptr.vmem [resolvable:$true] %s1787
          %1790 = dma.hbm_to_vmem [thread:$0]  %s95, 16, %s1788, [#allocation23]
        $region200: #{forward.1} parent=11 // pred_fallthru
          _
        // Predicated region
        $region201: #{forward.1} parent=11 // pred_check
          %p1791 = pneg %p1182
        $region202: #{forward.1} parent=11 // pred_check_branch
          %1793 = sbr.rel (%p1791) target = $region204
        $region203: #{forward.1} parent=11 // pred_region
          _
        $region204: #{forward.1} parent=11 // pred_fallthru
          _
        // Predicated region
        $region205: #{forward.1} parent=11 // pred_check
          %p1794 = pneg %p1203
        $region206: #{forward.1} parent=11 // pred_check_branch
          %1796 = sbr.rel (%p1794) target = $region208
        $region207: #{forward.1} parent=11 // pred_region
          %s1798 = ssub.s32 16, 16
          %1799 = vsyncadd [#allocation23], %s1798
          %s1801 = sshll.u32 [#allocation24], 4
          %s1802 = int_to_ptr.vmem [resolvable:$true] %s1801
          %1804 = dma.hbm_to_vmem [thread:$0]  %s99, 16, %s1802, [#allocation23]
        $region208: #{forward.1} parent=11 // pred_fallthru
          _
        // Predicated region
        $region209: #{forward.1} parent=11 // pred_check
          %p1805 = pneg %p1224
        $region210: #{forward.1} parent=11 // pred_check_branch
          %1807 = sbr.rel (%p1805) target = $region212
        $region211: #{forward.1} parent=11 // pred_region
          %s1809 = ssub.s32 16, 16
          %1810 = vsyncadd [#allocation26], %s1809
          %s1812 = sshll.u32 [#allocation25], 4
          %s1813 = int_to_ptr.vmem [resolvable:$true] %s1812
          %1815 = dma.hbm_to_vmem [thread:$0]  %s101, 16, %s1813, [#allocation26]
        $region212: #{forward.1} parent=11 // pred_fallthru
          _
        // Predicated region
        $region213: #{forward.1} parent=11 // pred_check
          %p1816 = pneg %p1245
        $region214: #{forward.1} parent=11 // pred_check_branch
          %1818 = sbr.rel (%p1816) target = $region216
        $region215: #{forward.1} parent=11 // pred_region
          %s1820 = ssub.s32 16, 16
          %1821 = vsyncadd [#allocation26], %s1820
          %s1823 = sshll.u32 [#allocation27], 4
          %s1824 = int_to_ptr.vmem [resolvable:$true] %s1823
          %1826 = dma.hbm_to_vmem [thread:$0]  %s103, 16, %s1824, [#allocation26]
        $region216: #{forward.1} parent=11 // pred_fallthru
          _
        // Predicated region
        $region217: #{forward.1} parent=11 // pred_check
          %p1827 = pneg %p1266
        $region218: #{forward.1} parent=11 // pred_check_branch
          %1829 = sbr.rel (%p1827) target = $region220
        $region219: #{forward.1} parent=11 // pred_region
          _
        $region220: #{forward.1} parent=11 // pred_fallthru
          _
        // Predicated region
        $region221: #{forward.1} parent=11 // pred_check
          %p1830 = pneg %p1287
        $region222: #{forward.1} parent=11 // pred_check_branch
          %1832 = sbr.rel (%p1830) target = $region224
        $region223: #{forward.1} parent=11 // pred_region
          %s1834 = ssub.s32 16, 16
          %1835 = vsyncadd [#allocation29], %s1834
          %s1837 = sshll.u32 [#allocation28], 4
          %s1838 = int_to_ptr.vmem [resolvable:$true] %s1837
          %1840 = dma.hbm_to_vmem [thread:$0]  %s107, 16, %s1838, [#allocation29]
        $region224: #{forward.1} parent=11 // pred_fallthru
          _
        // Predicated region
        $region225: #{forward.1} parent=11 // pred_check
          %p1841 = pneg %p1308
        $region226: #{forward.1} parent=11 // pred_check_branch
          %1843 = sbr.rel (%p1841) target = $region228
        $region227: #{forward.1} parent=11 // pred_region
          %s1845 = ssub.s32 16, 16
          %1846 = vsyncadd [#allocation29], %s1845
          %s1848 = sshll.u32 [#allocation30], 4
          %s1849 = int_to_ptr.vmem [resolvable:$true] %s1848
          %1851 = dma.hbm_to_vmem [thread:$0]  %s109, 16, %s1849, [#allocation29]
        $region228: #{forward.1} parent=11 // pred_fallthru
          _
        // Predicated region
        $region229: #{forward.1} parent=11 // pred_check
          %p1852 = pneg %p1329
        $region230: #{forward.1} parent=11 // pred_check_branch
          %1854 = sbr.rel (%p1852) target = $region232
        $region231: #{forward.1} parent=11 // pred_region
          %s1856 = ssub.s32 16, 16
          %1857 = vsyncadd [#allocation32], %s1856
          %s1859 = sshll.u32 [#allocation31], 4
          %s1860 = int_to_ptr.vmem [resolvable:$true] %s1859
          %1862 = dma.hbm_to_vmem [thread:$0]  %s111, 16, %s1860, [#allocation32]
        $region232: #{forward.1} parent=11 // pred_fallthru
          _
        // Predicated region
        $region233: #{forward.1} parent=11 // pred_check
          %p1863 = pneg %p1350
        $region234: #{forward.1} parent=11 // pred_check_branch
          %1865 = sbr.rel (%p1863) target = $region236
        $region235: #{forward.1} parent=11 // pred_region
          _
        $region236: #{forward.1} parent=11 // pred_fallthru
          _
        // Predicated region
        $region237: #{forward.1} parent=11 // pred_check
          %p1866 = pneg %p1371
        $region238: #{forward.1} parent=11 // pred_check_branch
          %1868 = sbr.rel (%p1866) target = $region240
        $region239: #{forward.1} parent=11 // pred_region
          %s1870 = ssub.s32 16, 16
          %1871 = vsyncadd [#allocation32], %s1870
          %s1873 = sshll.u32 [#allocation33], 4
          %s1874 = int_to_ptr.vmem [resolvable:$true] %s1873
          %1876 = dma.hbm_to_vmem [thread:$0]  %s115, 16, %s1874, [#allocation32]
        $region240: #{forward.1} parent=11 // pred_fallthru
          _
        // Predicated region
        $region241: #{forward.1} parent=11 // pred_check
          %p1877 = pneg %p1392
        $region242: #{forward.1} parent=11 // pred_check_branch
          %1879 = sbr.rel (%p1877) target = $region244
        $region243: #{forward.1} parent=11 // pred_region
          %s1881 = ssub.s32 16, 16
          %1882 = vsyncadd [#allocation35], %s1881
          %s1884 = sshll.u32 [#allocation34], 4
          %s1885 = int_to_ptr.vmem [resolvable:$true] %s1884
          %1887 = dma.hbm_to_vmem [thread:$0]  %s117, 16, %s1885, [#allocation35]
        $region244: #{forward.1} parent=11 // pred_fallthru
          _
        // Predicated region
        $region245: #{forward.1} parent=11 // pred_check
          %p1888 = pneg %p1413
        $region246: #{forward.1} parent=11 // pred_check_branch
          %1890 = sbr.rel (%p1888) target = $region248
        $region247: #{forward.1} parent=11 // pred_region
          %s1892 = ssub.s32 16, 16
          %1893 = vsyncadd [#allocation35], %s1892
          %s1895 = sshll.u32 [#allocation36], 4
          %s1896 = int_to_ptr.vmem [resolvable:$true] %s1895
          %1898 = dma.hbm_to_vmem [thread:$0]  %s119, 16, %s1896, [#allocation35]
        $region248: #{forward.1} parent=11 // pred_fallthru
          _
        // Predicated region
        $region249: #{forward.1} parent=11 // pred_check
          %p1899 = pneg %p1434
        $region250: #{forward.1} parent=11 // pred_check_branch
          %1901 = sbr.rel (%p1899) target = $region252
        $region251: #{forward.1} parent=11 // pred_region
          _
        $region252: #{forward.1} parent=11 // pred_fallthru
          _
        // Predicated region
        $region253: #{forward.1} parent=11 // pred_check
          %p1902 = pneg %p1455
        $region254: #{forward.1} parent=11 // pred_check_branch
          %1904 = sbr.rel (%p1902) target = $region256
        $region255: #{forward.1} parent=11 // pred_region
          %s1906 = ssub.s32 16, 16
          %1907 = vsyncadd [#allocation38], %s1906
          %s1909 = sshll.u32 [#allocation37], 4
          %s1910 = int_to_ptr.vmem [resolvable:$true] %s1909
          %1912 = dma.hbm_to_vmem [thread:$0]  %s123, 16, %s1910, [#allocation38]
        $region256: #{forward.1} parent=11 // pred_fallthru
          _
        // Predicated region
        $region257: #{forward.1} parent=11 // pred_check
          %p1913 = pneg %p1476
        $region258: #{forward.1} parent=11 // pred_check_branch
          %1915 = sbr.rel (%p1913) target = $region260
        $region259: #{forward.1} parent=11 // pred_region
          _
        $region260: #{forward.1} parent=11 // pred_fallthru
          _
        // Predicated region
        $region261: #{forward.1} parent=11 // pred_check
          %p1916 = pneg %p1497
        $region262: #{forward.1} parent=11 // pred_check_branch
          %1918 = sbr.rel (%p1916) target = $region264
        $region263: #{forward.1} parent=11 // pred_region
          _
        $region264: #{forward.1} parent=11 // pred_fallthru
          _
      $region12: #{forward.1} parent=5 // pred_fallthru
        _
      %p1919 = scmp.lt.s32.totalorder %s148, 2
      // Predicated region
      $region265: #{forward.1} parent=5 // pred_check
        %p1920 = pneg %p1919
      $region266: #{forward.1} parent=5 // pred_check_branch
        %1922 = sbr.rel (%p1920) target = $region268
      $region267: #{forward.1} parent=5 // pred_region
        // Predicated region
        $region269: #{forward.1} parent=267 // pred_check
          %p1923 = pneg %p168
        $region270: #{forward.1} parent=267 // pred_check_branch
          %1925 = sbr.rel (%p1923) target = $region272
        $region271: #{forward.1} parent=267 // pred_region
          %p1926 = scmp.lt.s32.totalorder %s148, 1
          %s1927 = scalar_select %p1926, %s148, 1
          %s1928 = smul.addr %s1927, 41
          %s1929 = smul.addr %s1928, 8
          %s1930 = scalar_lea.vmem %s1, %s1929
        $region272: #{forward.1} parent=267 // pred_fallthru
          _
      $region268: #{forward.1} parent=5 // pred_fallthru
        _
      %p1931 = scmp.le.s32.totalorder 1, %s148
      %p1932 = scmp.lt.s32.totalorder %s148, 3
      %p1933 = pnand %p1931, %p1932
      %p1934 = pneg %p1933
      // Predicated region
      $region273: #{forward.1} parent=5 // pred_check
        _
      $region274: #{forward.1} parent=5 // pred_check_branch
        %1936 = sbr.rel (%p1933) target = $region276
      $region275: #{forward.1} parent=5 // pred_region
        %s1937 = ssub.s32 %s148, 1
        // Predicated region
        $region277: #{forward.1} parent=275 // pred_check
          %p1938 = pneg %p804
        $region278: #{forward.1} parent=275 // pred_check_branch
          %1940 = sbr.rel (%p1938) target = $region280
        $region279: #{forward.1} parent=275 // pred_region
          %1941 = dma.done [#allocation3], 16
        $region280: #{forward.1} parent=275 // pred_fallthru
          _
        // Predicated region
        $region281: #{forward.1} parent=275 // pred_check
          %p1942 = pneg %p846
        $region282: #{forward.1} parent=275 // pred_check_branch
          %1944 = sbr.rel (%p1942) target = $region284
        $region283: #{forward.1} parent=275 // pred_region
          %1945 = dma.done [#allocation5], 16
        $region284: #{forward.1} parent=275 // pred_fallthru
          _
        // Predicated region
        $region285: #{forward.1} parent=275 // pred_check
          %p1946 = pneg %p867
        $region286: #{forward.1} parent=275 // pred_check_branch
          %1948 = sbr.rel (%p1946) target = $region288
        $region287: #{forward.1} parent=275 // pred_region
          %1949 = dma.done [#allocation5], 16
        $region288: #{forward.1} parent=275 // pred_fallthru
          _
        // Predicated region
        $region289: #{forward.1} parent=275 // pred_check
          %p1950 = pneg %p888
        $region290: #{forward.1} parent=275 // pred_check_branch
          %1952 = sbr.rel (%p1950) target = $region292
        $region291: #{forward.1} parent=275 // pred_region
          %1953 = dma.done [#allocation8], 16
        $region292: #{forward.1} parent=275 // pred_fallthru
          _
        // Predicated region
        $region293: #{forward.1} parent=275 // pred_check
          %p1954 = pneg %p909
        $region294: #{forward.1} parent=275 // pred_check_branch
          %1956 = sbr.rel (%p1954) target = $region296
        $region295: #{forward.1} parent=275 // pred_region
          %1957 = dma.done [#allocation8], 16
        $region296: #{forward.1} parent=275 // pred_fallthru
          _
        // Predicated region
        $region297: #{forward.1} parent=275 // pred_check
          %p1958 = pneg %p951
        $region298: #{forward.1} parent=275 // pred_check_branch
          %1960 = sbr.rel (%p1958) target = $region300
        $region299: #{forward.1} parent=275 // pred_region
          %1961 = dma.done [#allocation11], 16
        $region300: #{forward.1} parent=275 // pred_fallthru
          _
        // Predicated region
        $region301: #{forward.1} parent=275 // pred_check
          %p1962 = pneg %p972
        $region302: #{forward.1} parent=275 // pred_check_branch
          %1964 = sbr.rel (%p1962) target = $region304
        $region303: #{forward.1} parent=275 // pred_region
          %1965 = dma.done [#allocation11], 16
        $region304: #{forward.1} parent=275 // pred_fallthru
          _
        // Predicated region
        $region305: #{forward.1} parent=275 // pred_check
          %p1966 = pneg %p993
        $region306: #{forward.1} parent=275 // pred_check_branch
          %1968 = sbr.rel (%p1966) target = $region308
        $region307: #{forward.1} parent=275 // pred_region
          %1969 = dma.done [#allocation14], 16
        $region308: #{forward.1} parent=275 // pred_fallthru
          _
        // Predicated region
        $region309: #{forward.1} parent=275 // pred_check
          %p1970 = pneg %p1035
        $region310: #{forward.1} parent=275 // pred_check_branch
          %1972 = sbr.rel (%p1970) target = $region312
        $region311: #{forward.1} parent=275 // pred_region
          %1973 = dma.done [#allocation14], 16
        $region312: #{forward.1} parent=275 // pred_fallthru
          _
        // Predicated region
        $region313: #{forward.1} parent=275 // pred_check
          %p1974 = pneg %p1056
        $region314: #{forward.1} parent=275 // pred_check_branch
          %1976 = sbr.rel (%p1974) target = $region316
        $region315: #{forward.1} parent=275 // pred_region
          %1977 = dma.done [#allocation17], 16
        $region316: #{forward.1} parent=275 // pred_fallthru
          _
        // Predicated region
        $region317: #{forward.1} parent=275 // pred_check
          %p1978 = pneg %p1077
        $region318: #{forward.1} parent=275 // pred_check_branch
          %1980 = sbr.rel (%p1978) target = $region320
        $region319: #{forward.1} parent=275 // pred_region
          %1981 = dma.done [#allocation17], 16
        $region320: #{forward.1} parent=275 // pred_fallthru
          _
        // Predicated region
        $region321: #{forward.1} parent=275 // pred_check
          %p1982 = pneg %p1119
        $region322: #{forward.1} parent=275 // pred_check_branch
          %1984 = sbr.rel (%p1982) target = $region324
        $region323: #{forward.1} parent=275 // pred_region
          %1985 = dma.done [#allocation20], 16
        $region324: #{forward.1} parent=275 // pred_fallthru
          _
        // Predicated region
        $region325: #{forward.1} parent=275 // pred_check
          %p1986 = pneg %p1140
        $region326: #{forward.1} parent=275 // pred_check_branch
          %1988 = sbr.rel (%p1986) target = $region328
        $region327: #{forward.1} parent=275 // pred_region
          %1989 = dma.done [#allocation20], 16
        $region328: #{forward.1} parent=275 // pred_fallthru
          _
        // Predicated region
        $region329: #{forward.1} parent=275 // pred_check
          %p1990 = pneg %p1161
        $region330: #{forward.1} parent=275 // pred_check_branch
          %1992 = sbr.rel (%p1990) target = $region332
        $region331: #{forward.1} parent=275 // pred_region
          %1993 = dma.done [#allocation23], 16
        $region332: #{forward.1} parent=275 // pred_fallthru
          _
        // Predicated region
        $region333: #{forward.1} parent=275 // pred_check
          %p1994 = pneg %p1203
        $region334: #{forward.1} parent=275 // pred_check_branch
          %1996 = sbr.rel (%p1994) target = $region336
        $region335: #{forward.1} parent=275 // pred_region
          %1997 = dma.done [#allocation23], 16
        $region336: #{forward.1} parent=275 // pred_fallthru
          _
        // Predicated region
        $region337: #{forward.1} parent=275 // pred_check
          %p1998 = pneg %p1224
        $region338: #{forward.1} parent=275 // pred_check_branch
          %2000 = sbr.rel (%p1998) target = $region340
        $region339: #{forward.1} parent=275 // pred_region
          %2001 = dma.done [#allocation26], 16
        $region340: #{forward.1} parent=275 // pred_fallthru
          _
        // Predicated region
        $region341: #{forward.1} parent=275 // pred_check
          %p2002 = pneg %p1245
        $region342: #{forward.1} parent=275 // pred_check_branch
          %2004 = sbr.rel (%p2002) target = $region344
        $region343: #{forward.1} parent=275 // pred_region
          %2005 = dma.done [#allocation26], 16
        $region344: #{forward.1} parent=275 // pred_fallthru
          _
        // Predicated region
        $region345: #{forward.1} parent=275 // pred_check
          %p2006 = pneg %p1287
        $region346: #{forward.1} parent=275 // pred_check_branch
          %2008 = sbr.rel (%p2006) target = $region348
        $region347: #{forward.1} parent=275 // pred_region
          %2009 = dma.done [#allocation29], 16
        $region348: #{forward.1} parent=275 // pred_fallthru
          _
        // Predicated region
        $region349: #{forward.1} parent=275 // pred_check
          %p2010 = pneg %p1308
        $region350: #{forward.1} parent=275 // pred_check_branch
          %2012 = sbr.rel (%p2010) target = $region352
        $region351: #{forward.1} parent=275 // pred_region
          %2013 = dma.done [#allocation29], 16
        $region352: #{forward.1} parent=275 // pred_fallthru
          _
        // Predicated region
        $region353: #{forward.1} parent=275 // pred_check
          %p2014 = pneg %p1329
        $region354: #{forward.1} parent=275 // pred_check_branch
          %2016 = sbr.rel (%p2014) target = $region356
        $region355: #{forward.1} parent=275 // pred_region
          %2017 = dma.done [#allocation32], 16
        $region356: #{forward.1} parent=275 // pred_fallthru
          _
        // Predicated region
        $region357: #{forward.1} parent=275 // pred_check
          %p2018 = pneg %p1371
        $region358: #{forward.1} parent=275 // pred_check_branch
          %2020 = sbr.rel (%p2018) target = $region360
        $region359: #{forward.1} parent=275 // pred_region
          %2021 = dma.done [#allocation32], 16
        $region360: #{forward.1} parent=275 // pred_fallthru
          _
        // Predicated region
        $region361: #{forward.1} parent=275 // pred_check
          %p2022 = pneg %p1392
        $region362: #{forward.1} parent=275 // pred_check_branch
          %2024 = sbr.rel (%p2022) target = $region364
        $region363: #{forward.1} parent=275 // pred_region
          %2025 = dma.done [#allocation35], 16
        $region364: #{forward.1} parent=275 // pred_fallthru
          _
        // Predicated region
        $region365: #{forward.1} parent=275 // pred_check
          %p2026 = pneg %p1413
        $region366: #{forward.1} parent=275 // pred_check_branch
          %2028 = sbr.rel (%p2026) target = $region368
        $region367: #{forward.1} parent=275 // pred_region
          %2029 = dma.done [#allocation35], 16
        $region368: #{forward.1} parent=275 // pred_fallthru
          _
        // Predicated region
        $region369: #{forward.1} parent=275 // pred_check
          %p2030 = pneg %p1455
        $region370: #{forward.1} parent=275 // pred_check_branch
          %2032 = sbr.rel (%p2030) target = $region372
        $region371: #{forward.1} parent=275 // pred_region
          %2033 = dma.done [#allocation38], 16
        $region372: #{forward.1} parent=275 // pred_fallthru
          _
        %p2034 = scmp.lt.s32.totalorder %s153, 1
        %s2035 = scalar_select %p2034, %s153, 1
        %s2036 = smul.addr %s2035, 41
        %s2037 = smul.addr %s2036, 8
        %s2038 = scalar_lea.vmem %s1, %s2037
        %p2039 = pneg %p174
        %p2040 = pneg %p171
        %p2041 = pneg %p195
        %p2042 = pneg %p192
        %p2043 = pneg %p216
        %p2044 = pneg %p213
        %p2045 = pneg %p237
        %p2046 = pneg %p234
        %p2047 = pneg %p258
        %p2048 = pneg %p255
        %p2049 = pneg %p279
        %p2050 = pneg %p276
        %p2051 = pneg %p300
        %p2052 = pneg %p297
        %p2053 = pneg %p321
        %p2054 = pneg %p318
        %p2055 = pneg %p342
        %p2056 = pneg %p339
        %p2057 = pneg %p363
        %p2058 = pneg %p360
        %p2059 = pneg %p384
        %p2060 = pneg %p381
        %p2061 = pneg %p405
        %p2062 = pneg %p402
        %p2063 = pneg %p426
        %p2064 = pneg %p423
        %p2065 = pneg %p447
        %p2066 = pneg %p444
        %p2067 = pneg %p468
        %p2068 = pneg %p465
        %p2069 = pneg %p489
        %p2070 = pneg %p486
        %p2071 = pneg %p510
        %p2072 = pneg %p507
        %p2073 = pneg %p531
        %p2074 = pneg %p528
        %p2075 = pneg %p552
        %p2076 = pneg %p549
        %p2077 = pneg %p573
        %p2078 = pneg %p570
        %p2079 = pneg %p594
        %p2080 = pneg %p591
        %p2081 = pneg %p615
        %p2082 = pneg %p612
        %p2083 = pneg %p636
        %p2084 = pneg %p633
        %p2085 = pneg %p657
        %p2086 = pneg %p654
        %p2087 = pneg %p678
        %p2088 = pneg %p675
        %p2089 = pneg %p699
        %p2090 = pneg %p696
        %p2091 = pneg %p720
        %p2092 = pneg %p717
        %p2093 = pneg %p741
        %p2094 = pneg %p738
        %p2095 = pneg %p762
        %p2096 = pneg %p759
        %p2097 = pneg %p783
        %p2098 = pneg %p780
        %p2099 = pneg %p804
        %p2100 = pneg %p801
        %p2101 = pneg %p825
        %p2102 = pneg %p822
        %p2103 = pneg %p846
        %p2104 = pneg %p843
        %p2105 = pneg %p867
        %p2106 = pneg %p864
        %p2107 = pneg %p888
        %p2108 = pneg %p885
        %p2109 = pneg %p909
        %p2110 = pneg %p906
        %p2111 = pneg %p930
        %p2112 = pneg %p927
        %p2113 = pneg %p951
        %p2114 = pneg %p948
        %p2115 = pneg %p972
        %p2116 = pneg %p969
        %p2117 = pneg %p993
        %p2118 = pneg %p990
        %p2119 = pneg %p1014
        %p2120 = pneg %p1011
        %p2121 = pneg %p1035
        %p2122 = pneg %p1032
        %p2123 = pneg %p1056
        %p2124 = pneg %p1053
        %p2125 = pneg %p1077
        %p2126 = pneg %p1074
        %p2127 = pneg %p1098
        %p2128 = pneg %p1095
        %p2129 = pneg %p1119
        %p2130 = pneg %p1116
        %p2131 = pneg %p1140
        %p2132 = pneg %p1137
        %p2133 = pneg %p1161
        %p2134 = pneg %p1158
        %p2135 = pneg %p1182
        %p2136 = pneg %p1179
        %p2137 = pneg %p1203
        %p2138 = pneg %p1200
        %p2139 = pneg %p1224
        %p2140 = pneg %p1221
        %p2141 = pneg %p1245
        %p2142 = pneg %p1242
        %p2143 = pneg %p1266
        %p2144 = pneg %p1263
        %p2145 = pneg %p1287
        %p2146 = pneg %p1284
        %p2147 = pneg %p1308
        %p2148 = pneg %p1305
        %p2149 = pneg %p1329
        %p2150 = pneg %p1326
        %p2151 = pneg %p1350
        %p2152 = pneg %p1347
        %p2153 = pneg %p1371
        %p2154 = pneg %p1368
        %p2155 = pneg %p1392
        %p2156 = pneg %p1389
        %p2157 = pneg %p1413
        %p2158 = pneg %p1410
        %p2159 = pneg %p1434
        %p2160 = pneg %p1431
        %p2161 = pneg %p1455
        %p2162 = pneg %p1452
        %p2163 = pneg %p1476
        %p2164 = pneg %p1473
        %p2165 = pneg %p1497
        %p2166 = pneg %p1494
        %p2167 = pneg %p1523
        %p2168 = pneg %p1520
        %p2169 = scmp.lt.s32.totalorder %s153, 1
        %s2170 = scalar_select %p2169, %s153, 1
        %s2171 = smul.addr %s2170, 7
        %s2172 = scalar_lea.vmem %s129, %s2171
        %p2173 = scmp.lt.s32.totalorder %s153, 1
        %s2174 = scalar_select %p2173, %s153, 1
        %s2175 = smul.addr %s2174, 41
        %s2176 = smul.addr %s2175, 8
        %s2177 = scalar_lea.vmem %s1, %s2176
        %p2178 = scmp.lt.s32.totalorder %s153, 1
        %s2179 = scalar_select %p2178, %s153, 1
        %s2180 = smul.addr %s2179, 7
        %s2181 = scalar_lea.vmem %s129, %s2180
        %v2182 = vld [vmem:[%s2177] sm:$0xff]
        %v2183 = vld [vmem:[%s2177 + $0x8] sm:$0xff]
        %v2184 = vld [vmem:[%s2177 + $0x10] sm:$0xff]
        %v2185 = vld [vmem:[%s2177 + $0x18] sm:$0xff]
        %v2186 = vld [vmem:[%s2177 + $0x20] sm:$0xff]
        %v2187 = vld [vmem:[%s2177 + $0x28] sm:$0xff]
        %v2188 = vld [vmem:[%s2177 + $0x30] sm:$0xff]
        %v2189 = vld [vmem:[%s2177 + $0x38] sm:$0xff]
        %v2190 = vld [vmem:[%s2177 + $0x40] sm:$0xff]
        %v2191 = vld [vmem:[%s2177 + $0x48] sm:$0xff]
        %v2192 = vld [vmem:[%s2177 + $0x50] sm:$0xff]
        %v2193 = vld [vmem:[%s2177 + $0x58] sm:$0xff]
        %v2194 = vld [vmem:[%s2177 + $0x60] sm:$0xff]
        %v2195 = vld [vmem:[%s2177 + $0x68] sm:$0xff]
        %v2196 = vld [vmem:[%s2177 + $0x70] sm:$0xff]
        %v2197 = vld [vmem:[%s2177 + $0x78] sm:$0xff]
        %v2198 = vld [vmem:[%s2177 + $0x80] sm:$0xff]
        %v2199 = vld [vmem:[%s2177 + $0x88] sm:$0xff]
        %v2200 = vld [vmem:[%s2177 + $0x90] sm:$0xff]
        %v2201 = vld [vmem:[%s2177 + $0x98] sm:$0xff]
        %v2202 = vld [vmem:[%s2177 + $0xa0] sm:$0xff]
        %v2203 = vld [vmem:[%s2177 + $0xa8] sm:$0xff]
        %v2204 = vld [vmem:[%s2177 + $0xb0] sm:$0xff]
        %v2205 = vld [vmem:[%s2177 + $0xb8] sm:$0xff]
        %v2206 = vld [vmem:[%s2177 + $0xc0] sm:$0xff]
        %v2207 = vld [vmem:[%s2177 + $0xc8] sm:$0xff]
        %v2208 = vld [vmem:[%s2177 + $0xd0] sm:$0xff]
        %v2209 = vld [vmem:[%s2177 + $0xd8] sm:$0xff]
        %v2210 = vld [vmem:[%s2177 + $0xe0] sm:$0xff]
        %v2211 = vld [vmem:[%s2177 + $0xe8] sm:$0xff]
        %v2212 = vld [vmem:[%s2177 + $0xf0] sm:$0xff]
        %v2213 = vld [vmem:[%s2177 + $0xf8] sm:$0xff]
        %v2214 = vld [vmem:[%s2177 + $0x100] sm:$0xff]
        %v2215 = vld [vmem:[%s2177 + $0x108] sm:$0xff]
        %v2216 = vld [vmem:[%s2177 + $0x110] sm:$0xff]
        %v2217 = vld [vmem:[%s2177 + $0x118] sm:$0xff]
        %v2218 = vld [vmem:[%s2177 + $0x120] sm:$0xff]
        %v2219 = vld [vmem:[%s2177 + $0x128] sm:$0xff]
        %v2220 = vld [vmem:[%s2177 + $0x130] sm:$0xff]
        %v2221 = vld [vmem:[%s2177 + $0x138] sm:$0xff]
        %v2222 = vld [vmem:[%s2177 + $0x140] sm:$0xf]
        %v2223 = vld [vmem:[%s3] sm:$0xff]
        %v2224 = vld [vmem:[%s3 + $0x8] sm:$0x1]
        %v2225 = vld [vmem:[%s5] sm:$0x1]
        %2227 = vset.pattern.permute.xlu0 0
        %2228 = vperm.xlu0 %2227, %v2182
        %v2229 = vpop.permute.xlu0 %2228
        %2232 = vset.pattern.permute.xlu0 0
        %2233 = vperm.xlu0 %2232, %v2183
        %v2234 = vpop.permute.xlu0 %2233
        %2237 = vset.pattern.permute.xlu0 0
        %2238 = vperm.xlu0 %2237, %v2184
        %v2239 = vpop.permute.xlu0 %2238
        %2242 = vset.pattern.permute.xlu0 0
        %2243 = vperm.xlu0 %2242, %v2185
        %v2244 = vpop.permute.xlu0 %2243
        %2247 = vset.pattern.permute.xlu0 0
        %2248 = vperm.xlu0 %2247, %v2186
        %v2249 = vpop.permute.xlu0 %2248
        %2252 = vset.pattern.permute.xlu0 0
        %2253 = vperm.xlu0 %2252, %v2187
        %v2254 = vpop.permute.xlu0 %2253
        %2257 = vset.pattern.permute.xlu0 0
        %2258 = vperm.xlu0 %2257, %v2188
        %v2259 = vpop.permute.xlu0 %2258
        %2262 = vset.pattern.permute.xlu0 0
        %2263 = vperm.xlu0 %2262, %v2189
        %v2264 = vpop.permute.xlu0 %2263
        %2267 = vset.pattern.permute.xlu0 0
        %2268 = vperm.xlu0 %2267, %v2190
        %v2269 = vpop.permute.xlu0 %2268
        %2272 = vset.pattern.permute.xlu0 0
        %2273 = vperm.xlu0 %2272, %v2191
        %v2274 = vpop.permute.xlu0 %2273
        %2277 = vset.pattern.permute.xlu0 0
        %2278 = vperm.xlu0 %2277, %v2192
        %v2279 = vpop.permute.xlu0 %2278
        %2282 = vset.pattern.permute.xlu0 0
        %2283 = vperm.xlu0 %2282, %v2193
        %v2284 = vpop.permute.xlu0 %2283
        %2287 = vset.pattern.permute.xlu0 0
        %2288 = vperm.xlu0 %2287, %v2194
        %v2289 = vpop.permute.xlu0 %2288
        %2292 = vset.pattern.permute.xlu0 0
        %2293 = vperm.xlu0 %2292, %v2195
        %v2294 = vpop.permute.xlu0 %2293
        %2297 = vset.pattern.permute.xlu0 0
        %2298 = vperm.xlu0 %2297, %v2196
        %v2299 = vpop.permute.xlu0 %2298
        %2302 = vset.pattern.permute.xlu0 0
        %2303 = vperm.xlu0 %2302, %v2197
        %v2304 = vpop.permute.xlu0 %2303
        %2307 = vset.pattern.permute.xlu0 0
        %2308 = vperm.xlu0 %2307, %v2198
        %v2309 = vpop.permute.xlu0 %2308
        %2312 = vset.pattern.permute.xlu0 0
        %2313 = vperm.xlu0 %2312, %v2199
        %v2314 = vpop.permute.xlu0 %2313
        %2317 = vset.pattern.permute.xlu0 0
        %2318 = vperm.xlu0 %2317, %v2200
        %v2319 = vpop.permute.xlu0 %2318
        %2322 = vset.pattern.permute.xlu0 0
        %2323 = vperm.xlu0 %2322, %v2201
        %v2324 = vpop.permute.xlu0 %2323
        %2327 = vset.pattern.permute.xlu0 0
        %2328 = vperm.xlu0 %2327, %v2202
        %v2329 = vpop.permute.xlu0 %2328
        %2332 = vset.pattern.permute.xlu0 0
        %2333 = vperm.xlu0 %2332, %v2203
        %v2334 = vpop.permute.xlu0 %2333
        %2337 = vset.pattern.permute.xlu0 0
        %2338 = vperm.xlu0 %2337, %v2204
        %v2339 = vpop.permute.xlu0 %2338
        %2342 = vset.pattern.permute.xlu0 0
        %2343 = vperm.xlu0 %2342, %v2205
        %v2344 = vpop.permute.xlu0 %2343
        %2347 = vset.pattern.permute.xlu0 0
        %2348 = vperm.xlu0 %2347, %v2206
        %v2349 = vpop.permute.xlu0 %2348
        %2352 = vset.pattern.permute.xlu0 0
        %2353 = vperm.xlu0 %2352, %v2207
        %v2354 = vpop.permute.xlu0 %2353
        %2357 = vset.pattern.permute.xlu0 0
        %2358 = vperm.xlu0 %2357, %v2208
        %v2359 = vpop.permute.xlu0 %2358
        %2362 = vset.pattern.permute.xlu0 0
        %2363 = vperm.xlu0 %2362, %v2209
        %v2364 = vpop.permute.xlu0 %2363
        %2367 = vset.pattern.permute.xlu0 0
        %2368 = vperm.xlu0 %2367, %v2210
        %v2369 = vpop.permute.xlu0 %2368
        %2372 = vset.pattern.permute.xlu0 0
        %2373 = vperm.xlu0 %2372, %v2211
        %v2374 = vpop.permute.xlu0 %2373
        %2377 = vset.pattern.permute.xlu0 0
        %2378 = vperm.xlu0 %2377, %v2212
        %v2379 = vpop.permute.xlu0 %2378
        %2382 = vset.pattern.permute.xlu0 0
        %2383 = vperm.xlu0 %2382, %v2213
        %v2384 = vpop.permute.xlu0 %2383
        %2387 = vset.pattern.permute.xlu0 0
        %2388 = vperm.xlu0 %2387, %v2214
        %v2389 = vpop.permute.xlu0 %2388
        %2392 = vset.pattern.permute.xlu0 0
        %2393 = vperm.xlu0 %2392, %v2215
        %v2394 = vpop.permute.xlu0 %2393
        %2397 = vset.pattern.permute.xlu0 0
        %2398 = vperm.xlu0 %2397, %v2216
        %v2399 = vpop.permute.xlu0 %2398
        %2402 = vset.pattern.permute.xlu0 0
        %2403 = vperm.xlu0 %2402, %v2217
        %v2404 = vpop.permute.xlu0 %2403
        %v2406 = vlaneseq
        %v2407 = vshrl.u32 %v2406, 7
        %v2408 = vsub.s32 0, %v2407
        %v2409 = vrot.slane %v2223, %v2408
        %v2410 = vmul.f32 %v2229, %v2409
        %v2411 = vmul.f32 %v2234, %v2409
        %v2412 = vmul.f32 %v2239, %v2409
        %v2413 = vmul.f32 %v2244, %v2409
        %v2414 = vmul.f32 %v2249, %v2409
        %v2415 = vmul.f32 %v2254, %v2409
        %v2416 = vmul.f32 %v2259, %v2409
        %v2417 = vmul.f32 %v2264, %v2409
        %v2418 = vmul.f32 %v2269, %v2409
        %v2419 = vmul.f32 %v2274, %v2409
        %v2420 = vmul.f32 %v2279, %v2409
        %v2421 = vmul.f32 %v2284, %v2409
        %v2422 = vmul.f32 %v2289, %v2409
        %v2423 = vmul.f32 %v2294, %v2409
        %v2424 = vmul.f32 %v2299, %v2409
        %v2425 = vmul.f32 %v2304, %v2409
        %v2426 = vmul.f32 %v2309, %v2409
        %v2427 = vmul.f32 %v2314, %v2409
        %v2428 = vmul.f32 %v2319, %v2409
        %v2429 = vmul.f32 %v2324, %v2409
        %v2430 = vmul.f32 %v2329, %v2409
        %v2431 = vmul.f32 %v2334, %v2409
        %v2432 = vmul.f32 %v2339, %v2409
        %v2433 = vmul.f32 %v2344, %v2409
        %v2434 = vmul.f32 %v2349, %v2409
        %v2435 = vmul.f32 %v2354, %v2409
        %v2436 = vmul.f32 %v2359, %v2409
        %v2437 = vmul.f32 %v2364, %v2409
        %v2438 = vmul.f32 %v2369, %v2409
        %v2439 = vmul.f32 %v2374, %v2409
        %v2440 = vmul.f32 %v2379, %v2409
        %v2441 = vmul.f32 %v2384, %v2409
        %v2442 = vmul.f32 %v2389, %v2409
        %v2443 = vmul.f32 %v2394, %v2409
        %v2444 = vmul.f32 %v2399, %v2409
        %v2445 = vmul.f32 %v2404, %v2409
        %v2446 = vlaneseq
        %v2447 = vshrl.u32 %v2446, 7
        %v2448 = vsub.s32 1, %v2447
        %v2449 = vrot.slane %v2223, %v2448
        %v2450 = vmul.f32 %v2229, %v2449
        %v2451 = vmul.f32 %v2234, %v2449
        %v2452 = vmul.f32 %v2239, %v2449
        %v2453 = vmul.f32 %v2244, %v2449
        %v2454 = vmul.f32 %v2249, %v2449
        %v2455 = vmul.f32 %v2254, %v2449
        %v2456 = vmul.f32 %v2259, %v2449
        %v2457 = vmul.f32 %v2264, %v2449
        %v2458 = vmul.f32 %v2269, %v2449
        %v2459 = vmul.f32 %v2274, %v2449
        %v2460 = vmul.f32 %v2279, %v2449
        %v2461 = vmul.f32 %v2284, %v2449
        %v2462 = vmul.f32 %v2289, %v2449
        %v2463 = vmul.f32 %v2294, %v2449
        %v2464 = vmul.f32 %v2299, %v2449
        %v2465 = vmul.f32 %v2304, %v2449
        %v2466 = vmul.f32 %v2309, %v2449
        %v2467 = vmul.f32 %v2314, %v2449
        %v2468 = vmul.f32 %v2319, %v2449
        %v2469 = vmul.f32 %v2324, %v2449
        %v2470 = vmul.f32 %v2329, %v2449
        %v2471 = vmul.f32 %v2334, %v2449
        %v2472 = vmul.f32 %v2339, %v2449
        %v2473 = vmul.f32 %v2344, %v2449
        %v2474 = vmul.f32 %v2349, %v2449
        %v2475 = vmul.f32 %v2354, %v2449
        %v2476 = vmul.f32 %v2359, %v2449
        %v2477 = vmul.f32 %v2364, %v2449
        %v2478 = vmul.f32 %v2369, %v2449
        %v2479 = vmul.f32 %v2374, %v2449
        %v2480 = vmul.f32 %v2379, %v2449
        %v2481 = vmul.f32 %v2384, %v2449
        %v2482 = vmul.f32 %v2389, %v2449
        %v2483 = vmul.f32 %v2394, %v2449
        %v2484 = vmul.f32 %v2399, %v2449
        %v2485 = vmul.f32 %v2404, %v2449
        %vm2522 = vcmask 1046528
        %v2523 = vrot.slane %v2450, 1
        %v2524 = vrot.slane %v2451, 1
        %v2525 = vsel %vm2522, %v2523, %v2524
        %v2526 = vrot.slane %v2452, 1
        %v2527 = vsel %vm2522, %v2524, %v2526
        %v2528 = vrot.slane %v2453, 1
        %v2529 = vsel %vm2522, %v2526, %v2528
        %v2530 = vrot.slane %v2454, 1
        %v2531 = vsel %vm2522, %v2528, %v2530
        %v2532 = vrot.slane %v2455, 1
        %v2533 = vsel %vm2522, %v2530, %v2532
        %v2534 = vrot.slane %v2456, 1
        %v2535 = vsel %vm2522, %v2532, %v2534
        %v2536 = vrot.slane %v2457, 1
        %v2537 = vsel %vm2522, %v2534, %v2536
        %v2538 = vrot.slane %v2458, 1
        %v2539 = vsel %vm2522, %v2536, %v2538
        %v2540 = vrot.slane %v2459, 1
        %v2541 = vsel %vm2522, %v2538, %v2540
        %v2542 = vrot.slane %v2460, 1
        %v2543 = vsel %vm2522, %v2540, %v2542
        %v2544 = vrot.slane %v2461, 1
        %v2545 = vsel %vm2522, %v2542, %v2544
        %v2546 = vrot.slane %v2462, 1
        %v2547 = vsel %vm2522, %v2544, %v2546
        %v2548 = vrot.slane %v2463, 1
        %v2549 = vsel %vm2522, %v2546, %v2548
        %v2550 = vrot.slane %v2464, 1
        %v2551 = vsel %vm2522, %v2548, %v2550
        %v2552 = vrot.slane %v2465, 1
        %v2553 = vsel %vm2522, %v2550, %v2552
        %v2554 = vrot.slane %v2466, 1
        %v2555 = vsel %vm2522, %v2552, %v2554
        %v2556 = vrot.slane %v2467, 1
        %v2557 = vsel %vm2522, %v2554, %v2556
        %v2558 = vrot.slane %v2468, 1
        %v2559 = vsel %vm2522, %v2556, %v2558
        %v2560 = vrot.slane %v2469, 1
        %v2561 = vsel %vm2522, %v2558, %v2560
        %v2562 = vrot.slane %v2470, 1
        %v2563 = vsel %vm2522, %v2560, %v2562
        %v2564 = vrot.slane %v2471, 1
        %v2565 = vsel %vm2522, %v2562, %v2564
        %v2566 = vrot.slane %v2472, 1
        %v2567 = vsel %vm2522, %v2564, %v2566
        %v2568 = vrot.slane %v2473, 1
        %v2569 = vsel %vm2522, %v2566, %v2568
        %v2570 = vrot.slane %v2474, 1
        %v2571 = vsel %vm2522, %v2568, %v2570
        %v2572 = vrot.slane %v2475, 1
        %v2573 = vsel %vm2522, %v2570, %v2572
        %v2574 = vrot.slane %v2476, 1
        %v2575 = vsel %vm2522, %v2572, %v2574
        %v2576 = vrot.slane %v2477, 1
        %v2577 = vsel %vm2522, %v2574, %v2576
        %v2578 = vrot.slane %v2478, 1
        %v2579 = vsel %vm2522, %v2576, %v2578
        %v2580 = vrot.slane %v2479, 1
        %v2581 = vsel %vm2522, %v2578, %v2580
        %v2582 = vrot.slane %v2480, 1
        %v2583 = vsel %vm2522, %v2580, %v2582
        %v2584 = vrot.slane %v2481, 1
        %v2585 = vsel %vm2522, %v2582, %v2584
        %v2586 = vrot.slane %v2482, 1
        %v2587 = vsel %vm2522, %v2584, %v2586
        %v2588 = vrot.slane %v2483, 1
        %v2589 = vsel %vm2522, %v2586, %v2588
        %v2590 = vrot.slane %v2484, 1
        %v2591 = vsel %vm2522, %v2588, %v2590
        %v2592 = vrot.slane %v2485, 1
        %v2593 = vsel %vm2522, %v2590, %v2592
        %v2630 = vadd.f32 %v2410, %v2525
        %v2631 = vadd.f32 %v2411, %v2527
        %v2632 = vadd.f32 %v2412, %v2529
        %v2633 = vadd.f32 %v2413, %v2531
        %v2634 = vadd.f32 %v2414, %v2533
        %v2635 = vadd.f32 %v2415, %v2535
        %v2636 = vadd.f32 %v2416, %v2537
        %v2637 = vadd.f32 %v2417, %v2539
        %v2638 = vadd.f32 %v2418, %v2541
        %v2639 = vadd.f32 %v2419, %v2543
        %v2640 = vadd.f32 %v2420, %v2545
        %v2641 = vadd.f32 %v2421, %v2547
        %v2642 = vadd.f32 %v2422, %v2549
        %v2643 = vadd.f32 %v2423, %v2551
        %v2644 = vadd.f32 %v2424, %v2553
        %v2645 = vadd.f32 %v2425, %v2555
        %v2646 = vadd.f32 %v2426, %v2557
        %v2647 = vadd.f32 %v2427, %v2559
        %v2648 = vadd.f32 %v2428, %v2561
        %v2649 = vadd.f32 %v2429, %v2563
        %v2650 = vadd.f32 %v2430, %v2565
        %v2651 = vadd.f32 %v2431, %v2567
        %v2652 = vadd.f32 %v2432, %v2569
        %v2653 = vadd.f32 %v2433, %v2571
        %v2654 = vadd.f32 %v2434, %v2573
        %v2655 = vadd.f32 %v2435, %v2575
        %v2656 = vadd.f32 %v2436, %v2577
        %v2657 = vadd.f32 %v2437, %v2579
        %v2658 = vadd.f32 %v2438, %v2581
        %v2659 = vadd.f32 %v2439, %v2583
        %v2660 = vadd.f32 %v2440, %v2585
        %v2661 = vadd.f32 %v2441, %v2587
        %v2662 = vadd.f32 %v2442, %v2589
        %v2663 = vadd.f32 %v2443, %v2591
        %v2664 = vadd.f32 %v2444, %v2593
        %v2665 = vadd.f32 %v2445, %v2592
        %v2666 = vlaneseq
        %v2667 = vshrl.u32 %v2666, 7
        %v2668 = vsub.s32 2, %v2667
        %v2669 = vrot.slane %v2223, %v2668
        %v2670 = vmul.f32 %v2229, %v2669
        %v2671 = vmul.f32 %v2234, %v2669
        %v2672 = vmul.f32 %v2239, %v2669
        %v2673 = vmul.f32 %v2244, %v2669
        %v2674 = vmul.f32 %v2249, %v2669
        %v2675 = vmul.f32 %v2254, %v2669
        %v2676 = vmul.f32 %v2259, %v2669
        %v2677 = vmul.f32 %v2264, %v2669
        %v2678 = vmul.f32 %v2269, %v2669
        %v2679 = vmul.f32 %v2274, %v2669
        %v2680 = vmul.f32 %v2279, %v2669
        %v2681 = vmul.f32 %v2284, %v2669
        %v2682 = vmul.f32 %v2289, %v2669
        %v2683 = vmul.f32 %v2294, %v2669
        %v2684 = vmul.f32 %v2299, %v2669
        %v2685 = vmul.f32 %v2304, %v2669
        %v2686 = vmul.f32 %v2309, %v2669
        %v2687 = vmul.f32 %v2314, %v2669
        %v2688 = vmul.f32 %v2319, %v2669
        %v2689 = vmul.f32 %v2324, %v2669
        %v2690 = vmul.f32 %v2329, %v2669
        %v2691 = vmul.f32 %v2334, %v2669
        %v2692 = vmul.f32 %v2339, %v2669
        %v2693 = vmul.f32 %v2344, %v2669
        %v2694 = vmul.f32 %v2349, %v2669
        %v2695 = vmul.f32 %v2354, %v2669
        %v2696 = vmul.f32 %v2359, %v2669
        %v2697 = vmul.f32 %v2364, %v2669
        %v2698 = vmul.f32 %v2369, %v2669
        %v2699 = vmul.f32 %v2374, %v2669
        %v2700 = vmul.f32 %v2379, %v2669
        %v2701 = vmul.f32 %v2384, %v2669
        %v2702 = vmul.f32 %v2389, %v2669
        %v2703 = vmul.f32 %v2394, %v2669
        %v2704 = vmul.f32 %v2399, %v2669
        %v2705 = vmul.f32 %v2404, %v2669
        %vm2742 = vcmask 1045504
        %v2743 = vrot.slane %v2670, 2
        %v2744 = vrot.slane %v2671, 2
        %v2745 = vsel %vm2742, %v2743, %v2744
        %v2746 = vrot.slane %v2672, 2
        %v2747 = vsel %vm2742, %v2744, %v2746
        %v2748 = vrot.slane %v2673, 2
        %v2749 = vsel %vm2742, %v2746, %v2748
        %v2750 = vrot.slane %v2674, 2
        %v2751 = vsel %vm2742, %v2748, %v2750
        %v2752 = vrot.slane %v2675, 2
        %v2753 = vsel %vm2742, %v2750, %v2752
        %v2754 = vrot.slane %v2676, 2
        %v2755 = vsel %vm2742, %v2752, %v2754
        %v2756 = vrot.slane %v2677, 2
        %v2757 = vsel %vm2742, %v2754, %v2756
        %v2758 = vrot.slane %v2678, 2
        %v2759 = vsel %vm2742, %v2756, %v2758
        %v2760 = vrot.slane %v2679, 2
        %v2761 = vsel %vm2742, %v2758, %v2760
        %v2762 = vrot.slane %v2680, 2
        %v2763 = vsel %vm2742, %v2760, %v2762
        %v2764 = vrot.slane %v2681, 2
        %v2765 = vsel %vm2742, %v2762, %v2764
        %v2766 = vrot.slane %v2682, 2
        %v2767 = vsel %vm2742, %v2764, %v2766
        %v2768 = vrot.slane %v2683, 2
        %v2769 = vsel %vm2742, %v2766, %v2768
        %v2770 = vrot.slane %v2684, 2
        %v2771 = vsel %vm2742, %v2768, %v2770
        %v2772 = vrot.slane %v2685, 2
        %v2773 = vsel %vm2742, %v2770, %v2772
        %v2774 = vrot.slane %v2686, 2
        %v2775 = vsel %vm2742, %v2772, %v2774
        %v2776 = vrot.slane %v2687, 2
        %v2777 = vsel %vm2742, %v2774, %v2776
        %v2778 = vrot.slane %v2688, 2
        %v2779 = vsel %vm2742, %v2776, %v2778
        %v2780 = vrot.slane %v2689, 2
        %v2781 = vsel %vm2742, %v2778, %v2780
        %v2782 = vrot.slane %v2690, 2
        %v2783 = vsel %vm2742, %v2780, %v2782
        %v2784 = vrot.slane %v2691, 2
        %v2785 = vsel %vm2742, %v2782, %v2784
        %v2786 = vrot.slane %v2692, 2
        %v2787 = vsel %vm2742, %v2784, %v2786
        %v2788 = vrot.slane %v2693, 2
        %v2789 = vsel %vm2742, %v2786, %v2788
        %v2790 = vrot.slane %v2694, 2
        %v2791 = vsel %vm2742, %v2788, %v2790
        %v2792 = vrot.slane %v2695, 2
        %v2793 = vsel %vm2742, %v2790, %v2792
        %v2794 = vrot.slane %v2696, 2
        %v2795 = vsel %vm2742, %v2792, %v2794
        %v2796 = vrot.slane %v2697, 2
        %v2797 = vsel %vm2742, %v2794, %v2796
        %v2798 = vrot.slane %v2698, 2
        %v2799 = vsel %vm2742, %v2796, %v2798
        %v2800 = vrot.slane %v2699, 2
        %v2801 = vsel %vm2742, %v2798, %v2800
        %v2802 = vrot.slane %v2700, 2
        %v2803 = vsel %vm2742, %v2800, %v2802
        %v2804 = vrot.slane %v2701, 2
        %v2805 = vsel %vm2742, %v2802, %v2804
        %v2806 = vrot.slane %v2702, 2
        %v2807 = vsel %vm2742, %v2804, %v2806
        %v2808 = vrot.slane %v2703, 2
        %v2809 = vsel %vm2742, %v2806, %v2808
        %v2810 = vrot.slane %v2704, 2
        %v2811 = vsel %vm2742, %v2808, %v2810
        %v2812 = vrot.slane %v2705, 2
        %v2813 = vsel %vm2742, %v2810, %v2812
        %v2850 = vadd.f32 %v2630, %v2745
        %v2851 = vadd.f32 %v2631, %v2747
        %v2852 = vadd.f32 %v2632, %v2749
        %v2853 = vadd.f32 %v2633, %v2751
        %v2854 = vadd.f32 %v2634, %v2753
        %v2855 = vadd.f32 %v2635, %v2755
        %v2856 = vadd.f32 %v2636, %v2757
        %v2857 = vadd.f32 %v2637, %v2759
        %v2858 = vadd.f32 %v2638, %v2761
        %v2859 = vadd.f32 %v2639, %v2763
        %v2860 = vadd.f32 %v2640, %v2765
        %v2861 = vadd.f32 %v2641, %v2767
        %v2862 = vadd.f32 %v2642, %v2769
        %v2863 = vadd.f32 %v2643, %v2771
        %v2864 = vadd.f32 %v2644, %v2773
        %v2865 = vadd.f32 %v2645, %v2775
        %v2866 = vadd.f32 %v2646, %v2777
        %v2867 = vadd.f32 %v2647, %v2779
        %v2868 = vadd.f32 %v2648, %v2781
        %v2869 = vadd.f32 %v2649, %v2783
        %v2870 = vadd.f32 %v2650, %v2785
        %v2871 = vadd.f32 %v2651, %v2787
        %v2872 = vadd.f32 %v2652, %v2789
        %v2873 = vadd.f32 %v2653, %v2791
        %v2874 = vadd.f32 %v2654, %v2793
        %v2875 = vadd.f32 %v2655, %v2795
        %v2876 = vadd.f32 %v2656, %v2797
        %v2877 = vadd.f32 %v2657, %v2799
        %v2878 = vadd.f32 %v2658, %v2801
        %v2879 = vadd.f32 %v2659, %v2803
        %v2880 = vadd.f32 %v2660, %v2805
        %v2881 = vadd.f32 %v2661, %v2807
        %v2882 = vadd.f32 %v2662, %v2809
        %v2883 = vadd.f32 %v2663, %v2811
        %v2884 = vadd.f32 %v2664, %v2813
        %v2885 = vadd.f32 %v2665, %v2812
        %2887 = vset.pattern.permute.xlu0 0
        %2888 = vperm.xlu0 %2887, %v2218
        %v2889 = vpop.permute.xlu0 %2888
        %2892 = vset.pattern.permute.xlu0 0
        %2893 = vperm.xlu0 %2892, %v2219
        %v2894 = vpop.permute.xlu0 %2893
        %v2896 = vlaneseq
        %v2897 = vshrl.u32 %v2896, 7
        %v2898 = vsub.s32 3, %v2897
        %v2899 = vrot.slane %v2223, %v2898
        %v2900 = vmul.f32 %v2239, %v2899
        %v2901 = vmul.f32 %v2244, %v2899
        %v2902 = vmul.f32 %v2249, %v2899
        %v2903 = vmul.f32 %v2254, %v2899
        %v2904 = vmul.f32 %v2259, %v2899
        %v2905 = vmul.f32 %v2264, %v2899
        %v2906 = vmul.f32 %v2269, %v2899
        %v2907 = vmul.f32 %v2274, %v2899
        %v2908 = vmul.f32 %v2279, %v2899
        %v2909 = vmul.f32 %v2284, %v2899
        %v2910 = vmul.f32 %v2289, %v2899
        %v2911 = vmul.f32 %v2294, %v2899
        %v2912 = vmul.f32 %v2299, %v2899
        %v2913 = vmul.f32 %v2304, %v2899
        %v2914 = vmul.f32 %v2309, %v2899
        %v2915 = vmul.f32 %v2314, %v2899
        %v2916 = vmul.f32 %v2319, %v2899
        %v2917 = vmul.f32 %v2324, %v2899
        %v2918 = vmul.f32 %v2329, %v2899
        %v2919 = vmul.f32 %v2334, %v2899
        %v2920 = vmul.f32 %v2339, %v2899
        %v2921 = vmul.f32 %v2344, %v2899
        %v2922 = vmul.f32 %v2349, %v2899
        %v2923 = vmul.f32 %v2354, %v2899
        %v2924 = vmul.f32 %v2359, %v2899
        %v2925 = vmul.f32 %v2364, %v2899
        %v2926 = vmul.f32 %v2369, %v2899
        %v2927 = vmul.f32 %v2374, %v2899
        %v2928 = vmul.f32 %v2379, %v2899
        %v2929 = vmul.f32 %v2384, %v2899
        %v2930 = vmul.f32 %v2389, %v2899
        %v2931 = vmul.f32 %v2394, %v2899
        %v2932 = vmul.f32 %v2399, %v2899
        %v2933 = vmul.f32 %v2404, %v2899
        %v2934 = vmul.f32 %v2889, %v2899
        %v2935 = vmul.f32 %v2894, %v2899
        %v2972 = vrot.slane %v2900, 2
        %v2973 = vrot.slane %v2901, 2
        %v2974 = vsel %vm2742, %v2972, %v2973
        %v2975 = vrot.slane %v2902, 2
        %v2976 = vsel %vm2742, %v2973, %v2975
        %v2977 = vrot.slane %v2903, 2
        %v2978 = vsel %vm2742, %v2975, %v2977
        %v2979 = vrot.slane %v2904, 2
        %v2980 = vsel %vm2742, %v2977, %v2979
        %v2981 = vrot.slane %v2905, 2
        %v2982 = vsel %vm2742, %v2979, %v2981
        %v2983 = vrot.slane %v2906, 2
        %v2984 = vsel %vm2742, %v2981, %v2983
        %v2985 = vrot.slane %v2907, 2
        %v2986 = vsel %vm2742, %v2983, %v2985
        %v2987 = vrot.slane %v2908, 2
        %v2988 = vsel %vm2742, %v2985, %v2987
        %v2989 = vrot.slane %v2909, 2
        %v2990 = vsel %vm2742, %v2987, %v2989
        %v2991 = vrot.slane %v2910, 2
        %v2992 = vsel %vm2742, %v2989, %v2991
        %v2993 = vrot.slane %v2911, 2
        %v2994 = vsel %vm2742, %v2991, %v2993
        %v2995 = vrot.slane %v2912, 2
        %v2996 = vsel %vm2742, %v2993, %v2995
        %v2997 = vrot.slane %v2913, 2
        %v2998 = vsel %vm2742, %v2995, %v2997
        %v2999 = vrot.slane %v2914, 2
        %v3000 = vsel %vm2742, %v2997, %v2999
        %v3001 = vrot.slane %v2915, 2
        %v3002 = vsel %vm2742, %v2999, %v3001
        %v3003 = vrot.slane %v2916, 2
        %v3004 = vsel %vm2742, %v3001, %v3003
        %v3005 = vrot.slane %v2917, 2
        %v3006 = vsel %vm2742, %v3003, %v3005
        %v3007 = vrot.slane %v2918, 2
        %v3008 = vsel %vm2742, %v3005, %v3007
        %v3009 = vrot.slane %v2919, 2
        %v3010 = vsel %vm2742, %v3007, %v3009
        %v3011 = vrot.slane %v2920, 2
        %v3012 = vsel %vm2742, %v3009, %v3011
        %v3013 = vrot.slane %v2921, 2
        %v3014 = vsel %vm2742, %v3011, %v3013
        %v3015 = vrot.slane %v2922, 2
        %v3016 = vsel %vm2742, %v3013, %v3015
        %v3017 = vrot.slane %v2923, 2
        %v3018 = vsel %vm2742, %v3015, %v3017
        %v3019 = vrot.slane %v2924, 2
        %v3020 = vsel %vm2742, %v3017, %v3019
        %v3021 = vrot.slane %v2925, 2
        %v3022 = vsel %vm2742, %v3019, %v3021
        %v3023 = vrot.slane %v2926, 2
        %v3024 = vsel %vm2742, %v3021, %v3023
        %v3025 = vrot.slane %v2927, 2
        %v3026 = vsel %vm2742, %v3023, %v3025
        %v3027 = vrot.slane %v2928, 2
        %v3028 = vsel %vm2742, %v3025, %v3027
        %v3029 = vrot.slane %v2929, 2
        %v3030 = vsel %vm2742, %v3027, %v3029
        %v3031 = vrot.slane %v2930, 2
        %v3032 = vsel %vm2742, %v3029, %v3031
        %v3033 = vrot.slane %v2931, 2
        %v3034 = vsel %vm2742, %v3031, %v3033
        %v3035 = vrot.slane %v2932, 2
        %v3036 = vsel %vm2742, %v3033, %v3035
        %v3037 = vrot.slane %v2933, 2
        %v3038 = vsel %vm2742, %v3035, %v3037
        %v3039 = vrot.slane %v2934, 2
        %v3040 = vsel %vm2742, %v3037, %v3039
        %v3041 = vrot.slane %v2935, 2
        %v3042 = vsel %vm2742, %v3039, %v3041
        %v3079 = vadd.f32 %v2850, %v2974
        %v3080 = vadd.f32 %v2851, %v2976
        %v3081 = vadd.f32 %v2852, %v2978
        %v3082 = vadd.f32 %v2853, %v2980
        %v3083 = vadd.f32 %v2854, %v2982
        %v3084 = vadd.f32 %v2855, %v2984
        %v3085 = vadd.f32 %v2856, %v2986
        %v3086 = vadd.f32 %v2857, %v2988
        %v3087 = vadd.f32 %v2858, %v2990
        %v3088 = vadd.f32 %v2859, %v2992
        %v3089 = vadd.f32 %v2860, %v2994
        %v3090 = vadd.f32 %v2861, %v2996
        %v3091 = vadd.f32 %v2862, %v2998
        %v3092 = vadd.f32 %v2863, %v3000
        %v3093 = vadd.f32 %v2864, %v3002
        %v3094 = vadd.f32 %v2865, %v3004
        %v3095 = vadd.f32 %v2866, %v3006
        %v3096 = vadd.f32 %v2867, %v3008
        %v3097 = vadd.f32 %v2868, %v3010
        %v3098 = vadd.f32 %v2869, %v3012
        %v3099 = vadd.f32 %v2870, %v3014
        %v3100 = vadd.f32 %v2871, %v3016
        %v3101 = vadd.f32 %v2872, %v3018
        %v3102 = vadd.f32 %v2873, %v3020
        %v3103 = vadd.f32 %v2874, %v3022
        %v3104 = vadd.f32 %v2875, %v3024
        %v3105 = vadd.f32 %v2876, %v3026
        %v3106 = vadd.f32 %v2877, %v3028
        %v3107 = vadd.f32 %v2878, %v3030
        %v3108 = vadd.f32 %v2879, %v3032
        %v3109 = vadd.f32 %v2880, %v3034
        %v3110 = vadd.f32 %v2881, %v3036
        %v3111 = vadd.f32 %v2882, %v3038
        %v3112 = vadd.f32 %v2883, %v3040
        %v3113 = vadd.f32 %v2884, %v3042
        %v3114 = vadd.f32 %v2885, %v3041
        %3116 = vset.pattern.permute.xlu0 0
        %3117 = vperm.xlu0 %3116, %v2220
        %v3118 = vpop.permute.xlu0 %3117
        %v3120 = vlaneseq
        %v3121 = vshrl.u32 %v3120, 7
        %v3122 = vsub.s32 4, %v3121
        %v3123 = vrot.slane %v2223, %v3122
        %v3124 = vmul.f32 %v2239, %v3123
        %v3125 = vmul.f32 %v2244, %v3123
        %v3126 = vmul.f32 %v2249, %v3123
        %v3127 = vmul.f32 %v2254, %v3123
        %v3128 = vmul.f32 %v2259, %v3123
        %v3129 = vmul.f32 %v2264, %v3123
        %v3130 = vmul.f32 %v2269, %v3123
        %v3131 = vmul.f32 %v2274, %v3123
        %v3132 = vmul.f32 %v2279, %v3123
        %v3133 = vmul.f32 %v2284, %v3123
        %v3134 = vmul.f32 %v2289, %v3123
        %v3135 = vmul.f32 %v2294, %v3123
        %v3136 = vmul.f32 %v2299, %v3123
        %v3137 = vmul.f32 %v2304, %v3123
        %v3138 = vmul.f32 %v2309, %v3123
        %v3139 = vmul.f32 %v2314, %v3123
        %v3140 = vmul.f32 %v2319, %v3123
        %v3141 = vmul.f32 %v2324, %v3123
        %v3142 = vmul.f32 %v2329, %v3123
        %v3143 = vmul.f32 %v2334, %v3123
        %v3144 = vmul.f32 %v2339, %v3123
        %v3145 = vmul.f32 %v2344, %v3123
        %v3146 = vmul.f32 %v2349, %v3123
        %v3147 = vmul.f32 %v2354, %v3123
        %v3148 = vmul.f32 %v2359, %v3123
        %v3149 = vmul.f32 %v2364, %v3123
        %v3150 = vmul.f32 %v2369, %v3123
        %v3151 = vmul.f32 %v2374, %v3123
        %v3152 = vmul.f32 %v2379, %v3123
        %v3153 = vmul.f32 %v2384, %v3123
        %v3154 = vmul.f32 %v2389, %v3123
        %v3155 = vmul.f32 %v2394, %v3123
        %v3156 = vmul.f32 %v2399, %v3123
        %v3157 = vmul.f32 %v2404, %v3123
        %v3158 = vmul.f32 %v2889, %v3123
        %v3159 = vmul.f32 %v2894, %v3123
        %v3160 = vmul.f32 %v3118, %v3123
        %vm3198 = vcmask 1044480
        %v3199 = vrot.slane %v3124, 3
        %v3200 = vrot.slane %v3125, 3
        %v3201 = vsel %vm3198, %v3199, %v3200
        %v3202 = vrot.slane %v3126, 3
        %v3203 = vsel %vm3198, %v3200, %v3202
        %v3204 = vrot.slane %v3127, 3
        %v3205 = vsel %vm3198, %v3202, %v3204
        %v3206 = vrot.slane %v3128, 3
        %v3207 = vsel %vm3198, %v3204, %v3206
        %v3208 = vrot.slane %v3129, 3
        %v3209 = vsel %vm3198, %v3206, %v3208
        %v3210 = vrot.slane %v3130, 3
        %v3211 = vsel %vm3198, %v3208, %v3210
        %v3212 = vrot.slane %v3131, 3
        %v3213 = vsel %vm3198, %v3210, %v3212
        %v3214 = vrot.slane %v3132, 3
        %v3215 = vsel %vm3198, %v3212, %v3214
        %v3216 = vrot.slane %v3133, 3
        %v3217 = vsel %vm3198, %v3214, %v3216
        %v3218 = vrot.slane %v3134, 3
        %v3219 = vsel %vm3198, %v3216, %v3218
        %v3220 = vrot.slane %v3135, 3
        %v3221 = vsel %vm3198, %v3218, %v3220
        %v3222 = vrot.slane %v3136, 3
        %v3223 = vsel %vm3198, %v3220, %v3222
        %v3224 = vrot.slane %v3137, 3
        %v3225 = vsel %vm3198, %v3222, %v3224
        %v3226 = vrot.slane %v3138, 3
        %v3227 = vsel %vm3198, %v3224, %v3226
        %v3228 = vrot.slane %v3139, 3
        %v3229 = vsel %vm3198, %v3226, %v3228
        %v3230 = vrot.slane %v3140, 3
        %v3231 = vsel %vm3198, %v3228, %v3230
        %v3232 = vrot.slane %v3141, 3
        %v3233 = vsel %vm3198, %v3230, %v3232
        %v3234 = vrot.slane %v3142, 3
        %v3235 = vsel %vm3198, %v3232, %v3234
        %v3236 = vrot.slane %v3143, 3
        %v3237 = vsel %vm3198, %v3234, %v3236
        %v3238 = vrot.slane %v3144, 3
        %v3239 = vsel %vm3198, %v3236, %v3238
        %v3240 = vrot.slane %v3145, 3
        %v3241 = vsel %vm3198, %v3238, %v3240
        %v3242 = vrot.slane %v3146, 3
        %v3243 = vsel %vm3198, %v3240, %v3242
        %v3244 = vrot.slane %v3147, 3
        %v3245 = vsel %vm3198, %v3242, %v3244
        %v3246 = vrot.slane %v3148, 3
        %v3247 = vsel %vm3198, %v3244, %v3246
        %v3248 = vrot.slane %v3149, 3
        %v3249 = vsel %vm3198, %v3246, %v3248
        %v3250 = vrot.slane %v3150, 3
        %v3251 = vsel %vm3198, %v3248, %v3250
        %v3252 = vrot.slane %v3151, 3
        %v3253 = vsel %vm3198, %v3250, %v3252
        %v3254 = vrot.slane %v3152, 3
        %v3255 = vsel %vm3198, %v3252, %v3254
        %v3256 = vrot.slane %v3153, 3
        %v3257 = vsel %vm3198, %v3254, %v3256
        %v3258 = vrot.slane %v3154, 3
        %v3259 = vsel %vm3198, %v3256, %v3258
        %v3260 = vrot.slane %v3155, 3
        %v3261 = vsel %vm3198, %v3258, %v3260
        %v3262 = vrot.slane %v3156, 3
        %v3263 = vsel %vm3198, %v3260, %v3262
        %v3264 = vrot.slane %v3157, 3
        %v3265 = vsel %vm3198, %v3262, %v3264
        %v3266 = vrot.slane %v3158, 3
        %v3267 = vsel %vm3198, %v3264, %v3266
        %v3268 = vrot.slane %v3159, 3
        %v3269 = vsel %vm3198, %v3266, %v3268
        %v3270 = vrot.slane %v3160, 3
        %v3271 = vsel %vm3198, %v3268, %v3270
        %v3308 = vadd.f32 %v3079, %v3201
        %v3309 = vadd.f32 %v3080, %v3203
        %v3310 = vadd.f32 %v3081, %v3205
        %v3311 = vadd.f32 %v3082, %v3207
        %v3312 = vadd.f32 %v3083, %v3209
        %v3313 = vadd.f32 %v3084, %v3211
        %v3314 = vadd.f32 %v3085, %v3213
        %v3315 = vadd.f32 %v3086, %v3215
        %v3316 = vadd.f32 %v3087, %v3217
        %v3317 = vadd.f32 %v3088, %v3219
        %v3318 = vadd.f32 %v3089, %v3221
        %v3319 = vadd.f32 %v3090, %v3223
        %v3320 = vadd.f32 %v3091, %v3225
        %v3321 = vadd.f32 %v3092, %v3227
        %v3322 = vadd.f32 %v3093, %v3229
        %v3323 = vadd.f32 %v3094, %v3231
        %v3324 = vadd.f32 %v3095, %v3233
        %v3325 = vadd.f32 %v3096, %v3235
        %v3326 = vadd.f32 %v3097, %v3237
        %v3327 = vadd.f32 %v3098, %v3239
        %v3328 = vadd.f32 %v3099, %v3241
        %v3329 = vadd.f32 %v3100, %v3243
        %v3330 = vadd.f32 %v3101, %v3245
        %v3331 = vadd.f32 %v3102, %v3247
        %v3332 = vadd.f32 %v3103, %v3249
        %v3333 = vadd.f32 %v3104, %v3251
        %v3334 = vadd.f32 %v3105, %v3253
        %v3335 = vadd.f32 %v3106, %v3255
        %v3336 = vadd.f32 %v3107, %v3257
        %v3337 = vadd.f32 %v3108, %v3259
        %v3338 = vadd.f32 %v3109, %v3261
        %v3339 = vadd.f32 %v3110, %v3263
        %v3340 = vadd.f32 %v3111, %v3265
        %v3341 = vadd.f32 %v3112, %v3267
        %v3342 = vadd.f32 %v3113, %v3269
        %v3343 = vadd.f32 %v3114, %v3271
        %v3344 = vlaneseq
        %v3345 = vshrl.u32 %v3344, 7
        %v3346 = vsub.s32 5, %v3345
        %v3347 = vrot.slane %v2223, %v3346
        %v3348 = vmul.f32 %v2239, %v3347
        %v3349 = vmul.f32 %v2244, %v3347
        %v3350 = vmul.f32 %v2249, %v3347
        %v3351 = vmul.f32 %v2254, %v3347
        %v3352 = vmul.f32 %v2259, %v3347
        %v3353 = vmul.f32 %v2264, %v3347
        %v3354 = vmul.f32 %v2269, %v3347
        %v3355 = vmul.f32 %v2274, %v3347
        %v3356 = vmul.f32 %v2279, %v3347
        %v3357 = vmul.f32 %v2284, %v3347
        %v3358 = vmul.f32 %v2289, %v3347
        %v3359 = vmul.f32 %v2294, %v3347
        %v3360 = vmul.f32 %v2299, %v3347
        %v3361 = vmul.f32 %v2304, %v3347
        %v3362 = vmul.f32 %v2309, %v3347
        %v3363 = vmul.f32 %v2314, %v3347
        %v3364 = vmul.f32 %v2319, %v3347
        %v3365 = vmul.f32 %v2324, %v3347
        %v3366 = vmul.f32 %v2329, %v3347
        %v3367 = vmul.f32 %v2334, %v3347
        %v3368 = vmul.f32 %v2339, %v3347
        %v3369 = vmul.f32 %v2344, %v3347
        %v3370 = vmul.f32 %v2349, %v3347
        %v3371 = vmul.f32 %v2354, %v3347
        %v3372 = vmul.f32 %v2359, %v3347
        %v3373 = vmul.f32 %v2364, %v3347
        %v3374 = vmul.f32 %v2369, %v3347
        %v3375 = vmul.f32 %v2374, %v3347
        %v3376 = vmul.f32 %v2379, %v3347
        %v3377 = vmul.f32 %v2384, %v3347
        %v3378 = vmul.f32 %v2389, %v3347
        %v3379 = vmul.f32 %v2394, %v3347
        %v3380 = vmul.f32 %v2399, %v3347
        %v3381 = vmul.f32 %v2404, %v3347
        %v3382 = vmul.f32 %v2889, %v3347
        %v3383 = vmul.f32 %v2894, %v3347
        %v3384 = vmul.f32 %v3118, %v3347
        %vm3422 = vcmask 1043456
        %v3423 = vrot.slane %v3348, 4
        %v3424 = vrot.slane %v3349, 4
        %v3425 = vsel %vm3422, %v3423, %v3424
        %v3426 = vrot.slane %v3350, 4
        %v3427 = vsel %vm3422, %v3424, %v3426
        %v3428 = vrot.slane %v3351, 4
        %v3429 = vsel %vm3422, %v3426, %v3428
        %v3430 = vrot.slane %v3352, 4
        %v3431 = vsel %vm3422, %v3428, %v3430
        %v3432 = vrot.slane %v3353, 4
        %v3433 = vsel %vm3422, %v3430, %v3432
        %v3434 = vrot.slane %v3354, 4
        %v3435 = vsel %vm3422, %v3432, %v3434
        %v3436 = vrot.slane %v3355, 4
        %v3437 = vsel %vm3422, %v3434, %v3436
        %v3438 = vrot.slane %v3356, 4
        %v3439 = vsel %vm3422, %v3436, %v3438
        %v3440 = vrot.slane %v3357, 4
        %v3441 = vsel %vm3422, %v3438, %v3440
        %v3442 = vrot.slane %v3358, 4
        %v3443 = vsel %vm3422, %v3440, %v3442
        %v3444 = vrot.slane %v3359, 4
        %v3445 = vsel %vm3422, %v3442, %v3444
        %v3446 = vrot.slane %v3360, 4
        %v3447 = vsel %vm3422, %v3444, %v3446
        %v3448 = vrot.slane %v3361, 4
        %v3449 = vsel %vm3422, %v3446, %v3448
        %v3450 = vrot.slane %v3362, 4
        %v3451 = vsel %vm3422, %v3448, %v3450
        %v3452 = vrot.slane %v3363, 4
        %v3453 = vsel %vm3422, %v3450, %v3452
        %v3454 = vrot.slane %v3364, 4
        %v3455 = vsel %vm3422, %v3452, %v3454
        %v3456 = vrot.slane %v3365, 4
        %v3457 = vsel %vm3422, %v3454, %v3456
        %v3458 = vrot.slane %v3366, 4
        %v3459 = vsel %vm3422, %v3456, %v3458
        %v3460 = vrot.slane %v3367, 4
        %v3461 = vsel %vm3422, %v3458, %v3460
        %v3462 = vrot.slane %v3368, 4
        %v3463 = vsel %vm3422, %v3460, %v3462
        %v3464 = vrot.slane %v3369, 4
        %v3465 = vsel %vm3422, %v3462, %v3464
        %v3466 = vrot.slane %v3370, 4
        %v3467 = vsel %vm3422, %v3464, %v3466
        %v3468 = vrot.slane %v3371, 4
        %v3469 = vsel %vm3422, %v3466, %v3468
        %v3470 = vrot.slane %v3372, 4
        %v3471 = vsel %vm3422, %v3468, %v3470
        %v3472 = vrot.slane %v3373, 4
        %v3473 = vsel %vm3422, %v3470, %v3472
        %v3474 = vrot.slane %v3374, 4
        %v3475 = vsel %vm3422, %v3472, %v3474
        %v3476 = vrot.slane %v3375, 4
        %v3477 = vsel %vm3422, %v3474, %v3476
        %v3478 = vrot.slane %v3376, 4
        %v3479 = vsel %vm3422, %v3476, %v3478
        %v3480 = vrot.slane %v3377, 4
        %v3481 = vsel %vm3422, %v3478, %v3480
        %v3482 = vrot.slane %v3378, 4
        %v3483 = vsel %vm3422, %v3480, %v3482
        %v3484 = vrot.slane %v3379, 4
        %v3485 = vsel %vm3422, %v3482, %v3484
        %v3486 = vrot.slane %v3380, 4
        %v3487 = vsel %vm3422, %v3484, %v3486
        %v3488 = vrot.slane %v3381, 4
        %v3489 = vsel %vm3422, %v3486, %v3488
        %v3490 = vrot.slane %v3382, 4
        %v3491 = vsel %vm3422, %v3488, %v3490
        %v3492 = vrot.slane %v3383, 4
        %v3493 = vsel %vm3422, %v3490, %v3492
        %v3494 = vrot.slane %v3384, 4
        %v3495 = vsel %vm3422, %v3492, %v3494
        %v3532 = vadd.f32 %v3308, %v3425
        %v3533 = vadd.f32 %v3309, %v3427
        %v3534 = vadd.f32 %v3310, %v3429
        %v3535 = vadd.f32 %v3311, %v3431
        %v3536 = vadd.f32 %v3312, %v3433
        %v3537 = vadd.f32 %v3313, %v3435
        %v3538 = vadd.f32 %v3314, %v3437
        %v3539 = vadd.f32 %v3315, %v3439
        %v3540 = vadd.f32 %v3316, %v3441
        %v3541 = vadd.f32 %v3317, %v3443
        %v3542 = vadd.f32 %v3318, %v3445
        %v3543 = vadd.f32 %v3319, %v3447
        %v3544 = vadd.f32 %v3320, %v3449
        %v3545 = vadd.f32 %v3321, %v3451
        %v3546 = vadd.f32 %v3322, %v3453
        %v3547 = vadd.f32 %v3323, %v3455
        %v3548 = vadd.f32 %v3324, %v3457
        %v3549 = vadd.f32 %v3325, %v3459
        %v3550 = vadd.f32 %v3326, %v3461
        %v3551 = vadd.f32 %v3327, %v3463
        %v3552 = vadd.f32 %v3328, %v3465
        %v3553 = vadd.f32 %v3329, %v3467
        %v3554 = vadd.f32 %v3330, %v3469
        %v3555 = vadd.f32 %v3331, %v3471
        %v3556 = vadd.f32 %v3332, %v3473
        %v3557 = vadd.f32 %v3333, %v3475
        %v3558 = vadd.f32 %v3334, %v3477
        %v3559 = vadd.f32 %v3335, %v3479
        %v3560 = vadd.f32 %v3336, %v3481
        %v3561 = vadd.f32 %v3337, %v3483
        %v3562 = vadd.f32 %v3338, %v3485
        %v3563 = vadd.f32 %v3339, %v3487
        %v3564 = vadd.f32 %v3340, %v3489
        %v3565 = vadd.f32 %v3341, %v3491
        %v3566 = vadd.f32 %v3342, %v3493
        %v3567 = vadd.f32 %v3343, %v3495
        %3569 = vset.pattern.permute.xlu0 0
        %3570 = vperm.xlu0 %3569, %v2221
        %v3571 = vpop.permute.xlu0 %3570
        %3574 = vset.pattern.permute.xlu0 0
        %3575 = vperm.xlu0 %3574, %v2222
        %v3576 = vpop.permute.xlu0 %3575
        %v3578 = vlaneseq
        %v3579 = vshrl.u32 %v3578, 7
        %v3580 = vsub.s32 6, %v3579
        %v3581 = vrot.slane %v2223, %v3580
        %v3582 = vmul.f32 %v2249, %v3581
        %v3583 = vmul.f32 %v2254, %v3581
        %v3584 = vmul.f32 %v2259, %v3581
        %v3585 = vmul.f32 %v2264, %v3581
        %v3586 = vmul.f32 %v2269, %v3581
        %v3587 = vmul.f32 %v2274, %v3581
        %v3588 = vmul.f32 %v2279, %v3581
        %v3589 = vmul.f32 %v2284, %v3581
        %v3590 = vmul.f32 %v2289, %v3581
        %v3591 = vmul.f32 %v2294, %v3581
        %v3592 = vmul.f32 %v2299, %v3581
        %v3593 = vmul.f32 %v2304, %v3581
        %v3594 = vmul.f32 %v2309, %v3581
        %v3595 = vmul.f32 %v2314, %v3581
        %v3596 = vmul.f32 %v2319, %v3581
        %v3597 = vmul.f32 %v2324, %v3581
        %v3598 = vmul.f32 %v2329, %v3581
        %v3599 = vmul.f32 %v2334, %v3581
        %v3600 = vmul.f32 %v2339, %v3581
        %v3601 = vmul.f32 %v2344, %v3581
        %v3602 = vmul.f32 %v2349, %v3581
        %v3603 = vmul.f32 %v2354, %v3581
        %v3604 = vmul.f32 %v2359, %v3581
        %v3605 = vmul.f32 %v2364, %v3581
        %v3606 = vmul.f32 %v2369, %v3581
        %v3607 = vmul.f32 %v2374, %v3581
        %v3608 = vmul.f32 %v2379, %v3581
        %v3609 = vmul.f32 %v2384, %v3581
        %v3610 = vmul.f32 %v2389, %v3581
        %v3611 = vmul.f32 %v2394, %v3581
        %v3612 = vmul.f32 %v2399, %v3581
        %v3613 = vmul.f32 %v2404, %v3581
        %v3614 = vmul.f32 %v2889, %v3581
        %v3615 = vmul.f32 %v2894, %v3581
        %v3616 = vmul.f32 %v3118, %v3581
        %v3617 = vmul.f32 %v3571, %v3581
        %v3618 = vmul.f32 %v3576, %v3581
        %v3656 = vrot.slane %v3582, 4
        %v3657 = vrot.slane %v3583, 4
        %v3658 = vsel %vm3422, %v3656, %v3657
        %v3659 = vrot.slane %v3584, 4
        %v3660 = vsel %vm3422, %v3657, %v3659
        %v3661 = vrot.slane %v3585, 4
        %v3662 = vsel %vm3422, %v3659, %v3661
        %v3663 = vrot.slane %v3586, 4
        %v3664 = vsel %vm3422, %v3661, %v3663
        %v3665 = vrot.slane %v3587, 4
        %v3666 = vsel %vm3422, %v3663, %v3665
        %v3667 = vrot.slane %v3588, 4
        %v3668 = vsel %vm3422, %v3665, %v3667
        %v3669 = vrot.slane %v3589, 4
        %v3670 = vsel %vm3422, %v3667, %v3669
        %v3671 = vrot.slane %v3590, 4
        %v3672 = vsel %vm3422, %v3669, %v3671
        %v3673 = vrot.slane %v3591, 4
        %v3674 = vsel %vm3422, %v3671, %v3673
        %v3675 = vrot.slane %v3592, 4
        %v3676 = vsel %vm3422, %v3673, %v3675
        %v3677 = vrot.slane %v3593, 4
        %v3678 = vsel %vm3422, %v3675, %v3677
        %v3679 = vrot.slane %v3594, 4
        %v3680 = vsel %vm3422, %v3677, %v3679
        %v3681 = vrot.slane %v3595, 4
        %v3682 = vsel %vm3422, %v3679, %v3681
        %v3683 = vrot.slane %v3596, 4
        %v3684 = vsel %vm3422, %v3681, %v3683
        %v3685 = vrot.slane %v3597, 4
        %v3686 = vsel %vm3422, %v3683, %v3685
        %v3687 = vrot.slane %v3598, 4
        %v3688 = vsel %vm3422, %v3685, %v3687
        %v3689 = vrot.slane %v3599, 4
        %v3690 = vsel %vm3422, %v3687, %v3689
        %v3691 = vrot.slane %v3600, 4
        %v3692 = vsel %vm3422, %v3689, %v3691
        %v3693 = vrot.slane %v3601, 4
        %v3694 = vsel %vm3422, %v3691, %v3693
        %v3695 = vrot.slane %v3602, 4
        %v3696 = vsel %vm3422, %v3693, %v3695
        %v3697 = vrot.slane %v3603, 4
        %v3698 = vsel %vm3422, %v3695, %v3697
        %v3699 = vrot.slane %v3604, 4
        %v3700 = vsel %vm3422, %v3697, %v3699
        %v3701 = vrot.slane %v3605, 4
        %v3702 = vsel %vm3422, %v3699, %v3701
        %v3703 = vrot.slane %v3606, 4
        %v3704 = vsel %vm3422, %v3701, %v3703
        %v3705 = vrot.slane %v3607, 4
        %v3706 = vsel %vm3422, %v3703, %v3705
        %v3707 = vrot.slane %v3608, 4
        %v3708 = vsel %vm3422, %v3705, %v3707
        %v3709 = vrot.slane %v3609, 4
        %v3710 = vsel %vm3422, %v3707, %v3709
        %v3711 = vrot.slane %v3610, 4
        %v3712 = vsel %vm3422, %v3709, %v3711
        %v3713 = vrot.slane %v3611, 4
        %v3714 = vsel %vm3422, %v3711, %v3713
        %v3715 = vrot.slane %v3612, 4
        %v3716 = vsel %vm3422, %v3713, %v3715
        %v3717 = vrot.slane %v3613, 4
        %v3718 = vsel %vm3422, %v3715, %v3717
        %v3719 = vrot.slane %v3614, 4
        %v3720 = vsel %vm3422, %v3717, %v3719
        %v3721 = vrot.slane %v3615, 4
        %v3722 = vsel %vm3422, %v3719, %v3721
        %v3723 = vrot.slane %v3616, 4
        %v3724 = vsel %vm3422, %v3721, %v3723
        %v3725 = vrot.slane %v3617, 4
        %v3726 = vsel %vm3422, %v3723, %v3725
        %v3727 = vrot.slane %v3618, 4
        %v3728 = vsel %vm3422, %v3725, %v3727
        %v3765 = vadd.f32 %v3532, %v3658
        %v3766 = vadd.f32 %v3533, %v3660
        %v3767 = vadd.f32 %v3534, %v3662
        %v3768 = vadd.f32 %v3535, %v3664
        %v3769 = vadd.f32 %v3536, %v3666
        %v3770 = vadd.f32 %v3537, %v3668
        %v3771 = vadd.f32 %v3538, %v3670
        %v3772 = vadd.f32 %v3539, %v3672
        %v3773 = vadd.f32 %v3540, %v3674
        %v3774 = vadd.f32 %v3541, %v3676
        %v3775 = vadd.f32 %v3542, %v3678
        %v3776 = vadd.f32 %v3543, %v3680
        %v3777 = vadd.f32 %v3544, %v3682
        %v3778 = vadd.f32 %v3545, %v3684
        %v3779 = vadd.f32 %v3546, %v3686
        %v3780 = vadd.f32 %v3547, %v3688
        %v3781 = vadd.f32 %v3548, %v3690
        %v3782 = vadd.f32 %v3549, %v3692
        %v3783 = vadd.f32 %v3550, %v3694
        %v3784 = vadd.f32 %v3551, %v3696
        %v3785 = vadd.f32 %v3552, %v3698
        %v3786 = vadd.f32 %v3553, %v3700
        %v3787 = vadd.f32 %v3554, %v3702
        %v3788 = vadd.f32 %v3555, %v3704
        %v3789 = vadd.f32 %v3556, %v3706
        %v3790 = vadd.f32 %v3557, %v3708
        %v3791 = vadd.f32 %v3558, %v3710
        %v3792 = vadd.f32 %v3559, %v3712
        %v3793 = vadd.f32 %v3560, %v3714
        %v3794 = vadd.f32 %v3561, %v3716
        %v3795 = vadd.f32 %v3562, %v3718
        %v3796 = vadd.f32 %v3563, %v3720
        %v3797 = vadd.f32 %v3564, %v3722
        %v3798 = vadd.f32 %v3565, %v3724
        %v3799 = vadd.f32 %v3566, %v3726
        %v3800 = vadd.f32 %v3567, %v3728
        %v3801 = vlaneseq
        %v3802 = vshrl.u32 %v3801, 7
        %v3803 = vsub.s32 7, %v3802
        %v3804 = vrot.slane %v2223, %v3803
        %v3805 = vmul.f32 %v2249, %v3804
        %v3806 = vmul.f32 %v2254, %v3804
        %v3807 = vmul.f32 %v2259, %v3804
        %v3808 = vmul.f32 %v2264, %v3804
        %v3809 = vmul.f32 %v2269, %v3804
        %v3810 = vmul.f32 %v2274, %v3804
        %v3811 = vmul.f32 %v2279, %v3804
        %v3812 = vmul.f32 %v2284, %v3804
        %v3813 = vmul.f32 %v2289, %v3804
        %v3814 = vmul.f32 %v2294, %v3804
        %v3815 = vmul.f32 %v2299, %v3804
        %v3816 = vmul.f32 %v2304, %v3804
        %v3817 = vmul.f32 %v2309, %v3804
        %v3818 = vmul.f32 %v2314, %v3804
        %v3819 = vmul.f32 %v2319, %v3804
        %v3820 = vmul.f32 %v2324, %v3804
        %v3821 = vmul.f32 %v2329, %v3804
        %v3822 = vmul.f32 %v2334, %v3804
        %v3823 = vmul.f32 %v2339, %v3804
        %v3824 = vmul.f32 %v2344, %v3804
        %v3825 = vmul.f32 %v2349, %v3804
        %v3826 = vmul.f32 %v2354, %v3804
        %v3827 = vmul.f32 %v2359, %v3804
        %v3828 = vmul.f32 %v2364, %v3804
        %v3829 = vmul.f32 %v2369, %v3804
        %v3830 = vmul.f32 %v2374, %v3804
        %v3831 = vmul.f32 %v2379, %v3804
        %v3832 = vmul.f32 %v2384, %v3804
        %v3833 = vmul.f32 %v2389, %v3804
        %v3834 = vmul.f32 %v2394, %v3804
        %v3835 = vmul.f32 %v2399, %v3804
        %v3836 = vmul.f32 %v2404, %v3804
        %v3837 = vmul.f32 %v2889, %v3804
        %v3838 = vmul.f32 %v2894, %v3804
        %v3839 = vmul.f32 %v3118, %v3804
        %v3840 = vmul.f32 %v3571, %v3804
        %v3841 = vmul.f32 %v3576, %v3804
        %vm3879 = vcmask 1042432
        %v3880 = vrot.slane %v3805, 5
        %v3881 = vrot.slane %v3806, 5
        %v3882 = vsel %vm3879, %v3880, %v3881
        %v3883 = vrot.slane %v3807, 5
        %v3884 = vsel %vm3879, %v3881, %v3883
        %v3885 = vrot.slane %v3808, 5
        %v3886 = vsel %vm3879, %v3883, %v3885
        %v3887 = vrot.slane %v3809, 5
        %v3888 = vsel %vm3879, %v3885, %v3887
        %v3889 = vrot.slane %v3810, 5
        %v3890 = vsel %vm3879, %v3887, %v3889
        %v3891 = vrot.slane %v3811, 5
        %v3892 = vsel %vm3879, %v3889, %v3891
        %v3893 = vrot.slane %v3812, 5
        %v3894 = vsel %vm3879, %v3891, %v3893
        %v3895 = vrot.slane %v3813, 5
        %v3896 = vsel %vm3879, %v3893, %v3895
        %v3897 = vrot.slane %v3814, 5
        %v3898 = vsel %vm3879, %v3895, %v3897
        %v3899 = vrot.slane %v3815, 5
        %v3900 = vsel %vm3879, %v3897, %v3899
        %v3901 = vrot.slane %v3816, 5
        %v3902 = vsel %vm3879, %v3899, %v3901
        %v3903 = vrot.slane %v3817, 5
        %v3904 = vsel %vm3879, %v3901, %v3903
        %v3905 = vrot.slane %v3818, 5
        %v3906 = vsel %vm3879, %v3903, %v3905
        %v3907 = vrot.slane %v3819, 5
        %v3908 = vsel %vm3879, %v3905, %v3907
        %v3909 = vrot.slane %v3820, 5
        %v3910 = vsel %vm3879, %v3907, %v3909
        %v3911 = vrot.slane %v3821, 5
        %v3912 = vsel %vm3879, %v3909, %v3911
        %v3913 = vrot.slane %v3822, 5
        %v3914 = vsel %vm3879, %v3911, %v3913
        %v3915 = vrot.slane %v3823, 5
        %v3916 = vsel %vm3879, %v3913, %v3915
        %v3917 = vrot.slane %v3824, 5
        %v3918 = vsel %vm3879, %v3915, %v3917
        %v3919 = vrot.slane %v3825, 5
        %v3920 = vsel %vm3879, %v3917, %v3919
        %v3921 = vrot.slane %v3826, 5
        %v3922 = vsel %vm3879, %v3919, %v3921
        %v3923 = vrot.slane %v3827, 5
        %v3924 = vsel %vm3879, %v3921, %v3923
        %v3925 = vrot.slane %v3828, 5
        %v3926 = vsel %vm3879, %v3923, %v3925
        %v3927 = vrot.slane %v3829, 5
        %v3928 = vsel %vm3879, %v3925, %v3927
        %v3929 = vrot.slane %v3830, 5
        %v3930 = vsel %vm3879, %v3927, %v3929
        %v3931 = vrot.slane %v3831, 5
        %v3932 = vsel %vm3879, %v3929, %v3931
        %v3933 = vrot.slane %v3832, 5
        %v3934 = vsel %vm3879, %v3931, %v3933
        %v3935 = vrot.slane %v3833, 5
        %v3936 = vsel %vm3879, %v3933, %v3935
        %v3937 = vrot.slane %v3834, 5
        %v3938 = vsel %vm3879, %v3935, %v3937
        %v3939 = vrot.slane %v3835, 5
        %v3940 = vsel %vm3879, %v3937, %v3939
        %v3941 = vrot.slane %v3836, 5
        %v3942 = vsel %vm3879, %v3939, %v3941
        %v3943 = vrot.slane %v3837, 5
        %v3944 = vsel %vm3879, %v3941, %v3943
        %v3945 = vrot.slane %v3838, 5
        %v3946 = vsel %vm3879, %v3943, %v3945
        %v3947 = vrot.slane %v3839, 5
        %v3948 = vsel %vm3879, %v3945, %v3947
        %v3949 = vrot.slane %v3840, 5
        %v3950 = vsel %vm3879, %v3947, %v3949
        %v3951 = vrot.slane %v3841, 5
        %v3952 = vsel %vm3879, %v3949, %v3951
        %v3989 = vadd.f32 %v3765, %v3882
        %v3990 = vadd.f32 %v3766, %v3884
        %v3991 = vadd.f32 %v3767, %v3886
        %v3992 = vadd.f32 %v3768, %v3888
        %v3993 = vadd.f32 %v3769, %v3890
        %v3994 = vadd.f32 %v3770, %v3892
        %v3995 = vadd.f32 %v3771, %v3894
        %v3996 = vadd.f32 %v3772, %v3896
        %v3997 = vadd.f32 %v3773, %v3898
        %v3998 = vadd.f32 %v3774, %v3900
        %v3999 = vadd.f32 %v3775, %v3902
        %v4000 = vadd.f32 %v3776, %v3904
        %v4001 = vadd.f32 %v3777, %v3906
        %v4002 = vadd.f32 %v3778, %v3908
        %v4003 = vadd.f32 %v3779, %v3910
        %v4004 = vadd.f32 %v3780, %v3912
        %v4005 = vadd.f32 %v3781, %v3914
        %v4006 = vadd.f32 %v3782, %v3916
        %v4007 = vadd.f32 %v3783, %v3918
        %v4008 = vadd.f32 %v3784, %v3920
        %v4009 = vadd.f32 %v3785, %v3922
        %v4010 = vadd.f32 %v3786, %v3924
        %v4011 = vadd.f32 %v3787, %v3926
        %v4012 = vadd.f32 %v3788, %v3928
        %v4013 = vadd.f32 %v3789, %v3930
        %v4014 = vadd.f32 %v3790, %v3932
        %v4015 = vadd.f32 %v3791, %v3934
        %v4016 = vadd.f32 %v3792, %v3936
        %v4017 = vadd.f32 %v3793, %v3938
        %v4018 = vadd.f32 %v3794, %v3940
        %v4019 = vadd.f32 %v3795, %v3942
        %v4020 = vadd.f32 %v3796, %v3944
        %v4021 = vadd.f32 %v3797, %v3946
        %v4022 = vadd.f32 %v3798, %v3948
        %v4023 = vadd.f32 %v3799, %v3950
        %v4024 = vadd.f32 %v3800, %v3952
        %v4025 = vlaneseq
        %v4026 = vshrl.u32 %v4025, 7
        %v4027 = vsub.s32 0, %v4026
        %v4028 = vrot.slane %v2224, %v4027
        %v4029 = vmul.f32 %v2249, %v4028
        %v4030 = vmul.f32 %v2254, %v4028
        %v4031 = vmul.f32 %v2259, %v4028
        %v4032 = vmul.f32 %v2264, %v4028
        %v4033 = vmul.f32 %v2269, %v4028
        %v4034 = vmul.f32 %v2274, %v4028
        %v4035 = vmul.f32 %v2279, %v4028
        %v4036 = vmul.f32 %v2284, %v4028
        %v4037 = vmul.f32 %v2289, %v4028
        %v4038 = vmul.f32 %v2294, %v4028
        %v4039 = vmul.f32 %v2299, %v4028
        %v4040 = vmul.f32 %v2304, %v4028
        %v4041 = vmul.f32 %v2309, %v4028
        %v4042 = vmul.f32 %v2314, %v4028
        %v4043 = vmul.f32 %v2319, %v4028
        %v4044 = vmul.f32 %v2324, %v4028
        %v4045 = vmul.f32 %v2329, %v4028
        %v4046 = vmul.f32 %v2334, %v4028
        %v4047 = vmul.f32 %v2339, %v4028
        %v4048 = vmul.f32 %v2344, %v4028
        %v4049 = vmul.f32 %v2349, %v4028
        %v4050 = vmul.f32 %v2354, %v4028
        %v4051 = vmul.f32 %v2359, %v4028
        %v4052 = vmul.f32 %v2364, %v4028
        %v4053 = vmul.f32 %v2369, %v4028
        %v4054 = vmul.f32 %v2374, %v4028
        %v4055 = vmul.f32 %v2379, %v4028
        %v4056 = vmul.f32 %v2384, %v4028
        %v4057 = vmul.f32 %v2389, %v4028
        %v4058 = vmul.f32 %v2394, %v4028
        %v4059 = vmul.f32 %v2399, %v4028
        %v4060 = vmul.f32 %v2404, %v4028
        %v4061 = vmul.f32 %v2889, %v4028
        %v4062 = vmul.f32 %v2894, %v4028
        %v4063 = vmul.f32 %v3118, %v4028
        %v4064 = vmul.f32 %v3571, %v4028
        %v4065 = vmul.f32 %v3576, %v4028
        %vm4103 = vcmask 1041408
        %v4104 = vrot.slane %v4029, 6
        %v4105 = vrot.slane %v4030, 6
        %v4106 = vsel %vm4103, %v4104, %v4105
        %v4107 = vrot.slane %v4031, 6
        %v4108 = vsel %vm4103, %v4105, %v4107
        %v4109 = vrot.slane %v4032, 6
        %v4110 = vsel %vm4103, %v4107, %v4109
        %v4111 = vrot.slane %v4033, 6
        %v4112 = vsel %vm4103, %v4109, %v4111
        %v4113 = vrot.slane %v4034, 6
        %v4114 = vsel %vm4103, %v4111, %v4113
        %v4115 = vrot.slane %v4035, 6
        %v4116 = vsel %vm4103, %v4113, %v4115
        %v4117 = vrot.slane %v4036, 6
        %v4118 = vsel %vm4103, %v4115, %v4117
        %v4119 = vrot.slane %v4037, 6
        %v4120 = vsel %vm4103, %v4117, %v4119
        %v4121 = vrot.slane %v4038, 6
        %v4122 = vsel %vm4103, %v4119, %v4121
        %v4123 = vrot.slane %v4039, 6
        %v4124 = vsel %vm4103, %v4121, %v4123
        %v4125 = vrot.slane %v4040, 6
        %v4126 = vsel %vm4103, %v4123, %v4125
        %v4127 = vrot.slane %v4041, 6
        %v4128 = vsel %vm4103, %v4125, %v4127
        %v4129 = vrot.slane %v4042, 6
        %v4130 = vsel %vm4103, %v4127, %v4129
        %v4131 = vrot.slane %v4043, 6
        %v4132 = vsel %vm4103, %v4129, %v4131
        %v4133 = vrot.slane %v4044, 6
        %v4134 = vsel %vm4103, %v4131, %v4133
        %v4135 = vrot.slane %v4045, 6
        %v4136 = vsel %vm4103, %v4133, %v4135
        %v4137 = vrot.slane %v4046, 6
        %v4138 = vsel %vm4103, %v4135, %v4137
        %v4139 = vrot.slane %v4047, 6
        %v4140 = vsel %vm4103, %v4137, %v4139
        %v4141 = vrot.slane %v4048, 6
        %v4142 = vsel %vm4103, %v4139, %v4141
        %v4143 = vrot.slane %v4049, 6
        %v4144 = vsel %vm4103, %v4141, %v4143
        %v4145 = vrot.slane %v4050, 6
        %v4146 = vsel %vm4103, %v4143, %v4145
        %v4147 = vrot.slane %v4051, 6
        %v4148 = vsel %vm4103, %v4145, %v4147
        %v4149 = vrot.slane %v4052, 6
        %v4150 = vsel %vm4103, %v4147, %v4149
        %v4151 = vrot.slane %v4053, 6
        %v4152 = vsel %vm4103, %v4149, %v4151
        %v4153 = vrot.slane %v4054, 6
        %v4154 = vsel %vm4103, %v4151, %v4153
        %v4155 = vrot.slane %v4055, 6
        %v4156 = vsel %vm4103, %v4153, %v4155
        %v4157 = vrot.slane %v4056, 6
        %v4158 = vsel %vm4103, %v4155, %v4157
        %v4159 = vrot.slane %v4057, 6
        %v4160 = vsel %vm4103, %v4157, %v4159
        %v4161 = vrot.slane %v4058, 6
        %v4162 = vsel %vm4103, %v4159, %v4161
        %v4163 = vrot.slane %v4059, 6
        %v4164 = vsel %vm4103, %v4161, %v4163
        %v4165 = vrot.slane %v4060, 6
        %v4166 = vsel %vm4103, %v4163, %v4165
        %v4167 = vrot.slane %v4061, 6
        %v4168 = vsel %vm4103, %v4165, %v4167
        %v4169 = vrot.slane %v4062, 6
        %v4170 = vsel %vm4103, %v4167, %v4169
        %v4171 = vrot.slane %v4063, 6
        %v4172 = vsel %vm4103, %v4169, %v4171
        %v4173 = vrot.slane %v4064, 6
        %v4174 = vsel %vm4103, %v4171, %v4173
        %v4175 = vrot.slane %v4065, 6
        %v4176 = vsel %vm4103, %v4173, %v4175
        %v4213 = vadd.f32 %v3989, %v4106
        %v4214 = vadd.f32 %v3990, %v4108
        %v4215 = vadd.f32 %v3991, %v4110
        %v4216 = vadd.f32 %v3992, %v4112
        %v4217 = vadd.f32 %v3993, %v4114
        %v4218 = vadd.f32 %v3994, %v4116
        %v4219 = vadd.f32 %v3995, %v4118
        %v4220 = vadd.f32 %v3996, %v4120
        %v4221 = vadd.f32 %v3997, %v4122
        %v4222 = vadd.f32 %v3998, %v4124
        %v4223 = vadd.f32 %v3999, %v4126
        %v4224 = vadd.f32 %v4000, %v4128
        %v4225 = vadd.f32 %v4001, %v4130
        %v4226 = vadd.f32 %v4002, %v4132
        %v4227 = vadd.f32 %v4003, %v4134
        %v4228 = vadd.f32 %v4004, %v4136
        %v4229 = vadd.f32 %v4005, %v4138
        %v4230 = vadd.f32 %v4006, %v4140
        %v4231 = vadd.f32 %v4007, %v4142
        %v4232 = vadd.f32 %v4008, %v4144
        %v4233 = vadd.f32 %v4009, %v4146
        %v4234 = vadd.f32 %v4010, %v4148
        %v4235 = vadd.f32 %v4011, %v4150
        %v4236 = vadd.f32 %v4012, %v4152
        %v4237 = vadd.f32 %v4013, %v4154
        %v4238 = vadd.f32 %v4014, %v4156
        %v4239 = vadd.f32 %v4015, %v4158
        %v4240 = vadd.f32 %v4016, %v4160
        %v4241 = vadd.f32 %v4017, %v4162
        %v4242 = vadd.f32 %v4018, %v4164
        %v4243 = vadd.f32 %v4019, %v4166
        %v4244 = vadd.f32 %v4020, %v4168
        %v4245 = vadd.f32 %v4021, %v4170
        %v4246 = vadd.f32 %v4022, %v4172
        %v4247 = vadd.f32 %v4023, %v4174
        %v4248 = vadd.f32 %v4024, %v4176
        %v4250 = vlaneseq
        %v4251 = vshrl.u32 %v4250, 7
        %v4252 = vsub.s32 0, %v4251
        %v4253 = vrot.slane %v2225, %v4252
        %v4255 = vadd.f32 %v4213, %v4253
        %v4256 = vadd.f32 %v4214, %v4253
        %v4257 = vadd.f32 %v4215, %v4253
        %v4258 = vadd.f32 %v4216, %v4253
        %v4259 = vadd.f32 %v4217, %v4253
        %v4260 = vadd.f32 %v4218, %v4253
        %v4261 = vadd.f32 %v4219, %v4253
        %v4262 = vadd.f32 %v4220, %v4253
        %v4263 = vadd.f32 %v4221, %v4253
        %v4264 = vadd.f32 %v4222, %v4253
        %v4265 = vadd.f32 %v4223, %v4253
        %v4266 = vadd.f32 %v4224, %v4253
        %v4267 = vadd.f32 %v4225, %v4253
        %v4268 = vadd.f32 %v4226, %v4253
        %v4269 = vadd.f32 %v4227, %v4253
        %v4270 = vadd.f32 %v4228, %v4253
        %v4271 = vadd.f32 %v4229, %v4253
        %v4272 = vadd.f32 %v4230, %v4253
        %v4273 = vadd.f32 %v4231, %v4253
        %v4274 = vadd.f32 %v4232, %v4253
        %v4275 = vadd.f32 %v4233, %v4253
        %v4276 = vadd.f32 %v4234, %v4253
        %v4277 = vadd.f32 %v4235, %v4253
        %v4278 = vadd.f32 %v4236, %v4253
        %v4279 = vadd.f32 %v4237, %v4253
        %v4280 = vadd.f32 %v4238, %v4253
        %v4281 = vadd.f32 %v4239, %v4253
        %v4282 = vadd.f32 %v4240, %v4253
        %v4283 = vadd.f32 %v4241, %v4253
        %v4284 = vadd.f32 %v4242, %v4253
        %v4285 = vadd.f32 %v4243, %v4253
        %v4286 = vadd.f32 %v4244, %v4253
        %v4287 = vadd.f32 %v4245, %v4253
        %v4288 = vadd.f32 %v4246, %v4253
        %v4289 = vadd.f32 %v4247, %v4253
        %v4290 = vadd.f32 %v4248, %v4253
        %v4291 = vmax.f32 %v4255, 0.0
        %v4292 = vmax.f32 %v4256, 0.0
        %v4293 = vmax.f32 %v4257, 0.0
        %v4294 = vmax.f32 %v4258, 0.0
        %v4295 = vmax.f32 %v4259, 0.0
        %v4296 = vmax.f32 %v4260, 0.0
        %v4297 = vmax.f32 %v4261, 0.0
        %v4298 = vmax.f32 %v4262, 0.0
        %v4299 = vmax.f32 %v4263, 0.0
        %v4300 = vmax.f32 %v4264, 0.0
        %v4301 = vmax.f32 %v4265, 0.0
        %v4302 = vmax.f32 %v4266, 0.0
        %v4303 = vmax.f32 %v4267, 0.0
        %v4304 = vmax.f32 %v4268, 0.0
        %v4305 = vmax.f32 %v4269, 0.0
        %v4306 = vmax.f32 %v4270, 0.0
        %v4307 = vmax.f32 %v4271, 0.0
        %v4308 = vmax.f32 %v4272, 0.0
        %v4309 = vmax.f32 %v4273, 0.0
        %v4310 = vmax.f32 %v4274, 0.0
        %v4311 = vmax.f32 %v4275, 0.0
        %v4312 = vmax.f32 %v4276, 0.0
        %v4313 = vmax.f32 %v4277, 0.0
        %v4314 = vmax.f32 %v4278, 0.0
        %v4315 = vmax.f32 %v4279, 0.0
        %v4316 = vmax.f32 %v4280, 0.0
        %v4317 = vmax.f32 %v4281, 0.0
        %v4318 = vmax.f32 %v4282, 0.0
        %v4319 = vmax.f32 %v4283, 0.0
        %v4320 = vmax.f32 %v4284, 0.0
        %v4321 = vmax.f32 %v4285, 0.0
        %v4322 = vmax.f32 %v4286, 0.0
        %v4323 = vmax.f32 %v4287, 0.0
        %v4324 = vmax.f32 %v4288, 0.0
        %v4325 = vmax.f32 %v4289, 0.0
        %v4326 = vmax.f32 %v4290, 0.0
        %v4327 = vld [vmem:[%s7] sm:$0xff]
        %v4328 = vld [vmem:[%s7 + $0x8] sm:$0xff]
        %v4329 = vld [vmem:[%s7 + $0x10] sm:$0xff]
        %v4330 = vld [vmem:[%s7 + $0x18] sm:$0xff]
        %v4331 = vld [vmem:[%s7 + $0x20] sm:$0xff]
        %v4332 = vld [vmem:[%s7 + $0x28] sm:$0xff]
        %v4333 = vld [vmem:[%s7 + $0x30] sm:$0xff]
        %v4334 = vld [vmem:[%s7 + $0x38] sm:$0xff]
        %v4335 = vld [vmem:[%s7 + $0x40] sm:$0xff]
        %v4336 = vld [vmem:[%s7 + $0x48] sm:$0xff]
        %v4337 = vld [vmem:[%s7 + $0x50] sm:$0xff]
        %v4338 = vld [vmem:[%s7 + $0x58] sm:$0xff]
        %v4339 = vld [vmem:[%s7 + $0x60] sm:$0xff]
        %v4340 = vld [vmem:[%s7 + $0x68] sm:$0xff]
        %v4341 = vld [vmem:[%s7 + $0x70] sm:$0xff]
        %v4342 = vld [vmem:[%s7 + $0x78] sm:$0xff]
        %v4343 = vld [vmem:[%s7 + $0x80] sm:$0xff]
        %v4344 = vld [vmem:[%s7 + $0x88] sm:$0xff]
        %v4345 = vld [vmem:[%s7 + $0x90] sm:$0xff]
        %v4346 = vld [vmem:[%s7 + $0x98] sm:$0xff]
        %v4347 = vld [vmem:[%s7 + $0xa0] sm:$0xff]
        %v4348 = vld [vmem:[%s7 + $0xa8] sm:$0xff]
        %v4349 = vld [vmem:[%s7 + $0xb0] sm:$0xff]
        %v4350 = vld [vmem:[%s7 + $0xb8] sm:$0xff]
        %v4351 = vld [vmem:[%s7 + $0xc0] sm:$0xff]
        %v4352 = vld [vmem:[%s7 + $0xc8] sm:$0xff]
        %v4353 = vld [vmem:[%s7 + $0xd0] sm:$0xff]
        %v4354 = vld [vmem:[%s7 + $0xd8] sm:$0xff]
        %v4355 = vld [vmem:[%s7 + $0xe0] sm:$0xff]
        %v4356 = vld [vmem:[%s7 + $0xe8] sm:$0xff]
        %v4357 = vld [vmem:[%s7 + $0xf0] sm:$0xff]
        %v4358 = vld [vmem:[%s7 + $0xf8] sm:$0xff]
        %v4359 = vld [vmem:[%s7 + $0x100] sm:$0xff]
        %v4360 = vld [vmem:[%s7 + $0x108] sm:$0xff]
        %v4361 = vld [vmem:[%s7 + $0x110] sm:$0xff]
        %v4362 = vld [vmem:[%s7 + $0x118] sm:$0xff]
        %v4363 = vld [vmem:[%s7 + $0x120] sm:$0xf]
        %v4364 = vld [vmem:[%s7 + $0x128] sm:$0xf]
        %v4365 = vld [vmem:[%s7 + $0x130] sm:$0xf]
        %vm4366 = vcmask 244736
        %v4368 = vsel %vm4366, %v4329, 0
        %v4371 = vsel %vm4366, %v4332, 0
        %v4374 = vsel %vm4366, %v4335, 0
        %v4377 = vsel %vm4366, %v4338, 0
        %v4380 = vsel %vm4366, %v4341, 0
        %v4383 = vsel %vm4366, %v4344, 0
        %v4386 = vsel %vm4366, %v4347, 0
        %v4389 = vsel %vm4366, %v4350, 0
        %v4392 = vsel %vm4366, %v4353, 0
        %v4395 = vsel %vm4366, %v4356, 0
        %v4398 = vsel %vm4366, %v4359, 0
        %v4401 = vsel %vm4366, %v4362, 0
        %v4404 = vsel %vm4366, %v4365, 0
        %v4407 = vsel %vm2742, %v4326, 0
        %4409 = vmatprep.subr.mxu0 0.0
        %4410 = vmatpush1.msra.mxu0 %v4291
        %4411 = vmatprep.subr.mxu0 0.0
        %4412 = vmatpush1.msra.mxu0 %v4292
        %4413 = vmatprep.subr.mxu0 0.0
        %4414 = vmatpush1.msra.mxu0 %v4293
        %4415 = vmatprep.subr.mxu0 0.0
        %4416 = vmatpush1.msra.mxu0 %v4294
        %4417 = vmatprep.subr.mxu0 0.0
        %4418 = vmatpush1.msra.mxu0 %v4295
        %4419 = vmatprep.subr.mxu0 0.0
        %4420 = vmatpush1.msra.mxu0 %v4296
        %4421 = vmatprep.subr.mxu0 0.0
        %4422 = vmatpush1.msra.mxu0 %v4297
        %4423 = vmatprep.subr.mxu0 0.0
        %4424 = vmatpush1.msra.mxu0 %v4298
        %4425 = vmatprep.subr.mxu0 0.0
        %4426 = vmatpush1.msra.mxu0 %v4299
        %4427 = vmatprep.subr.mxu0 0.0
        %4428 = vmatpush1.msra.mxu0 %v4300
        %4429 = vmatprep.subr.mxu0 0.0
        %4430 = vmatpush1.msra.mxu0 %v4301
        %4431 = vmatprep.subr.mxu0 0.0
        %4432 = vmatpush1.msra.mxu0 %v4302
        %4433 = vmatprep.subr.mxu0 0.0
        %4434 = vmatpush1.msra.mxu0 %v4303
        %4435 = vmatprep.subr.mxu0 0.0
        %4436 = vmatpush1.msra.mxu0 %v4304
        %4437 = vmatprep.subr.mxu0 0.0
        %4438 = vmatpush1.msra.mxu0 %v4305
        %4439 = vmatprep.subr.mxu0 0.0
        %4440 = vmatpush1.msra.mxu0 %v4306
        %4441 = vmatprep.subr.mxu0 0.0
        %4442 = vmatpush1.msra.mxu0 %v4307
        %4443 = vmatprep.subr.mxu0 0.0
        %4444 = vmatpush1.msra.mxu0 %v4308
        %4445 = vmatprep.subr.mxu0 0.0
        %4446 = vmatpush1.msra.mxu0 %v4309
        %4447 = vmatprep.subr.mxu0 0.0
        %4448 = vmatpush1.msra.mxu0 %v4310
        %4449 = vmatprep.subr.mxu0 0.0
        %4450 = vmatpush1.msra.mxu0 %v4311
        %4451 = vmatprep.subr.mxu0 0.0
        %4452 = vmatpush1.msra.mxu0 %v4312
        %4453 = vmatprep.subr.mxu0 0.0
        %4454 = vmatpush1.msra.mxu0 %v4313
        %4455 = vmatprep.subr.mxu0 0.0
        %4456 = vmatpush1.msra.mxu0 %v4314
        %4457 = vmatprep.subr.mxu0 0.0
        %4458 = vmatpush1.msra.mxu0 %v4315
        %4459 = vmatprep.subr.mxu0 0.0
        %4460 = vmatpush1.msra.mxu0 %v4316
        %4461 = vmatprep.subr.mxu0 0.0
        %4462 = vmatpush1.msra.mxu0 %v4317
        %4463 = vmatprep.subr.mxu0 0.0
        %4464 = vmatpush1.msra.mxu0 %v4318
        %4465 = vmatprep.subr.mxu0 0.0
        %4466 = vmatpush1.msra.mxu0 %v4319
        %4467 = vmatprep.subr.mxu0 0.0
        %4468 = vmatpush1.msra.mxu0 %v4320
        %4469 = vmatprep.subr.mxu0 0.0
        %4470 = vmatpush1.msra.mxu0 %v4321
        %4471 = vmatprep.subr.mxu0 0.0
        %4472 = vmatpush1.msra.mxu0 %v4322
        %4473 = vmatprep.mubr.f32.mxu0 %v4328
        %4474 = vmatmul.mubr.f32.gmra.mrb[0].mxu0 %v4327
        %v4475 = vpop.f32.mrb[0].mxu0
        %v4476 = vadd.f32 0.0, %v4475
        %v4477 = vpop.f32.mrb[0].mxu0
        %4478 = vmatprep.mubr.f32.mxu0 %v4331
        %4479 = vmatmul.mubr.f32.gmra.mrb[0].mxu0 %v4330
        %v4480 = vpop.f32.mrb[0].mxu0
        %v4481 = vadd.f32 0.0, %v4480
        %v4482 = vpop.f32.mrb[0].mxu0
        %4483 = vmatprep.mubr.f32.mxu0 %v4334
        %4484 = vmatmul.mubr.f32.gmra.mrb[0].mxu0 %v4333
        %v4485 = vpop.f32.mrb[0].mxu0
        %v4486 = vadd.f32 0.0, %v4485
        %v4487 = vpop.f32.mrb[0].mxu0
        %4488 = vmatprep.mubr.f32.mxu0 %v4337
        %4489 = vmatmul.mubr.f32.gmra.mrb[0].mxu0 %v4336
        %v4490 = vpop.f32.mrb[0].mxu0
        %v4491 = vadd.f32 0.0, %v4490
        %v4492 = vpop.f32.mrb[0].mxu0
        %4493 = vmatprep.mubr.f32.mxu0 %v4340
        %4494 = vmatmul.mubr.f32.gmra.mrb[0].mxu0 %v4339
        %v4495 = vpop.f32.mrb[0].mxu0
        %v4496 = vadd.f32 0.0, %v4495
        %v4497 = vpop.f32.mrb[0].mxu0
        %4498 = vmatprep.mubr.f32.mxu0 %v4343
        %4499 = vmatmul.mubr.f32.gmra.mrb[0].mxu0 %v4342
        %v4500 = vpop.f32.mrb[0].mxu0
        %v4501 = vadd.f32 0.0, %v4500
        %v4502 = vpop.f32.mrb[0].mxu0
        %4503 = vmatprep.mubr.f32.mxu0 %v4346
        %4504 = vmatmul.mubr.f32.gmra.mrb[0].mxu0 %v4345
        %v4505 = vpop.f32.mrb[0].mxu0
        %v4506 = vadd.f32 0.0, %v4505
        %v4507 = vpop.f32.mrb[0].mxu0
        %4508 = vmatprep.mubr.f32.mxu0 %v4349
        %4509 = vmatmul.mubr.f32.gmra.mrb[0].mxu0 %v4348
        %v4510 = vpop.f32.mrb[0].mxu0
        %v4511 = vadd.f32 0.0, %v4510
        %v4512 = vpop.f32.mrb[0].mxu0
        %4513 = vmatprep.mubr.f32.mxu0 %v4352
        %4514 = vmatmul.mubr.f32.gmra.mrb[0].mxu0 %v4351
        %v4515 = vpop.f32.mrb[0].mxu0
        %v4516 = vadd.f32 0.0, %v4515
        %v4517 = vpop.f32.mrb[0].mxu0
        %4518 = vmatprep.mubr.f32.mxu0 %v4355
        %4519 = vmatmul.mubr.f32.gmra.mrb[0].mxu0 %v4354
        %v4520 = vpop.f32.mrb[0].mxu0
        %v4521 = vadd.f32 0.0, %v4520
        %v4522 = vpop.f32.mrb[0].mxu0
        %4523 = vmatprep.mubr.f32.mxu0 %v4358
        %4524 = vmatmul.mubr.f32.gmra.mrb[0].mxu0 %v4357
        %v4525 = vpop.f32.mrb[0].mxu0
        %v4526 = vadd.f32 0.0, %v4525
        %v4527 = vpop.f32.mrb[0].mxu0
        %4528 = vmatprep.mubr.f32.mxu0 %v4361
        %4529 = vmatmul.mubr.f32.gmra.mrb[0].mxu0 %v4360
        %v4530 = vpop.f32.mrb[0].mxu0
        %v4531 = vadd.f32 0.0, %v4530
        %v4532 = vpop.f32.mrb[0].mxu0
        %4533 = vmatprep.mubr.f32.mxu0 %v4364
        %4534 = vmatmul.mubr.f32.gmra.mrb[0].mxu0 %v4363
        %v4535 = vpop.f32.mrb[0].mxu0
        %v4536 = vadd.f32 0.0, %v4535
        %v4537 = vpop.f32.mrb[0].mxu0
        %4538 = vdwg.mxu0
        %4539 = vmatprep.subr.mxu0 0.0
        %4540 = vmatpush1.msra.mxu0 %v4323
        %4541 = vmatprep.subr.mxu0 0.0
        %4542 = vmatpush1.msra.mxu0 %v4324
        %4543 = vmatprep.subr.mxu0 0.0
        %4544 = vmatpush1.msra.mxu0 %v4325
        %4545 = vmatprep.subr.mxu0 0.0
        %4546 = vmatpush1.msra.mxu0 %v4407
        %4547 = vmatprep.subr.mxu0 0.0
        %4548 = vmatpush1.msra.mxu0 0.0
        %4549 = vmatprep.subr.mxu0 0.0
        %4550 = vmatpush1.msra.mxu0 0.0
        %4551 = vmatprep.subr.mxu0 0.0
        %4552 = vmatpush1.msra.mxu0 0.0
        %4553 = vmatprep.subr.mxu0 0.0
        %4554 = vmatpush1.msra.mxu0 0.0
        %4555 = vmatprep.subr.mxu0 0.0
        %4556 = vmatpush1.msra.mxu0 0.0
        %4557 = vmatprep.subr.mxu0 0.0
        %4558 = vmatpush1.msra.mxu0 0.0
        %4559 = vmatprep.subr.mxu0 0.0
        %4560 = vmatpush1.msra.mxu0 0.0
        %4561 = vmatprep.subr.mxu0 0.0
        %4562 = vmatpush1.msra.mxu0 0.0
        %4563 = vmatprep.subr.mxu0 0.0
        %4564 = vmatpush1.msra.mxu0 0.0
        %4565 = vmatprep.subr.mxu0 0.0
        %4566 = vmatpush1.msra.mxu0 0.0
        %4567 = vmatprep.subr.mxu0 0.0
        %4568 = vmatpush1.msra.mxu0 0.0
        %4569 = vmatprep.subr.mxu0 0.0
        %4570 = vmatpush1.msra.mxu0 0.0
        %4571 = vmatprep.subr.mxu0 0.0
        %4572 = vmatpush1.msra.mxu0 0.0
        %4573 = vmatprep.subr.mxu0 0.0
        %4574 = vmatpush1.msra.mxu0 0.0
        %4575 = vmatprep.subr.mxu0 0.0
        %4576 = vmatpush1.msra.mxu0 0.0
        %4577 = vmatprep.subr.mxu0 0.0
        %4578 = vmatpush1.msra.mxu0 0.0
        %4579 = vmatprep.subr.mxu0 0.0
        %4580 = vmatpush1.msra.mxu0 0.0
        %4581 = vmatprep.subr.mxu0 0.0
        %4582 = vmatpush1.msra.mxu0 0.0
        %4583 = vmatprep.subr.mxu0 0.0
        %4584 = vmatpush1.msra.mxu0 0.0
        %4585 = vmatprep.subr.mxu0 0.0
        %4586 = vmatpush1.msra.mxu0 0.0
        %4587 = vmatprep.subr.mxu0 0.0
        %4588 = vmatpush1.msra.mxu0 0.0
        %4589 = vmatprep.subr.mxu0 0.0
        %4590 = vmatpush1.msra.mxu0 0.0
        %4591 = vmatprep.subr.mxu0 0.0
        %4592 = vmatpush1.msra.mxu0 0.0
        %4593 = vmatprep.subr.mxu0 0.0
        %4594 = vmatpush1.msra.mxu0 0.0
        %4595 = vmatprep.subr.mxu0 0.0
        %4596 = vmatpush1.msra.mxu0 0.0
        %4597 = vmatprep.subr.mxu0 0.0
        %4598 = vmatpush1.msra.mxu0 0.0
        %4599 = vmatprep.subr.mxu0 0.0
        %4600 = vmatpush1.msra.mxu0 0.0
        %4601 = vmatprep.subr.mxu0 0.0
        %4602 = vmatpush1.msra.mxu0 0.0
        %4603 = vmatprep.mubr.f32.mxu0 0.0
        %4604 = vmatmul.mubr.f32.gmra.mrb[0].mxu0 %v4368
        %v4605 = vpop.f32.mrb[0].mxu0
        %v4606 = vadd.f32 %v4476, %v4605
        %v4607 = vpop.f32.mrb[0].mxu0
        %4608 = vmatprep.mubr.f32.mxu0 0.0
        %4609 = vmatmul.mubr.f32.gmra.mrb[0].mxu0 %v4371
        %v4610 = vpop.f32.mrb[0].mxu0
        %v4611 = vadd.f32 %v4481, %v4610
        %v4612 = vpop.f32.mrb[0].mxu0
        %4613 = vmatprep.mubr.f32.mxu0 0.0
        %4614 = vmatmul.mubr.f32.gmra.mrb[0].mxu0 %v4374
        %v4615 = vpop.f32.mrb[0].mxu0
        %v4616 = vadd.f32 %v4486, %v4615
        %v4617 = vpop.f32.mrb[0].mxu0
        %4618 = vmatprep.mubr.f32.mxu0 0.0
        %4619 = vmatmul.mubr.f32.gmra.mrb[0].mxu0 %v4377
        %v4620 = vpop.f32.mrb[0].mxu0
        %v4621 = vadd.f32 %v4491, %v4620
        %v4622 = vpop.f32.mrb[0].mxu0
        %4623 = vmatprep.mubr.f32.mxu0 0.0
        %4624 = vmatmul.mubr.f32.gmra.mrb[0].mxu0 %v4380
        %v4625 = vpop.f32.mrb[0].mxu0
        %v4626 = vadd.f32 %v4496, %v4625
        %v4627 = vpop.f32.mrb[0].mxu0
        %4628 = vmatprep.mubr.f32.mxu0 0.0
        %4629 = vmatmul.mubr.f32.gmra.mrb[0].mxu0 %v4383
        %v4630 = vpop.f32.mrb[0].mxu0
        %v4631 = vadd.f32 %v4501, %v4630
        %v4632 = vpop.f32.mrb[0].mxu0
        %4633 = vmatprep.mubr.f32.mxu0 0.0
        %4634 = vmatmul.mubr.f32.gmra.mrb[0].mxu0 %v4386
        %v4635 = vpop.f32.mrb[0].mxu0
        %v4636 = vadd.f32 %v4506, %v4635
        %v4637 = vpop.f32.mrb[0].mxu0
        %4638 = vmatprep.mubr.f32.mxu0 0.0
        %4639 = vmatmul.mubr.f32.gmra.mrb[0].mxu0 %v4389
        %v4640 = vpop.f32.mrb[0].mxu0
        %v4641 = vadd.f32 %v4511, %v4640
        %v4642 = vpop.f32.mrb[0].mxu0
        %4643 = vmatprep.mubr.f32.mxu0 0.0
        %4644 = vmatmul.mubr.f32.gmra.mrb[0].mxu0 %v4392
        %v4645 = vpop.f32.mrb[0].mxu0
        %v4646 = vadd.f32 %v4516, %v4645
        %v4647 = vpop.f32.mrb[0].mxu0
        %4648 = vmatprep.mubr.f32.mxu0 0.0
        %4649 = vmatmul.mubr.f32.gmra.mrb[0].mxu0 %v4395
        %v4650 = vpop.f32.mrb[0].mxu0
        %v4651 = vadd.f32 %v4521, %v4650
        %v4652 = vpop.f32.mrb[0].mxu0
        %4653 = vmatprep.mubr.f32.mxu0 0.0
        %4654 = vmatmul.mubr.f32.gmra.mrb[0].mxu0 %v4398
        %v4655 = vpop.f32.mrb[0].mxu0
        %v4656 = vadd.f32 %v4526, %v4655
        %v4657 = vpop.f32.mrb[0].mxu0
        %4658 = vmatprep.mubr.f32.mxu0 0.0
        %4659 = vmatmul.mubr.f32.gmra.mrb[0].mxu0 %v4401
        %v4660 = vpop.f32.mrb[0].mxu0
        %v4661 = vadd.f32 %v4531, %v4660
        %v4662 = vpop.f32.mrb[0].mxu0
        %4663 = vmatprep.mubr.f32.mxu0 0.0
        %4664 = vmatmul.mubr.f32.gmra.mrb[0].mxu0 %v4404
        %v4665 = vpop.f32.mrb[0].mxu0
        %v4666 = vadd.f32 %v4536, %v4665
        %v4667 = vpop.f32.mrb[0].mxu0
        %4668 = vdwg.mxu0
        %v4669 = vld [vmem:[%s9] sm:$0xff]
        %v4670 = vld [vmem:[%s9 + $0x8] sm:$0x1]
        %v4671 = vld [vmem:[%s11] sm:$0x1]
        %v4672 = vld [vmem:[%s13] sm:$0xff]
        %v4673 = vld [vmem:[%s15] sm:$0x1]
        %v4674 = vlaneseq
        %v4675 = vshrl.u32 %v4674, 7
        %v4676 = vsub.s32 0, %v4675
        %v4677 = vrot.slane %v4669, %v4676
        %v4678 = vmul.f32 %v4606, %v4677
        %v4679 = vmul.f32 %v4611, %v4677
        %v4680 = vmul.f32 %v4616, %v4677
        %v4681 = vmul.f32 %v4621, %v4677
        %v4682 = vmul.f32 %v4626, %v4677
        %v4683 = vmul.f32 %v4631, %v4677
        %v4684 = vmul.f32 %v4636, %v4677
        %v4685 = vmul.f32 %v4641, %v4677
        %v4686 = vmul.f32 %v4646, %v4677
        %v4687 = vmul.f32 %v4651, %v4677
        %v4688 = vlaneseq
        %v4689 = vshrl.u32 %v4688, 7
        %v4690 = vsub.s32 1, %v4689
        %v4691 = vrot.slane %v4669, %v4690
        %v4692 = vmul.f32 %v4606, %v4691
        %v4693 = vmul.f32 %v4611, %v4691
        %v4694 = vmul.f32 %v4616, %v4691
        %v4695 = vmul.f32 %v4621, %v4691
        %v4696 = vmul.f32 %v4626, %v4691
        %v4697 = vmul.f32 %v4631, %v4691
        %v4698 = vmul.f32 %v4636, %v4691
        %v4699 = vmul.f32 %v4641, %v4691
        %v4700 = vmul.f32 %v4646, %v4691
        %v4701 = vmul.f32 %v4651, %v4691
        %v4712 = vrot.slane %v4692, 1
        %v4713 = vrot.slane %v4693, 1
        %v4714 = vsel %vm2522, %v4712, %v4713
        %v4715 = vrot.slane %v4694, 1
        %v4716 = vsel %vm2522, %v4713, %v4715
        %v4717 = vrot.slane %v4695, 1
        %v4718 = vsel %vm2522, %v4715, %v4717
        %v4719 = vrot.slane %v4696, 1
        %v4720 = vsel %vm2522, %v4717, %v4719
        %v4721 = vrot.slane %v4697, 1
        %v4722 = vsel %vm2522, %v4719, %v4721
        %v4723 = vrot.slane %v4698, 1
        %v4724 = vsel %vm2522, %v4721, %v4723
        %v4725 = vrot.slane %v4699, 1
        %v4726 = vsel %vm2522, %v4723, %v4725
        %v4727 = vrot.slane %v4700, 1
        %v4728 = vsel %vm2522, %v4725, %v4727
        %v4729 = vrot.slane %v4701, 1
        %v4730 = vsel %vm2522, %v4727, %v4729
        %v4741 = vadd.f32 %v4678, %v4714
        %v4742 = vadd.f32 %v4679, %v4716
        %v4743 = vadd.f32 %v4680, %v4718
        %v4744 = vadd.f32 %v4681, %v4720
        %v4745 = vadd.f32 %v4682, %v4722
        %v4746 = vadd.f32 %v4683, %v4724
        %v4747 = vadd.f32 %v4684, %v4726
        %v4748 = vadd.f32 %v4685, %v4728
        %v4749 = vadd.f32 %v4686, %v4730
        %v4750 = vadd.f32 %v4687, %v4729
        %v4751 = vlaneseq
        %v4752 = vshrl.u32 %v4751, 7
        %v4753 = vsub.s32 2, %v4752
        %v4754 = vrot.slane %v4669, %v4753
        %v4755 = vmul.f32 %v4606, %v4754
        %v4756 = vmul.f32 %v4611, %v4754
        %v4757 = vmul.f32 %v4616, %v4754
        %v4758 = vmul.f32 %v4621, %v4754
        %v4759 = vmul.f32 %v4626, %v4754
        %v4760 = vmul.f32 %v4631, %v4754
        %v4761 = vmul.f32 %v4636, %v4754
        %v4762 = vmul.f32 %v4641, %v4754
        %v4763 = vmul.f32 %v4646, %v4754
        %v4764 = vmul.f32 %v4651, %v4754
        %v4775 = vrot.slane %v4755, 2
        %v4776 = vrot.slane %v4756, 2
        %v4777 = vsel %vm2742, %v4775, %v4776
        %v4778 = vrot.slane %v4757, 2
        %v4779 = vsel %vm2742, %v4776, %v4778
        %v4780 = vrot.slane %v4758, 2
        %v4781 = vsel %vm2742, %v4778, %v4780
        %v4782 = vrot.slane %v4759, 2
        %v4783 = vsel %vm2742, %v4780, %v4782
        %v4784 = vrot.slane %v4760, 2
        %v4785 = vsel %vm2742, %v4782, %v4784
        %v4786 = vrot.slane %v4761, 2
        %v4787 = vsel %vm2742, %v4784, %v4786
        %v4788 = vrot.slane %v4762, 2
        %v4789 = vsel %vm2742, %v4786, %v4788
        %v4790 = vrot.slane %v4763, 2
        %v4791 = vsel %vm2742, %v4788, %v4790
        %v4792 = vrot.slane %v4764, 2
        %v4793 = vsel %vm2742, %v4790, %v4792
        %v4804 = vadd.f32 %v4741, %v4777
        %v4805 = vadd.f32 %v4742, %v4779
        %v4806 = vadd.f32 %v4743, %v4781
        %v4807 = vadd.f32 %v4744, %v4783
        %v4808 = vadd.f32 %v4745, %v4785
        %v4809 = vadd.f32 %v4746, %v4787
        %v4810 = vadd.f32 %v4747, %v4789
        %v4811 = vadd.f32 %v4748, %v4791
        %v4812 = vadd.f32 %v4749, %v4793
        %v4813 = vadd.f32 %v4750, %v4792
        %v4814 = vlaneseq
        %v4815 = vshrl.u32 %v4814, 7
        %v4816 = vsub.s32 3, %v4815
        %v4817 = vrot.slane %v4669, %v4816
        %v4818 = vmul.f32 %v4611, %v4817
        %v4819 = vmul.f32 %v4616, %v4817
        %v4820 = vmul.f32 %v4621, %v4817
        %v4821 = vmul.f32 %v4626, %v4817
        %v4822 = vmul.f32 %v4631, %v4817
        %v4823 = vmul.f32 %v4636, %v4817
        %v4824 = vmul.f32 %v4641, %v4817
        %v4825 = vmul.f32 %v4646, %v4817
        %v4826 = vmul.f32 %v4651, %v4817
        %v4827 = vmul.f32 %v4656, %v4817
        %v4838 = vrot.slane %v4818, 2
        %v4839 = vrot.slane %v4819, 2
        %v4840 = vsel %vm2742, %v4838, %v4839
        %v4841 = vrot.slane %v4820, 2
        %v4842 = vsel %vm2742, %v4839, %v4841
        %v4843 = vrot.slane %v4821, 2
        %v4844 = vsel %vm2742, %v4841, %v4843
        %v4845 = vrot.slane %v4822, 2
        %v4846 = vsel %vm2742, %v4843, %v4845
        %v4847 = vrot.slane %v4823, 2
        %v4848 = vsel %vm2742, %v4845, %v4847
        %v4849 = vrot.slane %v4824, 2
        %v4850 = vsel %vm2742, %v4847, %v4849
        %v4851 = vrot.slane %v4825, 2
        %v4852 = vsel %vm2742, %v4849, %v4851
        %v4853 = vrot.slane %v4826, 2
        %v4854 = vsel %vm2742, %v4851, %v4853
        %v4855 = vrot.slane %v4827, 2
        %v4856 = vsel %vm2742, %v4853, %v4855
        %v4867 = vadd.f32 %v4804, %v4840
        %v4868 = vadd.f32 %v4805, %v4842
        %v4869 = vadd.f32 %v4806, %v4844
        %v4870 = vadd.f32 %v4807, %v4846
        %v4871 = vadd.f32 %v4808, %v4848
        %v4872 = vadd.f32 %v4809, %v4850
        %v4873 = vadd.f32 %v4810, %v4852
        %v4874 = vadd.f32 %v4811, %v4854
        %v4875 = vadd.f32 %v4812, %v4856
        %v4876 = vadd.f32 %v4813, %v4855
        %v4877 = vlaneseq
        %v4878 = vshrl.u32 %v4877, 7
        %v4879 = vsub.s32 4, %v4878
        %v4880 = vrot.slane %v4669, %v4879
        %v4881 = vmul.f32 %v4611, %v4880
        %v4882 = vmul.f32 %v4616, %v4880
        %v4883 = vmul.f32 %v4621, %v4880
        %v4884 = vmul.f32 %v4626, %v4880
        %v4885 = vmul.f32 %v4631, %v4880
        %v4886 = vmul.f32 %v4636, %v4880
        %v4887 = vmul.f32 %v4641, %v4880
        %v4888 = vmul.f32 %v4646, %v4880
        %v4889 = vmul.f32 %v4651, %v4880
        %v4890 = vmul.f32 %v4656, %v4880
        %v4891 = vmul.f32 %v4661, %v4880
        %v4903 = vrot.slane %v4881, 3
        %v4904 = vrot.slane %v4882, 3
        %v4905 = vsel %vm3198, %v4903, %v4904
        %v4906 = vrot.slane %v4883, 3
        %v4907 = vsel %vm3198, %v4904, %v4906
        %v4908 = vrot.slane %v4884, 3
        %v4909 = vsel %vm3198, %v4906, %v4908
        %v4910 = vrot.slane %v4885, 3
        %v4911 = vsel %vm3198, %v4908, %v4910
        %v4912 = vrot.slane %v4886, 3
        %v4913 = vsel %vm3198, %v4910, %v4912
        %v4914 = vrot.slane %v4887, 3
        %v4915 = vsel %vm3198, %v4912, %v4914
        %v4916 = vrot.slane %v4888, 3
        %v4917 = vsel %vm3198, %v4914, %v4916
        %v4918 = vrot.slane %v4889, 3
        %v4919 = vsel %vm3198, %v4916, %v4918
        %v4920 = vrot.slane %v4890, 3
        %v4921 = vsel %vm3198, %v4918, %v4920
        %v4922 = vrot.slane %v4891, 3
        %v4923 = vsel %vm3198, %v4920, %v4922
        %v4934 = vadd.f32 %v4867, %v4905
        %v4935 = vadd.f32 %v4868, %v4907
        %v4936 = vadd.f32 %v4869, %v4909
        %v4937 = vadd.f32 %v4870, %v4911
        %v4938 = vadd.f32 %v4871, %v4913
        %v4939 = vadd.f32 %v4872, %v4915
        %v4940 = vadd.f32 %v4873, %v4917
        %v4941 = vadd.f32 %v4874, %v4919
        %v4942 = vadd.f32 %v4875, %v4921
        %v4943 = vadd.f32 %v4876, %v4923
        %v4944 = vlaneseq
        %v4945 = vshrl.u32 %v4944, 7
        %v4946 = vsub.s32 5, %v4945
        %v4947 = vrot.slane %v4669, %v4946
        %v4948 = vmul.f32 %v4611, %v4947
        %v4949 = vmul.f32 %v4616, %v4947
        %v4950 = vmul.f32 %v4621, %v4947
        %v4951 = vmul.f32 %v4626, %v4947
        %v4952 = vmul.f32 %v4631, %v4947
        %v4953 = vmul.f32 %v4636, %v4947
        %v4954 = vmul.f32 %v4641, %v4947
        %v4955 = vmul.f32 %v4646, %v4947
        %v4956 = vmul.f32 %v4651, %v4947
        %v4957 = vmul.f32 %v4656, %v4947
        %v4958 = vmul.f32 %v4661, %v4947
        %v4970 = vrot.slane %v4948, 4
        %v4971 = vrot.slane %v4949, 4
        %v4972 = vsel %vm3422, %v4970, %v4971
        %v4973 = vrot.slane %v4950, 4
        %v4974 = vsel %vm3422, %v4971, %v4973
        %v4975 = vrot.slane %v4951, 4
        %v4976 = vsel %vm3422, %v4973, %v4975
        %v4977 = vrot.slane %v4952, 4
        %v4978 = vsel %vm3422, %v4975, %v4977
        %v4979 = vrot.slane %v4953, 4
        %v4980 = vsel %vm3422, %v4977, %v4979
        %v4981 = vrot.slane %v4954, 4
        %v4982 = vsel %vm3422, %v4979, %v4981
        %v4983 = vrot.slane %v4955, 4
        %v4984 = vsel %vm3422, %v4981, %v4983
        %v4985 = vrot.slane %v4956, 4
        %v4986 = vsel %vm3422, %v4983, %v4985
        %v4987 = vrot.slane %v4957, 4
        %v4988 = vsel %vm3422, %v4985, %v4987
        %v4989 = vrot.slane %v4958, 4
        %v4990 = vsel %vm3422, %v4987, %v4989
        %v5001 = vadd.f32 %v4934, %v4972
        %v5002 = vadd.f32 %v4935, %v4974
        %v5003 = vadd.f32 %v4936, %v4976
        %v5004 = vadd.f32 %v4937, %v4978
        %v5005 = vadd.f32 %v4938, %v4980
        %v5006 = vadd.f32 %v4939, %v4982
        %v5007 = vadd.f32 %v4940, %v4984
        %v5008 = vadd.f32 %v4941, %v4986
        %v5009 = vadd.f32 %v4942, %v4988
        %v5010 = vadd.f32 %v4943, %v4990
        %v5011 = vlaneseq
        %v5012 = vshrl.u32 %v5011, 7
        %v5013 = vsub.s32 6, %v5012
        %v5014 = vrot.slane %v4669, %v5013
        %v5015 = vmul.f32 %v4616, %v5014
        %v5016 = vmul.f32 %v4621, %v5014
        %v5017 = vmul.f32 %v4626, %v5014
        %v5018 = vmul.f32 %v4631, %v5014
        %v5019 = vmul.f32 %v4636, %v5014
        %v5020 = vmul.f32 %v4641, %v5014
        %v5021 = vmul.f32 %v4646, %v5014
        %v5022 = vmul.f32 %v4651, %v5014
        %v5023 = vmul.f32 %v4656, %v5014
        %v5024 = vmul.f32 %v4661, %v5014
        %v5025 = vmul.f32 %v4666, %v5014
        %v5037 = vrot.slane %v5015, 4
        %v5038 = vrot.slane %v5016, 4
        %v5039 = vsel %vm3422, %v5037, %v5038
        %v5040 = vrot.slane %v5017, 4
        %v5041 = vsel %vm3422, %v5038, %v5040
        %v5042 = vrot.slane %v5018, 4
        %v5043 = vsel %vm3422, %v5040, %v5042
        %v5044 = vrot.slane %v5019, 4
        %v5045 = vsel %vm3422, %v5042, %v5044
        %v5046 = vrot.slane %v5020, 4
        %v5047 = vsel %vm3422, %v5044, %v5046
        %v5048 = vrot.slane %v5021, 4
        %v5049 = vsel %vm3422, %v5046, %v5048
        %v5050 = vrot.slane %v5022, 4
        %v5051 = vsel %vm3422, %v5048, %v5050
        %v5052 = vrot.slane %v5023, 4
        %v5053 = vsel %vm3422, %v5050, %v5052
        %v5054 = vrot.slane %v5024, 4
        %v5055 = vsel %vm3422, %v5052, %v5054
        %v5056 = vrot.slane %v5025, 4
        %v5057 = vsel %vm3422, %v5054, %v5056
        %v5068 = vadd.f32 %v5001, %v5039
        %v5069 = vadd.f32 %v5002, %v5041
        %v5070 = vadd.f32 %v5003, %v5043
        %v5071 = vadd.f32 %v5004, %v5045
        %v5072 = vadd.f32 %v5005, %v5047
        %v5073 = vadd.f32 %v5006, %v5049
        %v5074 = vadd.f32 %v5007, %v5051
        %v5075 = vadd.f32 %v5008, %v5053
        %v5076 = vadd.f32 %v5009, %v5055
        %v5077 = vadd.f32 %v5010, %v5057
        %v5078 = vlaneseq
        %v5079 = vshrl.u32 %v5078, 7
        %v5080 = vsub.s32 7, %v5079
        %v5081 = vrot.slane %v4669, %v5080
        %v5082 = vmul.f32 %v4616, %v5081
        %v5083 = vmul.f32 %v4621, %v5081
        %v5084 = vmul.f32 %v4626, %v5081
        %v5085 = vmul.f32 %v4631, %v5081
        %v5086 = vmul.f32 %v4636, %v5081
        %v5087 = vmul.f32 %v4641, %v5081
        %v5088 = vmul.f32 %v4646, %v5081
        %v5089 = vmul.f32 %v4651, %v5081
        %v5090 = vmul.f32 %v4656, %v5081
        %v5091 = vmul.f32 %v4661, %v5081
        %v5092 = vmul.f32 %v4666, %v5081
        %v5104 = vrot.slane %v5082, 5
        %v5105 = vrot.slane %v5083, 5
        %v5106 = vsel %vm3879, %v5104, %v5105
        %v5107 = vrot.slane %v5084, 5
        %v5108 = vsel %vm3879, %v5105, %v5107
        %v5109 = vrot.slane %v5085, 5
        %v5110 = vsel %vm3879, %v5107, %v5109
        %v5111 = vrot.slane %v5086, 5
        %v5112 = vsel %vm3879, %v5109, %v5111
        %v5113 = vrot.slane %v5087, 5
        %v5114 = vsel %vm3879, %v5111, %v5113
        %v5115 = vrot.slane %v5088, 5
        %v5116 = vsel %vm3879, %v5113, %v5115
        %v5117 = vrot.slane %v5089, 5
        %v5118 = vsel %vm3879, %v5115, %v5117
        %v5119 = vrot.slane %v5090, 5
        %v5120 = vsel %vm3879, %v5117, %v5119
        %v5121 = vrot.slane %v5091, 5
        %v5122 = vsel %vm3879, %v5119, %v5121
        %v5123 = vrot.slane %v5092, 5
        %v5124 = vsel %vm3879, %v5121, %v5123
        %v5135 = vadd.f32 %v5068, %v5106
        %v5136 = vadd.f32 %v5069, %v5108
        %v5137 = vadd.f32 %v5070, %v5110
        %v5138 = vadd.f32 %v5071, %v5112
        %v5139 = vadd.f32 %v5072, %v5114
        %v5140 = vadd.f32 %v5073, %v5116
        %v5141 = vadd.f32 %v5074, %v5118
        %v5142 = vadd.f32 %v5075, %v5120
        %v5143 = vadd.f32 %v5076, %v5122
        %v5144 = vadd.f32 %v5077, %v5124
        %v5145 = vlaneseq
        %v5146 = vshrl.u32 %v5145, 7
        %v5147 = vsub.s32 0, %v5146
        %v5148 = vrot.slane %v4670, %v5147
        %v5149 = vmul.f32 %v4616, %v5148
        %v5150 = vmul.f32 %v4621, %v5148
        %v5151 = vmul.f32 %v4626, %v5148
        %v5152 = vmul.f32 %v4631, %v5148
        %v5153 = vmul.f32 %v4636, %v5148
        %v5154 = vmul.f32 %v4641, %v5148
        %v5155 = vmul.f32 %v4646, %v5148
        %v5156 = vmul.f32 %v4651, %v5148
        %v5157 = vmul.f32 %v4656, %v5148
        %v5158 = vmul.f32 %v4661, %v5148
        %v5159 = vmul.f32 %v4666, %v5148
        %v5171 = vrot.slane %v5149, 6
        %v5172 = vrot.slane %v5150, 6
        %v5173 = vsel %vm4103, %v5171, %v5172
        %v5174 = vrot.slane %v5151, 6
        %v5175 = vsel %vm4103, %v5172, %v5174
        %v5176 = vrot.slane %v5152, 6
        %v5177 = vsel %vm4103, %v5174, %v5176
        %v5178 = vrot.slane %v5153, 6
        %v5179 = vsel %vm4103, %v5176, %v5178
        %v5180 = vrot.slane %v5154, 6
        %v5181 = vsel %vm4103, %v5178, %v5180
        %v5182 = vrot.slane %v5155, 6
        %v5183 = vsel %vm4103, %v5180, %v5182
        %v5184 = vrot.slane %v5156, 6
        %v5185 = vsel %vm4103, %v5182, %v5184
        %v5186 = vrot.slane %v5157, 6
        %v5187 = vsel %vm4103, %v5184, %v5186
        %v5188 = vrot.slane %v5158, 6
        %v5189 = vsel %vm4103, %v5186, %v5188
        %v5190 = vrot.slane %v5159, 6
        %v5191 = vsel %vm4103, %v5188, %v5190
        %v5202 = vadd.f32 %v5135, %v5173
        %v5203 = vadd.f32 %v5136, %v5175
        %v5204 = vadd.f32 %v5137, %v5177
        %v5205 = vadd.f32 %v5138, %v5179
        %v5206 = vadd.f32 %v5139, %v5181
        %v5207 = vadd.f32 %v5140, %v5183
        %v5208 = vadd.f32 %v5141, %v5185
        %v5209 = vadd.f32 %v5142, %v5187
        %v5210 = vadd.f32 %v5143, %v5189
        %v5211 = vadd.f32 %v5144, %v5191
        %v5213 = vlaneseq
        %v5214 = vshrl.u32 %v5213, 7
        %v5215 = vsub.s32 0, %v5214
        %v5216 = vrot.slane %v4671, %v5215
        %v5218 = vadd.f32 %v5202, %v5216
        %v5219 = vadd.f32 %v5203, %v5216
        %v5220 = vadd.f32 %v5204, %v5216
        %v5221 = vadd.f32 %v5205, %v5216
        %v5222 = vadd.f32 %v5206, %v5216
        %v5223 = vadd.f32 %v5207, %v5216
        %v5224 = vadd.f32 %v5208, %v5216
        %v5225 = vadd.f32 %v5209, %v5216
        %v5226 = vadd.f32 %v5210, %v5216
        %v5227 = vadd.f32 %v5211, %v5216
        %v5228 = vmax.f32 %v5218, 0.0
        %v5229 = vmax.f32 %v5219, 0.0
        %v5230 = vmax.f32 %v5220, 0.0
        %v5231 = vmax.f32 %v5221, 0.0
        %v5232 = vmax.f32 %v5222, 0.0
        %v5233 = vmax.f32 %v5223, 0.0
        %v5234 = vmax.f32 %v5224, 0.0
        %v5235 = vmax.f32 %v5225, 0.0
        %v5236 = vmax.f32 %v5226, 0.0
        %v5237 = vmax.f32 %v5227, 0.0
        %v5239 = vlaneseq
        %v5240 = vshrl.u32 %v5239, 7
        %v5241 = vsub.s32 0, %v5240
        %v5242 = vrot.slane %v4673, %v5241
        %vm5244 = vcmask 64512
        %v5246 = vsel %vm5244, %v5228, 0
        %v5249 = vsel %vm5244, %v5229, 0
        %v5252 = vsel %vm5244, %v5230, 0
        %v5255 = vsel %vm5244, %v5231, 0
        %v5258 = vsel %vm5244, %v5232, 0
        %v5261 = vsel %vm5244, %v5233, 0
        %v5264 = vsel %vm5244, %v5234, 0
        %v5267 = vsel %vm5244, %v5235, 0
        %v5270 = vsel %vm5244, %v5236, 0
        %v5273 = vsel %vm5244, %v5237, 0
        %5275 = vmatprep.subr.mxu0 0.0
        %5276 = vmatpush1.msra.mxu0 %v4672
        %5277 = vmatprep.subr.mxu0 0.0
        %5278 = vmatpush1.msra.mxu0 0.0
        %5279 = vmatprep.subr.mxu0 0.0
        %5280 = vmatpush1.msra.mxu0 0.0
        %5281 = vmatprep.subr.mxu0 0.0
        %5282 = vmatpush1.msra.mxu0 0.0
        %5283 = vmatprep.subr.mxu0 0.0
        %5284 = vmatpush1.msra.mxu0 0.0
        %5285 = vmatprep.subr.mxu0 0.0
        %5286 = vmatpush1.msra.mxu0 0.0
        %5287 = vmatprep.subr.mxu0 0.0
        %5288 = vmatpush1.msra.mxu0 0.0
        %5289 = vmatprep.subr.mxu0 0.0
        %5290 = vmatpush1.msra.mxu0 0.0
        %5291 = vmatprep.subr.mxu0 0.0
        %5292 = vmatpush1.msra.mxu0 0.0
        %5293 = vmatprep.subr.mxu0 0.0
        %5294 = vmatpush1.msra.mxu0 0.0
        %5295 = vmatprep.subr.mxu0 0.0
        %5296 = vmatpush1.msra.mxu0 0.0
        %5297 = vmatprep.subr.mxu0 0.0
        %5298 = vmatpush1.msra.mxu0 0.0
        %5299 = vmatprep.subr.mxu0 0.0
        %5300 = vmatpush1.msra.mxu0 0.0
        %5301 = vmatprep.subr.mxu0 0.0
        %5302 = vmatpush1.msra.mxu0 0.0
        %5303 = vmatprep.subr.mxu0 0.0
        %5304 = vmatpush1.msra.mxu0 0.0
        %5305 = vmatprep.subr.mxu0 0.0
        %5306 = vmatpush1.msra.mxu0 0.0
        %5307 = vmatprep.subr.mxu0 0.0
        %5308 = vmatpush1.msra.mxu0 0.0
        %5309 = vmatprep.subr.mxu0 0.0
        %5310 = vmatpush1.msra.mxu0 0.0
        %5311 = vmatprep.subr.mxu0 0.0
        %5312 = vmatpush1.msra.mxu0 0.0
        %5313 = vmatprep.subr.mxu0 0.0
        %5314 = vmatpush1.msra.mxu0 0.0
        %5315 = vmatprep.subr.mxu0 0.0
        %5316 = vmatpush1.msra.mxu0 0.0
        %5317 = vmatprep.subr.mxu0 0.0
        %5318 = vmatpush1.msra.mxu0 0.0
        %5319 = vmatprep.subr.mxu0 0.0
        %5320 = vmatpush1.msra.mxu0 0.0
        %5321 = vmatprep.subr.mxu0 0.0
        %5322 = vmatpush1.msra.mxu0 0.0
        %5323 = vmatprep.subr.mxu0 0.0
        %5324 = vmatpush1.msra.mxu0 0.0
        %5325 = vmatprep.subr.mxu0 0.0
        %5326 = vmatpush1.msra.mxu0 0.0
        %5327 = vmatprep.subr.mxu0 0.0
        %5328 = vmatpush1.msra.mxu0 0.0
        %5329 = vmatprep.subr.mxu0 0.0
        %5330 = vmatpush1.msra.mxu0 0.0
        %5331 = vmatprep.subr.mxu0 0.0
        %5332 = vmatpush1.msra.mxu0 0.0
        %5333 = vmatprep.subr.mxu0 0.0
        %5334 = vmatpush1.msra.mxu0 0.0
        %5335 = vmatprep.subr.mxu0 0.0
        %5336 = vmatpush1.msra.mxu0 0.0
        %5337 = vmatprep.subr.mxu0 0.0
        %5338 = vmatpush1.msra.mxu0 0.0
        %5339 = vmatprep.mubr.f32.mxu0 0.0
        %5340 = vmatmul.mubr.f32.gmra.mrb[0].mxu0 %v5246
        %v5341 = vpop.f32.mrb[0].mxu0
        %v5342 = vadd.f32 %v5242, %v5341
        %v5343 = vpop.f32.mrb[0].mxu0
        %5344 = vmatprep.mubr.f32.mxu0 0.0
        %5345 = vmatmul.mubr.f32.gmra.mrb[0].mxu0 %v5249
        %v5346 = vpop.f32.mrb[0].mxu0
        %v5347 = vadd.f32 %v5242, %v5346
        %v5348 = vpop.f32.mrb[0].mxu0
        %5349 = vmatprep.mubr.f32.mxu0 0.0
        %5350 = vmatmul.mubr.f32.gmra.mrb[0].mxu0 %v5252
        %v5351 = vpop.f32.mrb[0].mxu0
        %v5352 = vadd.f32 %v5242, %v5351
        %v5353 = vpop.f32.mrb[0].mxu0
        %5354 = vmatprep.mubr.f32.mxu0 0.0
        %5355 = vmatmul.mubr.f32.gmra.mrb[0].mxu0 %v5255
        %v5356 = vpop.f32.mrb[0].mxu0
        %v5357 = vadd.f32 %v5242, %v5356
        %v5358 = vpop.f32.mrb[0].mxu0
        %5359 = vmatprep.mubr.f32.mxu0 0.0
        %5360 = vmatmul.mubr.f32.gmra.mrb[0].mxu0 %v5258
        %v5361 = vpop.f32.mrb[0].mxu0
        %v5362 = vadd.f32 %v5242, %v5361
        %v5363 = vpop.f32.mrb[0].mxu0
        %5364 = vmatprep.mubr.f32.mxu0 0.0
        %5365 = vmatmul.mubr.f32.gmra.mrb[0].mxu0 %v5261
        %v5366 = vpop.f32.mrb[0].mxu0
        %v5367 = vadd.f32 %v5242, %v5366
        %v5368 = vpop.f32.mrb[0].mxu0
        %5369 = vmatprep.mubr.f32.mxu0 0.0
        %5370 = vmatmul.mubr.f32.gmra.mrb[0].mxu0 %v5264
        %v5371 = vpop.f32.mrb[0].mxu0
        %v5372 = vadd.f32 %v5242, %v5371
        %v5373 = vpop.f32.mrb[0].mxu0
        %5374 = vmatprep.mubr.f32.mxu0 0.0
        %5375 = vmatmul.mubr.f32.gmra.mrb[0].mxu0 %v5267
        %v5376 = vpop.f32.mrb[0].mxu0
        %v5377 = vadd.f32 %v5242, %v5376
        %v5378 = vpop.f32.mrb[0].mxu0
        %5379 = vmatprep.mubr.f32.mxu0 0.0
        %5380 = vmatmul.mubr.f32.gmra.mrb[0].mxu0 %v5270
        %v5381 = vpop.f32.mrb[0].mxu0
        %v5382 = vadd.f32 %v5242, %v5381
        %v5383 = vpop.f32.mrb[0].mxu0
        %5384 = vmatprep.mubr.f32.mxu0 0.0
        %5385 = vmatmul.mubr.f32.gmra.mrb[0].mxu0 %v5273
        %v5386 = vpop.f32.mrb[0].mxu0
        %v5387 = vadd.f32 %v5242, %v5386
        %v5388 = vpop.f32.mrb[0].mxu0
        %5389 = vdwg.mxu0
        %v5390 = vmax.f32 %v5342, 0.0
        %v5391 = vmax.f32 %v5347, 0.0
        %v5392 = vmax.f32 %v5352, 0.0
        %v5393 = vmax.f32 %v5357, 0.0
        %v5394 = vmax.f32 %v5362, 0.0
        %v5395 = vmax.f32 %v5367, 0.0
        %v5396 = vmax.f32 %v5372, 0.0
        %v5397 = vmax.f32 %v5377, 0.0
        %v5398 = vmax.f32 %v5382, 0.0
        %v5399 = vmax.f32 %v5387, 0.0
        %v5400 = vld [vmem:[%s17] sm:$0xff]
        %v5401 = vld [vmem:[%s17 + $0x8] sm:$0xff]
        %v5402 = vld [vmem:[%s17 + $0x10] sm:$0xff]
        %v5403 = vld [vmem:[%s17 + $0x18] sm:$0xff]
        %v5404 = vld [vmem:[%s17 + $0x20] sm:$0xff]
        %v5405 = vld [vmem:[%s17 + $0x28] sm:$0xff]
        %v5406 = vld [vmem:[%s17 + $0x30] sm:$0xff]
        %v5407 = vld [vmem:[%s17 + $0x38] sm:$0xff]
        %v5408 = vld [vmem:[%s17 + $0x40] sm:$0xff]
        %v5409 = vld [vmem:[%s17 + $0x48] sm:$0xff]
        %v5410 = vld [vmem:[%s17 + $0x50] sm:$0xff]
        %v5411 = vld [vmem:[%s17 + $0x58] sm:$0xff]
        %v5412 = vld [vmem:[%s17 + $0x60] sm:$0xf]
        %vm5413 = vcmask 637952
        %v5415 = vsel %vm5413, %v5400, 0
        %v5418 = vsel %vm5413, %v5401, 0
        %v5421 = vsel %vm5413, %v5402, 0
        %v5424 = vsel %vm5413, %v5403, 0
        %v5427 = vsel %vm5413, %v5404, 0
        %v5430 = vsel %vm5413, %v5405, 0
        %v5433 = vsel %vm5413, %v5406, 0
        %v5436 = vsel %vm5413, %v5407, 0
        %v5439 = vsel %vm5413, %v5408, 0
        %v5442 = vsel %vm5413, %v5409, 0
        %v5445 = vsel %vm5413, %v5410, 0
        %v5448 = vsel %vm5413, %v5411, 0
        %v5451 = vsel %vm5413, %v5412, 0
        %v5454 = vsel %vm2742, %v5399, 0
        %5456 = vmatprep.subr.mxu0 0.0
        %5457 = vmatpush1.msra.mxu0 %v5390
        %5458 = vmatprep.subr.mxu0 0.0
        %5459 = vmatpush1.msra.mxu0 %v5391
        %5460 = vmatprep.subr.mxu0 0.0
        %5461 = vmatpush1.msra.mxu0 %v5392
        %5462 = vmatprep.subr.mxu0 0.0
        %5463 = vmatpush1.msra.mxu0 %v5393
        %5464 = vmatprep.subr.mxu0 0.0
        %5465 = vmatpush1.msra.mxu0 %v5394
        %5466 = vmatprep.subr.mxu0 0.0
        %5467 = vmatpush1.msra.mxu0 %v5395
        %5468 = vmatprep.subr.mxu0 0.0
        %5469 = vmatpush1.msra.mxu0 %v5396
        %5470 = vmatprep.subr.mxu0 0.0
        %5471 = vmatpush1.msra.mxu0 %v5397
        %5472 = vmatprep.subr.mxu0 0.0
        %5473 = vmatpush1.msra.mxu0 %v5398
        %5474 = vmatprep.subr.mxu0 0.0
        %5475 = vmatpush1.msra.mxu0 %v5454
        %5476 = vmatprep.subr.mxu0 0.0
        %5477 = vmatpush1.msra.mxu0 0.0
        %5478 = vmatprep.subr.mxu0 0.0
        %5479 = vmatpush1.msra.mxu0 0.0
        %5480 = vmatprep.subr.mxu0 0.0
        %5481 = vmatpush1.msra.mxu0 0.0
        %5482 = vmatprep.subr.mxu0 0.0
        %5483 = vmatpush1.msra.mxu0 0.0
        %5484 = vmatprep.subr.mxu0 0.0
        %5485 = vmatpush1.msra.mxu0 0.0
        %5486 = vmatprep.subr.mxu0 0.0
        %5487 = vmatpush1.msra.mxu0 0.0
        %5488 = vmatprep.subr.mxu0 0.0
        %5489 = vmatpush1.msra.mxu0 0.0
        %5490 = vmatprep.subr.mxu0 0.0
        %5491 = vmatpush1.msra.mxu0 0.0
        %5492 = vmatprep.subr.mxu0 0.0
        %5493 = vmatpush1.msra.mxu0 0.0
        %5494 = vmatprep.subr.mxu0 0.0
        %5495 = vmatpush1.msra.mxu0 0.0
        %5496 = vmatprep.subr.mxu0 0.0
        %5497 = vmatpush1.msra.mxu0 0.0
        %5498 = vmatprep.subr.mxu0 0.0
        %5499 = vmatpush1.msra.mxu0 0.0
        %5500 = vmatprep.subr.mxu0 0.0
        %5501 = vmatpush1.msra.mxu0 0.0
        %5502 = vmatprep.subr.mxu0 0.0
        %5503 = vmatpush1.msra.mxu0 0.0
        %5504 = vmatprep.subr.mxu0 0.0
        %5505 = vmatpush1.msra.mxu0 0.0
        %5506 = vmatprep.subr.mxu0 0.0
        %5507 = vmatpush1.msra.mxu0 0.0
        %5508 = vmatprep.subr.mxu0 0.0
        %5509 = vmatpush1.msra.mxu0 0.0
        %5510 = vmatprep.subr.mxu0 0.0
        %5511 = vmatpush1.msra.mxu0 0.0
        %5512 = vmatprep.subr.mxu0 0.0
        %5513 = vmatpush1.msra.mxu0 0.0
        %5514 = vmatprep.subr.mxu0 0.0
        %5515 = vmatpush1.msra.mxu0 0.0
        %5516 = vmatprep.subr.mxu0 0.0
        %5517 = vmatpush1.msra.mxu0 0.0
        %5518 = vmatprep.subr.mxu0 0.0
        %5519 = vmatpush1.msra.mxu0 0.0
        %5520 = vmatprep.mubr.f32.mxu0 0.0
        %5521 = vmatmul.mubr.f32.gmra.mrb[0].mxu0 %v5415
        %v5522 = vpop.f32.mrb[0].mxu0
        %v5523 = vadd.f32 0.0, %v5522
        %v5524 = vpop.f32.mrb[0].mxu0
        %5525 = vmatprep.mubr.f32.mxu0 0.0
        %5526 = vmatmul.mubr.f32.gmra.mrb[0].mxu0 %v5418
        %v5527 = vpop.f32.mrb[0].mxu0
        %v5528 = vadd.f32 0.0, %v5527
        %v5529 = vpop.f32.mrb[0].mxu0
        %5530 = vmatprep.mubr.f32.mxu0 0.0
        %5531 = vmatmul.mubr.f32.gmra.mrb[0].mxu0 %v5421
        %v5532 = vpop.f32.mrb[0].mxu0
        %v5533 = vadd.f32 0.0, %v5532
        %v5534 = vpop.f32.mrb[0].mxu0
        %5535 = vmatprep.mubr.f32.mxu0 0.0
        %5536 = vmatmul.mubr.f32.gmra.mrb[0].mxu0 %v5424
        %v5537 = vpop.f32.mrb[0].mxu0
        %v5538 = vadd.f32 0.0, %v5537
        %v5539 = vpop.f32.mrb[0].mxu0
        %5540 = vmatprep.mubr.f32.mxu0 0.0
        %5541 = vmatmul.mubr.f32.gmra.mrb[0].mxu0 %v5427
        %v5542 = vpop.f32.mrb[0].mxu0
        %v5543 = vadd.f32 0.0, %v5542
        %v5544 = vpop.f32.mrb[0].mxu0
        %5545 = vmatprep.mubr.f32.mxu0 0.0
        %5546 = vmatmul.mubr.f32.gmra.mrb[0].mxu0 %v5430
        %v5547 = vpop.f32.mrb[0].mxu0
        %v5548 = vadd.f32 0.0, %v5547
        %v5549 = vpop.f32.mrb[0].mxu0
        %5550 = vmatprep.mubr.f32.mxu0 0.0
        %5551 = vmatmul.mubr.f32.gmra.mrb[0].mxu0 %v5433
        %v5552 = vpop.f32.mrb[0].mxu0
        %v5553 = vadd.f32 0.0, %v5552
        %v5554 = vpop.f32.mrb[0].mxu0
        %5555 = vmatprep.mubr.f32.mxu0 0.0
        %5556 = vmatmul.mubr.f32.gmra.mrb[0].mxu0 %v5436
        %v5557 = vpop.f32.mrb[0].mxu0
        %v5558 = vadd.f32 0.0, %v5557
        %v5559 = vpop.f32.mrb[0].mxu0
        %5560 = vmatprep.mubr.f32.mxu0 0.0
        %5561 = vmatmul.mubr.f32.gmra.mrb[0].mxu0 %v5439
        %v5562 = vpop.f32.mrb[0].mxu0
        %v5563 = vadd.f32 0.0, %v5562
        %v5564 = vpop.f32.mrb[0].mxu0
        %5565 = vmatprep.mubr.f32.mxu0 0.0
        %5566 = vmatmul.mubr.f32.gmra.mrb[0].mxu0 %v5442
        %v5567 = vpop.f32.mrb[0].mxu0
        %v5568 = vadd.f32 0.0, %v5567
        %v5569 = vpop.f32.mrb[0].mxu0
        %5570 = vmatprep.mubr.f32.mxu0 0.0
        %5571 = vmatmul.mubr.f32.gmra.mrb[0].mxu0 %v5445
        %v5572 = vpop.f32.mrb[0].mxu0
        %v5573 = vadd.f32 0.0, %v5572
        %v5574 = vpop.f32.mrb[0].mxu0
        %5575 = vmatprep.mubr.f32.mxu0 0.0
        %5576 = vmatmul.mubr.f32.gmra.mrb[0].mxu0 %v5448
        %v5577 = vpop.f32.mrb[0].mxu0
        %v5578 = vadd.f32 0.0, %v5577
        %v5579 = vpop.f32.mrb[0].mxu0
        %5580 = vmatprep.mubr.f32.mxu0 0.0
        %5581 = vmatmul.mubr.f32.gmra.mrb[0].mxu0 %v5451
        %v5582 = vpop.f32.mrb[0].mxu0
        %v5583 = vadd.f32 0.0, %v5582
        %v5584 = vpop.f32.mrb[0].mxu0
        %5585 = vdwg.mxu0
        %v5586 = vld [vmem:[%s19] sm:$0xff]
        %v5587 = vld [vmem:[%s19 + $0x8] sm:$0x1]
        %v5588 = vld [vmem:[%s21] sm:$0x1]
        %v5589 = vld [vmem:[%s23] sm:$0xff]
        %v5590 = vld [vmem:[%s23 + $0x8] sm:$0xff]
        %v5591 = vld [vmem:[%s25] sm:$0x1]
        %v5592 = vlaneseq
        %v5593 = vshrl.u32 %v5592, 7
        %v5594 = vsub.s32 0, %v5593
        %v5595 = vrot.slane %v5586, %v5594
        %v5596 = vmul.f32 %v5523, %v5595
        %v5597 = vmul.f32 %v5528, %v5595
        %v5598 = vmul.f32 %v5533, %v5595
        %v5599 = vmul.f32 %v5538, %v5595
        %v5600 = vmul.f32 %v5543, %v5595
        %v5601 = vmul.f32 %v5548, %v5595
        %v5602 = vmul.f32 %v5553, %v5595
        %v5603 = vmul.f32 %v5558, %v5595
        %v5604 = vmul.f32 %v5563, %v5595
        %v5605 = vmul.f32 %v5568, %v5595
        %v5606 = vlaneseq
        %v5607 = vshrl.u32 %v5606, 7
        %v5608 = vsub.s32 1, %v5607
        %v5609 = vrot.slane %v5586, %v5608
        %v5610 = vmul.f32 %v5523, %v5609
        %v5611 = vmul.f32 %v5528, %v5609
        %v5612 = vmul.f32 %v5533, %v5609
        %v5613 = vmul.f32 %v5538, %v5609
        %v5614 = vmul.f32 %v5543, %v5609
        %v5615 = vmul.f32 %v5548, %v5609
        %v5616 = vmul.f32 %v5553, %v5609
        %v5617 = vmul.f32 %v5558, %v5609
        %v5618 = vmul.f32 %v5563, %v5609
        %v5619 = vmul.f32 %v5568, %v5609
        %v5630 = vrot.slane %v5610, 1
        %v5631 = vrot.slane %v5611, 1
        %v5632 = vsel %vm2522, %v5630, %v5631
        %v5633 = vrot.slane %v5612, 1
        %v5634 = vsel %vm2522, %v5631, %v5633
        %v5635 = vrot.slane %v5613, 1
        %v5636 = vsel %vm2522, %v5633, %v5635
        %v5637 = vrot.slane %v5614, 1
        %v5638 = vsel %vm2522, %v5635, %v5637
        %v5639 = vrot.slane %v5615, 1
        %v5640 = vsel %vm2522, %v5637, %v5639
        %v5641 = vrot.slane %v5616, 1
        %v5642 = vsel %vm2522, %v5639, %v5641
        %v5643 = vrot.slane %v5617, 1
        %v5644 = vsel %vm2522, %v5641, %v5643
        %v5645 = vrot.slane %v5618, 1
        %v5646 = vsel %vm2522, %v5643, %v5645
        %v5647 = vrot.slane %v5619, 1
        %v5648 = vsel %vm2522, %v5645, %v5647
        %v5659 = vadd.f32 %v5596, %v5632
        %v5660 = vadd.f32 %v5597, %v5634
        %v5661 = vadd.f32 %v5598, %v5636
        %v5662 = vadd.f32 %v5599, %v5638
        %v5663 = vadd.f32 %v5600, %v5640
        %v5664 = vadd.f32 %v5601, %v5642
        %v5665 = vadd.f32 %v5602, %v5644
        %v5666 = vadd.f32 %v5603, %v5646
        %v5667 = vadd.f32 %v5604, %v5648
        %v5668 = vadd.f32 %v5605, %v5647
        %v5669 = vlaneseq
        %v5670 = vshrl.u32 %v5669, 7
        %v5671 = vsub.s32 2, %v5670
        %v5672 = vrot.slane %v5586, %v5671
        %v5673 = vmul.f32 %v5523, %v5672
        %v5674 = vmul.f32 %v5528, %v5672
        %v5675 = vmul.f32 %v5533, %v5672
        %v5676 = vmul.f32 %v5538, %v5672
        %v5677 = vmul.f32 %v5543, %v5672
        %v5678 = vmul.f32 %v5548, %v5672
        %v5679 = vmul.f32 %v5553, %v5672
        %v5680 = vmul.f32 %v5558, %v5672
        %v5681 = vmul.f32 %v5563, %v5672
        %v5682 = vmul.f32 %v5568, %v5672
        %v5693 = vrot.slane %v5673, 2
        %v5694 = vrot.slane %v5674, 2
        %v5695 = vsel %vm2742, %v5693, %v5694
        %v5696 = vrot.slane %v5675, 2
        %v5697 = vsel %vm2742, %v5694, %v5696
        %v5698 = vrot.slane %v5676, 2
        %v5699 = vsel %vm2742, %v5696, %v5698
        %v5700 = vrot.slane %v5677, 2
        %v5701 = vsel %vm2742, %v5698, %v5700
        %v5702 = vrot.slane %v5678, 2
        %v5703 = vsel %vm2742, %v5700, %v5702
        %v5704 = vrot.slane %v5679, 2
        %v5705 = vsel %vm2742, %v5702, %v5704
        %v5706 = vrot.slane %v5680, 2
        %v5707 = vsel %vm2742, %v5704, %v5706
        %v5708 = vrot.slane %v5681, 2
        %v5709 = vsel %vm2742, %v5706, %v5708
        %v5710 = vrot.slane %v5682, 2
        %v5711 = vsel %vm2742, %v5708, %v5710
        %v5722 = vadd.f32 %v5659, %v5695
        %v5723 = vadd.f32 %v5660, %v5697
        %v5724 = vadd.f32 %v5661, %v5699
        %v5725 = vadd.f32 %v5662, %v5701
        %v5726 = vadd.f32 %v5663, %v5703
        %v5727 = vadd.f32 %v5664, %v5705
        %v5728 = vadd.f32 %v5665, %v5707
        %v5729 = vadd.f32 %v5666, %v5709
        %v5730 = vadd.f32 %v5667, %v5711
        %v5731 = vadd.f32 %v5668, %v5710
        %v5732 = vlaneseq
        %v5733 = vshrl.u32 %v5732, 7
        %v5734 = vsub.s32 3, %v5733
        %v5735 = vrot.slane %v5586, %v5734
        %v5736 = vmul.f32 %v5528, %v5735
        %v5737 = vmul.f32 %v5533, %v5735
        %v5738 = vmul.f32 %v5538, %v5735
        %v5739 = vmul.f32 %v5543, %v5735
        %v5740 = vmul.f32 %v5548, %v5735
        %v5741 = vmul.f32 %v5553, %v5735
        %v5742 = vmul.f32 %v5558, %v5735
        %v5743 = vmul.f32 %v5563, %v5735
        %v5744 = vmul.f32 %v5568, %v5735
        %v5745 = vmul.f32 %v5573, %v5735
        %v5756 = vrot.slane %v5736, 2
        %v5757 = vrot.slane %v5737, 2
        %v5758 = vsel %vm2742, %v5756, %v5757
        %v5759 = vrot.slane %v5738, 2
        %v5760 = vsel %vm2742, %v5757, %v5759
        %v5761 = vrot.slane %v5739, 2
        %v5762 = vsel %vm2742, %v5759, %v5761
        %v5763 = vrot.slane %v5740, 2
        %v5764 = vsel %vm2742, %v5761, %v5763
        %v5765 = vrot.slane %v5741, 2
        %v5766 = vsel %vm2742, %v5763, %v5765
        %v5767 = vrot.slane %v5742, 2
        %v5768 = vsel %vm2742, %v5765, %v5767
        %v5769 = vrot.slane %v5743, 2
        %v5770 = vsel %vm2742, %v5767, %v5769
        %v5771 = vrot.slane %v5744, 2
        %v5772 = vsel %vm2742, %v5769, %v5771
        %v5773 = vrot.slane %v5745, 2
        %v5774 = vsel %vm2742, %v5771, %v5773
        %v5785 = vadd.f32 %v5722, %v5758
        %v5786 = vadd.f32 %v5723, %v5760
        %v5787 = vadd.f32 %v5724, %v5762
        %v5788 = vadd.f32 %v5725, %v5764
        %v5789 = vadd.f32 %v5726, %v5766
        %v5790 = vadd.f32 %v5727, %v5768
        %v5791 = vadd.f32 %v5728, %v5770
        %v5792 = vadd.f32 %v5729, %v5772
        %v5793 = vadd.f32 %v5730, %v5774
        %v5794 = vadd.f32 %v5731, %v5773
        %v5795 = vlaneseq
        %v5796 = vshrl.u32 %v5795, 7
        %v5797 = vsub.s32 4, %v5796
        %v5798 = vrot.slane %v5586, %v5797
        %v5799 = vmul.f32 %v5528, %v5798
        %v5800 = vmul.f32 %v5533, %v5798
        %v5801 = vmul.f32 %v5538, %v5798
        %v5802 = vmul.f32 %v5543, %v5798
        %v5803 = vmul.f32 %v5548, %v5798
        %v5804 = vmul.f32 %v5553, %v5798
        %v5805 = vmul.f32 %v5558, %v5798
        %v5806 = vmul.f32 %v5563, %v5798
        %v5807 = vmul.f32 %v5568, %v5798
        %v5808 = vmul.f32 %v5573, %v5798
        %v5809 = vmul.f32 %v5578, %v5798
        %v5821 = vrot.slane %v5799, 3
        %v5822 = vrot.slane %v5800, 3
        %v5823 = vsel %vm3198, %v5821, %v5822
        %v5824 = vrot.slane %v5801, 3
        %v5825 = vsel %vm3198, %v5822, %v5824
        %v5826 = vrot.slane %v5802, 3
        %v5827 = vsel %vm3198, %v5824, %v5826
        %v5828 = vrot.slane %v5803, 3
        %v5829 = vsel %vm3198, %v5826, %v5828
        %v5830 = vrot.slane %v5804, 3
        %v5831 = vsel %vm3198, %v5828, %v5830
        %v5832 = vrot.slane %v5805, 3
        %v5833 = vsel %vm3198, %v5830, %v5832
        %v5834 = vrot.slane %v5806, 3
        %v5835 = vsel %vm3198, %v5832, %v5834
        %v5836 = vrot.slane %v5807, 3
        %v5837 = vsel %vm3198, %v5834, %v5836
        %v5838 = vrot.slane %v5808, 3
        %v5839 = vsel %vm3198, %v5836, %v5838
        %v5840 = vrot.slane %v5809, 3
        %v5841 = vsel %vm3198, %v5838, %v5840
        %v5852 = vadd.f32 %v5785, %v5823
        %v5853 = vadd.f32 %v5786, %v5825
        %v5854 = vadd.f32 %v5787, %v5827
        %v5855 = vadd.f32 %v5788, %v5829
        %v5856 = vadd.f32 %v5789, %v5831
        %v5857 = vadd.f32 %v5790, %v5833
        %v5858 = vadd.f32 %v5791, %v5835
        %v5859 = vadd.f32 %v5792, %v5837
        %v5860 = vadd.f32 %v5793, %v5839
        %v5861 = vadd.f32 %v5794, %v5841
        %v5862 = vlaneseq
        %v5863 = vshrl.u32 %v5862, 7
        %v5864 = vsub.s32 5, %v5863
        %v5865 = vrot.slane %v5586, %v5864
        %v5866 = vmul.f32 %v5528, %v5865
        %v5867 = vmul.f32 %v5533, %v5865
        %v5868 = vmul.f32 %v5538, %v5865
        %v5869 = vmul.f32 %v5543, %v5865
        %v5870 = vmul.f32 %v5548, %v5865
        %v5871 = vmul.f32 %v5553, %v5865
        %v5872 = vmul.f32 %v5558, %v5865
        %v5873 = vmul.f32 %v5563, %v5865
        %v5874 = vmul.f32 %v5568, %v5865
        %v5875 = vmul.f32 %v5573, %v5865
        %v5876 = vmul.f32 %v5578, %v5865
        %v5888 = vrot.slane %v5866, 4
        %v5889 = vrot.slane %v5867, 4
        %v5890 = vsel %vm3422, %v5888, %v5889
        %v5891 = vrot.slane %v5868, 4
        %v5892 = vsel %vm3422, %v5889, %v5891
        %v5893 = vrot.slane %v5869, 4
        %v5894 = vsel %vm3422, %v5891, %v5893
        %v5895 = vrot.slane %v5870, 4
        %v5896 = vsel %vm3422, %v5893, %v5895
        %v5897 = vrot.slane %v5871, 4
        %v5898 = vsel %vm3422, %v5895, %v5897
        %v5899 = vrot.slane %v5872, 4
        %v5900 = vsel %vm3422, %v5897, %v5899
        %v5901 = vrot.slane %v5873, 4
        %v5902 = vsel %vm3422, %v5899, %v5901
        %v5903 = vrot.slane %v5874, 4
        %v5904 = vsel %vm3422, %v5901, %v5903
        %v5905 = vrot.slane %v5875, 4
        %v5906 = vsel %vm3422, %v5903, %v5905
        %v5907 = vrot.slane %v5876, 4
        %v5908 = vsel %vm3422, %v5905, %v5907
        %v5919 = vadd.f32 %v5852, %v5890
        %v5920 = vadd.f32 %v5853, %v5892
        %v5921 = vadd.f32 %v5854, %v5894
        %v5922 = vadd.f32 %v5855, %v5896
        %v5923 = vadd.f32 %v5856, %v5898
        %v5924 = vadd.f32 %v5857, %v5900
        %v5925 = vadd.f32 %v5858, %v5902
        %v5926 = vadd.f32 %v5859, %v5904
        %v5927 = vadd.f32 %v5860, %v5906
        %v5928 = vadd.f32 %v5861, %v5908
        %v5929 = vlaneseq
        %v5930 = vshrl.u32 %v5929, 7
        %v5931 = vsub.s32 6, %v5930
        %v5932 = vrot.slane %v5586, %v5931
        %v5933 = vmul.f32 %v5533, %v5932
        %v5934 = vmul.f32 %v5538, %v5932
        %v5935 = vmul.f32 %v5543, %v5932
        %v5936 = vmul.f32 %v5548, %v5932
        %v5937 = vmul.f32 %v5553, %v5932
        %v5938 = vmul.f32 %v5558, %v5932
        %v5939 = vmul.f32 %v5563, %v5932
        %v5940 = vmul.f32 %v5568, %v5932
        %v5941 = vmul.f32 %v5573, %v5932
        %v5942 = vmul.f32 %v5578, %v5932
        %v5943 = vmul.f32 %v5583, %v5932
        %v5955 = vrot.slane %v5933, 4
        %v5956 = vrot.slane %v5934, 4
        %v5957 = vsel %vm3422, %v5955, %v5956
        %v5958 = vrot.slane %v5935, 4
        %v5959 = vsel %vm3422, %v5956, %v5958
        %v5960 = vrot.slane %v5936, 4
        %v5961 = vsel %vm3422, %v5958, %v5960
        %v5962 = vrot.slane %v5937, 4
        %v5963 = vsel %vm3422, %v5960, %v5962
        %v5964 = vrot.slane %v5938, 4
        %v5965 = vsel %vm3422, %v5962, %v5964
        %v5966 = vrot.slane %v5939, 4
        %v5967 = vsel %vm3422, %v5964, %v5966
        %v5968 = vrot.slane %v5940, 4
        %v5969 = vsel %vm3422, %v5966, %v5968
        %v5970 = vrot.slane %v5941, 4
        %v5971 = vsel %vm3422, %v5968, %v5970
        %v5972 = vrot.slane %v5942, 4
        %v5973 = vsel %vm3422, %v5970, %v5972
        %v5974 = vrot.slane %v5943, 4
        %v5975 = vsel %vm3422, %v5972, %v5974
        %v5986 = vadd.f32 %v5919, %v5957
        %v5987 = vadd.f32 %v5920, %v5959
        %v5988 = vadd.f32 %v5921, %v5961
        %v5989 = vadd.f32 %v5922, %v5963
        %v5990 = vadd.f32 %v5923, %v5965
        %v5991 = vadd.f32 %v5924, %v5967
        %v5992 = vadd.f32 %v5925, %v5969
        %v5993 = vadd.f32 %v5926, %v5971
        %v5994 = vadd.f32 %v5927, %v5973
        %v5995 = vadd.f32 %v5928, %v5975
        %v5996 = vlaneseq
        %v5997 = vshrl.u32 %v5996, 7
        %v5998 = vsub.s32 7, %v5997
        %v5999 = vrot.slane %v5586, %v5998
        %v6000 = vmul.f32 %v5533, %v5999
        %v6001 = vmul.f32 %v5538, %v5999
        %v6002 = vmul.f32 %v5543, %v5999
        %v6003 = vmul.f32 %v5548, %v5999
        %v6004 = vmul.f32 %v5553, %v5999
        %v6005 = vmul.f32 %v5558, %v5999
        %v6006 = vmul.f32 %v5563, %v5999
        %v6007 = vmul.f32 %v5568, %v5999
        %v6008 = vmul.f32 %v5573, %v5999
        %v6009 = vmul.f32 %v5578, %v5999
        %v6010 = vmul.f32 %v5583, %v5999
        %v6022 = vrot.slane %v6000, 5
        %v6023 = vrot.slane %v6001, 5
        %v6024 = vsel %vm3879, %v6022, %v6023
        %v6025 = vrot.slane %v6002, 5
        %v6026 = vsel %vm3879, %v6023, %v6025
        %v6027 = vrot.slane %v6003, 5
        %v6028 = vsel %vm3879, %v6025, %v6027
        %v6029 = vrot.slane %v6004, 5
        %v6030 = vsel %vm3879, %v6027, %v6029
        %v6031 = vrot.slane %v6005, 5
        %v6032 = vsel %vm3879, %v6029, %v6031
        %v6033 = vrot.slane %v6006, 5
        %v6034 = vsel %vm3879, %v6031, %v6033
        %v6035 = vrot.slane %v6007, 5
        %v6036 = vsel %vm3879, %v6033, %v6035
        %v6037 = vrot.slane %v6008, 5
        %v6038 = vsel %vm3879, %v6035, %v6037
        %v6039 = vrot.slane %v6009, 5
        %v6040 = vsel %vm3879, %v6037, %v6039
        %v6041 = vrot.slane %v6010, 5
        %v6042 = vsel %vm3879, %v6039, %v6041
        %v6053 = vadd.f32 %v5986, %v6024
        %v6054 = vadd.f32 %v5987, %v6026
        %v6055 = vadd.f32 %v5988, %v6028
        %v6056 = vadd.f32 %v5989, %v6030
        %v6057 = vadd.f32 %v5990, %v6032
        %v6058 = vadd.f32 %v5991, %v6034
        %v6059 = vadd.f32 %v5992, %v6036
        %v6060 = vadd.f32 %v5993, %v6038
        %v6061 = vadd.f32 %v5994, %v6040
        %v6062 = vadd.f32 %v5995, %v6042
        %v6063 = vlaneseq
        %v6064 = vshrl.u32 %v6063, 7
        %v6065 = vsub.s32 0, %v6064
        %v6066 = vrot.slane %v5587, %v6065
        %v6067 = vmul.f32 %v5533, %v6066
        %v6068 = vmul.f32 %v5538, %v6066
        %v6069 = vmul.f32 %v5543, %v6066
        %v6070 = vmul.f32 %v5548, %v6066
        %v6071 = vmul.f32 %v5553, %v6066
        %v6072 = vmul.f32 %v5558, %v6066
        %v6073 = vmul.f32 %v5563, %v6066
        %v6074 = vmul.f32 %v5568, %v6066
        %v6075 = vmul.f32 %v5573, %v6066
        %v6076 = vmul.f32 %v5578, %v6066
        %v6077 = vmul.f32 %v5583, %v6066
        %v6089 = vrot.slane %v6067, 6
        %v6090 = vrot.slane %v6068, 6
        %v6091 = vsel %vm4103, %v6089, %v6090
        %v6092 = vrot.slane %v6069, 6
        %v6093 = vsel %vm4103, %v6090, %v6092
        %v6094 = vrot.slane %v6070, 6
        %v6095 = vsel %vm4103, %v6092, %v6094
        %v6096 = vrot.slane %v6071, 6
        %v6097 = vsel %vm4103, %v6094, %v6096
        %v6098 = vrot.slane %v6072, 6
        %v6099 = vsel %vm4103, %v6096, %v6098
        %v6100 = vrot.slane %v6073, 6
        %v6101 = vsel %vm4103, %v6098, %v6100
        %v6102 = vrot.slane %v6074, 6
        %v6103 = vsel %vm4103, %v6100, %v6102
        %v6104 = vrot.slane %v6075, 6
        %v6105 = vsel %vm4103, %v6102, %v6104
        %v6106 = vrot.slane %v6076, 6
        %v6107 = vsel %vm4103, %v6104, %v6106
        %v6108 = vrot.slane %v6077, 6
        %v6109 = vsel %vm4103, %v6106, %v6108
        %v6120 = vadd.f32 %v6053, %v6091
        %v6121 = vadd.f32 %v6054, %v6093
        %v6122 = vadd.f32 %v6055, %v6095
        %v6123 = vadd.f32 %v6056, %v6097
        %v6124 = vadd.f32 %v6057, %v6099
        %v6125 = vadd.f32 %v6058, %v6101
        %v6126 = vadd.f32 %v6059, %v6103
        %v6127 = vadd.f32 %v6060, %v6105
        %v6128 = vadd.f32 %v6061, %v6107
        %v6129 = vadd.f32 %v6062, %v6109
        %v6131 = vlaneseq
        %v6132 = vshrl.u32 %v6131, 7
        %v6133 = vsub.s32 0, %v6132
        %v6134 = vrot.slane %v5588, %v6133
        %v6136 = vadd.f32 %v6120, %v6134
        %v6137 = vadd.f32 %v6121, %v6134
        %v6138 = vadd.f32 %v6122, %v6134
        %v6139 = vadd.f32 %v6123, %v6134
        %v6140 = vadd.f32 %v6124, %v6134
        %v6141 = vadd.f32 %v6125, %v6134
        %v6142 = vadd.f32 %v6126, %v6134
        %v6143 = vadd.f32 %v6127, %v6134
        %v6144 = vadd.f32 %v6128, %v6134
        %v6145 = vadd.f32 %v6129, %v6134
        %v6146 = vmax.f32 %v6136, 0.0
        %v6147 = vmax.f32 %v6137, 0.0
        %v6148 = vmax.f32 %v6138, 0.0
        %v6149 = vmax.f32 %v6139, 0.0
        %v6150 = vmax.f32 %v6140, 0.0
        %v6151 = vmax.f32 %v6141, 0.0
        %v6152 = vmax.f32 %v6142, 0.0
        %v6153 = vmax.f32 %v6143, 0.0
        %v6154 = vmax.f32 %v6144, 0.0
        %v6155 = vmax.f32 %v6145, 0.0
        %v6157 = vlaneseq
        %v6158 = vshrl.u32 %v6157, 7
        %v6159 = vsub.s32 0, %v6158
        %v6160 = vrot.slane %v5591, %v6159
        %vm6162 = vcmask 130048
        %v6164 = vsel %vm6162, %v6146, 0
        %v6167 = vsel %vm6162, %v6147, 0
        %v6170 = vsel %vm6162, %v6148, 0
        %v6173 = vsel %vm6162, %v6149, 0
        %v6176 = vsel %vm6162, %v6150, 0
        %v6179 = vsel %vm6162, %v6151, 0
        %v6182 = vsel %vm6162, %v6152, 0
        %v6185 = vsel %vm6162, %v6153, 0
        %v6188 = vsel %vm6162, %v6154, 0
        %v6191 = vsel %vm6162, %v6155, 0
        %6193 = vmatprep.subr.mxu0 0.0
        %6194 = vmatpush1.msra.mxu0 %v5589
        %6195 = vmatprep.subr.mxu0 0.0
        %6196 = vmatpush1.msra.mxu0 %v5590
        %6197 = vmatprep.subr.mxu0 0.0
        %6198 = vmatpush1.msra.mxu0 0.0
        %6199 = vmatprep.subr.mxu0 0.0
        %6200 = vmatpush1.msra.mxu0 0.0
        %6201 = vmatprep.subr.mxu0 0.0
        %6202 = vmatpush1.msra.mxu0 0.0
        %6203 = vmatprep.subr.mxu0 0.0
        %6204 = vmatpush1.msra.mxu0 0.0
        %6205 = vmatprep.subr.mxu0 0.0
        %6206 = vmatpush1.msra.mxu0 0.0
        %6207 = vmatprep.subr.mxu0 0.0
        %6208 = vmatpush1.msra.mxu0 0.0
        %6209 = vmatprep.subr.mxu0 0.0
        %6210 = vmatpush1.msra.mxu0 0.0
        %6211 = vmatprep.subr.mxu0 0.0
        %6212 = vmatpush1.msra.mxu0 0.0
        %6213 = vmatprep.subr.mxu0 0.0
        %6214 = vmatpush1.msra.mxu0 0.0
        %6215 = vmatprep.subr.mxu0 0.0
        %6216 = vmatpush1.msra.mxu0 0.0
        %6217 = vmatprep.subr.mxu0 0.0
        %6218 = vmatpush1.msra.mxu0 0.0
        %6219 = vmatprep.subr.mxu0 0.0
        %6220 = vmatpush1.msra.mxu0 0.0
        %6221 = vmatprep.subr.mxu0 0.0
        %6222 = vmatpush1.msra.mxu0 0.0
        %6223 = vmatprep.subr.mxu0 0.0
        %6224 = vmatpush1.msra.mxu0 0.0
        %6225 = vmatprep.subr.mxu0 0.0
        %6226 = vmatpush1.msra.mxu0 0.0
        %6227 = vmatprep.subr.mxu0 0.0
        %6228 = vmatpush1.msra.mxu0 0.0
        %6229 = vmatprep.subr.mxu0 0.0
        %6230 = vmatpush1.msra.mxu0 0.0
        %6231 = vmatprep.subr.mxu0 0.0
        %6232 = vmatpush1.msra.mxu0 0.0
        %6233 = vmatprep.subr.mxu0 0.0
        %6234 = vmatpush1.msra.mxu0 0.0
        %6235 = vmatprep.subr.mxu0 0.0
        %6236 = vmatpush1.msra.mxu0 0.0
        %6237 = vmatprep.subr.mxu0 0.0
        %6238 = vmatpush1.msra.mxu0 0.0
        %6239 = vmatprep.subr.mxu0 0.0
        %6240 = vmatpush1.msra.mxu0 0.0
        %6241 = vmatprep.subr.mxu0 0.0
        %6242 = vmatpush1.msra.mxu0 0.0
        %6243 = vmatprep.subr.mxu0 0.0
        %6244 = vmatpush1.msra.mxu0 0.0
        %6245 = vmatprep.subr.mxu0 0.0
        %6246 = vmatpush1.msra.mxu0 0.0
        %6247 = vmatprep.subr.mxu0 0.0
        %6248 = vmatpush1.msra.mxu0 0.0
        %6249 = vmatprep.subr.mxu0 0.0
        %6250 = vmatpush1.msra.mxu0 0.0
        %6251 = vmatprep.subr.mxu0 0.0
        %6252 = vmatpush1.msra.mxu0 0.0
        %6253 = vmatprep.subr.mxu0 0.0
        %6254 = vmatpush1.msra.mxu0 0.0
        %6255 = vmatprep.subr.mxu0 0.0
        %6256 = vmatpush1.msra.mxu0 0.0
        %6257 = vmatprep.mubr.f32.mxu0 0.0
        %6258 = vmatmul.mubr.f32.gmra.mrb[0].mxu0 %v6164
        %v6259 = vpop.f32.mrb[0].mxu0
        %v6260 = vadd.f32 %v6160, %v6259
        %v6261 = vpop.f32.mrb[0].mxu0
        %6262 = vmatprep.mubr.f32.mxu0 0.0
        %6263 = vmatmul.mubr.f32.gmra.mrb[0].mxu0 %v6167
        %v6264 = vpop.f32.mrb[0].mxu0
        %v6265 = vadd.f32 %v6160, %v6264
        %v6266 = vpop.f32.mrb[0].mxu0
        %6267 = vmatprep.mubr.f32.mxu0 0.0
        %6268 = vmatmul.mubr.f32.gmra.mrb[0].mxu0 %v6170
        %v6269 = vpop.f32.mrb[0].mxu0
        %v6270 = vadd.f32 %v6160, %v6269
        %v6271 = vpop.f32.mrb[0].mxu0
        %6272 = vmatprep.mubr.f32.mxu0 0.0
        %6273 = vmatmul.mubr.f32.gmra.mrb[0].mxu0 %v6173
        %v6274 = vpop.f32.mrb[0].mxu0
        %v6275 = vadd.f32 %v6160, %v6274
        %v6276 = vpop.f32.mrb[0].mxu0
        %6277 = vmatprep.mubr.f32.mxu0 0.0
        %6278 = vmatmul.mubr.f32.gmra.mrb[0].mxu0 %v6176
        %v6279 = vpop.f32.mrb[0].mxu0
        %v6280 = vadd.f32 %v6160, %v6279
        %v6281 = vpop.f32.mrb[0].mxu0
        %6282 = vmatprep.mubr.f32.mxu0 0.0
        %6283 = vmatmul.mubr.f32.gmra.mrb[0].mxu0 %v6179
        %v6284 = vpop.f32.mrb[0].mxu0
        %v6285 = vadd.f32 %v6160, %v6284
        %v6286 = vpop.f32.mrb[0].mxu0
        %6287 = vmatprep.mubr.f32.mxu0 0.0
        %6288 = vmatmul.mubr.f32.gmra.mrb[0].mxu0 %v6182
        %v6289 = vpop.f32.mrb[0].mxu0
        %v6290 = vadd.f32 %v6160, %v6289
        %v6291 = vpop.f32.mrb[0].mxu0
        %6292 = vmatprep.mubr.f32.mxu0 0.0
        %6293 = vmatmul.mubr.f32.gmra.mrb[0].mxu0 %v6185
        %v6294 = vpop.f32.mrb[0].mxu0
        %v6295 = vadd.f32 %v6160, %v6294
        %v6296 = vpop.f32.mrb[0].mxu0
        %6297 = vmatprep.mubr.f32.mxu0 0.0
        %6298 = vmatmul.mubr.f32.gmra.mrb[0].mxu0 %v6188
        %v6299 = vpop.f32.mrb[0].mxu0
        %v6300 = vadd.f32 %v6160, %v6299
        %v6301 = vpop.f32.mrb[0].mxu0
        %6302 = vmatprep.mubr.f32.mxu0 0.0
        %6303 = vmatmul.mubr.f32.gmra.mrb[0].mxu0 %v6191
        %v6304 = vpop.f32.mrb[0].mxu0
        %v6305 = vadd.f32 %v6160, %v6304
        %v6306 = vpop.f32.mrb[0].mxu0
        %6307 = vdwg.mxu0
        %v6308 = vmax.f32 %v6260, 0.0
        %v6309 = vmax.f32 %v6265, 0.0
        %v6310 = vmax.f32 %v6270, 0.0
        %v6311 = vmax.f32 %v6275, 0.0
        %v6312 = vmax.f32 %v6280, 0.0
        %v6313 = vmax.f32 %v6285, 0.0
        %v6314 = vmax.f32 %v6290, 0.0
        %v6315 = vmax.f32 %v6295, 0.0
        %v6316 = vmax.f32 %v6300, 0.0
        %v6317 = vmax.f32 %v6305, 0.0
        %v6318 = vld [vmem:[%s27] sm:$0xff]
        %v6319 = vld [vmem:[%s27 + $0x8] sm:$0xff]
        %v6320 = vld [vmem:[%s27 + $0x10] sm:$0xff]
        %v6321 = vld [vmem:[%s27 + $0x18] sm:$0xff]
        %v6322 = vld [vmem:[%s27 + $0x20] sm:$0xf]
        %v6324 = vsel %vm5413, %v6318, 0
        %v6327 = vsel %vm5413, %v6319, 0
        %v6330 = vsel %vm5413, %v6320, 0
        %v6333 = vsel %vm5413, %v6321, 0
        %v6336 = vsel %vm5413, %v6322, 0
        %v6339 = vsel %vm2742, %v6317, 0
        %6341 = vmatprep.subr.mxu0 0.0
        %6342 = vmatpush1.msra.mxu0 %v6308
        %6343 = vmatprep.subr.mxu0 0.0
        %6344 = vmatpush1.msra.mxu0 %v6309
        %6345 = vmatprep.subr.mxu0 0.0
        %6346 = vmatpush1.msra.mxu0 %v6310
        %6347 = vmatprep.subr.mxu0 0.0
        %6348 = vmatpush1.msra.mxu0 %v6311
        %6349 = vmatprep.subr.mxu0 0.0
        %6350 = vmatpush1.msra.mxu0 %v6312
        %6351 = vmatprep.subr.mxu0 0.0
        %6352 = vmatpush1.msra.mxu0 %v6313
        %6353 = vmatprep.subr.mxu0 0.0
        %6354 = vmatpush1.msra.mxu0 %v6314
        %6355 = vmatprep.subr.mxu0 0.0
        %6356 = vmatpush1.msra.mxu0 %v6315
        %6357 = vmatprep.subr.mxu0 0.0
        %6358 = vmatpush1.msra.mxu0 %v6316
        %6359 = vmatprep.subr.mxu0 0.0
        %6360 = vmatpush1.msra.mxu0 %v6339
        %6361 = vmatprep.subr.mxu0 0.0
        %6362 = vmatpush1.msra.mxu0 0.0
        %6363 = vmatprep.subr.mxu0 0.0
        %6364 = vmatpush1.msra.mxu0 0.0
        %6365 = vmatprep.subr.mxu0 0.0
        %6366 = vmatpush1.msra.mxu0 0.0
        %6367 = vmatprep.subr.mxu0 0.0
        %6368 = vmatpush1.msra.mxu0 0.0
        %6369 = vmatprep.subr.mxu0 0.0
        %6370 = vmatpush1.msra.mxu0 0.0
        %6371 = vmatprep.subr.mxu0 0.0
        %6372 = vmatpush1.msra.mxu0 0.0
        %6373 = vmatprep.subr.mxu0 0.0
        %6374 = vmatpush1.msra.mxu0 0.0
        %6375 = vmatprep.subr.mxu0 0.0
        %6376 = vmatpush1.msra.mxu0 0.0
        %6377 = vmatprep.subr.mxu0 0.0
        %6378 = vmatpush1.msra.mxu0 0.0
        %6379 = vmatprep.subr.mxu0 0.0
        %6380 = vmatpush1.msra.mxu0 0.0
        %6381 = vmatprep.subr.mxu0 0.0
        %6382 = vmatpush1.msra.mxu0 0.0
        %6383 = vmatprep.subr.mxu0 0.0
        %6384 = vmatpush1.msra.mxu0 0.0
        %6385 = vmatprep.subr.mxu0 0.0
        %6386 = vmatpush1.msra.mxu0 0.0
        %6387 = vmatprep.subr.mxu0 0.0
        %6388 = vmatpush1.msra.mxu0 0.0
        %6389 = vmatprep.subr.mxu0 0.0
        %6390 = vmatpush1.msra.mxu0 0.0
        %6391 = vmatprep.subr.mxu0 0.0
        %6392 = vmatpush1.msra.mxu0 0.0
        %6393 = vmatprep.subr.mxu0 0.0
        %6394 = vmatpush1.msra.mxu0 0.0
        %6395 = vmatprep.subr.mxu0 0.0
        %6396 = vmatpush1.msra.mxu0 0.0
        %6397 = vmatprep.subr.mxu0 0.0
        %6398 = vmatpush1.msra.mxu0 0.0
        %6399 = vmatprep.subr.mxu0 0.0
        %6400 = vmatpush1.msra.mxu0 0.0
        %6401 = vmatprep.subr.mxu0 0.0
        %6402 = vmatpush1.msra.mxu0 0.0
        %6403 = vmatprep.subr.mxu0 0.0
        %6404 = vmatpush1.msra.mxu0 0.0
        %6405 = vmatprep.mubr.f32.mxu0 0.0
        %6406 = vmatmul.mubr.f32.gmra.mrb[0].mxu0 %v6324
        %v6407 = vpop.f32.mrb[0].mxu0
        %v6408 = vadd.f32 0.0, %v6407
        %v6409 = vpop.f32.mrb[0].mxu0
        %6410 = vmatprep.mubr.f32.mxu0 0.0
        %6411 = vmatmul.mubr.f32.gmra.mrb[0].mxu0 %v6327
        %v6412 = vpop.f32.mrb[0].mxu0
        %v6413 = vadd.f32 0.0, %v6412
        %v6414 = vpop.f32.mrb[0].mxu0
        %6415 = vmatprep.mubr.f32.mxu0 0.0
        %6416 = vmatmul.mubr.f32.gmra.mrb[0].mxu0 %v6330
        %v6417 = vpop.f32.mrb[0].mxu0
        %v6418 = vadd.f32 0.0, %v6417
        %v6419 = vpop.f32.mrb[0].mxu0
        %6420 = vmatprep.mubr.f32.mxu0 0.0
        %6421 = vmatmul.mubr.f32.gmra.mrb[0].mxu0 %v6333
        %v6422 = vpop.f32.mrb[0].mxu0
        %v6423 = vadd.f32 0.0, %v6422
        %v6424 = vpop.f32.mrb[0].mxu0
        %6425 = vmatprep.mubr.f32.mxu0 0.0
        %6426 = vmatmul.mubr.f32.gmra.mrb[0].mxu0 %v6336
        %v6427 = vpop.f32.mrb[0].mxu0
        %v6428 = vadd.f32 0.0, %v6427
        %v6429 = vpop.f32.mrb[0].mxu0
        %6430 = vdwg.mxu0
        %v6431 = vld [vmem:[%s29] sm:$0xff]
        %v6432 = vld [vmem:[%s29 + $0x8] sm:$0x1]
        %v6433 = vld [vmem:[%s31] sm:$0x1]
        %v6434 = vld [vmem:[%s33] sm:$0xff]
        %v6435 = vld [vmem:[%s33 + $0x8] sm:$0xff]
        %v6436 = vld [vmem:[%s35] sm:$0x1]
        %v6437 = vlaneseq
        %v6438 = vshrl.u32 %v6437, 7
        %v6439 = vsub.s32 0, %v6438
        %v6440 = vrot.slane %v6431, %v6439
        %v6441 = vmul.f32 %v6408, %v6440
        %v6442 = vmul.f32 %v6413, %v6440
        %v6443 = vmul.f32 %v6418, %v6440
        %v6444 = vlaneseq
        %v6445 = vshrl.u32 %v6444, 7
        %v6446 = vsub.s32 1, %v6445
        %v6447 = vrot.slane %v6431, %v6446
        %v6448 = vmul.f32 %v6408, %v6447
        %v6449 = vmul.f32 %v6413, %v6447
        %v6450 = vmul.f32 %v6418, %v6447
        %v6454 = vrot.slane %v6448, 1
        %v6455 = vrot.slane %v6449, 1
        %v6456 = vsel %vm2522, %v6454, %v6455
        %v6457 = vrot.slane %v6450, 1
        %v6458 = vsel %vm2522, %v6455, %v6457
        %v6462 = vadd.f32 %v6441, %v6456
        %v6463 = vadd.f32 %v6442, %v6458
        %v6464 = vadd.f32 %v6443, %v6457
        %v6465 = vlaneseq
        %v6466 = vshrl.u32 %v6465, 7
        %v6467 = vsub.s32 2, %v6466
        %v6468 = vrot.slane %v6431, %v6467
        %v6469 = vmul.f32 %v6408, %v6468
        %v6470 = vmul.f32 %v6413, %v6468
        %v6471 = vmul.f32 %v6418, %v6468
        %v6475 = vrot.slane %v6469, 2
        %v6476 = vrot.slane %v6470, 2
        %v6477 = vsel %vm2742, %v6475, %v6476
        %v6478 = vrot.slane %v6471, 2
        %v6479 = vsel %vm2742, %v6476, %v6478
        %v6483 = vadd.f32 %v6462, %v6477
        %v6484 = vadd.f32 %v6463, %v6479
        %v6485 = vadd.f32 %v6464, %v6478
        %v6486 = vlaneseq
        %v6487 = vshrl.u32 %v6486, 7
        %v6488 = vsub.s32 3, %v6487
        %v6489 = vrot.slane %v6431, %v6488
        %v6490 = vmul.f32 %v6408, %v6489
        %v6491 = vmul.f32 %v6413, %v6489
        %v6492 = vmul.f32 %v6418, %v6489
        %v6493 = vmul.f32 %v6423, %v6489
        %v6498 = vrot.slane %v6490, 6
        %v6499 = vrot.slane %v6491, 6
        %v6500 = vsel %vm4103, %v6498, %v6499
        %v6501 = vrot.slane %v6492, 6
        %v6502 = vsel %vm4103, %v6499, %v6501
        %v6503 = vrot.slane %v6493, 6
        %v6504 = vsel %vm4103, %v6501, %v6503
        %v6508 = vadd.f32 %v6483, %v6500
        %v6509 = vadd.f32 %v6484, %v6502
        %v6510 = vadd.f32 %v6485, %v6504
        %v6511 = vlaneseq
        %v6512 = vshrl.u32 %v6511, 7
        %v6513 = vsub.s32 4, %v6512
        %v6514 = vrot.slane %v6431, %v6513
        %v6515 = vmul.f32 %v6408, %v6514
        %v6516 = vmul.f32 %v6413, %v6514
        %v6517 = vmul.f32 %v6418, %v6514
        %v6518 = vmul.f32 %v6423, %v6514
        %vm6523 = vcmask 1040384
        %v6524 = vrot.slane %v6515, 7
        %v6525 = vrot.slane %v6516, 7
        %v6526 = vsel %vm6523, %v6524, %v6525
        %v6527 = vrot.slane %v6517, 7
        %v6528 = vsel %vm6523, %v6525, %v6527
        %v6529 = vrot.slane %v6518, 7
        %v6530 = vsel %vm6523, %v6527, %v6529
        %v6534 = vadd.f32 %v6508, %v6526
        %v6535 = vadd.f32 %v6509, %v6528
        %v6536 = vadd.f32 %v6510, %v6530
        %v6537 = vlaneseq
        %v6538 = vshrl.u32 %v6537, 7
        %v6539 = vsub.s32 5, %v6538
        %v6540 = vrot.slane %v6431, %v6539
        %v6541 = vmul.f32 %v6413, %v6540
        %v6542 = vmul.f32 %v6418, %v6540
        %v6543 = vmul.f32 %v6423, %v6540
        %v6544 = vadd.f32 %v6534, %v6541
        %v6545 = vadd.f32 %v6535, %v6542
        %v6546 = vadd.f32 %v6536, %v6543
        %v6547 = vlaneseq
        %v6548 = vshrl.u32 %v6547, 7
        %v6549 = vsub.s32 6, %v6548
        %v6550 = vrot.slane %v6431, %v6549
        %v6551 = vmul.f32 %v6413, %v6550
        %v6552 = vmul.f32 %v6418, %v6550
        %v6553 = vmul.f32 %v6423, %v6550
        %v6554 = vmul.f32 %v6428, %v6550
        %v6559 = vrot.slane %v6551, 4
        %v6560 = vrot.slane %v6552, 4
        %v6561 = vsel %vm3422, %v6559, %v6560
        %v6562 = vrot.slane %v6553, 4
        %v6563 = vsel %vm3422, %v6560, %v6562
        %v6564 = vrot.slane %v6554, 4
        %v6565 = vsel %vm3422, %v6562, %v6564
        %v6569 = vadd.f32 %v6544, %v6561
        %v6570 = vadd.f32 %v6545, %v6563
        %v6571 = vadd.f32 %v6546, %v6565
        %v6572 = vlaneseq
        %v6573 = vshrl.u32 %v6572, 7
        %v6574 = vsub.s32 7, %v6573
        %v6575 = vrot.slane %v6431, %v6574
        %v6576 = vmul.f32 %v6413, %v6575
        %v6577 = vmul.f32 %v6418, %v6575
        %v6578 = vmul.f32 %v6423, %v6575
        %v6579 = vmul.f32 %v6428, %v6575
        %v6584 = vrot.slane %v6576, 5
        %v6585 = vrot.slane %v6577, 5
        %v6586 = vsel %vm3879, %v6584, %v6585
        %v6587 = vrot.slane %v6578, 5
        %v6588 = vsel %vm3879, %v6585, %v6587
        %v6589 = vrot.slane %v6579, 5
        %v6590 = vsel %vm3879, %v6587, %v6589
        %v6594 = vadd.f32 %v6569, %v6586
        %v6595 = vadd.f32 %v6570, %v6588
        %v6596 = vadd.f32 %v6571, %v6590
        %v6597 = vlaneseq
        %v6598 = vshrl.u32 %v6597, 7
        %v6599 = vsub.s32 0, %v6598
        %v6600 = vrot.slane %v6432, %v6599
        %v6601 = vmul.f32 %v6413, %v6600
        %v6602 = vmul.f32 %v6418, %v6600
        %v6603 = vmul.f32 %v6423, %v6600
        %v6604 = vmul.f32 %v6428, %v6600
        %v6609 = vrot.slane %v6601, 6
        %v6610 = vrot.slane %v6602, 6
        %v6611 = vsel %vm4103, %v6609, %v6610
        %v6612 = vrot.slane %v6603, 6
        %v6613 = vsel %vm4103, %v6610, %v6612
        %v6614 = vrot.slane %v6604, 6
        %v6615 = vsel %vm4103, %v6612, %v6614
        %v6619 = vadd.f32 %v6594, %v6611
        %v6620 = vadd.f32 %v6595, %v6613
        %v6621 = vadd.f32 %v6596, %v6615
        %v6623 = vlaneseq
        %v6624 = vshrl.u32 %v6623, 7
        %v6625 = vsub.s32 0, %v6624
        %v6626 = vrot.slane %v6433, %v6625
        %v6628 = vadd.f32 %v6619, %v6626
        %v6629 = vadd.f32 %v6620, %v6626
        %v6630 = vadd.f32 %v6621, %v6626
        %v6631 = vmax.f32 %v6628, 0.0
        %v6632 = vmax.f32 %v6629, 0.0
        %v6633 = vmax.f32 %v6630, 0.0
        %v6635 = vlaneseq
        %v6636 = vshrl.u32 %v6635, 7
        %v6637 = vsub.s32 0, %v6636
        %v6638 = vrot.slane %v6436, %v6637
        %v6641 = vsel %vm6162, %v6631, 0
        %v6644 = vsel %vm6162, %v6632, 0
        %v6647 = vsel %vm6162, %v6633, 0
        %6649 = vmatprep.subr.mxu0 0.0
        %6650 = vmatpush1.msra.mxu0 %v6434
        %6651 = vmatprep.subr.mxu0 0.0
        %6652 = vmatpush1.msra.mxu0 %v6435
        %6653 = vmatprep.subr.mxu0 0.0
        %6654 = vmatpush1.msra.mxu0 0.0
        %6655 = vmatprep.subr.mxu0 0.0
        %6656 = vmatpush1.msra.mxu0 0.0
        %6657 = vmatprep.subr.mxu0 0.0
        %6658 = vmatpush1.msra.mxu0 0.0
        %6659 = vmatprep.subr.mxu0 0.0
        %6660 = vmatpush1.msra.mxu0 0.0
        %6661 = vmatprep.subr.mxu0 0.0
        %6662 = vmatpush1.msra.mxu0 0.0
        %6663 = vmatprep.subr.mxu0 0.0
        %6664 = vmatpush1.msra.mxu0 0.0
        %6665 = vmatprep.subr.mxu0 0.0
        %6666 = vmatpush1.msra.mxu0 0.0
        %6667 = vmatprep.subr.mxu0 0.0
        %6668 = vmatpush1.msra.mxu0 0.0
        %6669 = vmatprep.subr.mxu0 0.0
        %6670 = vmatpush1.msra.mxu0 0.0
        %6671 = vmatprep.subr.mxu0 0.0
        %6672 = vmatpush1.msra.mxu0 0.0
        %6673 = vmatprep.subr.mxu0 0.0
        %6674 = vmatpush1.msra.mxu0 0.0
        %6675 = vmatprep.subr.mxu0 0.0
        %6676 = vmatpush1.msra.mxu0 0.0
        %6677 = vmatprep.subr.mxu0 0.0
        %6678 = vmatpush1.msra.mxu0 0.0
        %6679 = vmatprep.subr.mxu0 0.0
        %6680 = vmatpush1.msra.mxu0 0.0
        %6681 = vmatprep.subr.mxu0 0.0
        %6682 = vmatpush1.msra.mxu0 0.0
        %6683 = vmatprep.subr.mxu0 0.0
        %6684 = vmatpush1.msra.mxu0 0.0
        %6685 = vmatprep.subr.mxu0 0.0
        %6686 = vmatpush1.msra.mxu0 0.0
        %6687 = vmatprep.subr.mxu0 0.0
        %6688 = vmatpush1.msra.mxu0 0.0
        %6689 = vmatprep.subr.mxu0 0.0
        %6690 = vmatpush1.msra.mxu0 0.0
        %6691 = vmatprep.subr.mxu0 0.0
        %6692 = vmatpush1.msra.mxu0 0.0
        %6693 = vmatprep.subr.mxu0 0.0
        %6694 = vmatpush1.msra.mxu0 0.0
        %6695 = vmatprep.subr.mxu0 0.0
        %6696 = vmatpush1.msra.mxu0 0.0
        %6697 = vmatprep.subr.mxu0 0.0
        %6698 = vmatpush1.msra.mxu0 0.0
        %6699 = vmatprep.subr.mxu0 0.0
        %6700 = vmatpush1.msra.mxu0 0.0
        %6701 = vmatprep.subr.mxu0 0.0
        %6702 = vmatpush1.msra.mxu0 0.0
        %6703 = vmatprep.subr.mxu0 0.0
        %6704 = vmatpush1.msra.mxu0 0.0
        %6705 = vmatprep.subr.mxu0 0.0
        %6706 = vmatpush1.msra.mxu0 0.0
        %6707 = vmatprep.subr.mxu0 0.0
        %6708 = vmatpush1.msra.mxu0 0.0
        %6709 = vmatprep.subr.mxu0 0.0
        %6710 = vmatpush1.msra.mxu0 0.0
        %6711 = vmatprep.subr.mxu0 0.0
        %6712 = vmatpush1.msra.mxu0 0.0
        %6713 = vmatprep.mubr.f32.mxu0 0.0
        %6714 = vmatmul.mubr.f32.gmra.mrb[0].mxu0 %v6641
        %v6715 = vpop.f32.mrb[0].mxu0
        %v6716 = vadd.f32 %v6638, %v6715
        %v6717 = vpop.f32.mrb[0].mxu0
        %6718 = vmatprep.mubr.f32.mxu0 0.0
        %6719 = vmatmul.mubr.f32.gmra.mrb[0].mxu0 %v6644
        %v6720 = vpop.f32.mrb[0].mxu0
        %v6721 = vadd.f32 %v6638, %v6720
        %v6722 = vpop.f32.mrb[0].mxu0
        %6723 = vmatprep.mubr.f32.mxu0 0.0
        %6724 = vmatmul.mubr.f32.gmra.mrb[0].mxu0 %v6647
        %v6725 = vpop.f32.mrb[0].mxu0
        %v6726 = vadd.f32 %v6638, %v6725
        %v6727 = vpop.f32.mrb[0].mxu0
        %6728 = vdwg.mxu0
        %v6729 = vmax.f32 %v6716, 0.0
        %v6730 = vmax.f32 %v6721, 0.0
        %v6731 = vmax.f32 %v6726, 0.0
        %v6732 = vld [vmem:[%s37] sm:$0xff]
        %v6733 = vld [vmem:[%s37 + $0x8] sm:$0xff]
        %v6734 = vld [vmem:[%s37 + $0x10] sm:$0xff]
        %v6735 = vld [vmem:[%s37 + $0x18] sm:$0xff]
        %v6736 = vld [vmem:[%s37 + $0x20] sm:$0xf]
        %vm6737 = vcmask 179200
        %v6739 = vsel %vm6737, %v6732, 0
        %v6742 = vsel %vm6737, %v6733, 0
        %v6745 = vsel %vm6737, %v6734, 0
        %v6748 = vsel %vm6737, %v6735, 0
        %v6751 = vsel %vm6737, %v6736, 0
        %v6754 = vsel %vm2742, %v6731, 0
        %6756 = vmatprep.subr.mxu0 0.0
        %6757 = vmatpush1.msra.mxu0 %v6729
        %6758 = vmatprep.subr.mxu0 0.0
        %6759 = vmatpush1.msra.mxu0 %v6730
        %6760 = vmatprep.subr.mxu0 0.0
        %6761 = vmatpush1.msra.mxu0 %v6754
        %6762 = vmatprep.subr.mxu0 0.0
        %6763 = vmatpush1.msra.mxu0 0.0
        %6764 = vmatprep.subr.mxu0 0.0
        %6765 = vmatpush1.msra.mxu0 0.0
        %6766 = vmatprep.subr.mxu0 0.0
        %6767 = vmatpush1.msra.mxu0 0.0
        %6768 = vmatprep.subr.mxu0 0.0
        %6769 = vmatpush1.msra.mxu0 0.0
        %6770 = vmatprep.subr.mxu0 0.0
        %6771 = vmatpush1.msra.mxu0 0.0
        %6772 = vmatprep.subr.mxu0 0.0
        %6773 = vmatpush1.msra.mxu0 0.0
        %6774 = vmatprep.subr.mxu0 0.0
        %6775 = vmatpush1.msra.mxu0 0.0
        %6776 = vmatprep.subr.mxu0 0.0
        %6777 = vmatpush1.msra.mxu0 0.0
        %6778 = vmatprep.subr.mxu0 0.0
        %6779 = vmatpush1.msra.mxu0 0.0
        %6780 = vmatprep.subr.mxu0 0.0
        %6781 = vmatpush1.msra.mxu0 0.0
        %6782 = vmatprep.subr.mxu0 0.0
        %6783 = vmatpush1.msra.mxu0 0.0
        %6784 = vmatprep.subr.mxu0 0.0
        %6785 = vmatpush1.msra.mxu0 0.0
        %6786 = vmatprep.subr.mxu0 0.0
        %6787 = vmatpush1.msra.mxu0 0.0
        %6788 = vmatprep.subr.mxu0 0.0
        %6789 = vmatpush1.msra.mxu0 0.0
        %6790 = vmatprep.subr.mxu0 0.0
        %6791 = vmatpush1.msra.mxu0 0.0
        %6792 = vmatprep.subr.mxu0 0.0
        %6793 = vmatpush1.msra.mxu0 0.0
        %6794 = vmatprep.subr.mxu0 0.0
        %6795 = vmatpush1.msra.mxu0 0.0
        %6796 = vmatprep.subr.mxu0 0.0
        %6797 = vmatpush1.msra.mxu0 0.0
        %6798 = vmatprep.subr.mxu0 0.0
        %6799 = vmatpush1.msra.mxu0 0.0
        %6800 = vmatprep.subr.mxu0 0.0
        %6801 = vmatpush1.msra.mxu0 0.0
        %6802 = vmatprep.subr.mxu0 0.0
        %6803 = vmatpush1.msra.mxu0 0.0
        %6804 = vmatprep.subr.mxu0 0.0
        %6805 = vmatpush1.msra.mxu0 0.0
        %6806 = vmatprep.subr.mxu0 0.0
        %6807 = vmatpush1.msra.mxu0 0.0
        %6808 = vmatprep.subr.mxu0 0.0
        %6809 = vmatpush1.msra.mxu0 0.0
        %6810 = vmatprep.subr.mxu0 0.0
        %6811 = vmatpush1.msra.mxu0 0.0
        %6812 = vmatprep.subr.mxu0 0.0
        %6813 = vmatpush1.msra.mxu0 0.0
        %6814 = vmatprep.subr.mxu0 0.0
        %6815 = vmatpush1.msra.mxu0 0.0
        %6816 = vmatprep.subr.mxu0 0.0
        %6817 = vmatpush1.msra.mxu0 0.0
        %6818 = vmatprep.subr.mxu0 0.0
        %6819 = vmatpush1.msra.mxu0 0.0
        %6820 = vmatprep.mubr.f32.mxu0 0.0
        %6821 = vmatmul.mubr.f32.gmra.mrb[0].mxu0 %v6739
        %v6822 = vpop.f32.mrb[0].mxu0
        %v6823 = vadd.f32 0.0, %v6822
        %v6824 = vpop.f32.mrb[0].mxu0
        %6825 = vmatprep.mubr.f32.mxu0 0.0
        %6826 = vmatmul.mubr.f32.gmra.mrb[0].mxu0 %v6742
        %v6827 = vpop.f32.mrb[0].mxu0
        %v6828 = vadd.f32 0.0, %v6827
        %v6829 = vpop.f32.mrb[0].mxu0
        %6830 = vmatprep.mubr.f32.mxu0 0.0
        %6831 = vmatmul.mubr.f32.gmra.mrb[0].mxu0 %v6745
        %v6832 = vpop.f32.mrb[0].mxu0
        %v6833 = vadd.f32 0.0, %v6832
        %v6834 = vpop.f32.mrb[0].mxu0
        %6835 = vmatprep.mubr.f32.mxu0 0.0
        %6836 = vmatmul.mubr.f32.gmra.mrb[0].mxu0 %v6748
        %v6837 = vpop.f32.mrb[0].mxu0
        %v6838 = vadd.f32 0.0, %v6837
        %v6839 = vpop.f32.mrb[0].mxu0
        %6840 = vmatprep.mubr.f32.mxu0 0.0
        %6841 = vmatmul.mubr.f32.gmra.mrb[0].mxu0 %v6751
        %v6842 = vpop.f32.mrb[0].mxu0
        %v6843 = vadd.f32 0.0, %v6842
        %v6844 = vpop.f32.mrb[0].mxu0
        %6845 = vdwg.mxu0
        %v6846 = vld [vmem:[%s39] sm:$0xff]
        %v6847 = vld [vmem:[%s39 + $0x8] sm:$0x1]
        %v6848 = vld [vmem:[%s41] sm:$0x1]
        %v6849 = vld [vmem:[%s43] sm:$0xff]
        %v6850 = vld [vmem:[%s43 + $0x8] sm:$0xff]
        %v6851 = vld [vmem:[%s45] sm:$0x1]
        %v6852 = vlaneseq
        %v6853 = vshrl.u32 %v6852, 7
        %v6854 = vsub.s32 0, %v6853
        %v6855 = vrot.slane %v6846, %v6854
        %v6856 = vmul.f32 %v6823, %v6855
        %v6857 = vmul.f32 %v6828, %v6855
        %v6858 = vmul.f32 %v6833, %v6855
        %v6859 = vlaneseq
        %v6860 = vshrl.u32 %v6859, 7
        %v6861 = vsub.s32 1, %v6860
        %v6862 = vrot.slane %v6846, %v6861
        %v6863 = vmul.f32 %v6823, %v6862
        %v6864 = vmul.f32 %v6828, %v6862
        %v6865 = vmul.f32 %v6833, %v6862
        %v6869 = vrot.slane %v6863, 1
        %v6870 = vrot.slane %v6864, 1
        %v6871 = vsel %vm2522, %v6869, %v6870
        %v6872 = vrot.slane %v6865, 1
        %v6873 = vsel %vm2522, %v6870, %v6872
        %v6877 = vadd.f32 %v6856, %v6871
        %v6878 = vadd.f32 %v6857, %v6873
        %v6879 = vadd.f32 %v6858, %v6872
        %v6880 = vlaneseq
        %v6881 = vshrl.u32 %v6880, 7
        %v6882 = vsub.s32 2, %v6881
        %v6883 = vrot.slane %v6846, %v6882
        %v6884 = vmul.f32 %v6823, %v6883
        %v6885 = vmul.f32 %v6828, %v6883
        %v6886 = vmul.f32 %v6833, %v6883
        %v6890 = vrot.slane %v6884, 2
        %v6891 = vrot.slane %v6885, 2
        %v6892 = vsel %vm2742, %v6890, %v6891
        %v6893 = vrot.slane %v6886, 2
        %v6894 = vsel %vm2742, %v6891, %v6893
        %v6898 = vadd.f32 %v6877, %v6892
        %v6899 = vadd.f32 %v6878, %v6894
        %v6900 = vadd.f32 %v6879, %v6893
        %v6901 = vlaneseq
        %v6902 = vshrl.u32 %v6901, 7
        %v6903 = vsub.s32 3, %v6902
        %v6904 = vrot.slane %v6846, %v6903
        %v6905 = vmul.f32 %v6823, %v6904
        %v6906 = vmul.f32 %v6828, %v6904
        %v6907 = vmul.f32 %v6833, %v6904
        %v6908 = vmul.f32 %v6838, %v6904
        %v6913 = vrot.slane %v6905, 6
        %v6914 = vrot.slane %v6906, 6
        %v6915 = vsel %vm4103, %v6913, %v6914
        %v6916 = vrot.slane %v6907, 6
        %v6917 = vsel %vm4103, %v6914, %v6916
        %v6918 = vrot.slane %v6908, 6
        %v6919 = vsel %vm4103, %v6916, %v6918
        %v6923 = vadd.f32 %v6898, %v6915
        %v6924 = vadd.f32 %v6899, %v6917
        %v6925 = vadd.f32 %v6900, %v6919
        %v6926 = vlaneseq
        %v6927 = vshrl.u32 %v6926, 7
        %v6928 = vsub.s32 4, %v6927
        %v6929 = vrot.slane %v6846, %v6928
        %v6930 = vmul.f32 %v6823, %v6929
        %v6931 = vmul.f32 %v6828, %v6929
        %v6932 = vmul.f32 %v6833, %v6929
        %v6933 = vmul.f32 %v6838, %v6929
        %v6938 = vrot.slane %v6930, 7
        %v6939 = vrot.slane %v6931, 7
        %v6940 = vsel %vm6523, %v6938, %v6939
        %v6941 = vrot.slane %v6932, 7
        %v6942 = vsel %vm6523, %v6939, %v6941
        %v6943 = vrot.slane %v6933, 7
        %v6944 = vsel %vm6523, %v6941, %v6943
        %v6948 = vadd.f32 %v6923, %v6940
        %v6949 = vadd.f32 %v6924, %v6942
        %v6950 = vadd.f32 %v6925, %v6944
        %v6951 = vlaneseq
        %v6952 = vshrl.u32 %v6951, 7
        %v6953 = vsub.s32 5, %v6952
        %v6954 = vrot.slane %v6846, %v6953
        %v6955 = vmul.f32 %v6828, %v6954
        %v6956 = vmul.f32 %v6833, %v6954
        %v6957 = vmul.f32 %v6838, %v6954
        %v6958 = vadd.f32 %v6948, %v6955
        %v6959 = vadd.f32 %v6949, %v6956
        %v6960 = vadd.f32 %v6950, %v6957
        %v6961 = vlaneseq
        %v6962 = vshrl.u32 %v6961, 7
        %v6963 = vsub.s32 6, %v6962
        %v6964 = vrot.slane %v6846, %v6963
        %v6965 = vmul.f32 %v6828, %v6964
        %v6966 = vmul.f32 %v6833, %v6964
        %v6967 = vmul.f32 %v6838, %v6964
        %v6968 = vmul.f32 %v6843, %v6964
        %v6973 = vrot.slane %v6965, 4
        %v6974 = vrot.slane %v6966, 4
        %v6975 = vsel %vm3422, %v6973, %v6974
        %v6976 = vrot.slane %v6967, 4
        %v6977 = vsel %vm3422, %v6974, %v6976
        %v6978 = vrot.slane %v6968, 4
        %v6979 = vsel %vm3422, %v6976, %v6978
        %v6983 = vadd.f32 %v6958, %v6975
        %v6984 = vadd.f32 %v6959, %v6977
        %v6985 = vadd.f32 %v6960, %v6979
        %v6986 = vlaneseq
        %v6987 = vshrl.u32 %v6986, 7
        %v6988 = vsub.s32 7, %v6987
        %v6989 = vrot.slane %v6846, %v6988
        %v6990 = vmul.f32 %v6828, %v6989
        %v6991 = vmul.f32 %v6833, %v6989
        %v6992 = vmul.f32 %v6838, %v6989
        %v6993 = vmul.f32 %v6843, %v6989
        %v6998 = vrot.slane %v6990, 5
        %v6999 = vrot.slane %v6991, 5
        %v7000 = vsel %vm3879, %v6998, %v6999
        %v7001 = vrot.slane %v6992, 5
        %v7002 = vsel %vm3879, %v6999, %v7001
        %v7003 = vrot.slane %v6993, 5
        %v7004 = vsel %vm3879, %v7001, %v7003
        %v7008 = vadd.f32 %v6983, %v7000
        %v7009 = vadd.f32 %v6984, %v7002
        %v7010 = vadd.f32 %v6985, %v7004
        %v7011 = vlaneseq
        %v7012 = vshrl.u32 %v7011, 7
        %v7013 = vsub.s32 0, %v7012
        %v7014 = vrot.slane %v6847, %v7013
        %v7015 = vmul.f32 %v6828, %v7014
        %v7016 = vmul.f32 %v6833, %v7014
        %v7017 = vmul.f32 %v6838, %v7014
        %v7018 = vmul.f32 %v6843, %v7014
        %v7023 = vrot.slane %v7015, 6
        %v7024 = vrot.slane %v7016, 6
        %v7025 = vsel %vm4103, %v7023, %v7024
        %v7026 = vrot.slane %v7017, 6
        %v7027 = vsel %vm4103, %v7024, %v7026
        %v7028 = vrot.slane %v7018, 6
        %v7029 = vsel %vm4103, %v7026, %v7028
        %v7033 = vadd.f32 %v7008, %v7025
        %v7034 = vadd.f32 %v7009, %v7027
        %v7035 = vadd.f32 %v7010, %v7029
        %v7037 = vlaneseq
        %v7038 = vshrl.u32 %v7037, 7
        %v7039 = vsub.s32 0, %v7038
        %v7040 = vrot.slane %v6848, %v7039
        %v7042 = vadd.f32 %v7033, %v7040
        %v7043 = vadd.f32 %v7034, %v7040
        %v7044 = vadd.f32 %v7035, %v7040
        %v7045 = vmax.f32 %v7042, 0.0
        %v7046 = vmax.f32 %v7043, 0.0
        %v7047 = vmax.f32 %v7044, 0.0
        %v7049 = vlaneseq
        %v7050 = vshrl.u32 %v7049, 7
        %v7051 = vsub.s32 0, %v7050
        %v7052 = vrot.slane %v6851, %v7051
        %v7055 = vsel %vm6162, %v7045, 0
        %v7058 = vsel %vm6162, %v7046, 0
        %v7061 = vsel %vm6162, %v7047, 0
        %7063 = vmatprep.subr.mxu0 0.0
        %7064 = vmatpush1.msra.mxu0 %v6849
        %7065 = vmatprep.subr.mxu0 0.0
        %7066 = vmatpush1.msra.mxu0 %v6850
        %7067 = vmatprep.subr.mxu0 0.0
        %7068 = vmatpush1.msra.mxu0 0.0
        %7069 = vmatprep.subr.mxu0 0.0
        %7070 = vmatpush1.msra.mxu0 0.0
        %7071 = vmatprep.subr.mxu0 0.0
        %7072 = vmatpush1.msra.mxu0 0.0
        %7073 = vmatprep.subr.mxu0 0.0
        %7074 = vmatpush1.msra.mxu0 0.0
        %7075 = vmatprep.subr.mxu0 0.0
        %7076 = vmatpush1.msra.mxu0 0.0
        %7077 = vmatprep.subr.mxu0 0.0
        %7078 = vmatpush1.msra.mxu0 0.0
        %7079 = vmatprep.subr.mxu0 0.0
        %7080 = vmatpush1.msra.mxu0 0.0
        %7081 = vmatprep.subr.mxu0 0.0
        %7082 = vmatpush1.msra.mxu0 0.0
        %7083 = vmatprep.subr.mxu0 0.0
        %7084 = vmatpush1.msra.mxu0 0.0
        %7085 = vmatprep.subr.mxu0 0.0
        %7086 = vmatpush1.msra.mxu0 0.0
        %7087 = vmatprep.subr.mxu0 0.0
        %7088 = vmatpush1.msra.mxu0 0.0
        %7089 = vmatprep.subr.mxu0 0.0
        %7090 = vmatpush1.msra.mxu0 0.0
        %7091 = vmatprep.subr.mxu0 0.0
        %7092 = vmatpush1.msra.mxu0 0.0
        %7093 = vmatprep.subr.mxu0 0.0
        %7094 = vmatpush1.msra.mxu0 0.0
        %7095 = vmatprep.subr.mxu0 0.0
        %7096 = vmatpush1.msra.mxu0 0.0
        %7097 = vmatprep.subr.mxu0 0.0
        %7098 = vmatpush1.msra.mxu0 0.0
        %7099 = vmatprep.subr.mxu0 0.0
        %7100 = vmatpush1.msra.mxu0 0.0
        %7101 = vmatprep.subr.mxu0 0.0
        %7102 = vmatpush1.msra.mxu0 0.0
        %7103 = vmatprep.subr.mxu0 0.0
        %7104 = vmatpush1.msra.mxu0 0.0
        %7105 = vmatprep.subr.mxu0 0.0
        %7106 = vmatpush1.msra.mxu0 0.0
        %7107 = vmatprep.subr.mxu0 0.0
        %7108 = vmatpush1.msra.mxu0 0.0
        %7109 = vmatprep.subr.mxu0 0.0
        %7110 = vmatpush1.msra.mxu0 0.0
        %7111 = vmatprep.subr.mxu0 0.0
        %7112 = vmatpush1.msra.mxu0 0.0
        %7113 = vmatprep.subr.mxu0 0.0
        %7114 = vmatpush1.msra.mxu0 0.0
        %7115 = vmatprep.subr.mxu0 0.0
        %7116 = vmatpush1.msra.mxu0 0.0
        %7117 = vmatprep.subr.mxu0 0.0
        %7118 = vmatpush1.msra.mxu0 0.0
        %7119 = vmatprep.subr.mxu0 0.0
        %7120 = vmatpush1.msra.mxu0 0.0
        %7121 = vmatprep.subr.mxu0 0.0
        %7122 = vmatpush1.msra.mxu0 0.0
        %7123 = vmatprep.subr.mxu0 0.0
        %7124 = vmatpush1.msra.mxu0 0.0
        %7125 = vmatprep.subr.mxu0 0.0
        %7126 = vmatpush1.msra.mxu0 0.0
        %7127 = vmatprep.mubr.f32.mxu0 0.0
        %7128 = vmatmul.mubr.f32.gmra.mrb[0].mxu0 %v7055
        %v7129 = vpop.f32.mrb[0].mxu0
        %v7130 = vadd.f32 %v7052, %v7129
        %v7131 = vpop.f32.mrb[0].mxu0
        %7132 = vmatprep.mubr.f32.mxu0 0.0
        %7133 = vmatmul.mubr.f32.gmra.mrb[0].mxu0 %v7058
        %v7134 = vpop.f32.mrb[0].mxu0
        %v7135 = vadd.f32 %v7052, %v7134
        %v7136 = vpop.f32.mrb[0].mxu0
        %7137 = vmatprep.mubr.f32.mxu0 0.0
        %7138 = vmatmul.mubr.f32.gmra.mrb[0].mxu0 %v7061
        %v7139 = vpop.f32.mrb[0].mxu0
        %v7140 = vadd.f32 %v7052, %v7139
        %v7141 = vpop.f32.mrb[0].mxu0
        %7142 = vdwg.mxu0
        %v7143 = vmax.f32 %v7130, 0.0
        %v7144 = vmax.f32 %v7135, 0.0
        %v7145 = vmax.f32 %v7140, 0.0
        %v7146 = vld [vmem:[%s47] sm:$0xff]
        %v7147 = vld [vmem:[%s47 + $0x8] sm:$0xff]
        %v7149 = vsel %vm6737, %v7146, 0
        %v7152 = vsel %vm6737, %v7147, 0
        %v7155 = vsel %vm2742, %v7145, 0
        %7157 = vmatprep.subr.mxu0 0.0
        %7158 = vmatpush1.msra.mxu0 %v7143
        %7159 = vmatprep.subr.mxu0 0.0
        %7160 = vmatpush1.msra.mxu0 %v7144
        %7161 = vmatprep.subr.mxu0 0.0
        %7162 = vmatpush1.msra.mxu0 %v7155
        %7163 = vmatprep.subr.mxu0 0.0
        %7164 = vmatpush1.msra.mxu0 0.0
        %7165 = vmatprep.subr.mxu0 0.0
        %7166 = vmatpush1.msra.mxu0 0.0
        %7167 = vmatprep.subr.mxu0 0.0
        %7168 = vmatpush1.msra.mxu0 0.0
        %7169 = vmatprep.subr.mxu0 0.0
        %7170 = vmatpush1.msra.mxu0 0.0
        %7171 = vmatprep.subr.mxu0 0.0
        %7172 = vmatpush1.msra.mxu0 0.0
        %7173 = vmatprep.subr.mxu0 0.0
        %7174 = vmatpush1.msra.mxu0 0.0
        %7175 = vmatprep.subr.mxu0 0.0
        %7176 = vmatpush1.msra.mxu0 0.0
        %7177 = vmatprep.subr.mxu0 0.0
        %7178 = vmatpush1.msra.mxu0 0.0
        %7179 = vmatprep.subr.mxu0 0.0
        %7180 = vmatpush1.msra.mxu0 0.0
        %7181 = vmatprep.subr.mxu0 0.0
        %7182 = vmatpush1.msra.mxu0 0.0
        %7183 = vmatprep.subr.mxu0 0.0
        %7184 = vmatpush1.msra.mxu0 0.0
        %7185 = vmatprep.subr.mxu0 0.0
        %7186 = vmatpush1.msra.mxu0 0.0
        %7187 = vmatprep.subr.mxu0 0.0
        %7188 = vmatpush1.msra.mxu0 0.0
        %7189 = vmatprep.subr.mxu0 0.0
        %7190 = vmatpush1.msra.mxu0 0.0
        %7191 = vmatprep.subr.mxu0 0.0
        %7192 = vmatpush1.msra.mxu0 0.0
        %7193 = vmatprep.subr.mxu0 0.0
        %7194 = vmatpush1.msra.mxu0 0.0
        %7195 = vmatprep.subr.mxu0 0.0
        %7196 = vmatpush1.msra.mxu0 0.0
        %7197 = vmatprep.subr.mxu0 0.0
        %7198 = vmatpush1.msra.mxu0 0.0
        %7199 = vmatprep.subr.mxu0 0.0
        %7200 = vmatpush1.msra.mxu0 0.0
        %7201 = vmatprep.subr.mxu0 0.0
        %7202 = vmatpush1.msra.mxu0 0.0
        %7203 = vmatprep.subr.mxu0 0.0
        %7204 = vmatpush1.msra.mxu0 0.0
        %7205 = vmatprep.subr.mxu0 0.0
        %7206 = vmatpush1.msra.mxu0 0.0
        %7207 = vmatprep.subr.mxu0 0.0
        %7208 = vmatpush1.msra.mxu0 0.0
        %7209 = vmatprep.subr.mxu0 0.0
        %7210 = vmatpush1.msra.mxu0 0.0
        %7211 = vmatprep.subr.mxu0 0.0
        %7212 = vmatpush1.msra.mxu0 0.0
        %7213 = vmatprep.subr.mxu0 0.0
        %7214 = vmatpush1.msra.mxu0 0.0
        %7215 = vmatprep.subr.mxu0 0.0
        %7216 = vmatpush1.msra.mxu0 0.0
        %7217 = vmatprep.subr.mxu0 0.0
        %7218 = vmatpush1.msra.mxu0 0.0
        %7219 = vmatprep.subr.mxu0 0.0
        %7220 = vmatpush1.msra.mxu0 0.0
        %7221 = vmatprep.mubr.f32.mxu0 0.0
        %7222 = vmatmul.mubr.f32.gmra.mrb[0].mxu0 %v7149
        %v7223 = vpop.f32.mrb[0].mxu0
        %v7224 = vadd.f32 0.0, %v7223
        %v7225 = vpop.f32.mrb[0].mxu0
        %7226 = vmatprep.mubr.f32.mxu0 0.0
        %7227 = vmatmul.mubr.f32.gmra.mrb[0].mxu0 %v7152
        %v7228 = vpop.f32.mrb[0].mxu0
        %v7229 = vadd.f32 0.0, %v7228
        %v7230 = vpop.f32.mrb[0].mxu0
        %7231 = vdwg.mxu0
        %v7232 = vld [vmem:[%s49] sm:$0xff]
        %v7233 = vld [vmem:[%s49 + $0x8] sm:$0x1]
        %v7234 = vld [vmem:[%s51] sm:$0x1]
        %v7235 = vld [vmem:[%s53] sm:$0xff]
        %v7236 = vld [vmem:[%s53 + $0x8] sm:$0xff]
        %v7237 = vld [vmem:[%s53 + $0x10] sm:$0xff]
        %v7238 = vld [vmem:[%s53 + $0x18] sm:$0xff]
        %v7239 = vld [vmem:[%s55] sm:$0x1]
        %v7240 = vlaneseq
        %v7241 = vshrl.u32 %v7240, 7
        %v7242 = vsub.s32 0, %v7241
        %v7243 = vrot.slane %v7232, %v7242
        %v7244 = vmul.f32 %v7224, %v7243
        %v7245 = vlaneseq
        %v7246 = vshrl.u32 %v7245, 7
        %v7247 = vsub.s32 1, %v7246
        %v7248 = vrot.slane %v7232, %v7247
        %v7249 = vmul.f32 %v7224, %v7248
        %v7251 = vrot.slane %v7249, 1
        %v7253 = vadd.f32 %v7244, %v7251
        %v7254 = vlaneseq
        %v7255 = vshrl.u32 %v7254, 7
        %v7256 = vsub.s32 2, %v7255
        %v7257 = vrot.slane %v7232, %v7256
        %v7258 = vmul.f32 %v7224, %v7257
        %v7260 = vrot.slane %v7258, 2
        %v7262 = vadd.f32 %v7253, %v7260
        %v7263 = vlaneseq
        %v7264 = vshrl.u32 %v7263, 7
        %v7265 = vsub.s32 3, %v7264
        %v7266 = vrot.slane %v7232, %v7265
        %v7267 = vmul.f32 %v7224, %v7266
        %v7268 = vmul.f32 %v7229, %v7266
        %v7271 = vrot.slane %v7267, 4
        %v7272 = vrot.slane %v7268, 4
        %v7273 = vsel %vm3422, %v7271, %v7272
        %v7275 = vadd.f32 %v7262, %v7273
        %v7276 = vlaneseq
        %v7277 = vshrl.u32 %v7276, 7
        %v7278 = vsub.s32 4, %v7277
        %v7279 = vrot.slane %v7232, %v7278
        %v7280 = vmul.f32 %v7224, %v7279
        %v7281 = vmul.f32 %v7229, %v7279
        %v7284 = vrot.slane %v7280, 5
        %v7285 = vrot.slane %v7281, 5
        %v7286 = vsel %vm3879, %v7284, %v7285
        %v7288 = vadd.f32 %v7275, %v7286
        %v7289 = vlaneseq
        %v7290 = vshrl.u32 %v7289, 7
        %v7291 = vsub.s32 5, %v7290
        %v7292 = vrot.slane %v7232, %v7291
        %v7293 = vmul.f32 %v7224, %v7292
        %v7294 = vmul.f32 %v7229, %v7292
        %v7297 = vrot.slane %v7293, 6
        %v7298 = vrot.slane %v7294, 6
        %v7299 = vsel %vm4103, %v7297, %v7298
        %v7301 = vadd.f32 %v7288, %v7299
        %v7302 = vlaneseq
        %v7303 = vshrl.u32 %v7302, 7
        %v7304 = vsub.s32 6, %v7303
        %v7305 = vrot.slane %v7232, %v7304
        %v7306 = vmul.f32 %v7229, %v7305
        %v7307 = vadd.f32 %v7301, %v7306
        %v7308 = vlaneseq
        %v7309 = vshrl.u32 %v7308, 7
        %v7310 = vsub.s32 7, %v7309
        %v7311 = vrot.slane %v7232, %v7310
        %v7312 = vmul.f32 %v7229, %v7311
        %v7314 = vrot.slane %v7312, 1
        %v7316 = vadd.f32 %v7307, %v7314
        %v7317 = vlaneseq
        %v7318 = vshrl.u32 %v7317, 7
        %v7319 = vsub.s32 0, %v7318
        %v7320 = vrot.slane %v7233, %v7319
        %v7321 = vmul.f32 %v7229, %v7320
        %v7323 = vrot.slane %v7321, 2
        %v7325 = vadd.f32 %v7316, %v7323
        %v7327 = vlaneseq
        %v7328 = vshrl.u32 %v7327, 7
        %v7329 = vsub.s32 0, %v7328
        %v7330 = vrot.slane %v7234, %v7329
        %v7332 = vadd.f32 %v7325, %v7330
        %v7333 = vmax.f32 %v7332, 0.0
        %v7335 = vlaneseq
        %v7336 = vshrl.u32 %v7335, 7
        %v7337 = vsub.s32 0, %v7336
        %v7338 = vrot.slane %v7239, %v7337
        %vm7340 = vcmask 261120
        %v7342 = vsel %vm7340, %v7333, 0
        %7344 = vmatprep.subr.mxu0 0.0
        %7345 = vmatpush1.msra.mxu0 %v7235
        %7346 = vmatprep.subr.mxu0 0.0
        %7347 = vmatpush1.msra.mxu0 %v7236
        %7348 = vmatprep.subr.mxu0 0.0
        %7349 = vmatpush1.msra.mxu0 %v7237
        %7350 = vmatprep.subr.mxu0 0.0
        %7351 = vmatpush1.msra.mxu0 %v7238
        %7352 = vmatprep.subr.mxu0 0.0
        %7353 = vmatpush1.msra.mxu0 0.0
        %7354 = vmatprep.subr.mxu0 0.0
        %7355 = vmatpush1.msra.mxu0 0.0
        %7356 = vmatprep.subr.mxu0 0.0
        %7357 = vmatpush1.msra.mxu0 0.0
        %7358 = vmatprep.subr.mxu0 0.0
        %7359 = vmatpush1.msra.mxu0 0.0
        %7360 = vmatprep.subr.mxu0 0.0
        %7361 = vmatpush1.msra.mxu0 0.0
        %7362 = vmatprep.subr.mxu0 0.0
        %7363 = vmatpush1.msra.mxu0 0.0
        %7364 = vmatprep.subr.mxu0 0.0
        %7365 = vmatpush1.msra.mxu0 0.0
        %7366 = vmatprep.subr.mxu0 0.0
        %7367 = vmatpush1.msra.mxu0 0.0
        %7368 = vmatprep.subr.mxu0 0.0
        %7369 = vmatpush1.msra.mxu0 0.0
        %7370 = vmatprep.subr.mxu0 0.0
        %7371 = vmatpush1.msra.mxu0 0.0
        %7372 = vmatprep.subr.mxu0 0.0
        %7373 = vmatpush1.msra.mxu0 0.0
        %7374 = vmatprep.subr.mxu0 0.0
        %7375 = vmatpush1.msra.mxu0 0.0
        %7376 = vmatprep.subr.mxu0 0.0
        %7377 = vmatpush1.msra.mxu0 0.0
        %7378 = vmatprep.subr.mxu0 0.0
        %7379 = vmatpush1.msra.mxu0 0.0
        %7380 = vmatprep.subr.mxu0 0.0
        %7381 = vmatpush1.msra.mxu0 0.0
        %7382 = vmatprep.subr.mxu0 0.0
        %7383 = vmatpush1.msra.mxu0 0.0
        %7384 = vmatprep.subr.mxu0 0.0
        %7385 = vmatpush1.msra.mxu0 0.0
        %7386 = vmatprep.subr.mxu0 0.0
        %7387 = vmatpush1.msra.mxu0 0.0
        %7388 = vmatprep.subr.mxu0 0.0
        %7389 = vmatpush1.msra.mxu0 0.0
        %7390 = vmatprep.subr.mxu0 0.0
        %7391 = vmatpush1.msra.mxu0 0.0
        %7392 = vmatprep.subr.mxu0 0.0
        %7393 = vmatpush1.msra.mxu0 0.0
        %7394 = vmatprep.subr.mxu0 0.0
        %7395 = vmatpush1.msra.mxu0 0.0
        %7396 = vmatprep.subr.mxu0 0.0
        %7397 = vmatpush1.msra.mxu0 0.0
        %7398 = vmatprep.subr.mxu0 0.0
        %7399 = vmatpush1.msra.mxu0 0.0
        %7400 = vmatprep.subr.mxu0 0.0
        %7401 = vmatpush1.msra.mxu0 0.0
        %7402 = vmatprep.subr.mxu0 0.0
        %7403 = vmatpush1.msra.mxu0 0.0
        %7404 = vmatprep.subr.mxu0 0.0
        %7405 = vmatpush1.msra.mxu0 0.0
        %7406 = vmatprep.subr.mxu0 0.0
        %7407 = vmatpush1.msra.mxu0 0.0
        %7408 = vmatprep.mubr.f32.mxu0 0.0
        %7409 = vmatmul.mubr.f32.gmra.mrb[0].mxu0 %v7342
        %v7410 = vpop.f32.mrb[0].mxu0
        %v7411 = vadd.f32 %v7338, %v7410
        %v7412 = vpop.f32.mrb[0].mxu0
        %7413 = vdwg.mxu0
        %v7414 = vmax.f32 %v7411, 0.0
        %v7415 = vld [vmem:[%s57] sm:$0xff]
        %v7416 = vld [vmem:[%s57 + $0x8] sm:$0xff]
        %vm7417 = vcmask 48128
        %v7419 = vsel %vm7417, %v7415, 0
        %v7422 = vsel %vm7417, %v7416, 0
        %v7425 = vsel %vm2742, %v7414, 0
        %7427 = vmatprep.subr.mxu0 0.0
        %7428 = vmatpush1.msra.mxu0 %v7425
        %7429 = vmatprep.subr.mxu0 0.0
        %7430 = vmatpush1.msra.mxu0 0.0
        %7431 = vmatprep.subr.mxu0 0.0
        %7432 = vmatpush1.msra.mxu0 0.0
        %7433 = vmatprep.subr.mxu0 0.0
        %7434 = vmatpush1.msra.mxu0 0.0
        %7435 = vmatprep.subr.mxu0 0.0
        %7436 = vmatpush1.msra.mxu0 0.0
        %7437 = vmatprep.subr.mxu0 0.0
        %7438 = vmatpush1.msra.mxu0 0.0
        %7439 = vmatprep.subr.mxu0 0.0
        %7440 = vmatpush1.msra.mxu0 0.0
        %7441 = vmatprep.subr.mxu0 0.0
        %7442 = vmatpush1.msra.mxu0 0.0
        %7443 = vmatprep.subr.mxu0 0.0
        %7444 = vmatpush1.msra.mxu0 0.0
        %7445 = vmatprep.subr.mxu0 0.0
        %7446 = vmatpush1.msra.mxu0 0.0
        %7447 = vmatprep.subr.mxu0 0.0
        %7448 = vmatpush1.msra.mxu0 0.0
        %7449 = vmatprep.subr.mxu0 0.0
        %7450 = vmatpush1.msra.mxu0 0.0
        %7451 = vmatprep.subr.mxu0 0.0
        %7452 = vmatpush1.msra.mxu0 0.0
        %7453 = vmatprep.subr.mxu0 0.0
        %7454 = vmatpush1.msra.mxu0 0.0
        %7455 = vmatprep.subr.mxu0 0.0
        %7456 = vmatpush1.msra.mxu0 0.0
        %7457 = vmatprep.subr.mxu0 0.0
        %7458 = vmatpush1.msra.mxu0 0.0
        %7459 = vmatprep.subr.mxu0 0.0
        %7460 = vmatpush1.msra.mxu0 0.0
        %7461 = vmatprep.subr.mxu0 0.0
        %7462 = vmatpush1.msra.mxu0 0.0
        %7463 = vmatprep.subr.mxu0 0.0
        %7464 = vmatpush1.msra.mxu0 0.0
        %7465 = vmatprep.subr.mxu0 0.0
        %7466 = vmatpush1.msra.mxu0 0.0
        %7467 = vmatprep.subr.mxu0 0.0
        %7468 = vmatpush1.msra.mxu0 0.0
        %7469 = vmatprep.subr.mxu0 0.0
        %7470 = vmatpush1.msra.mxu0 0.0
        %7471 = vmatprep.subr.mxu0 0.0
        %7472 = vmatpush1.msra.mxu0 0.0
        %7473 = vmatprep.subr.mxu0 0.0
        %7474 = vmatpush1.msra.mxu0 0.0
        %7475 = vmatprep.subr.mxu0 0.0
        %7476 = vmatpush1.msra.mxu0 0.0
        %7477 = vmatprep.subr.mxu0 0.0
        %7478 = vmatpush1.msra.mxu0 0.0
        %7479 = vmatprep.subr.mxu0 0.0
        %7480 = vmatpush1.msra.mxu0 0.0
        %7481 = vmatprep.subr.mxu0 0.0
        %7482 = vmatpush1.msra.mxu0 0.0
        %7483 = vmatprep.subr.mxu0 0.0
        %7484 = vmatpush1.msra.mxu0 0.0
        %7485 = vmatprep.subr.mxu0 0.0
        %7486 = vmatpush1.msra.mxu0 0.0
        %7487 = vmatprep.subr.mxu0 0.0
        %7488 = vmatpush1.msra.mxu0 0.0
        %7489 = vmatprep.subr.mxu0 0.0
        %7490 = vmatpush1.msra.mxu0 0.0
        %7491 = vmatprep.mubr.f32.mxu0 0.0
        %7492 = vmatmul.mubr.f32.gmra.mrb[0].mxu0 %v7419
        %v7493 = vpop.f32.mrb[0].mxu0
        %v7494 = vadd.f32 0.0, %v7493
        %v7495 = vpop.f32.mrb[0].mxu0
        %7496 = vmatprep.mubr.f32.mxu0 0.0
        %7497 = vmatmul.mubr.f32.gmra.mrb[0].mxu0 %v7422
        %v7498 = vpop.f32.mrb[0].mxu0
        %v7499 = vadd.f32 0.0, %v7498
        %v7500 = vpop.f32.mrb[0].mxu0
        %7501 = vdwg.mxu0
        %v7502 = vld [vmem:[%s59] sm:$0xff]
        %v7503 = vld [vmem:[%s59 + $0x8] sm:$0x1]
        %v7504 = vld [vmem:[#allocation2] sm:$0x1]
        %v7505 = vld [vmem:[%s63] sm:$0xff]
        %v7506 = vld [vmem:[%s63 + $0x8] sm:$0xff]
        %v7507 = vld [vmem:[%s63 + $0x10] sm:$0xff]
        %v7508 = vld [vmem:[%s63 + $0x18] sm:$0xff]
        %v7509 = vld [vmem:[#allocation4] sm:$0x1]
        %v7510 = vlaneseq
        %v7511 = vshrl.u32 %v7510, 7
        %v7512 = vsub.s32 0, %v7511
        %v7513 = vrot.slane %v7502, %v7512
        %v7514 = vmul.f32 %v7494, %v7513
        %v7515 = vlaneseq
        %v7516 = vshrl.u32 %v7515, 7
        %v7517 = vsub.s32 1, %v7516
        %v7518 = vrot.slane %v7502, %v7517
        %v7519 = vmul.f32 %v7494, %v7518
        %v7521 = vrot.slane %v7519, 1
        %v7523 = vadd.f32 %v7514, %v7521
        %v7524 = vlaneseq
        %v7525 = vshrl.u32 %v7524, 7
        %v7526 = vsub.s32 2, %v7525
        %v7527 = vrot.slane %v7502, %v7526
        %v7528 = vmul.f32 %v7494, %v7527
        %v7530 = vrot.slane %v7528, 2
        %v7532 = vadd.f32 %v7523, %v7530
        %v7533 = vlaneseq
        %v7534 = vshrl.u32 %v7533, 7
        %v7535 = vsub.s32 3, %v7534
        %v7536 = vrot.slane %v7502, %v7535
        %v7537 = vmul.f32 %v7494, %v7536
        %v7538 = vmul.f32 %v7499, %v7536
        %v7541 = vrot.slane %v7537, 4
        %v7542 = vrot.slane %v7538, 4
        %v7543 = vsel %vm3422, %v7541, %v7542
        %v7545 = vadd.f32 %v7532, %v7543
        %v7546 = vlaneseq
        %v7547 = vshrl.u32 %v7546, 7
        %v7548 = vsub.s32 4, %v7547
        %v7549 = vrot.slane %v7502, %v7548
        %v7550 = vmul.f32 %v7494, %v7549
        %v7551 = vmul.f32 %v7499, %v7549
        %v7554 = vrot.slane %v7550, 5
        %v7555 = vrot.slane %v7551, 5
        %v7556 = vsel %vm3879, %v7554, %v7555
        %v7558 = vadd.f32 %v7545, %v7556
        %v7559 = vlaneseq
        %v7560 = vshrl.u32 %v7559, 7
        %v7561 = vsub.s32 5, %v7560
        %v7562 = vrot.slane %v7502, %v7561
        %v7563 = vmul.f32 %v7494, %v7562
        %v7564 = vmul.f32 %v7499, %v7562
        %v7567 = vrot.slane %v7563, 6
        %v7568 = vrot.slane %v7564, 6
        %v7569 = vsel %vm4103, %v7567, %v7568
        %v7571 = vadd.f32 %v7558, %v7569
        %v7572 = vlaneseq
        %v7573 = vshrl.u32 %v7572, 7
        %v7574 = vsub.s32 6, %v7573
        %v7575 = vrot.slane %v7502, %v7574
        %v7576 = vmul.f32 %v7499, %v7575
        %v7577 = vadd.f32 %v7571, %v7576
        %v7578 = vlaneseq
        %v7579 = vshrl.u32 %v7578, 7
        %v7580 = vsub.s32 7, %v7579
        %v7581 = vrot.slane %v7502, %v7580
        %v7582 = vmul.f32 %v7499, %v7581
        %v7584 = vrot.slane %v7582, 1
        %v7586 = vadd.f32 %v7577, %v7584
        %v7587 = vlaneseq
        %v7588 = vshrl.u32 %v7587, 7
        %v7589 = vsub.s32 0, %v7588
        %v7590 = vrot.slane %v7503, %v7589
        %v7591 = vmul.f32 %v7499, %v7590
        %v7593 = vrot.slane %v7591, 2
        %v7595 = vadd.f32 %v7586, %v7593
        %v7597 = vlaneseq
        %v7598 = vshrl.u32 %v7597, 7
        %v7599 = vsub.s32 0, %v7598
        %v7600 = vrot.slane %v7504, %v7599
        %v7602 = vadd.f32 %v7595, %v7600
        %v7603 = vmax.f32 %v7602, 0.0
        %v7605 = vlaneseq
        %v7606 = vshrl.u32 %v7605, 7
        %v7607 = vsub.s32 0, %v7606
        %v7608 = vrot.slane %v7509, %v7607
        %v7611 = vsel %vm7340, %v7603, 0
        %7613 = vmatprep.subr.mxu0 0.0
        %7614 = vmatpush1.msra.mxu0 %v7505
        %7615 = vmatprep.subr.mxu0 0.0
        %7616 = vmatpush1.msra.mxu0 %v7506
        %7617 = vmatprep.subr.mxu0 0.0
        %7618 = vmatpush1.msra.mxu0 %v7507
        %7619 = vmatprep.subr.mxu0 0.0
        %7620 = vmatpush1.msra.mxu0 %v7508
        %7621 = vmatprep.subr.mxu0 0.0
        %7622 = vmatpush1.msra.mxu0 0.0
        %7623 = vmatprep.subr.mxu0 0.0
        %7624 = vmatpush1.msra.mxu0 0.0
        %7625 = vmatprep.subr.mxu0 0.0
        %7626 = vmatpush1.msra.mxu0 0.0
        %7627 = vmatprep.subr.mxu0 0.0
        %7628 = vmatpush1.msra.mxu0 0.0
        %7629 = vmatprep.subr.mxu0 0.0
        %7630 = vmatpush1.msra.mxu0 0.0
        %7631 = vmatprep.subr.mxu0 0.0
        %7632 = vmatpush1.msra.mxu0 0.0
        %7633 = vmatprep.subr.mxu0 0.0
        %7634 = vmatpush1.msra.mxu0 0.0
        %7635 = vmatprep.subr.mxu0 0.0
        %7636 = vmatpush1.msra.mxu0 0.0
        %7637 = vmatprep.subr.mxu0 0.0
        %7638 = vmatpush1.msra.mxu0 0.0
        %7639 = vmatprep.subr.mxu0 0.0
        %7640 = vmatpush1.msra.mxu0 0.0
        %7641 = vmatprep.subr.mxu0 0.0
        %7642 = vmatpush1.msra.mxu0 0.0
        %7643 = vmatprep.subr.mxu0 0.0
        %7644 = vmatpush1.msra.mxu0 0.0
        %7645 = vmatprep.subr.mxu0 0.0
        %7646 = vmatpush1.msra.mxu0 0.0
        %7647 = vmatprep.subr.mxu0 0.0
        %7648 = vmatpush1.msra.mxu0 0.0
        %7649 = vmatprep.subr.mxu0 0.0
        %7650 = vmatpush1.msra.mxu0 0.0
        %7651 = vmatprep.subr.mxu0 0.0
        %7652 = vmatpush1.msra.mxu0 0.0
        %7653 = vmatprep.subr.mxu0 0.0
        %7654 = vmatpush1.msra.mxu0 0.0
        %7655 = vmatprep.subr.mxu0 0.0
        %7656 = vmatpush1.msra.mxu0 0.0
        %7657 = vmatprep.subr.mxu0 0.0
        %7658 = vmatpush1.msra.mxu0 0.0
        %7659 = vmatprep.subr.mxu0 0.0
        %7660 = vmatpush1.msra.mxu0 0.0
        %7661 = vmatprep.subr.mxu0 0.0
        %7662 = vmatpush1.msra.mxu0 0.0
        %7663 = vmatprep.subr.mxu0 0.0
        %7664 = vmatpush1.msra.mxu0 0.0
        %7665 = vmatprep.subr.mxu0 0.0
        %7666 = vmatpush1.msra.mxu0 0.0
        %7667 = vmatprep.subr.mxu0 0.0
        %7668 = vmatpush1.msra.mxu0 0.0
        %7669 = vmatprep.subr.mxu0 0.0
        %7670 = vmatpush1.msra.mxu0 0.0
        %7671 = vmatprep.subr.mxu0 0.0
        %7672 = vmatpush1.msra.mxu0 0.0
        %7673 = vmatprep.subr.mxu0 0.0
        %7674 = vmatpush1.msra.mxu0 0.0
        %7675 = vmatprep.subr.mxu0 0.0
        %7676 = vmatpush1.msra.mxu0 0.0
        %7677 = vmatprep.mubr.f32.mxu0 0.0
        %7678 = vmatmul.mubr.f32.gmra.mrb[0].mxu0 %v7611
        %v7679 = vpop.f32.mrb[0].mxu0
        %v7680 = vadd.f32 %v7608, %v7679
        %v7681 = vpop.f32.mrb[0].mxu0
        %7682 = vdwg.mxu0
        %v7683 = vmax.f32 %v7680, 0.0
        %v7684 = vld [vmem:[#allocation6] sm:$0x1]
        %v7686 = vsel %vm7417, %v7684, 0
        %v7689 = vsel %vm2742, %v7683, 0
        %7691 = vmatprep.subr.mxu0 0.0
        %7692 = vmatpush1.msra.mxu0 %v7689
        %7693 = vmatprep.subr.mxu0 0.0
        %7694 = vmatpush1.msra.mxu0 0.0
        %7695 = vmatprep.subr.mxu0 0.0
        %7696 = vmatpush1.msra.mxu0 0.0
        %7697 = vmatprep.subr.mxu0 0.0
        %7698 = vmatpush1.msra.mxu0 0.0
        %7699 = vmatprep.subr.mxu0 0.0
        %7700 = vmatpush1.msra.mxu0 0.0
        %7701 = vmatprep.subr.mxu0 0.0
        %7702 = vmatpush1.msra.mxu0 0.0
        %7703 = vmatprep.subr.mxu0 0.0
        %7704 = vmatpush1.msra.mxu0 0.0
        %7705 = vmatprep.subr.mxu0 0.0
        %7706 = vmatpush1.msra.mxu0 0.0
        %7707 = vmatprep.subr.mxu0 0.0
        %7708 = vmatpush1.msra.mxu0 0.0
        %7709 = vmatprep.subr.mxu0 0.0
        %7710 = vmatpush1.msra.mxu0 0.0
        %7711 = vmatprep.subr.mxu0 0.0
        %7712 = vmatpush1.msra.mxu0 0.0
        %7713 = vmatprep.subr.mxu0 0.0
        %7714 = vmatpush1.msra.mxu0 0.0
        %7715 = vmatprep.subr.mxu0 0.0
        %7716 = vmatpush1.msra.mxu0 0.0
        %7717 = vmatprep.subr.mxu0 0.0
        %7718 = vmatpush1.msra.mxu0 0.0
        %7719 = vmatprep.subr.mxu0 0.0
        %7720 = vmatpush1.msra.mxu0 0.0
        %7721 = vmatprep.subr.mxu0 0.0
        %7722 = vmatpush1.msra.mxu0 0.0
        %7723 = vmatprep.subr.mxu0 0.0
        %7724 = vmatpush1.msra.mxu0 0.0
        %7725 = vmatprep.subr.mxu0 0.0
        %7726 = vmatpush1.msra.mxu0 0.0
        %7727 = vmatprep.subr.mxu0 0.0
        %7728 = vmatpush1.msra.mxu0 0.0
        %7729 = vmatprep.subr.mxu0 0.0
        %7730 = vmatpush1.msra.mxu0 0.0
        %7731 = vmatprep.subr.mxu0 0.0
        %7732 = vmatpush1.msra.mxu0 0.0
        %7733 = vmatprep.subr.mxu0 0.0
        %7734 = vmatpush1.msra.mxu0 0.0
        %7735 = vmatprep.subr.mxu0 0.0
        %7736 = vmatpush1.msra.mxu0 0.0
        %7737 = vmatprep.subr.mxu0 0.0
        %7738 = vmatpush1.msra.mxu0 0.0
        %7739 = vmatprep.subr.mxu0 0.0
        %7740 = vmatpush1.msra.mxu0 0.0
        %7741 = vmatprep.subr.mxu0 0.0
        %7742 = vmatpush1.msra.mxu0 0.0
        %7743 = vmatprep.subr.mxu0 0.0
        %7744 = vmatpush1.msra.mxu0 0.0
        %7745 = vmatprep.subr.mxu0 0.0
        %7746 = vmatpush1.msra.mxu0 0.0
        %7747 = vmatprep.subr.mxu0 0.0
        %7748 = vmatpush1.msra.mxu0 0.0
        %7749 = vmatprep.subr.mxu0 0.0
        %7750 = vmatpush1.msra.mxu0 0.0
        %7751 = vmatprep.subr.mxu0 0.0
        %7752 = vmatpush1.msra.mxu0 0.0
        %7753 = vmatprep.subr.mxu0 0.0
        %7754 = vmatpush1.msra.mxu0 0.0
        %7755 = vmatprep.mubr.f32.mxu0 0.0
        %7756 = vmatmul.mubr.f32.gmra.mrb[0].mxu0 %v7686
        %v7757 = vpop.f32.mrb[0].mxu0
        %v7758 = vadd.f32 0.0, %v7757
        %v7759 = vpop.f32.mrb[0].mxu0
        %7760 = vdwg.mxu0
        %v7761 = vld [vmem:[#allocation7] sm:$0x1]
        %v7762 = vld [vmem:[#allocation9] sm:$0x1]
        %v7763 = vld [vmem:[%s73] sm:$0xff]
        %v7764 = vld [vmem:[%s73 + $0x8] sm:$0xff]
        %v7765 = vld [vmem:[%s73 + $0x10] sm:$0xff]
        %v7766 = vld [vmem:[%s73 + $0x18] sm:$0xff]
        %v7767 = vld [vmem:[#allocation10] sm:$0x1]
        %v7768 = vmul.f32 %v7758, %v7761
        %v7769 = vadd.f32 %v7768, %v7762
        %v7770 = vmax.f32 %v7769, 0.0
        %v7772 = vsel %vm7340, %v7770, 0
        %7774 = vmatprep.subr.mxu0 0.0
        %7775 = vmatpush1.msra.mxu0 %v7763
        %7776 = vmatprep.subr.mxu0 0.0
        %7777 = vmatpush1.msra.mxu0 %v7764
        %7778 = vmatprep.subr.mxu0 0.0
        %7779 = vmatpush1.msra.mxu0 %v7765
        %7780 = vmatprep.subr.mxu0 0.0
        %7781 = vmatpush1.msra.mxu0 %v7766
        %7782 = vmatprep.subr.mxu0 0.0
        %7783 = vmatpush1.msra.mxu0 0.0
        %7784 = vmatprep.subr.mxu0 0.0
        %7785 = vmatpush1.msra.mxu0 0.0
        %7786 = vmatprep.subr.mxu0 0.0
        %7787 = vmatpush1.msra.mxu0 0.0
        %7788 = vmatprep.subr.mxu0 0.0
        %7789 = vmatpush1.msra.mxu0 0.0
        %7790 = vmatprep.subr.mxu0 0.0
        %7791 = vmatpush1.msra.mxu0 0.0
        %7792 = vmatprep.subr.mxu0 0.0
        %7793 = vmatpush1.msra.mxu0 0.0
        %7794 = vmatprep.subr.mxu0 0.0
        %7795 = vmatpush1.msra.mxu0 0.0
        %7796 = vmatprep.subr.mxu0 0.0
        %7797 = vmatpush1.msra.mxu0 0.0
        %7798 = vmatprep.subr.mxu0 0.0
        %7799 = vmatpush1.msra.mxu0 0.0
        %7800 = vmatprep.subr.mxu0 0.0
        %7801 = vmatpush1.msra.mxu0 0.0
        %7802 = vmatprep.subr.mxu0 0.0
        %7803 = vmatpush1.msra.mxu0 0.0
        %7804 = vmatprep.subr.mxu0 0.0
        %7805 = vmatpush1.msra.mxu0 0.0
        %7806 = vmatprep.subr.mxu0 0.0
        %7807 = vmatpush1.msra.mxu0 0.0
        %7808 = vmatprep.subr.mxu0 0.0
        %7809 = vmatpush1.msra.mxu0 0.0
        %7810 = vmatprep.subr.mxu0 0.0
        %7811 = vmatpush1.msra.mxu0 0.0
        %7812 = vmatprep.subr.mxu0 0.0
        %7813 = vmatpush1.msra.mxu0 0.0
        %7814 = vmatprep.subr.mxu0 0.0
        %7815 = vmatpush1.msra.mxu0 0.0
        %7816 = vmatprep.subr.mxu0 0.0
        %7817 = vmatpush1.msra.mxu0 0.0
        %7818 = vmatprep.subr.mxu0 0.0
        %7819 = vmatpush1.msra.mxu0 0.0
        %7820 = vmatprep.subr.mxu0 0.0
        %7821 = vmatpush1.msra.mxu0 0.0
        %7822 = vmatprep.subr.mxu0 0.0
        %7823 = vmatpush1.msra.mxu0 0.0
        %7824 = vmatprep.subr.mxu0 0.0
        %7825 = vmatpush1.msra.mxu0 0.0
        %7826 = vmatprep.subr.mxu0 0.0
        %7827 = vmatpush1.msra.mxu0 0.0
        %7828 = vmatprep.subr.mxu0 0.0
        %7829 = vmatpush1.msra.mxu0 0.0
        %7830 = vmatprep.subr.mxu0 0.0
        %7831 = vmatpush1.msra.mxu0 0.0
        %7832 = vmatprep.subr.mxu0 0.0
        %7833 = vmatpush1.msra.mxu0 0.0
        %7834 = vmatprep.subr.mxu0 0.0
        %7835 = vmatpush1.msra.mxu0 0.0
        %7836 = vmatprep.subr.mxu0 0.0
        %7837 = vmatpush1.msra.mxu0 0.0
        %7838 = vmatprep.mubr.f32.mxu0 0.0
        %7839 = vmatmul.mubr.f32.gmra.mrb[0].mxu0 %v7772
        %v7840 = vpop.f32.mrb[0].mxu0
        %v7841 = vadd.f32 %v7767, %v7840
        %v7842 = vpop.f32.mrb[0].mxu0
        %7843 = vdwg.mxu0
        %v7844 = vmax.f32 %v7841, 0.0
        %v7845 = vld [vmem:[#allocation12] sm:$0x1]
        %v7846 = vld [vmem:[#allocation13] sm:$0x1]
        %v7847 = vld [vmem:[%s81] sm:$0xff]
        %v7848 = vld [vmem:[%s81 + $0x8] sm:$0xff]
        %v7849 = vld [vmem:[%s81 + $0x10] sm:$0xff]
        %v7850 = vld [vmem:[%s81 + $0x18] sm:$0xff]
        %v7851 = vld [vmem:[#allocation15] sm:$0x1]
        %v7852 = vmul.f32 %v7844, %v7845
        %v7853 = vadd.f32 %v7852, %v7846
        %v7854 = vmax.f32 %v7853, 0.0
        %v7856 = vsel %vm7340, %v7854, 0
        %7858 = vmatprep.subr.mxu0 0.0
        %7859 = vmatpush1.msra.mxu0 %v7847
        %7860 = vmatprep.subr.mxu0 0.0
        %7861 = vmatpush1.msra.mxu0 %v7848
        %7862 = vmatprep.subr.mxu0 0.0
        %7863 = vmatpush1.msra.mxu0 %v7849
        %7864 = vmatprep.subr.mxu0 0.0
        %7865 = vmatpush1.msra.mxu0 %v7850
        %7866 = vmatprep.subr.mxu0 0.0
        %7867 = vmatpush1.msra.mxu0 0.0
        %7868 = vmatprep.subr.mxu0 0.0
        %7869 = vmatpush1.msra.mxu0 0.0
        %7870 = vmatprep.subr.mxu0 0.0
        %7871 = vmatpush1.msra.mxu0 0.0
        %7872 = vmatprep.subr.mxu0 0.0
        %7873 = vmatpush1.msra.mxu0 0.0
        %7874 = vmatprep.subr.mxu0 0.0
        %7875 = vmatpush1.msra.mxu0 0.0
        %7876 = vmatprep.subr.mxu0 0.0
        %7877 = vmatpush1.msra.mxu0 0.0
        %7878 = vmatprep.subr.mxu0 0.0
        %7879 = vmatpush1.msra.mxu0 0.0
        %7880 = vmatprep.subr.mxu0 0.0
        %7881 = vmatpush1.msra.mxu0 0.0
        %7882 = vmatprep.subr.mxu0 0.0
        %7883 = vmatpush1.msra.mxu0 0.0
        %7884 = vmatprep.subr.mxu0 0.0
        %7885 = vmatpush1.msra.mxu0 0.0
        %7886 = vmatprep.subr.mxu0 0.0
        %7887 = vmatpush1.msra.mxu0 0.0
        %7888 = vmatprep.subr.mxu0 0.0
        %7889 = vmatpush1.msra.mxu0 0.0
        %7890 = vmatprep.subr.mxu0 0.0
        %7891 = vmatpush1.msra.mxu0 0.0
        %7892 = vmatprep.subr.mxu0 0.0
        %7893 = vmatpush1.msra.mxu0 0.0
        %7894 = vmatprep.subr.mxu0 0.0
        %7895 = vmatpush1.msra.mxu0 0.0
        %7896 = vmatprep.subr.mxu0 0.0
        %7897 = vmatpush1.msra.mxu0 0.0
        %7898 = vmatprep.subr.mxu0 0.0
        %7899 = vmatpush1.msra.mxu0 0.0
        %7900 = vmatprep.subr.mxu0 0.0
        %7901 = vmatpush1.msra.mxu0 0.0
        %7902 = vmatprep.subr.mxu0 0.0
        %7903 = vmatpush1.msra.mxu0 0.0
        %7904 = vmatprep.subr.mxu0 0.0
        %7905 = vmatpush1.msra.mxu0 0.0
        %7906 = vmatprep.subr.mxu0 0.0
        %7907 = vmatpush1.msra.mxu0 0.0
        %7908 = vmatprep.subr.mxu0 0.0
        %7909 = vmatpush1.msra.mxu0 0.0
        %7910 = vmatprep.subr.mxu0 0.0
        %7911 = vmatpush1.msra.mxu0 0.0
        %7912 = vmatprep.subr.mxu0 0.0
        %7913 = vmatpush1.msra.mxu0 0.0
        %7914 = vmatprep.subr.mxu0 0.0
        %7915 = vmatpush1.msra.mxu0 0.0
        %7916 = vmatprep.subr.mxu0 0.0
        %7917 = vmatpush1.msra.mxu0 0.0
        %7918 = vmatprep.subr.mxu0 0.0
        %7919 = vmatpush1.msra.mxu0 0.0
        %7920 = vmatprep.subr.mxu0 0.0
        %7921 = vmatpush1.msra.mxu0 0.0
        %7922 = vmatprep.mubr.f32.mxu0 0.0
        %7923 = vmatmul.mubr.f32.gmra.mrb[0].mxu0 %v7856
        %v7924 = vpop.f32.mrb[0].mxu0
        %v7925 = vadd.f32 %v7851, %v7924
        %v7926 = vpop.f32.mrb[0].mxu0
        %7927 = vdwg.mxu0
        %v7928 = vmax.f32 %v7925, 0.0
        %v7929 = vld [vmem:[#allocation16] sm:$0x1]
        %v7930 = vld [vmem:[#allocation18] sm:$0x1]
        %v7931 = vld [vmem:[%s89] sm:$0xff]
        %v7932 = vld [vmem:[%s89 + $0x8] sm:$0xff]
        %v7933 = vld [vmem:[%s89 + $0x10] sm:$0xff]
        %v7934 = vld [vmem:[%s89 + $0x18] sm:$0xff]
        %v7935 = vld [vmem:[#allocation19] sm:$0x1]
        %v7936 = vmul.f32 %v7928, %v7929
        %v7937 = vadd.f32 %v7936, %v7930
        %v7938 = vmax.f32 %v7937, 0.0
        %v7940 = vsel %vm7340, %v7938, 0
        %7942 = vmatprep.subr.mxu0 0.0
        %7943 = vmatpush1.msra.mxu0 %v7931
        %7944 = vmatprep.subr.mxu0 0.0
        %7945 = vmatpush1.msra.mxu0 %v7932
        %7946 = vmatprep.subr.mxu0 0.0
        %7947 = vmatpush1.msra.mxu0 %v7933
        %7948 = vmatprep.subr.mxu0 0.0
        %7949 = vmatpush1.msra.mxu0 %v7934
        %7950 = vmatprep.subr.mxu0 0.0
        %7951 = vmatpush1.msra.mxu0 0.0
        %7952 = vmatprep.subr.mxu0 0.0
        %7953 = vmatpush1.msra.mxu0 0.0
        %7954 = vmatprep.subr.mxu0 0.0
        %7955 = vmatpush1.msra.mxu0 0.0
        %7956 = vmatprep.subr.mxu0 0.0
        %7957 = vmatpush1.msra.mxu0 0.0
        %7958 = vmatprep.subr.mxu0 0.0
        %7959 = vmatpush1.msra.mxu0 0.0
        %7960 = vmatprep.subr.mxu0 0.0
        %7961 = vmatpush1.msra.mxu0 0.0
        %7962 = vmatprep.subr.mxu0 0.0
        %7963 = vmatpush1.msra.mxu0 0.0
        %7964 = vmatprep.subr.mxu0 0.0
        %7965 = vmatpush1.msra.mxu0 0.0
        %7966 = vmatprep.subr.mxu0 0.0
        %7967 = vmatpush1.msra.mxu0 0.0
        %7968 = vmatprep.subr.mxu0 0.0
        %7969 = vmatpush1.msra.mxu0 0.0
        %7970 = vmatprep.subr.mxu0 0.0
        %7971 = vmatpush1.msra.mxu0 0.0
        %7972 = vmatprep.subr.mxu0 0.0
        %7973 = vmatpush1.msra.mxu0 0.0
        %7974 = vmatprep.subr.mxu0 0.0
        %7975 = vmatpush1.msra.mxu0 0.0
        %7976 = vmatprep.subr.mxu0 0.0
        %7977 = vmatpush1.msra.mxu0 0.0
        %7978 = vmatprep.subr.mxu0 0.0
        %7979 = vmatpush1.msra.mxu0 0.0
        %7980 = vmatprep.subr.mxu0 0.0
        %7981 = vmatpush1.msra.mxu0 0.0
        %7982 = vmatprep.subr.mxu0 0.0
        %7983 = vmatpush1.msra.mxu0 0.0
        %7984 = vmatprep.subr.mxu0 0.0
        %7985 = vmatpush1.msra.mxu0 0.0
        %7986 = vmatprep.subr.mxu0 0.0
        %7987 = vmatpush1.msra.mxu0 0.0
        %7988 = vmatprep.subr.mxu0 0.0
        %7989 = vmatpush1.msra.mxu0 0.0
        %7990 = vmatprep.subr.mxu0 0.0
        %7991 = vmatpush1.msra.mxu0 0.0
        %7992 = vmatprep.subr.mxu0 0.0
        %7993 = vmatpush1.msra.mxu0 0.0
        %7994 = vmatprep.subr.mxu0 0.0
        %7995 = vmatpush1.msra.mxu0 0.0
        %7996 = vmatprep.subr.mxu0 0.0
        %7997 = vmatpush1.msra.mxu0 0.0
        %7998 = vmatprep.subr.mxu0 0.0
        %7999 = vmatpush1.msra.mxu0 0.0
        %8000 = vmatprep.subr.mxu0 0.0
        %8001 = vmatpush1.msra.mxu0 0.0
        %8002 = vmatprep.subr.mxu0 0.0
        %8003 = vmatpush1.msra.mxu0 0.0
        %8004 = vmatprep.subr.mxu0 0.0
        %8005 = vmatpush1.msra.mxu0 0.0
        %8006 = vmatprep.mubr.f32.mxu0 0.0
        %8007 = vmatmul.mubr.f32.gmra.mrb[0].mxu0 %v7940
        %v8008 = vpop.f32.mrb[0].mxu0
        %v8009 = vadd.f32 %v7935, %v8008
        %v8010 = vpop.f32.mrb[0].mxu0
        %8011 = vdwg.mxu0
        %v8012 = vmax.f32 %v8009, 0.0
        %v8013 = vld [vmem:[#allocation21] sm:$0x1]
        %v8014 = vld [vmem:[#allocation22] sm:$0x1]
        %v8015 = vld [vmem:[%s97] sm:$0xff]
        %v8016 = vld [vmem:[%s97 + $0x8] sm:$0xff]
        %v8017 = vld [vmem:[%s97 + $0x10] sm:$0xff]
        %v8018 = vld [vmem:[%s97 + $0x18] sm:$0xff]
        %v8019 = vld [vmem:[#allocation24] sm:$0x1]
        %v8020 = vmul.f32 %v8012, %v8013
        %v8021 = vadd.f32 %v8020, %v8014
        %v8022 = vmax.f32 %v8021, 0.0
        %v8024 = vsel %vm7340, %v8022, 0
        %8026 = vmatprep.subr.mxu0 0.0
        %8027 = vmatpush1.msra.mxu0 %v8015
        %8028 = vmatprep.subr.mxu0 0.0
        %8029 = vmatpush1.msra.mxu0 %v8016
        %8030 = vmatprep.subr.mxu0 0.0
        %8031 = vmatpush1.msra.mxu0 %v8017
        %8032 = vmatprep.subr.mxu0 0.0
        %8033 = vmatpush1.msra.mxu0 %v8018
        %8034 = vmatprep.subr.mxu0 0.0
        %8035 = vmatpush1.msra.mxu0 0.0
        %8036 = vmatprep.subr.mxu0 0.0
        %8037 = vmatpush1.msra.mxu0 0.0
        %8038 = vmatprep.subr.mxu0 0.0
        %8039 = vmatpush1.msra.mxu0 0.0
        %8040 = vmatprep.subr.mxu0 0.0
        %8041 = vmatpush1.msra.mxu0 0.0
        %8042 = vmatprep.subr.mxu0 0.0
        %8043 = vmatpush1.msra.mxu0 0.0
        %8044 = vmatprep.subr.mxu0 0.0
        %8045 = vmatpush1.msra.mxu0 0.0
        %8046 = vmatprep.subr.mxu0 0.0
        %8047 = vmatpush1.msra.mxu0 0.0
        %8048 = vmatprep.subr.mxu0 0.0
        %8049 = vmatpush1.msra.mxu0 0.0
        %8050 = vmatprep.subr.mxu0 0.0
        %8051 = vmatpush1.msra.mxu0 0.0
        %8052 = vmatprep.subr.mxu0 0.0
        %8053 = vmatpush1.msra.mxu0 0.0
        %8054 = vmatprep.subr.mxu0 0.0
        %8055 = vmatpush1.msra.mxu0 0.0
        %8056 = vmatprep.subr.mxu0 0.0
        %8057 = vmatpush1.msra.mxu0 0.0
        %8058 = vmatprep.subr.mxu0 0.0
        %8059 = vmatpush1.msra.mxu0 0.0
        %8060 = vmatprep.subr.mxu0 0.0
        %8061 = vmatpush1.msra.mxu0 0.0
        %8062 = vmatprep.subr.mxu0 0.0
        %8063 = vmatpush1.msra.mxu0 0.0
        %8064 = vmatprep.subr.mxu0 0.0
        %8065 = vmatpush1.msra.mxu0 0.0
        %8066 = vmatprep.subr.mxu0 0.0
        %8067 = vmatpush1.msra.mxu0 0.0
        %8068 = vmatprep.subr.mxu0 0.0
        %8069 = vmatpush1.msra.mxu0 0.0
        %8070 = vmatprep.subr.mxu0 0.0
        %8071 = vmatpush1.msra.mxu0 0.0
        %8072 = vmatprep.subr.mxu0 0.0
        %8073 = vmatpush1.msra.mxu0 0.0
        %8074 = vmatprep.subr.mxu0 0.0
        %8075 = vmatpush1.msra.mxu0 0.0
        %8076 = vmatprep.subr.mxu0 0.0
        %8077 = vmatpush1.msra.mxu0 0.0
        %8078 = vmatprep.subr.mxu0 0.0
        %8079 = vmatpush1.msra.mxu0 0.0
        %8080 = vmatprep.subr.mxu0 0.0
        %8081 = vmatpush1.msra.mxu0 0.0
        %8082 = vmatprep.subr.mxu0 0.0
        %8083 = vmatpush1.msra.mxu0 0.0
        %8084 = vmatprep.subr.mxu0 0.0
        %8085 = vmatpush1.msra.mxu0 0.0
        %8086 = vmatprep.subr.mxu0 0.0
        %8087 = vmatpush1.msra.mxu0 0.0
        %8088 = vmatprep.subr.mxu0 0.0
        %8089 = vmatpush1.msra.mxu0 0.0
        %8090 = vmatprep.mubr.f32.mxu0 0.0
        %8091 = vmatmul.mubr.f32.gmra.mrb[0].mxu0 %v8024
        %v8092 = vpop.f32.mrb[0].mxu0
        %v8093 = vadd.f32 %v8019, %v8092
        %v8094 = vpop.f32.mrb[0].mxu0
        %8095 = vdwg.mxu0
        %v8096 = vmax.f32 %v8093, 0.0
        %v8097 = vld [vmem:[#allocation25] sm:$0x1]
        %v8098 = vld [vmem:[#allocation27] sm:$0x1]
        %v8099 = vld [vmem:[%s105] sm:$0xff]
        %v8100 = vld [vmem:[%s105 + $0x8] sm:$0xff]
        %v8101 = vld [vmem:[%s105 + $0x10] sm:$0xff]
        %v8102 = vld [vmem:[%s105 + $0x18] sm:$0xff]
        %v8103 = vld [vmem:[#allocation28] sm:$0x1]
        %v8104 = vmul.f32 %v8096, %v8097
        %v8105 = vadd.f32 %v8104, %v8098
        %v8106 = vmax.f32 %v8105, 0.0
        %v8108 = vsel %vm7340, %v8106, 0
        %8110 = vmatprep.subr.mxu0 0.0
        %8111 = vmatpush1.msra.mxu0 %v8099
        %8112 = vmatprep.subr.mxu0 0.0
        %8113 = vmatpush1.msra.mxu0 %v8100
        %8114 = vmatprep.subr.mxu0 0.0
        %8115 = vmatpush1.msra.mxu0 %v8101
        %8116 = vmatprep.subr.mxu0 0.0
        %8117 = vmatpush1.msra.mxu0 %v8102
        %8118 = vmatprep.subr.mxu0 0.0
        %8119 = vmatpush1.msra.mxu0 0.0
        %8120 = vmatprep.subr.mxu0 0.0
        %8121 = vmatpush1.msra.mxu0 0.0
        %8122 = vmatprep.subr.mxu0 0.0
        %8123 = vmatpush1.msra.mxu0 0.0
        %8124 = vmatprep.subr.mxu0 0.0
        %8125 = vmatpush1.msra.mxu0 0.0
        %8126 = vmatprep.subr.mxu0 0.0
        %8127 = vmatpush1.msra.mxu0 0.0
        %8128 = vmatprep.subr.mxu0 0.0
        %8129 = vmatpush1.msra.mxu0 0.0
        %8130 = vmatprep.subr.mxu0 0.0
        %8131 = vmatpush1.msra.mxu0 0.0
        %8132 = vmatprep.subr.mxu0 0.0
        %8133 = vmatpush1.msra.mxu0 0.0
        %8134 = vmatprep.subr.mxu0 0.0
        %8135 = vmatpush1.msra.mxu0 0.0
        %8136 = vmatprep.subr.mxu0 0.0
        %8137 = vmatpush1.msra.mxu0 0.0
        %8138 = vmatprep.subr.mxu0 0.0
        %8139 = vmatpush1.msra.mxu0 0.0
        %8140 = vmatprep.subr.mxu0 0.0
        %8141 = vmatpush1.msra.mxu0 0.0
        %8142 = vmatprep.subr.mxu0 0.0
        %8143 = vmatpush1.msra.mxu0 0.0
        %8144 = vmatprep.subr.mxu0 0.0
        %8145 = vmatpush1.msra.mxu0 0.0
        %8146 = vmatprep.subr.mxu0 0.0
        %8147 = vmatpush1.msra.mxu0 0.0
        %8148 = vmatprep.subr.mxu0 0.0
        %8149 = vmatpush1.msra.mxu0 0.0
        %8150 = vmatprep.subr.mxu0 0.0
        %8151 = vmatpush1.msra.mxu0 0.0
        %8152 = vmatprep.subr.mxu0 0.0
        %8153 = vmatpush1.msra.mxu0 0.0
        %8154 = vmatprep.subr.mxu0 0.0
        %8155 = vmatpush1.msra.mxu0 0.0
        %8156 = vmatprep.subr.mxu0 0.0
        %8157 = vmatpush1.msra.mxu0 0.0
        %8158 = vmatprep.subr.mxu0 0.0
        %8159 = vmatpush1.msra.mxu0 0.0
        %8160 = vmatprep.subr.mxu0 0.0
        %8161 = vmatpush1.msra.mxu0 0.0
        %8162 = vmatprep.subr.mxu0 0.0
        %8163 = vmatpush1.msra.mxu0 0.0
        %8164 = vmatprep.subr.mxu0 0.0
        %8165 = vmatpush1.msra.mxu0 0.0
        %8166 = vmatprep.subr.mxu0 0.0
        %8167 = vmatpush1.msra.mxu0 0.0
        %8168 = vmatprep.subr.mxu0 0.0
        %8169 = vmatpush1.msra.mxu0 0.0
        %8170 = vmatprep.subr.mxu0 0.0
        %8171 = vmatpush1.msra.mxu0 0.0
        %8172 = vmatprep.subr.mxu0 0.0
        %8173 = vmatpush1.msra.mxu0 0.0
        %8174 = vmatprep.mubr.f32.mxu0 0.0
        %8175 = vmatmul.mubr.f32.gmra.mrb[0].mxu0 %v8108
        %v8176 = vpop.f32.mrb[0].mxu0
        %v8177 = vadd.f32 %v8103, %v8176
        %v8178 = vpop.f32.mrb[0].mxu0
        %8179 = vdwg.mxu0
        %v8180 = vmax.f32 %v8177, 0.0
        %v8181 = vld [vmem:[#allocation30] sm:$0x1]
        %v8182 = vld [vmem:[#allocation31] sm:$0x1]
        %v8183 = vld [vmem:[%s113] sm:$0xff]
        %v8184 = vld [vmem:[%s113 + $0x8] sm:$0xff]
        %v8185 = vld [vmem:[%s113 + $0x10] sm:$0xff]
        %v8186 = vld [vmem:[%s113 + $0x18] sm:$0xff]
        %v8187 = vld [vmem:[#allocation33] sm:$0x1]
        %v8188 = vmul.f32 %v8180, %v8181
        %v8189 = vadd.f32 %v8188, %v8182
        %v8190 = vmax.f32 %v8189, 0.0
        %v8192 = vsel %vm7340, %v8190, 0
        %8194 = vmatprep.subr.mxu0 0.0
        %8195 = vmatpush1.msra.mxu0 %v8183
        %8196 = vmatprep.subr.mxu0 0.0
        %8197 = vmatpush1.msra.mxu0 %v8184
        %8198 = vmatprep.subr.mxu0 0.0
        %8199 = vmatpush1.msra.mxu0 %v8185
        %8200 = vmatprep.subr.mxu0 0.0
        %8201 = vmatpush1.msra.mxu0 %v8186
        %8202 = vmatprep.subr.mxu0 0.0
        %8203 = vmatpush1.msra.mxu0 0.0
        %8204 = vmatprep.subr.mxu0 0.0
        %8205 = vmatpush1.msra.mxu0 0.0
        %8206 = vmatprep.subr.mxu0 0.0
        %8207 = vmatpush1.msra.mxu0 0.0
        %8208 = vmatprep.subr.mxu0 0.0
        %8209 = vmatpush1.msra.mxu0 0.0
        %8210 = vmatprep.subr.mxu0 0.0
        %8211 = vmatpush1.msra.mxu0 0.0
        %8212 = vmatprep.subr.mxu0 0.0
        %8213 = vmatpush1.msra.mxu0 0.0
        %8214 = vmatprep.subr.mxu0 0.0
        %8215 = vmatpush1.msra.mxu0 0.0
        %8216 = vmatprep.subr.mxu0 0.0
        %8217 = vmatpush1.msra.mxu0 0.0
        %8218 = vmatprep.subr.mxu0 0.0
        %8219 = vmatpush1.msra.mxu0 0.0
        %8220 = vmatprep.subr.mxu0 0.0
        %8221 = vmatpush1.msra.mxu0 0.0
        %8222 = vmatprep.subr.mxu0 0.0
        %8223 = vmatpush1.msra.mxu0 0.0
        %8224 = vmatprep.subr.mxu0 0.0
        %8225 = vmatpush1.msra.mxu0 0.0
        %8226 = vmatprep.subr.mxu0 0.0
        %8227 = vmatpush1.msra.mxu0 0.0
        %8228 = vmatprep.subr.mxu0 0.0
        %8229 = vmatpush1.msra.mxu0 0.0
        %8230 = vmatprep.subr.mxu0 0.0
        %8231 = vmatpush1.msra.mxu0 0.0
        %8232 = vmatprep.subr.mxu0 0.0
        %8233 = vmatpush1.msra.mxu0 0.0
        %8234 = vmatprep.subr.mxu0 0.0
        %8235 = vmatpush1.msra.mxu0 0.0
        %8236 = vmatprep.subr.mxu0 0.0
        %8237 = vmatpush1.msra.mxu0 0.0
        %8238 = vmatprep.subr.mxu0 0.0
        %8239 = vmatpush1.msra.mxu0 0.0
        %8240 = vmatprep.subr.mxu0 0.0
        %8241 = vmatpush1.msra.mxu0 0.0
        %8242 = vmatprep.subr.mxu0 0.0
        %8243 = vmatpush1.msra.mxu0 0.0
        %8244 = vmatprep.subr.mxu0 0.0
        %8245 = vmatpush1.msra.mxu0 0.0
        %8246 = vmatprep.subr.mxu0 0.0
        %8247 = vmatpush1.msra.mxu0 0.0
        %8248 = vmatprep.subr.mxu0 0.0
        %8249 = vmatpush1.msra.mxu0 0.0
        %8250 = vmatprep.subr.mxu0 0.0
        %8251 = vmatpush1.msra.mxu0 0.0
        %8252 = vmatprep.subr.mxu0 0.0
        %8253 = vmatpush1.msra.mxu0 0.0
        %8254 = vmatprep.subr.mxu0 0.0
        %8255 = vmatpush1.msra.mxu0 0.0
        %8256 = vmatprep.subr.mxu0 0.0
        %8257 = vmatpush1.msra.mxu0 0.0
        %8258 = vmatprep.mubr.f32.mxu0 0.0
        %8259 = vmatmul.mubr.f32.gmra.mrb[0].mxu0 %v8192
        %v8260 = vpop.f32.mrb[0].mxu0
        %v8261 = vadd.f32 %v8187, %v8260
        %v8262 = vpop.f32.mrb[0].mxu0
        %8263 = vdwg.mxu0
        %v8264 = vmax.f32 %v8261, 0.0
        %v8265 = vld [vmem:[#allocation34] sm:$0x1]
        %v8266 = vld [vmem:[#allocation36] sm:$0x1]
        %v8267 = vld [vmem:[%s121] sm:$0xff]
        %v8268 = vld [vmem:[%s121 + $0x8] sm:$0xff]
        %v8269 = vld [vmem:[%s121 + $0x10] sm:$0xff]
        %v8270 = vld [vmem:[%s121 + $0x18] sm:$0xff]
        %v8271 = vld [vmem:[%s121 + $0x20] sm:$0xff]
        %v8272 = vld [vmem:[%s121 + $0x28] sm:$0xff]
        %v8273 = vld [vmem:[%s121 + $0x30] sm:$0xff]
        %v8274 = vld [vmem:[%s121 + $0x38] sm:$0xff]
        %v8275 = vld [vmem:[#allocation37] sm:$0x1]
        %v8276 = vmul.f32 %v8264, %v8265
        %v8277 = vadd.f32 %v8276, %v8266
        %v8278 = vmax.f32 %v8277, 0.0
        %vm8279 = vcmask 523264
        %v8281 = vsel %vm8279, %v8278, 0
        %8283 = vmatprep.subr.mxu0 0.0
        %8284 = vmatpush1.msra.mxu0 %v8267
        %8285 = vmatprep.subr.mxu0 0.0
        %8286 = vmatpush1.msra.mxu0 %v8268
        %8287 = vmatprep.subr.mxu0 0.0
        %8288 = vmatpush1.msra.mxu0 %v8269
        %8289 = vmatprep.subr.mxu0 0.0
        %8290 = vmatpush1.msra.mxu0 %v8270
        %8291 = vmatprep.subr.mxu0 0.0
        %8292 = vmatpush1.msra.mxu0 %v8271
        %8293 = vmatprep.subr.mxu0 0.0
        %8294 = vmatpush1.msra.mxu0 %v8272
        %8295 = vmatprep.subr.mxu0 0.0
        %8296 = vmatpush1.msra.mxu0 %v8273
        %8297 = vmatprep.subr.mxu0 0.0
        %8298 = vmatpush1.msra.mxu0 %v8274
        %8299 = vmatprep.subr.mxu0 0.0
        %8300 = vmatpush1.msra.mxu0 0.0
        %8301 = vmatprep.subr.mxu0 0.0
        %8302 = vmatpush1.msra.mxu0 0.0
        %8303 = vmatprep.subr.mxu0 0.0
        %8304 = vmatpush1.msra.mxu0 0.0
        %8305 = vmatprep.subr.mxu0 0.0
        %8306 = vmatpush1.msra.mxu0 0.0
        %8307 = vmatprep.subr.mxu0 0.0
        %8308 = vmatpush1.msra.mxu0 0.0
        %8309 = vmatprep.subr.mxu0 0.0
        %8310 = vmatpush1.msra.mxu0 0.0
        %8311 = vmatprep.subr.mxu0 0.0
        %8312 = vmatpush1.msra.mxu0 0.0
        %8313 = vmatprep.subr.mxu0 0.0
        %8314 = vmatpush1.msra.mxu0 0.0
        %8315 = vmatprep.subr.mxu0 0.0
        %8316 = vmatpush1.msra.mxu0 0.0
        %8317 = vmatprep.subr.mxu0 0.0
        %8318 = vmatpush1.msra.mxu0 0.0
        %8319 = vmatprep.subr.mxu0 0.0
        %8320 = vmatpush1.msra.mxu0 0.0
        %8321 = vmatprep.subr.mxu0 0.0
        %8322 = vmatpush1.msra.mxu0 0.0
        %8323 = vmatprep.subr.mxu0 0.0
        %8324 = vmatpush1.msra.mxu0 0.0
        %8325 = vmatprep.subr.mxu0 0.0
        %8326 = vmatpush1.msra.mxu0 0.0
        %8327 = vmatprep.subr.mxu0 0.0
        %8328 = vmatpush1.msra.mxu0 0.0
        %8329 = vmatprep.subr.mxu0 0.0
        %8330 = vmatpush1.msra.mxu0 0.0
        %8331 = vmatprep.subr.mxu0 0.0
        %8332 = vmatpush1.msra.mxu0 0.0
        %8333 = vmatprep.subr.mxu0 0.0
        %8334 = vmatpush1.msra.mxu0 0.0
        %8335 = vmatprep.subr.mxu0 0.0
        %8336 = vmatpush1.msra.mxu0 0.0
        %8337 = vmatprep.subr.mxu0 0.0
        %8338 = vmatpush1.msra.mxu0 0.0
        %8339 = vmatprep.subr.mxu0 0.0
        %8340 = vmatpush1.msra.mxu0 0.0
        %8341 = vmatprep.subr.mxu0 0.0
        %8342 = vmatpush1.msra.mxu0 0.0
        %8343 = vmatprep.subr.mxu0 0.0
        %8344 = vmatpush1.msra.mxu0 0.0
        %8345 = vmatprep.subr.mxu0 0.0
        %8346 = vmatpush1.msra.mxu0 0.0
        %8347 = vmatprep.mubr.f32.mxu0 0.0
        %8348 = vmatmul.mubr.f32.gmra.mrb[0].mxu0 %v8281
        %v8349 = vpop.f32.mrb[0].mxu0
        %v8350 = vadd.f32 %v8275, %v8349
        %v8351 = vpop.f32.mrb[0].mxu0
        %8352 = vdwg.mxu0
        %v8353 = vmax.f32 %v8350, 0.0
        %v8354 = vld [vmem:[%s125] sm:$0xff]
        %v8355 = vld [vmem:[%s125 + $0x8] sm:$0xff]
        %v8356 = vld [vmem:[%s125 + $0x10] sm:$0xff]
        %v8357 = vld [vmem:[%s125 + $0x18] sm:$0xff]
        %v8358 = vld [vmem:[%s125 + $0x20] sm:$0xff]
        %v8359 = vld [vmem:[%s125 + $0x28] sm:$0xff]
        %v8360 = vld [vmem:[%s125 + $0x30] sm:$0xff]
        %v8361 = vld [vmem:[%s125 + $0x38] sm:$0xff]
        %v8362 = vld [vmem:[%s125 + $0x40] sm:$0xff]
        %v8363 = vld [vmem:[%s125 + $0x48] sm:$0xff]
        %v8364 = vld [vmem:[%s125 + $0x50] sm:$0xff]
        %v8365 = vld [vmem:[%s125 + $0x58] sm:$0xff]
        %v8366 = vld [vmem:[%s125 + $0x60] sm:$0xff]
        %v8367 = vld [vmem:[%s125 + $0x68] sm:$0xff]
        %v8368 = vld [vmem:[%s125 + $0x70] sm:$0xff]
        %v8369 = vld [vmem:[%s125 + $0x78] sm:$0xff]
        %v8370 = vld [vmem:[%s125 + $0x80] sm:$0xff]
        %v8371 = vld [vmem:[%s125 + $0x88] sm:$0xff]
        %v8372 = vld [vmem:[%s125 + $0x90] sm:$0xff]
        %v8373 = vld [vmem:[%s125 + $0x98] sm:$0xff]
        %v8374 = vld [vmem:[%s125 + $0xa0] sm:$0xff]
        %v8375 = vld [vmem:[%s125 + $0xa8] sm:$0xff]
        %v8376 = vld [vmem:[%s125 + $0xb0] sm:$0xff]
        %v8377 = vld [vmem:[%s125 + $0xb8] sm:$0xff]
        %v8378 = vld [vmem:[%s125 + $0xc0] sm:$0xff]
        %v8379 = vld [vmem:[%s125 + $0xc8] sm:$0xff]
        %v8380 = vld [vmem:[%s125 + $0xd0] sm:$0xff]
        %v8381 = vld [vmem:[%s125 + $0xd8] sm:$0xff]
        %v8382 = vld [vmem:[%s125 + $0xe0] sm:$0xff]
        %v8383 = vld [vmem:[%s125 + $0xe8] sm:$0xff]
        %v8384 = vld [vmem:[%s125 + $0xf0] sm:$0xff]
        %v8385 = vld [vmem:[%s125 + $0xf8] sm:$0xff]
        %v8386 = vld [vmem:[%s125 + $0x100] sm:$0xff]
        %v8387 = vld [vmem:[%s125 + $0x108] sm:$0xff]
        %v8388 = vld [vmem:[%s125 + $0x110] sm:$0xff]
        %v8389 = vld [vmem:[%s125 + $0x118] sm:$0xff]
        %v8390 = vld [vmem:[%s125 + $0x120] sm:$0xff]
        %v8391 = vld [vmem:[%s125 + $0x128] sm:$0xff]
        %v8392 = vld [vmem:[%s125 + $0x130] sm:$0xff]
        %v8393 = vld [vmem:[%s125 + $0x138] sm:$0xff]
        %v8394 = vld [vmem:[%s125 + $0x140] sm:$0xff]
        %v8395 = vld [vmem:[%s125 + $0x148] sm:$0xff]
        %v8396 = vld [vmem:[%s125 + $0x150] sm:$0xff]
        %v8397 = vld [vmem:[%s125 + $0x158] sm:$0xff]
        %v8398 = vld [vmem:[%s125 + $0x160] sm:$0xff]
        %v8399 = vld [vmem:[%s125 + $0x168] sm:$0xff]
        %v8400 = vld [vmem:[%s125 + $0x170] sm:$0xff]
        %v8401 = vld [vmem:[%s125 + $0x178] sm:$0xff]
        %v8402 = vld [vmem:[%s125 + $0x180] sm:$0xff]
        %v8403 = vld [vmem:[%s125 + $0x188] sm:$0xff]
        %v8404 = vld [vmem:[%s125 + $0x190] sm:$0xff]
        %v8405 = vld [vmem:[%s125 + $0x198] sm:$0xff]
        %v8406 = vld [vmem:[%s125 + $0x1a0] sm:$0xff]
        %v8407 = vld [vmem:[%s125 + $0x1a8] sm:$0xff]
        %v8408 = vld [vmem:[%s125 + $0x1b0] sm:$0xff]
        %v8409 = vld [vmem:[%s125 + $0x1b8] sm:$0xff]
        %v8410 = vld [vmem:[%s127] sm:$0x7f]
        %v8412 = vlaneseq
        %v8413 = vshrl.u32 %v8412, 7
        %v8414 = vsub.s32 0, %v8413
        %v8415 = vrot.slane %v8410, %v8414
        %v8416 = vlaneseq
        %v8417 = vshrl.u32 %v8416, 7
        %v8418 = vsub.s32 1, %v8417
        %v8419 = vrot.slane %v8410, %v8418
        %v8420 = vlaneseq
        %v8421 = vshrl.u32 %v8420, 7
        %v8422 = vsub.s32 2, %v8421
        %v8423 = vrot.slane %v8410, %v8422
        %v8424 = vlaneseq
        %v8425 = vshrl.u32 %v8424, 7
        %v8426 = vsub.s32 3, %v8425
        %v8427 = vrot.slane %v8410, %v8426
        %v8428 = vlaneseq
        %v8429 = vshrl.u32 %v8428, 7
        %v8430 = vsub.s32 4, %v8429
        %v8431 = vrot.slane %v8410, %v8430
        %v8432 = vlaneseq
        %v8433 = vshrl.u32 %v8432, 7
        %v8434 = vsub.s32 5, %v8433
        %v8435 = vrot.slane %v8410, %v8434
        %v8436 = vlaneseq
        %v8437 = vshrl.u32 %v8436, 7
        %v8438 = vsub.s32 6, %v8437
        %v8439 = vrot.slane %v8410, %v8438
        %v8448 = vsel %vm8279, %v8353, 0
        %8450 = vmatprep.subr.mxu0 %v8355
        %8451 = vmatpush1.msra.mxu0 %v8354
        %8452 = vmatprep.subr.mxu0 %v8362
        %8453 = vmatpush1.msra.mxu0 %v8361
        %8454 = vmatprep.subr.mxu0 %v8369
        %8455 = vmatpush1.msra.mxu0 %v8368
        %8456 = vmatprep.subr.mxu0 %v8376
        %8457 = vmatpush1.msra.mxu0 %v8375
        %8458 = vmatprep.subr.mxu0 %v8383
        %8459 = vmatpush1.msra.mxu0 %v8382
        %8460 = vmatprep.subr.mxu0 %v8390
        %8461 = vmatpush1.msra.mxu0 %v8389
        %8462 = vmatprep.subr.mxu0 %v8397
        %8463 = vmatpush1.msra.mxu0 %v8396
        %8464 = vmatprep.subr.mxu0 %v8404
        %8465 = vmatpush1.msra.mxu0 %v8403
        %8466 = vmatprep.subr.mxu0 0.0
        %8467 = vmatpush1.msra.mxu0 0.0
        %8468 = vmatprep.subr.mxu0 0.0
        %8469 = vmatpush1.msra.mxu0 0.0
        %8470 = vmatprep.subr.mxu0 0.0
        %8471 = vmatpush1.msra.mxu0 0.0
        %8472 = vmatprep.subr.mxu0 0.0
        %8473 = vmatpush1.msra.mxu0 0.0
        %8474 = vmatprep.subr.mxu0 0.0
        %8475 = vmatpush1.msra.mxu0 0.0
        %8476 = vmatprep.subr.mxu0 0.0
        %8477 = vmatpush1.msra.mxu0 0.0
        %8478 = vmatprep.subr.mxu0 0.0
        %8479 = vmatpush1.msra.mxu0 0.0
        %8480 = vmatprep.subr.mxu0 0.0
        %8481 = vmatpush1.msra.mxu0 0.0
        %8482 = vmatprep.subr.mxu0 0.0
        %8483 = vmatpush1.msra.mxu0 0.0
        %8484 = vmatprep.subr.mxu0 0.0
        %8485 = vmatpush1.msra.mxu0 0.0
        %8486 = vmatprep.subr.mxu0 0.0
        %8487 = vmatpush1.msra.mxu0 0.0
        %8488 = vmatprep.subr.mxu0 0.0
        %8489 = vmatpush1.msra.mxu0 0.0
        %8490 = vmatprep.subr.mxu0 0.0
        %8491 = vmatpush1.msra.mxu0 0.0
        %8492 = vmatprep.subr.mxu0 0.0
        %8493 = vmatpush1.msra.mxu0 0.0
        %8494 = vmatprep.subr.mxu0 0.0
        %8495 = vmatpush1.msra.mxu0 0.0
        %8496 = vmatprep.subr.mxu0 0.0
        %8497 = vmatpush1.msra.mxu0 0.0
        %8498 = vmatprep.subr.mxu0 0.0
        %8499 = vmatpush1.msra.mxu0 0.0
        %8500 = vmatprep.subr.mxu0 0.0
        %8501 = vmatpush1.msra.mxu0 0.0
        %8502 = vmatprep.subr.mxu0 0.0
        %8503 = vmatpush1.msra.mxu0 0.0
        %8504 = vmatprep.subr.mxu0 0.0
        %8505 = vmatpush1.msra.mxu0 0.0
        %8506 = vmatprep.subr.mxu0 0.0
        %8507 = vmatpush1.msra.mxu0 0.0
        %8508 = vmatprep.subr.mxu0 0.0
        %8509 = vmatpush1.msra.mxu0 0.0
        %8510 = vmatprep.subr.mxu0 0.0
        %8511 = vmatpush1.msra.mxu0 0.0
        %8512 = vmatprep.subr.mxu0 0.0
        %8513 = vmatpush1.msra.mxu0 0.0
        %8514 = vmatprep.mubr.f32.mxu0 0.0
        %8515 = vmatmul.mubr.f32.gmra.mrb[0].mxu0 %v8448
        %v8516 = vpop.f32.mrb[0].mxu0
        %v8517 = vadd.f32 %v8415, %v8516
        %v8518 = vpop.f32.mrb[0].mxu0
        %v8519 = vadd.f32 %v8419, %v8518
        %8520 = vdwg.mxu0
        %8521 = vmatprep.subr.mxu0 %v8357
        %8522 = vmatpush1.msra.mxu0 %v8356
        %8523 = vmatprep.subr.mxu0 %v8364
        %8524 = vmatpush1.msra.mxu0 %v8363
        %8525 = vmatprep.subr.mxu0 %v8371
        %8526 = vmatpush1.msra.mxu0 %v8370
        %8527 = vmatprep.subr.mxu0 %v8378
        %8528 = vmatpush1.msra.mxu0 %v8377
        %8529 = vmatprep.subr.mxu0 %v8385
        %8530 = vmatpush1.msra.mxu0 %v8384
        %8531 = vmatprep.subr.mxu0 %v8392
        %8532 = vmatpush1.msra.mxu0 %v8391
        %8533 = vmatprep.subr.mxu0 %v8399
        %8534 = vmatpush1.msra.mxu0 %v8398
        %8535 = vmatprep.subr.mxu0 %v8406
        %8536 = vmatpush1.msra.mxu0 %v8405
        %8537 = vmatprep.subr.mxu0 0.0
        %8538 = vmatpush1.msra.mxu0 0.0
        %8539 = vmatprep.subr.mxu0 0.0
        %8540 = vmatpush1.msra.mxu0 0.0
        %8541 = vmatprep.subr.mxu0 0.0
        %8542 = vmatpush1.msra.mxu0 0.0
        %8543 = vmatprep.subr.mxu0 0.0
        %8544 = vmatpush1.msra.mxu0 0.0
        %8545 = vmatprep.subr.mxu0 0.0
        %8546 = vmatpush1.msra.mxu0 0.0
        %8547 = vmatprep.subr.mxu0 0.0
        %8548 = vmatpush1.msra.mxu0 0.0
        %8549 = vmatprep.subr.mxu0 0.0
        %8550 = vmatpush1.msra.mxu0 0.0
        %8551 = vmatprep.subr.mxu0 0.0
        %8552 = vmatpush1.msra.mxu0 0.0
        %8553 = vmatprep.subr.mxu0 0.0
        %8554 = vmatpush1.msra.mxu0 0.0
        %8555 = vmatprep.subr.mxu0 0.0
        %8556 = vmatpush1.msra.mxu0 0.0
        %8557 = vmatprep.subr.mxu0 0.0
        %8558 = vmatpush1.msra.mxu0 0.0
        %8559 = vmatprep.subr.mxu0 0.0
        %8560 = vmatpush1.msra.mxu0 0.0
        %8561 = vmatprep.subr.mxu0 0.0
        %8562 = vmatpush1.msra.mxu0 0.0
        %8563 = vmatprep.subr.mxu0 0.0
        %8564 = vmatpush1.msra.mxu0 0.0
        %8565 = vmatprep.subr.mxu0 0.0
        %8566 = vmatpush1.msra.mxu0 0.0
        %8567 = vmatprep.subr.mxu0 0.0
        %8568 = vmatpush1.msra.mxu0 0.0
        %8569 = vmatprep.subr.mxu0 0.0
        %8570 = vmatpush1.msra.mxu0 0.0
        %8571 = vmatprep.subr.mxu0 0.0
        %8572 = vmatpush1.msra.mxu0 0.0
        %8573 = vmatprep.subr.mxu0 0.0
        %8574 = vmatpush1.msra.mxu0 0.0
        %8575 = vmatprep.subr.mxu0 0.0
        %8576 = vmatpush1.msra.mxu0 0.0
        %8577 = vmatprep.subr.mxu0 0.0
        %8578 = vmatpush1.msra.mxu0 0.0
        %8579 = vmatprep.subr.mxu0 0.0
        %8580 = vmatpush1.msra.mxu0 0.0
        %8581 = vmatprep.subr.mxu0 0.0
        %8582 = vmatpush1.msra.mxu0 0.0
        %8583 = vmatprep.subr.mxu0 0.0
        %8584 = vmatpush1.msra.mxu0 0.0
        %8585 = vmatprep.mubr.f32.mxu0 0.0
        %8586 = vmatmul.mubr.f32.gmra.mrb[0].mxu0 %v8448
        %v8587 = vpop.f32.mrb[0].mxu0
        %v8588 = vadd.f32 %v8423, %v8587
        %v8589 = vpop.f32.mrb[0].mxu0
        %v8590 = vadd.f32 %v8427, %v8589
        %8591 = vdwg.mxu0
        %8592 = vmatprep.subr.mxu0 %v8359
        %8593 = vmatpush1.msra.mxu0 %v8358
        %8594 = vmatprep.subr.mxu0 %v8366
        %8595 = vmatpush1.msra.mxu0 %v8365
        %8596 = vmatprep.subr.mxu0 %v8373
        %8597 = vmatpush1.msra.mxu0 %v8372
        %8598 = vmatprep.subr.mxu0 %v8380
        %8599 = vmatpush1.msra.mxu0 %v8379
        %8600 = vmatprep.subr.mxu0 %v8387
        %8601 = vmatpush1.msra.mxu0 %v8386
        %8602 = vmatprep.subr.mxu0 %v8394
        %8603 = vmatpush1.msra.mxu0 %v8393
        %8604 = vmatprep.subr.mxu0 %v8401
        %8605 = vmatpush1.msra.mxu0 %v8400
        %8606 = vmatprep.subr.mxu0 %v8408
        %8607 = vmatpush1.msra.mxu0 %v8407
        %8608 = vmatprep.subr.mxu0 0.0
        %8609 = vmatpush1.msra.mxu0 0.0
        %8610 = vmatprep.subr.mxu0 0.0
        %8611 = vmatpush1.msra.mxu0 0.0
        %8612 = vmatprep.subr.mxu0 0.0
        %8613 = vmatpush1.msra.mxu0 0.0
        %8614 = vmatprep.subr.mxu0 0.0
        %8615 = vmatpush1.msra.mxu0 0.0
        %8616 = vmatprep.subr.mxu0 0.0
        %8617 = vmatpush1.msra.mxu0 0.0
        %8618 = vmatprep.subr.mxu0 0.0
        %8619 = vmatpush1.msra.mxu0 0.0
        %8620 = vmatprep.subr.mxu0 0.0
        %8621 = vmatpush1.msra.mxu0 0.0
        %8622 = vmatprep.subr.mxu0 0.0
        %8623 = vmatpush1.msra.mxu0 0.0
        %8624 = vmatprep.subr.mxu0 0.0
        %8625 = vmatpush1.msra.mxu0 0.0
        %8626 = vmatprep.subr.mxu0 0.0
        %8627 = vmatpush1.msra.mxu0 0.0
        %8628 = vmatprep.subr.mxu0 0.0
        %8629 = vmatpush1.msra.mxu0 0.0
        %8630 = vmatprep.subr.mxu0 0.0
        %8631 = vmatpush1.msra.mxu0 0.0
        %8632 = vmatprep.subr.mxu0 0.0
        %8633 = vmatpush1.msra.mxu0 0.0
        %8634 = vmatprep.subr.mxu0 0.0
        %8635 = vmatpush1.msra.mxu0 0.0
        %8636 = vmatprep.subr.mxu0 0.0
        %8637 = vmatpush1.msra.mxu0 0.0
        %8638 = vmatprep.subr.mxu0 0.0
        %8639 = vmatpush1.msra.mxu0 0.0
        %8640 = vmatprep.subr.mxu0 0.0
        %8641 = vmatpush1.msra.mxu0 0.0
        %8642 = vmatprep.subr.mxu0 0.0
        %8643 = vmatpush1.msra.mxu0 0.0
        %8644 = vmatprep.subr.mxu0 0.0
        %8645 = vmatpush1.msra.mxu0 0.0
        %8646 = vmatprep.subr.mxu0 0.0
        %8647 = vmatpush1.msra.mxu0 0.0
        %8648 = vmatprep.subr.mxu0 0.0
        %8649 = vmatpush1.msra.mxu0 0.0
        %8650 = vmatprep.subr.mxu0 0.0
        %8651 = vmatpush1.msra.mxu0 0.0
        %8652 = vmatprep.subr.mxu0 0.0
        %8653 = vmatpush1.msra.mxu0 0.0
        %8654 = vmatprep.subr.mxu0 0.0
        %8655 = vmatpush1.msra.mxu0 0.0
        %8656 = vmatprep.mubr.f32.mxu0 0.0
        %8657 = vmatmul.mubr.f32.gmra.mrb[0].mxu0 %v8448
        %v8658 = vpop.f32.mrb[0].mxu0
        %v8659 = vadd.f32 %v8431, %v8658
        %v8660 = vpop.f32.mrb[0].mxu0
        %v8661 = vadd.f32 %v8435, %v8660
        %8662 = vdwg.mxu0
        %8663 = vmatprep.subr.mxu0 0.0
        %8664 = vmatpush1.msra.mxu0 %v8360
        %8665 = vmatprep.subr.mxu0 0.0
        %8666 = vmatpush1.msra.mxu0 %v8367
        %8667 = vmatprep.subr.mxu0 0.0
        %8668 = vmatpush1.msra.mxu0 %v8374
        %8669 = vmatprep.subr.mxu0 0.0
        %8670 = vmatpush1.msra.mxu0 %v8381
        %8671 = vmatprep.subr.mxu0 0.0
        %8672 = vmatpush1.msra.mxu0 %v8388
        %8673 = vmatprep.subr.mxu0 0.0
        %8674 = vmatpush1.msra.mxu0 %v8395
        %8675 = vmatprep.subr.mxu0 0.0
        %8676 = vmatpush1.msra.mxu0 %v8402
        %8677 = vmatprep.subr.mxu0 0.0
        %8678 = vmatpush1.msra.mxu0 %v8409
        %8679 = vmatprep.subr.mxu0 0.0
        %8680 = vmatpush1.msra.mxu0 0.0
        %8681 = vmatprep.subr.mxu0 0.0
        %8682 = vmatpush1.msra.mxu0 0.0
        %8683 = vmatprep.subr.mxu0 0.0
        %8684 = vmatpush1.msra.mxu0 0.0
        %8685 = vmatprep.subr.mxu0 0.0
        %8686 = vmatpush1.msra.mxu0 0.0
        %8687 = vmatprep.subr.mxu0 0.0
        %8688 = vmatpush1.msra.mxu0 0.0
        %8689 = vmatprep.subr.mxu0 0.0
        %8690 = vmatpush1.msra.mxu0 0.0
        %8691 = vmatprep.subr.mxu0 0.0
        %8692 = vmatpush1.msra.mxu0 0.0
        %8693 = vmatprep.subr.mxu0 0.0
        %8694 = vmatpush1.msra.mxu0 0.0
        %8695 = vmatprep.subr.mxu0 0.0
        %8696 = vmatpush1.msra.mxu0 0.0
        %8697 = vmatprep.subr.mxu0 0.0
        %8698 = vmatpush1.msra.mxu0 0.0
        %8699 = vmatprep.subr.mxu0 0.0
        %8700 = vmatpush1.msra.mxu0 0.0
        %8701 = vmatprep.subr.mxu0 0.0
        %8702 = vmatpush1.msra.mxu0 0.0
        %8703 = vmatprep.subr.mxu0 0.0
        %8704 = vmatpush1.msra.mxu0 0.0
        %8705 = vmatprep.subr.mxu0 0.0
        %8706 = vmatpush1.msra.mxu0 0.0
        %8707 = vmatprep.subr.mxu0 0.0
        %8708 = vmatpush1.msra.mxu0 0.0
        %8709 = vmatprep.subr.mxu0 0.0
        %8710 = vmatpush1.msra.mxu0 0.0
        %8711 = vmatprep.subr.mxu0 0.0
        %8712 = vmatpush1.msra.mxu0 0.0
        %8713 = vmatprep.subr.mxu0 0.0
        %8714 = vmatpush1.msra.mxu0 0.0
        %8715 = vmatprep.subr.mxu0 0.0
        %8716 = vmatpush1.msra.mxu0 0.0
        %8717 = vmatprep.subr.mxu0 0.0
        %8718 = vmatpush1.msra.mxu0 0.0
        %8719 = vmatprep.subr.mxu0 0.0
        %8720 = vmatpush1.msra.mxu0 0.0
        %8721 = vmatprep.subr.mxu0 0.0
        %8722 = vmatpush1.msra.mxu0 0.0
        %8723 = vmatprep.subr.mxu0 0.0
        %8724 = vmatpush1.msra.mxu0 0.0
        %8725 = vmatprep.subr.mxu0 0.0
        %8726 = vmatpush1.msra.mxu0 0.0
        %8727 = vmatprep.mubr.f32.mxu0 0.0
        %8728 = vmatmul.mubr.f32.gmra.mrb[0].mxu0 %v8448
        %v8729 = vpop.f32.mrb[0].mxu0
        %v8730 = vadd.f32 %v8439, %v8729
        %v8731 = vpop.f32.mrb[0].mxu0
        %8732 = vdwg.mxu0
        %v8740 = vcombine.low %v8517, %v8519
        %v8741 = vcombine.low %v8588, %v8590
        %v8742 = vcombine.low %v8659, %v8661
        %v8744 = vunpack.c.l.s4 1966171168
        %v8745 = vunpack.c.0.s8 %v8744
        %v8746 = vlaneseq
        %v8747 = vshrl.u32 %v8746, 7
        %v8748 = vsub.s32 %v8745, %v8747
        %v8749 = vrot.slane %v8740, %v8748
        %v8751 = vunpack.c.l.s4 1966171168
        %v8752 = vunpack.c.0.s8 %v8751
        %v8753 = vlaneseq
        %v8754 = vshrl.u32 %v8753, 7
        %v8755 = vsub.s32 %v8752, %v8754
        %v8756 = vrot.slane %v8741, %v8755
        %v8758 = vunpack.c.l.s4 1966171168
        %v8759 = vunpack.c.0.s8 %v8758
        %v8760 = vlaneseq
        %v8761 = vshrl.u32 %v8760, 7
        %v8762 = vsub.s32 %v8759, %v8761
        %v8763 = vrot.slane %v8742, %v8762
        %v8765 = vunpack.c.l.s4 1966171168
        %v8766 = vunpack.c.0.s8 %v8765
        %v8767 = vlaneseq
        %v8768 = vshrl.u32 %v8767, 7
        %v8769 = vsub.s32 %v8766, %v8768
        %v8770 = vrot.slane %v8730, %v8769
        %v8771 = vcombine.low %v8749, %v8756
        %v8772 = vcombine.low %v8763, %v8770
        %v8774 = vunpack.c.l.s4 1966171168
        %v8775 = vunpack.c.0.s8 %v8774
        %v8776 = vlaneseq
        %v8777 = vshrl.u32 %v8776, 7
        %v8778 = vsub.s32 %v8775, %v8777
        %v8779 = vrot.slane %v8771, %v8778
        %v8781 = vunpack.c.l.s4 1966171168
        %v8782 = vunpack.c.0.s8 %v8781
        %v8783 = vlaneseq
        %v8784 = vshrl.u32 %v8783, 7
        %v8785 = vsub.s32 %v8782, %v8784
        %v8786 = vrot.slane %v8772, %v8785
        %v8787 = vcombine.low %v8779, %v8786
        %v8789 = vlaneseq
        %vm8790 = vcmp.ge.s32.totalorder %v8789, 0
        %vm8791 = vcmp.lt.s32.totalorder %v8789, 784
        %vm8792 = vmand %vm8790, %vm8791
        %8793 = vst.msk [vmem:[%s2181] sm:$0x7f] %vm8792, %v8787
        %p8794 = scmp.lt.s32.totalorder %s153, 1
        %s8795 = scalar_select %p8794, %s153, 1
        %s8796 = smul.addr %s8795, 7
        %s8797 = scalar_lea.vmem %s129, %s8796
        // Predicated region
        $region373: #{forward.1} parent=275 // pred_check
          %p8798 = pneg %p1520
        $region374: #{forward.1} parent=275 // pred_check_branch
          %8800 = sbr.rel (%p8798) target = $region376
        $region375: #{forward.1} parent=275 // pred_region
          _
        $region376: #{forward.1} parent=275 // pred_fallthru
          _
      $region276: #{forward.1} parent=5 // pred_fallthru
        _
      %p8801 = scmp.le.s32.totalorder 2, %s148
      // Predicated region
      $region377: #{forward.1} parent=5 // pred_check
        %p8802 = pneg %p8801
      $region378: #{forward.1} parent=5 // pred_check_branch
        %8804 = sbr.rel (%p8802) target = $region380
      $region379: #{forward.1} parent=5 // pred_region
        %s8805 = ssub.s32 %s148, 2
        // Predicated region
        $region381: #{forward.1} parent=379 // pred_check
          %p8806 = pneg %p1526
        $region382: #{forward.1} parent=379 // pred_check_branch
          %8808 = sbr.rel (%p8806) target = $region384
        $region383: #{forward.1} parent=379 // pred_region
          %p8809 = scmp.lt.s32.totalorder %s154, 1
          %s8810 = scalar_select %p8809, %s154, 1
          %s8811 = smul.addr %s8810, 7
          %s8812 = scalar_lea.vmem %s129, %s8811
        $region384: #{forward.1} parent=379 // pred_fallthru
          _
      $region380: #{forward.1} parent=5 // pred_fallthru
        _
    $region6: #{forward.1} parent=1 // loop_footer
      %s152 = sadd.s32 1, %s148
    $region7: #{forward.1} parent=1 // loop_footer_branch
      %147 = sbr.rel target = $region3
    $region8: #{forward.1} parent=1 // loop_exit
      _
    %8813 = vsyncpa [#allocation3], 1
    %s8814 = scalar_lea.sflag [#allocation3], 1
    %8815 = vsyncpa %s8814, 1
    %8816 = vsyncpa [#allocation5], 1
    %8817 = vsyncpa [#allocation8], 1
    %8818 = vsyncpa [#allocation11], 1
    %8819 = vsyncpa [#allocation14], 1
    %8820 = vsyncpa [#allocation17], 1
    %8821 = vsyncpa [#allocation20], 1
    %8822 = vsyncpa [#allocation23], 1
    %8823 = vsyncpa [#allocation26], 1
    %8824 = vsyncpa [#allocation29], 1
    %8825 = vsyncpa [#allocation32], 1
    %8826 = vsyncpa [#allocation35], 1
    %8827 = vsyncpa [#allocation38], 1

</llo_original>
